<compile_context>
chip_gen: v7x
topology: tpu7x:2x2x1
jax: 0.10.0
libtpu: 0.0.40
codegen_flags: <defaults>
</compile_context>

<pallas_src>
import jax
import jax.numpy as jnp
from jax import lax
from jax.experimental import pallas as pl
from jax.experimental.pallas import tpu as pltpu

_EPS = 1e-5      # nn.BatchNorm2d default eps
_LANE = 128      # TPU lane width


def _round_up(x, m):
    return (x + m - 1) // m * m


def _basic_block_kernel(x_ref, w1_ref, g1_ref, be1_ref, w2_ref, g2_ref,
                        be2_ref, o_ref, pad_ref):
    """Fused BasicBlock: conv3x3+BN+ReLU -> conv3x3+BN -> +x -> ReLU.

    Shapes (channel dims already padded to a 128 multiple, Cp):
      x_ref    : (N, H, W, Cp)      f32 NHWC
      w*_ref   : (9, Cp, Cp)        bf16, first axis ordered (dy, dx)
      g*/be*   : (1, Cp)            f32 BatchNorm gamma / beta
      o_ref    : (N, H, W, Cp)      f32
      pad_ref  : (N, H+2, W+2, Cp)  f32 VMEM scratch (zero border, reused)
    """
    N, H, W, C = x_ref.shape
    rows = N * H * W
    inv_cnt = jnp.float32(1.0 / rows)

    # Zero ONLY the 1-pixel border of the pad slab (4 thin strips); the
    # interior is fully overwritten before each conv, so a full-slab zero
    # store pass would be wasted vst traffic.
    zrow = jnp.zeros((N, 1, W + 2, C), dtype=pad_ref.dtype)
    zcol = jnp.zeros((N, H + 2, 1, C), dtype=pad_ref.dtype)
    pad_ref[:, 0:1, :, :] = zrow
    pad_ref[:, H + 1:H + 2, :, :] = zrow
    pad_ref[:, :, 0:1, :] = zcol
    pad_ref[:, :, W + 1:W + 2, :] = zcol

    def conv3x3_bn(src_nhwc, w_ref, g_ref, be_ref):
        # SAME padding: write the conv input into the slab interior.
        pad_ref[:, 1:H + 1, 1:W + 1, :] = src_nhwc
        # Shift-and-accumulate conv: 9 MXU dots read the shifted windows
        # straight out of pad_ref (no im2col slab); bf16 operands, f32 acc.
        acc = None
        for dy in range(3):
            for dx in range(3):
                win = pad_ref[:, dy:dy + H, dx:dx + W, :]
                win = win.reshape(rows, C).astype(jnp.bfloat16)
                d = jnp.dot(win, w_ref[dy * 3 + dx],
                            preferred_element_type=jnp.float32)
                acc = d if acc is None else acc + d
        # BatchNorm2d training-mode stats over (N,H,W); centered two-pass
        # variance (numerically safe, always >= 0).
        mean = jnp.sum(acc, axis=0, keepdims=True) * inv_cnt
        yc = acc - mean
        var = jnp.sum(yc * yc, axis=0, keepdims=True) * inv_cnt
        scale = lax.rsqrt(var + _EPS) * g_ref[...]
        return yc * scale + be_ref[...]                    # (rows, Cp) f32

    x = x_ref[...]
    h1 = jnp.maximum(conv3x3_bn(x, w1_ref, g1_ref, be1_ref), 0.0)
    y2 = conv3x3_bn(h1.reshape(N, H, W, C), w2_ref, g2_ref, be2_ref)
    out = jnp.maximum(y2 + x.reshape(rows, C), 0.0)
    o_ref[...] = out.reshape(N, H, W, C).astype(o_ref.dtype)


def _pick_vmem_limit_bytes():
    """Per-generation scoped-VMEM limit: ~112 MiB on v5e/v6e (128 MiB
    physical), ~48 MiB on v7x (64 MiB physical), ~16 MiB compiler headroom."""
    cap = 64 * 1024 * 1024
    try:
        cap = int(getattr(pltpu.get_tpu_info(), "vmem_capacity_bytes", cap))
    except Exception:
        pass
    return int(min(cap - 16 * 1024 * 1024, 112 * 1024 * 1024))


def prepare_padded_params(params):
    """Lane-pad and pack parameters once (reusable across calls / layers).

    Conv biases are accepted for module fidelity but dropped: a per-channel
    constant added before training-mode BatchNorm is cancelled exactly by the
    mean subtraction.
    """
    w1, _b1, g1, be1, w2, _b2, g2, be2 = params
    C = w1.shape[2]
    Cp = _round_up(C, _LANE)
    pc = Cp - C

    def prep_w(w):                       # HWIO (3,3,C,C) -> (9, Cp, Cp) bf16
        wp = jnp.pad(w, ((0, 0), (0, 0), (0, pc), (0, pc)))
        return wp.reshape(9, Cp, Cp).astype(jnp.bfloat16)

    def prep_v(v):                       # (C,) -> (1, Cp) f32
        return jnp.pad(v.astype(jnp.float32), (0, pc)).reshape(1, Cp)

    return (prep_w(w1), prep_v(g1), prep_v(be1),
            prep_w(w2), prep_v(g2), prep_v(be2))


def basic_block_forward_padded(xp, padded_params):
    """xp: (N, H, W, Cp) f32 with Cp a multiple of 128. Returns (N, H, W, Cp).

    Preferred entry point when chaining blocks: keep activations
    channel-padded across the whole network so no per-layer pad/slice copies
    round-trip through HBM.
    """
    w1p, g1p, be1p, w2p, g2p, be2p = padded_params
    N, H, W, Cp = xp.shape
    rows = N * H * W

    flops = 2 * (2 * rows * (9 * Cp) * Cp)                 # two 3x3 convs
    bytes_accessed = (xp.size * 4                          # x in
                      + xp.size * 4                        # out
                      + (w1p.size + w2p.size) * 2          # bf16 weights
                      + 4 * Cp * 4)                        # bn gamma/beta

    vmem = pl.BlockSpec(memory_space=pltpu.MemorySpace.VMEM)
    return pl.pallas_call(
        _basic_block_kernel,
        out_shape=jax.ShapeDtypeStruct((N, H, W, Cp), jnp.float32),
        in_specs=[vmem] * 7,
        out_specs=vmem,
        scratch_shapes=[
            pltpu.VMEM((N, H + 2, W + 2, Cp), jnp.float32),  # SAME-pad slab
        ],
        cost_estimate=pl.CostEstimate(flops=flops, transcendentals=0,
                                      bytes_accessed=bytes_accessed),
        compiler_params=pltpu.CompilerParams(
            vmem_limit_bytes=_pick_vmem_limit_bytes()),
    )(xp, w1p, g1p, be1p, w2p, g2p, be2p)


@jax.jit
def basic_block_forward(x, params):
    """Convenience wrapper: x (N, H, W, C) f32, PyTorch-equivalent params
    (w1, b1, g1, be1, w2, b2, g2, be2). Pads channels to 128 and slices back;
    for a full network use basic_block_forward_padded directly."""
    w1, _b1, _g1, _be1, w2, _b2, _g2, _be2 = params
    N, H, W, C = x.shape
    assert w1.shape == (3, 3, C, C) and w2.shape == (3, 3, C, C), (
        "stride=1, downsample=None BasicBlock requires inplanes == planes")
    Cp = _round_up(C, _LANE)
    xp = jnp.pad(x.astype(jnp.float32),
                 ((0, 0), (0, 0), (0, 0), (0, Cp - C)))
    out = basic_block_forward_padded(xp, prepare_padded_params(params))
    return out[..., :C]


def init_params(key, inplanes, planes):
    """Deterministic parameter init matching the module's shapes."""
    k1, k2, k3, k4 = jax.random.split(key, 4)
    w1 = jax.random.normal(k1, (3, 3, inplanes, planes), jnp.float32)
    w1 = w1 * (2.0 / (inplanes * 9)) ** 0.5
    b1 = jax.random.uniform(k2, (planes,), jnp.float32, -0.1, 0.1)
    w2 = jax.random.normal(k3, (3, 3, planes, planes), jnp.float32)
    w2 = w2 * (2.0 / (planes * 9)) ** 0.5
    b2 = jax.random.uniform(k4, (planes,), jnp.float32, -0.1, 0.1)
    g1 = jnp.ones((planes,), jnp.float32)    # BatchNorm default weight = 1
    be1 = jnp.zeros((planes,), jnp.float32)  # BatchNorm default bias  = 0
    g2 = jnp.ones((planes,), jnp.float32)
    be2 = jnp.zeros((planes,), jnp.float32)
    return (w1, b1, g1, be1, w2, b2, g2, be2)


def reference_forward(x, params):
    """Pure-JAX f32 reference of BasicBlock.forward (stride=1, no downsample)."""
    w1, b1, g1, be1, w2, b2, g2, be2 = params

    def conv(x, w, b):
        y = lax.conv_general_dilated(
            x, w, window_strides=(1, 1), padding="SAME",
            dimension_numbers=("NHWC", "HWIO", "NHWC"))
        return y + b.reshape(1, 1, 1, -1)

    def bn(y, g, be):
        mean = jnp.mean(y, axis=(0, 1, 2), keepdims=True)
        var = jnp.mean((y - mean) ** 2, axis=(0, 1, 2), keepdims=True)
        return ((y - mean) / jnp.sqrt(var + _EPS)
                * g.reshape(1, 1, 1, -1) + be.reshape(1, 1, 1, -1))

    h = jax.nn.relu(bn(conv(x, w1, b1), g1, be1))
    h = bn(conv(h, w2, b2), g2, be2) + x
    return jax.nn.relu(h)


if __name__ == "__main__":
    N, C, Hs, Ws = 2, 4, 16, 16          # PyTorch input would be NCHW (2, 4, 16, 16)
    key = jax.random.PRNGKey(0)
    kx, kp = jax.random.split(key)
    x = jax.random.normal(kx, (N, Hs, Ws, C), jnp.float32)   # NHWC layout
    params = init_params(kp, inplanes=C, planes=C)

    out = basic_block_forward(x, params)
    out = jax.block_until_ready(out)

    ref = reference_forward(x, params)
    assert out.shape == (N, Hs, Ws, C)
    # bf16 MXU operands with f32 accumulation -> bf16-level tolerance.
    assert jnp.allclose(out, ref, rtol=2e-2, atol=2e-2), (
        float(jnp.max(jnp.abs(out - ref))))
    print("KERNEL_OK")
</pallas_src>

<mosaic_0001>
module attributes {stable_mosaic.version = 11 : i64} {
  func.func @_basic_block_kernel(%arg0: memref<2x16x16x128xf32, #tpu.memory_space<vmem>>, %arg1: memref<9x128x128xbf16, #tpu.memory_space<vmem>>, %arg2: memref<1x128xf32, #tpu.memory_space<vmem>>, %arg3: memref<1x128xf32, #tpu.memory_space<vmem>>, %arg4: memref<9x128x128xbf16, #tpu.memory_space<vmem>>, %arg5: memref<1x128xf32, #tpu.memory_space<vmem>>, %arg6: memref<1x128xf32, #tpu.memory_space<vmem>>, %arg7: memref<2x16x16x128xf32, #tpu.memory_space<vmem>>, %arg8: memref<2x18x18x128xf32, #tpu.memory_space<vmem>>) attributes {dimension_semantics = [], scalar_prefetch = 0 : i64, scratch_operands = 1 : i64, tpu.core_type = #tpu.core_type<tc>} {
    %cst = arith.constant 0.000000e+00 : f32
    %0 = vector.broadcast %cst : f32 to vector<2x1x18x128xf32>
    %cst_0 = arith.constant 0.000000e+00 : f32
    %1 = vector.broadcast %cst_0 : f32 to vector<2x18x1x128xf32>
    %c0 = arith.constant 0 : index
    %c0_1 = arith.constant 0 : index
    %c0_2 = arith.constant 0 : index
    %c0_3 = arith.constant 0 : index
    %2 = vector.load %arg8[%c0, %c0_1, %c0_2, %c0_3] : memref<2x18x18x128xf32, #tpu.memory_space<vmem>>, vector<2x1x18x128xf32>
    tpu.vector_store %arg8[%c0, %c0_1, %c0_2, %c0_3], %0 {strides = array<i32>} : memref<2x18x18x128xf32, #tpu.memory_space<vmem>>, vector<2x1x18x128xf32>,
    %c0_4 = arith.constant 0 : index
    %c17 = arith.constant 17 : index
    %c0_5 = arith.constant 0 : index
    %c0_6 = arith.constant 0 : index
    %3 = vector.load %arg8[%c0_4, %c17, %c0_5, %c0_6] : memref<2x18x18x128xf32, #tpu.memory_space<vmem>>, vector<2x1x18x128xf32>
    tpu.vector_store %arg8[%c0_4, %c17, %c0_5, %c0_6], %0 {strides = array<i32>} : memref<2x18x18x128xf32, #tpu.memory_space<vmem>>, vector<2x1x18x128xf32>,
    %c0_7 = arith.constant 0 : index
    %c0_8 = arith.constant 0 : index
    %c0_9 = arith.constant 0 : index
    %c0_10 = arith.constant 0 : index
    %4 = vector.load %arg8[%c0_7, %c0_8, %c0_9, %c0_10] : memref<2x18x18x128xf32, #tpu.memory_space<vmem>>, vector<2x18x1x128xf32>
    tpu.vector_store %arg8[%c0_7, %c0_8, %c0_9, %c0_10], %1 {strides = array<i32>} : memref<2x18x18x128xf32, #tpu.memory_space<vmem>>, vector<2x18x1x128xf32>,
    %c0_11 = arith.constant 0 : index
    %c0_12 = arith.constant 0 : index
    %c17_13 = arith.constant 17 : index
    %c0_14 = arith.constant 0 : index
    %5 = vector.load %arg8[%c0_11, %c0_12, %c17_13, %c0_14] : memref<2x18x18x128xf32, #tpu.memory_space<vmem>>, vector<2x18x1x128xf32>
    tpu.vector_store %arg8[%c0_11, %c0_12, %c17_13, %c0_14], %1 {strides = array<i32>} : memref<2x18x18x128xf32, #tpu.memory_space<vmem>>, vector<2x18x1x128xf32>,
    %c0_15 = arith.constant 0 : index
    %c0_16 = arith.constant 0 : index
    %c0_17 = arith.constant 0 : index
    %c0_18 = arith.constant 0 : index
    %6 = vector.load %arg0[%c0_15, %c0_16, %c0_17, %c0_18] : memref<2x16x16x128xf32, #tpu.memory_space<vmem>>, vector<2x16x16x128xf32>
    %c0_19 = arith.constant 0 : index
    %c1 = arith.constant 1 : index
    %c1_20 = arith.constant 1 : index
    %c0_21 = arith.constant 0 : index
    %7 = vector.load %arg8[%c0_19, %c1, %c1_20, %c0_21] : memref<2x18x18x128xf32, #tpu.memory_space<vmem>>, vector<2x16x16x128xf32>
    tpu.vector_store %arg8[%c0_19, %c1, %c1_20, %c0_21], %6 {strides = array<i32>} : memref<2x18x18x128xf32, #tpu.memory_space<vmem>>, vector<2x16x16x128xf32>,
    %c0_22 = arith.constant 0 : index
    %c0_23 = arith.constant 0 : index
    %c0_24 = arith.constant 0 : index
    %c0_25 = arith.constant 0 : index
    %8 = vector.load %arg8[%c0_22, %c0_23, %c0_24, %c0_25] : memref<2x18x18x128xf32, #tpu.memory_space<vmem>>, vector<2x16x16x128xf32>
    %9 = vector.shape_cast %8 : vector<2x16x16x128xf32> to vector<512x128xf32>
    %10 = arith.truncf %9 : vector<512x128xf32> to vector<512x128xbf16>
    %c0_26 = arith.constant 0 : index
    %c0_27 = arith.constant 0 : index
    %c0_28 = arith.constant 0 : index
    %11 = vector.load %arg1[%c0_26, %c0_27, %c0_28] : memref<9x128x128xbf16, #tpu.memory_space<vmem>>, vector<1x128x128xbf16>
    %12 = vector.shape_cast %11 : vector<1x128x128xbf16> to vector<128x128xbf16>
    %cst_29 = arith.constant dense<0.000000e+00> : vector<512x128xf32>
    %13 = tpu.matmul %10, %12, %cst_29 {dimension_numbers = #tpu.dot_dimension_numbers<[1], [0], [0], [1], [0, 0, 1, 1], [], []>} : vector<512x128xbf16>, vector<128x128xbf16>, vector<512x128xf32> -> vector<512x128xf32>
    %c0_30 = arith.constant 0 : index
    %c0_31 = arith.constant 0 : index
    %c1_32 = arith.constant 1 : index
    %c0_33 = arith.constant 0 : index
    %14 = vector.load %arg8[%c0_30, %c0_31, %c1_32, %c0_33] : memref<2x18x18x128xf32, #tpu.memory_space<vmem>>, vector<2x16x16x128xf32>
    %15 = vector.shape_cast %14 : vector<2x16x16x128xf32> to vector<512x128xf32>
    %16 = arith.truncf %15 : vector<512x128xf32> to vector<512x128xbf16>
    %c1_34 = arith.constant 1 : index
    %c0_35 = arith.constant 0 : index
    %c0_36 = arith.constant 0 : index
    %17 = vector.load %arg1[%c1_34, %c0_35, %c0_36] : memref<9x128x128xbf16, #tpu.memory_space<vmem>>, vector<1x128x128xbf16>
    %18 = vector.shape_cast %17 : vector<1x128x128xbf16> to vector<128x128xbf16>
    %cst_37 = arith.constant dense<0.000000e+00> : vector<512x128xf32>
    %19 = tpu.matmul %16, %18, %cst_37 {dimension_numbers = #tpu.dot_dimension_numbers<[1], [0], [0], [1], [0, 0, 1, 1], [], []>} : vector<512x128xbf16>, vector<128x128xbf16>, vector<512x128xf32> -> vector<512x128xf32>
    %20 = arith.addf %13, %19 : vector<512x128xf32>
    %c0_38 = arith.constant 0 : index
    %c0_39 = arith.constant 0 : index
    %c2 = arith.constant 2 : index
    %c0_40 = arith.constant 0 : index
    %21 = vector.load %arg8[%c0_38, %c0_39, %c2, %c0_40] : memref<2x18x18x128xf32, #tpu.memory_space<vmem>>, vector<2x16x16x128xf32>
    %22 = vector.shape_cast %21 : vector<2x16x16x128xf32> to vector<512x128xf32>
    %23 = arith.truncf %22 : vector<512x128xf32> to vector<512x128xbf16>
    %c2_41 = arith.constant 2 : index
    %c0_42 = arith.constant 0 : index
    %c0_43 = arith.constant 0 : index
    %24 = vector.load %arg1[%c2_41, %c0_42, %c0_43] : memref<9x128x128xbf16, #tpu.memory_space<vmem>>, vector<1x128x128xbf16>
    %25 = vector.shape_cast %24 : vector<1x128x128xbf16> to vector<128x128xbf16>
    %cst_44 = arith.constant dense<0.000000e+00> : vector<512x128xf32>
    %26 = tpu.matmul %23, %25, %cst_44 {dimension_numbers = #tpu.dot_dimension_numbers<[1], [0], [0], [1], [0, 0, 1, 1], [], []>} : vector<512x128xbf16>, vector<128x128xbf16>, vector<512x128xf32> -> vector<512x128xf32>
    %27 = arith.addf %20, %26 : vector<512x128xf32>
    %c0_45 = arith.constant 0 : index
    %c1_46 = arith.constant 1 : index
    %c0_47 = arith.constant 0 : index
    %c0_48 = arith.constant 0 : index
    %28 = vector.load %arg8[%c0_45, %c1_46, %c0_47, %c0_48] : memref<2x18x18x128xf32, #tpu.memory_space<vmem>>, vector<2x16x16x128xf32>
    %29 = vector.shape_cast %28 : vector<2x16x16x128xf32> to vector<512x128xf32>
    %30 = arith.truncf %29 : vector<512x128xf32> to vector<512x128xbf16>
    %c3 = arith.constant 3 : index
    %c0_49 = arith.constant 0 : index
    %c0_50 = arith.constant 0 : index
    %31 = vector.load %arg1[%c3, %c0_49, %c0_50] : memref<9x128x128xbf16, #tpu.memory_space<vmem>>, vector<1x128x128xbf16>
    %32 = vector.shape_cast %31 : vector<1x128x128xbf16> to vector<128x128xbf16>
    %cst_51 = arith.constant dense<0.000000e+00> : vector<512x128xf32>
    %33 = tpu.matmul %30, %32, %cst_51 {dimension_numbers = #tpu.dot_dimension_numbers<[1], [0], [0], [1], [0, 0, 1, 1], [], []>} : vector<512x128xbf16>, vector<128x128xbf16>, vector<512x128xf32> -> vector<512x128xf32>
    %34 = arith.addf %27, %33 : vector<512x128xf32>
    %c0_52 = arith.constant 0 : index
    %c1_53 = arith.constant 1 : index
    %c1_54 = arith.constant 1 : index
    %c0_55 = arith.constant 0 : index
    %35 = vector.load %arg8[%c0_52, %c1_53, %c1_54, %c0_55] : memref<2x18x18x128xf32, #tpu.memory_space<vmem>>, vector<2x16x16x128xf32>
    %36 = vector.shape_cast %35 : vector<2x16x16x128xf32> to vector<512x128xf32>
    %37 = arith.truncf %36 : vector<512x128xf32> to vector<512x128xbf16>
    %c4 = arith.constant 4 : index
    %c0_56 = arith.constant 0 : index
    %c0_57 = arith.constant 0 : index
    %38 = vector.load %arg1[%c4, %c0_56, %c0_57] : memref<9x128x128xbf16, #tpu.memory_space<vmem>>, vector<1x128x128xbf16>
    %39 = vector.shape_cast %38 : vector<1x128x128xbf16> to vector<128x128xbf16>
    %cst_58 = arith.constant dense<0.000000e+00> : vector<512x128xf32>
    %40 = tpu.matmul %37, %39, %cst_58 {dimension_numbers = #tpu.dot_dimension_numbers<[1], [0], [0], [1], [0, 0, 1, 1], [], []>} : vector<512x128xbf16>, vector<128x128xbf16>, vector<512x128xf32> -> vector<512x128xf32>
    %41 = arith.addf %34, %40 : vector<512x128xf32>
    %c0_59 = arith.constant 0 : index
    %c1_60 = arith.constant 1 : index
    %c2_61 = arith.constant 2 : index
    %c0_62 = arith.constant 0 : index
    %42 = vector.load %arg8[%c0_59, %c1_60, %c2_61, %c0_62] : memref<2x18x18x128xf32, #tpu.memory_space<vmem>>, vector<2x16x16x128xf32>
    %43 = vector.shape_cast %42 : vector<2x16x16x128xf32> to vector<512x128xf32>
    %44 = arith.truncf %43 : vector<512x128xf32> to vector<512x128xbf16>
    %c5 = arith.constant 5 : index
    %c0_63 = arith.constant 0 : index
    %c0_64 = arith.constant 0 : index
    %45 = vector.load %arg1[%c5, %c0_63, %c0_64] : memref<9x128x128xbf16, #tpu.memory_space<vmem>>, vector<1x128x128xbf16>
    %46 = vector.shape_cast %45 : vector<1x128x128xbf16> to vector<128x128xbf16>
    %cst_65 = arith.constant dense<0.000000e+00> : vector<512x128xf32>
    %47 = tpu.matmul %44, %46, %cst_65 {dimension_numbers = #tpu.dot_dimension_numbers<[1], [0], [0], [1], [0, 0, 1, 1], [], []>} : vector<512x128xbf16>, vector<128x128xbf16>, vector<512x128xf32> -> vector<512x128xf32>
    %48 = arith.addf %41, %47 : vector<512x128xf32>
    %c0_66 = arith.constant 0 : index
    %c2_67 = arith.constant 2 : index
    %c0_68 = arith.constant 0 : index
    %c0_69 = arith.constant 0 : index
    %49 = vector.load %arg8[%c0_66, %c2_67, %c0_68, %c0_69] : memref<2x18x18x128xf32, #tpu.memory_space<vmem>>, vector<2x16x16x128xf32>
    %50 = vector.shape_cast %49 : vector<2x16x16x128xf32> to vector<512x128xf32>
    %51 = arith.truncf %50 : vector<512x128xf32> to vector<512x128xbf16>
    %c6 = arith.constant 6 : index
    %c0_70 = arith.constant 0 : index
    %c0_71 = arith.constant 0 : index
    %52 = vector.load %arg1[%c6, %c0_70, %c0_71] : memref<9x128x128xbf16, #tpu.memory_space<vmem>>, vector<1x128x128xbf16>
    %53 = vector.shape_cast %52 : vector<1x128x128xbf16> to vector<128x128xbf16>
    %cst_72 = arith.constant dense<0.000000e+00> : vector<512x128xf32>
    %54 = tpu.matmul %51, %53, %cst_72 {dimension_numbers = #tpu.dot_dimension_numbers<[1], [0], [0], [1], [0, 0, 1, 1], [], []>} : vector<512x128xbf16>, vector<128x128xbf16>, vector<512x128xf32> -> vector<512x128xf32>
    %55 = arith.addf %48, %54 : vector<512x128xf32>
    %c0_73 = arith.constant 0 : index
    %c2_74 = arith.constant 2 : index
    %c1_75 = arith.constant 1 : index
    %c0_76 = arith.constant 0 : index
    %56 = vector.load %arg8[%c0_73, %c2_74, %c1_75, %c0_76] : memref<2x18x18x128xf32, #tpu.memory_space<vmem>>, vector<2x16x16x128xf32>
    %57 = vector.shape_cast %56 : vector<2x16x16x128xf32> to vector<512x128xf32>
    %58 = arith.truncf %57 : vector<512x128xf32> to vector<512x128xbf16>
    %c7 = arith.constant 7 : index
    %c0_77 = arith.constant 0 : index
    %c0_78 = arith.constant 0 : index
    %59 = vector.load %arg1[%c7, %c0_77, %c0_78] : memref<9x128x128xbf16, #tpu.memory_space<vmem>>, vector<1x128x128xbf16>
    %60 = vector.shape_cast %59 : vector<1x128x128xbf16> to vector<128x128xbf16>
    %cst_79 = arith.constant dense<0.000000e+00> : vector<512x128xf32>
    %61 = tpu.matmul %58, %60, %cst_79 {dimension_numbers = #tpu.dot_dimension_numbers<[1], [0], [0], [1], [0, 0, 1, 1], [], []>} : vector<512x128xbf16>, vector<128x128xbf16>, vector<512x128xf32> -> vector<512x128xf32>
    %62 = arith.addf %55, %61 : vector<512x128xf32>
    %c0_80 = arith.constant 0 : index
    %c2_81 = arith.constant 2 : index
    %c2_82 = arith.constant 2 : index
    %c0_83 = arith.constant 0 : index
    %63 = vector.load %arg8[%c0_80, %c2_81, %c2_82, %c0_83] : memref<2x18x18x128xf32, #tpu.memory_space<vmem>>, vector<2x16x16x128xf32>
    %64 = vector.shape_cast %63 : vector<2x16x16x128xf32> to vector<512x128xf32>
    %65 = arith.truncf %64 : vector<512x128xf32> to vector<512x128xbf16>
    %c8 = arith.constant 8 : index
    %c0_84 = arith.constant 0 : index
    %c0_85 = arith.constant 0 : index
    %66 = vector.load %arg1[%c8, %c0_84, %c0_85] : memref<9x128x128xbf16, #tpu.memory_space<vmem>>, vector<1x128x128xbf16>
    %67 = vector.shape_cast %66 : vector<1x128x128xbf16> to vector<128x128xbf16>
    %cst_86 = arith.constant dense<0.000000e+00> : vector<512x128xf32>
    %68 = tpu.matmul %65, %67, %cst_86 {dimension_numbers = #tpu.dot_dimension_numbers<[1], [0], [0], [1], [0, 0, 1, 1], [], []>} : vector<512x128xbf16>, vector<128x128xbf16>, vector<512x128xf32> -> vector<512x128xf32>
    %69 = arith.addf %62, %68 : vector<512x128xf32>
    %cst_87 = arith.constant dense<0.000000e+00> : vector<128xf32>
    %70 = vector.multi_reduction <add>, %69, %cst_87 [0] : vector<512x128xf32> to vector<128xf32>
    %71 = vector.shape_cast %70 : vector<128xf32> to vector<1x128xf32>
    %cst_88 = arith.constant 0.001953125 : f32
    %72 = vector.broadcast %cst_88 : f32 to vector<1x128xf32>
    %73 = arith.mulf %71, %72 : vector<1x128xf32>
    %74 = vector.broadcast %73 : vector<1x128xf32> to vector<512x128xf32>
    %75 = arith.subf %69, %74 : vector<512x128xf32>
    %76 = arith.mulf %75, %75 : vector<512x128xf32>
    %cst_89 = arith.constant dense<0.000000e+00> : vector<128xf32>
    %77 = vector.multi_reduction <add>, %76, %cst_89 [0] : vector<512x128xf32> to vector<128xf32>
    %78 = vector.shape_cast %77 : vector<128xf32> to vector<1x128xf32>
    %cst_90 = arith.constant 0.001953125 : f32
    %79 = vector.broadcast %cst_90 : f32 to vector<1x128xf32>
    %80 = arith.mulf %78, %79 : vector<1x128xf32>
    %cst_91 = arith.constant 9.99999974E-6 : f32
    %81 = vector.broadcast %cst_91 : f32 to vector<1x128xf32>
    %82 = arith.addf %80, %81 : vector<1x128xf32>
    %83 = math.rsqrt %82 : vector<1x128xf32>
    %c0_92 = arith.constant 0 : index
    %c0_93 = arith.constant 0 : index
    %84 = vector.load %arg2[%c0_92, %c0_93] : memref<1x128xf32, #tpu.memory_space<vmem>>, vector<1x128xf32>
    %85 = arith.mulf %83, %84 : vector<1x128xf32>
    %86 = vector.broadcast %85 : vector<1x128xf32> to vector<512x128xf32>
    %87 = arith.mulf %75, %86 : vector<512x128xf32>
    %c0_94 = arith.constant 0 : index
    %c0_95 = arith.constant 0 : index
    %88 = vector.load %arg3[%c0_94, %c0_95] : memref<1x128xf32, #tpu.memory_space<vmem>>, vector<1x128xf32>
    %89 = vector.broadcast %88 : vector<1x128xf32> to vector<512x128xf32>
    %90 = arith.addf %87, %89 : vector<512x128xf32>
    %cst_96 = arith.constant 0.000000e+00 : f32
    %91 = vector.broadcast %cst_96 : f32 to vector<512x128xf32>
    %92 = arith.maximumf %90, %91 : vector<512x128xf32>
    %93 = vector.shape_cast %92 : vector<512x128xf32> to vector<2x16x16x128xf32>
    %c0_97 = arith.constant 0 : index
    %c1_98 = arith.constant 1 : index
    %c1_99 = arith.constant 1 : index
    %c0_100 = arith.constant 0 : index
    %94 = vector.load %arg8[%c0_97, %c1_98, %c1_99, %c0_100] : memref<2x18x18x128xf32, #tpu.memory_space<vmem>>, vector<2x16x16x128xf32>
    tpu.vector_store %arg8[%c0_97, %c1_98, %c1_99, %c0_100], %93 {strides = array<i32>} : memref<2x18x18x128xf32, #tpu.memory_space<vmem>>, vector<2x16x16x128xf32>,
    %c0_101 = arith.constant 0 : index
    %c0_102 = arith.constant 0 : index
    %c0_103 = arith.constant 0 : index
    %c0_104 = arith.constant 0 : index
    %95 = vector.load %arg8[%c0_101, %c0_102, %c0_103, %c0_104] : memref<2x18x18x128xf32, #tpu.memory_space<vmem>>, vector<2x16x16x128xf32>
    %96 = vector.shape_cast %95 : vector<2x16x16x128xf32> to vector<512x128xf32>
    %97 = arith.truncf %96 : vector<512x128xf32> to vector<512x128xbf16>
    %c0_105 = arith.constant 0 : index
    %c0_106 = arith.constant 0 : index
    %c0_107 = arith.constant 0 : index
    %98 = vector.load %arg4[%c0_105, %c0_106, %c0_107] : memref<9x128x128xbf16, #tpu.memory_space<vmem>>, vector<1x128x128xbf16>
    %99 = vector.shape_cast %98 : vector<1x128x128xbf16> to vector<128x128xbf16>
    %cst_108 = arith.constant dense<0.000000e+00> : vector<512x128xf32>
    %100 = tpu.matmul %97, %99, %cst_108 {dimension_numbers = #tpu.dot_dimension_numbers<[1], [0], [0], [1], [0, 0, 1, 1], [], []>} : vector<512x128xbf16>, vector<128x128xbf16>, vector<512x128xf32> -> vector<512x128xf32>
    %c0_109 = arith.constant 0 : index
    %c0_110 = arith.constant 0 : index
    %c1_111 = arith.constant 1 : index
    %c0_112 = arith.constant 0 : index
    %101 = vector.load %arg8[%c0_109, %c0_110, %c1_111, %c0_112] : memref<2x18x18x128xf32, #tpu.memory_space<vmem>>, vector<2x16x16x128xf32>
    %102 = vector.shape_cast %101 : vector<2x16x16x128xf32> to vector<512x128xf32>
    %103 = arith.truncf %102 : vector<512x128xf32> to vector<512x128xbf16>
    %c1_113 = arith.constant 1 : index
    %c0_114 = arith.constant 0 : index
    %c0_115 = arith.constant 0 : index
    %104 = vector.load %arg4[%c1_113, %c0_114, %c0_115] : memref<9x128x128xbf16, #tpu.memory_space<vmem>>, vector<1x128x128xbf16>
    %105 = vector.shape_cast %104 : vector<1x128x128xbf16> to vector<128x128xbf16>
    %cst_116 = arith.constant dense<0.000000e+00> : vector<512x128xf32>
    %106 = tpu.matmul %103, %105, %cst_116 {dimension_numbers = #tpu.dot_dimension_numbers<[1], [0], [0], [1], [0, 0, 1, 1], [], []>} : vector<512x128xbf16>, vector<128x128xbf16>, vector<512x128xf32> -> vector<512x128xf32>
    %107 = arith.addf %100, %106 : vector<512x128xf32>
    %c0_117 = arith.constant 0 : index
    %c0_118 = arith.constant 0 : index
    %c2_119 = arith.constant 2 : index
    %c0_120 = arith.constant 0 : index
    %108 = vector.load %arg8[%c0_117, %c0_118, %c2_119, %c0_120] : memref<2x18x18x128xf32, #tpu.memory_space<vmem>>, vector<2x16x16x128xf32>
    %109 = vector.shape_cast %108 : vector<2x16x16x128xf32> to vector<512x128xf32>
    %110 = arith.truncf %109 : vector<512x128xf32> to vector<512x128xbf16>
    %c2_121 = arith.constant 2 : index
    %c0_122 = arith.constant 0 : index
    %c0_123 = arith.constant 0 : index
    %111 = vector.load %arg4[%c2_121, %c0_122, %c0_123] : memref<9x128x128xbf16, #tpu.memory_space<vmem>>, vector<1x128x128xbf16>
    %112 = vector.shape_cast %111 : vector<1x128x128xbf16> to vector<128x128xbf16>
    %cst_124 = arith.constant dense<0.000000e+00> : vector<512x128xf32>
    %113 = tpu.matmul %110, %112, %cst_124 {dimension_numbers = #tpu.dot_dimension_numbers<[1], [0], [0], [1], [0, 0, 1, 1], [], []>} : vector<512x128xbf16>, vector<128x128xbf16>, vector<512x128xf32> -> vector<512x128xf32>
    %114 = arith.addf %107, %113 : vector<512x128xf32>
    %c0_125 = arith.constant 0 : index
    %c1_126 = arith.constant 1 : index
    %c0_127 = arith.constant 0 : index
    %c0_128 = arith.constant 0 : index
    %115 = vector.load %arg8[%c0_125, %c1_126, %c0_127, %c0_128] : memref<2x18x18x128xf32, #tpu.memory_space<vmem>>, vector<2x16x16x128xf32>
    %116 = vector.shape_cast %115 : vector<2x16x16x128xf32> to vector<512x128xf32>
    %117 = arith.truncf %116 : vector<512x128xf32> to vector<512x128xbf16>
    %c3_129 = arith.constant 3 : index
    %c0_130 = arith.constant 0 : index
    %c0_131 = arith.constant 0 : index
    %118 = vector.load %arg4[%c3_129, %c0_130, %c0_131] : memref<9x128x128xbf16, #tpu.memory_space<vmem>>, vector<1x128x128xbf16>
    %119 = vector.shape_cast %118 : vector<1x128x128xbf16> to vector<128x128xbf16>
    %cst_132 = arith.constant dense<0.000000e+00> : vector<512x128xf32>
    %120 = tpu.matmul %117, %119, %cst_132 {dimension_numbers = #tpu.dot_dimension_numbers<[1], [0], [0], [1], [0, 0, 1, 1], [], []>} : vector<512x128xbf16>, vector<128x128xbf16>, vector<512x128xf32> -> vector<512x128xf32>
    %121 = arith.addf %114, %120 : vector<512x128xf32>
    %c0_133 = arith.constant 0 : index
    %c1_134 = arith.constant 1 : index
    %c1_135 = arith.constant 1 : index
    %c0_136 = arith.constant 0 : index
    %122 = vector.load %arg8[%c0_133, %c1_134, %c1_135, %c0_136] : memref<2x18x18x128xf32, #tpu.memory_space<vmem>>, vector<2x16x16x128xf32>
    %123 = vector.shape_cast %122 : vector<2x16x16x128xf32> to vector<512x128xf32>
    %124 = arith.truncf %123 : vector<512x128xf32> to vector<512x128xbf16>
    %c4_137 = arith.constant 4 : index
    %c0_138 = arith.constant 0 : index
    %c0_139 = arith.constant 0 : index
    %125 = vector.load %arg4[%c4_137, %c0_138, %c0_139] : memref<9x128x128xbf16, #tpu.memory_space<vmem>>, vector<1x128x128xbf16>
    %126 = vector.shape_cast %125 : vector<1x128x128xbf16> to vector<128x128xbf16>
    %cst_140 = arith.constant dense<0.000000e+00> : vector<512x128xf32>
    %127 = tpu.matmul %124, %126, %cst_140 {dimension_numbers = #tpu.dot_dimension_numbers<[1], [0], [0], [1], [0, 0, 1, 1], [], []>} : vector<512x128xbf16>, vector<128x128xbf16>, vector<512x128xf32> -> vector<512x128xf32>
    %128 = arith.addf %121, %127 : vector<512x128xf32>
    %c0_141 = arith.constant 0 : index
    %c1_142 = arith.constant 1 : index
    %c2_143 = arith.constant 2 : index
    %c0_144 = arith.constant 0 : index
    %129 = vector.load %arg8[%c0_141, %c1_142, %c2_143, %c0_144] : memref<2x18x18x128xf32, #tpu.memory_space<vmem>>, vector<2x16x16x128xf32>
    %130 = vector.shape_cast %129 : vector<2x16x16x128xf32> to vector<512x128xf32>
    %131 = arith.truncf %130 : vector<512x128xf32> to vector<512x128xbf16>
    %c5_145 = arith.constant 5 : index
    %c0_146 = arith.constant 0 : index
    %c0_147 = arith.constant 0 : index
    %132 = vector.load %arg4[%c5_145, %c0_146, %c0_147] : memref<9x128x128xbf16, #tpu.memory_space<vmem>>, vector<1x128x128xbf16>
    %133 = vector.shape_cast %132 : vector<1x128x128xbf16> to vector<128x128xbf16>
    %cst_148 = arith.constant dense<0.000000e+00> : vector<512x128xf32>
    %134 = tpu.matmul %131, %133, %cst_148 {dimension_numbers = #tpu.dot_dimension_numbers<[1], [0], [0], [1], [0, 0, 1, 1], [], []>} : vector<512x128xbf16>, vector<128x128xbf16>, vector<512x128xf32> -> vector<512x128xf32>
    %135 = arith.addf %128, %134 : vector<512x128xf32>
    %c0_149 = arith.constant 0 : index
    %c2_150 = arith.constant 2 : index
    %c0_151 = arith.constant 0 : index
    %c0_152 = arith.constant 0 : index
    %136 = vector.load %arg8[%c0_149, %c2_150, %c0_151, %c0_152] : memref<2x18x18x128xf32, #tpu.memory_space<vmem>>, vector<2x16x16x128xf32>
    %137 = vector.shape_cast %136 : vector<2x16x16x128xf32> to vector<512x128xf32>
    %138 = arith.truncf %137 : vector<512x128xf32> to vector<512x128xbf16>
    %c6_153 = arith.constant 6 : index
    %c0_154 = arith.constant 0 : index
    %c0_155 = arith.constant 0 : index
    %139 = vector.load %arg4[%c6_153, %c0_154, %c0_155] : memref<9x128x128xbf16, #tpu.memory_space<vmem>>, vector<1x128x128xbf16>
    %140 = vector.shape_cast %139 : vector<1x128x128xbf16> to vector<128x128xbf16>
    %cst_156 = arith.constant dense<0.000000e+00> : vector<512x128xf32>
    %141 = tpu.matmul %138, %140, %cst_156 {dimension_numbers = #tpu.dot_dimension_numbers<[1], [0], [0], [1], [0, 0, 1, 1], [], []>} : vector<512x128xbf16>, vector<128x128xbf16>, vector<512x128xf32> -> vector<512x128xf32>
    %142 = arith.addf %135, %141 : vector<512x128xf32>
    %c0_157 = arith.constant 0 : index
    %c2_158 = arith.constant 2 : index
    %c1_159 = arith.constant 1 : index
    %c0_160 = arith.constant 0 : index
    %143 = vector.load %arg8[%c0_157, %c2_158, %c1_159, %c0_160] : memref<2x18x18x128xf32, #tpu.memory_space<vmem>>, vector<2x16x16x128xf32>
    %144 = vector.shape_cast %143 : vector<2x16x16x128xf32> to vector<512x128xf32>
    %145 = arith.truncf %144 : vector<512x128xf32> to vector<512x128xbf16>
    %c7_161 = arith.constant 7 : index
    %c0_162 = arith.constant 0 : index
    %c0_163 = arith.constant 0 : index
    %146 = vector.load %arg4[%c7_161, %c0_162, %c0_163] : memref<9x128x128xbf16, #tpu.memory_space<vmem>>, vector<1x128x128xbf16>
    %147 = vector.shape_cast %146 : vector<1x128x128xbf16> to vector<128x128xbf16>
    %cst_164 = arith.constant dense<0.000000e+00> : vector<512x128xf32>
    %148 = tpu.matmul %145, %147, %cst_164 {dimension_numbers = #tpu.dot_dimension_numbers<[1], [0], [0], [1], [0, 0, 1, 1], [], []>} : vector<512x128xbf16>, vector<128x128xbf16>, vector<512x128xf32> -> vector<512x128xf32>
    %149 = arith.addf %142, %148 : vector<512x128xf32>
    %c0_165 = arith.constant 0 : index
    %c2_166 = arith.constant 2 : index
    %c2_167 = arith.constant 2 : index
    %c0_168 = arith.constant 0 : index
    %150 = vector.load %arg8[%c0_165, %c2_166, %c2_167, %c0_168] : memref<2x18x18x128xf32, #tpu.memory_space<vmem>>, vector<2x16x16x128xf32>
    %151 = vector.shape_cast %150 : vector<2x16x16x128xf32> to vector<512x128xf32>
    %152 = arith.truncf %151 : vector<512x128xf32> to vector<512x128xbf16>
    %c8_169 = arith.constant 8 : index
    %c0_170 = arith.constant 0 : index
    %c0_171 = arith.constant 0 : index
    %153 = vector.load %arg4[%c8_169, %c0_170, %c0_171] : memref<9x128x128xbf16, #tpu.memory_space<vmem>>, vector<1x128x128xbf16>
    %154 = vector.shape_cast %153 : vector<1x128x128xbf16> to vector<128x128xbf16>
    %cst_172 = arith.constant dense<0.000000e+00> : vector<512x128xf32>
    %155 = tpu.matmul %152, %154, %cst_172 {dimension_numbers = #tpu.dot_dimension_numbers<[1], [0], [0], [1], [0, 0, 1, 1], [], []>} : vector<512x128xbf16>, vector<128x128xbf16>, vector<512x128xf32> -> vector<512x128xf32>
    %156 = arith.addf %149, %155 : vector<512x128xf32>
    %cst_173 = arith.constant dense<0.000000e+00> : vector<128xf32>
    %157 = vector.multi_reduction <add>, %156, %cst_173 [0] : vector<512x128xf32> to vector<128xf32>
    %158 = vector.shape_cast %157 : vector<128xf32> to vector<1x128xf32>
    %cst_174 = arith.constant 0.001953125 : f32
    %159 = vector.broadcast %cst_174 : f32 to vector<1x128xf32>
    %160 = arith.mulf %158, %159 : vector<1x128xf32>
    %161 = vector.broadcast %160 : vector<1x128xf32> to vector<512x128xf32>
    %162 = arith.subf %156, %161 : vector<512x128xf32>
    %163 = arith.mulf %162, %162 : vector<512x128xf32>
    %cst_175 = arith.constant dense<0.000000e+00> : vector<128xf32>
    %164 = vector.multi_reduction <add>, %163, %cst_175 [0] : vector<512x128xf32> to vector<128xf32>
    %165 = vector.shape_cast %164 : vector<128xf32> to vector<1x128xf32>
    %cst_176 = arith.constant 0.001953125 : f32
    %166 = vector.broadcast %cst_176 : f32 to vector<1x128xf32>
    %167 = arith.mulf %165, %166 : vector<1x128xf32>
    %cst_177 = arith.constant 9.99999974E-6 : f32
    %168 = vector.broadcast %cst_177 : f32 to vector<1x128xf32>
    %169 = arith.addf %167, %168 : vector<1x128xf32>
    %170 = math.rsqrt %169 : vector<1x128xf32>
    %c0_178 = arith.constant 0 : index
    %c0_179 = arith.constant 0 : index
    %171 = vector.load %arg5[%c0_178, %c0_179] : memref<1x128xf32, #tpu.memory_space<vmem>>, vector<1x128xf32>
    %172 = arith.mulf %170, %171 : vector<1x128xf32>
    %173 = vector.broadcast %172 : vector<1x128xf32> to vector<512x128xf32>
    %174 = arith.mulf %162, %173 : vector<512x128xf32>
    %c0_180 = arith.constant 0 : index
    %c0_181 = arith.constant 0 : index
    %175 = vector.load %arg6[%c0_180, %c0_181] : memref<1x128xf32, #tpu.memory_space<vmem>>, vector<1x128xf32>
    %176 = vector.broadcast %175 : vector<1x128xf32> to vector<512x128xf32>
    %177 = arith.addf %174, %176 : vector<512x128xf32>
    %178 = vector.shape_cast %6 : vector<2x16x16x128xf32> to vector<512x128xf32>
    %179 = arith.addf %177, %178 : vector<512x128xf32>
    %cst_182 = arith.constant 0.000000e+00 : f32
    %180 = vector.broadcast %cst_182 : f32 to vector<512x128xf32>
    %181 = arith.maximumf %179, %180 : vector<512x128xf32>
    %182 = vector.shape_cast %181 : vector<512x128xf32> to vector<2x16x16x128xf32>
    %c0_183 = arith.constant 0 : index
    %c0_184 = arith.constant 0 : index
    %c0_185 = arith.constant 0 : index
    %c0_186 = arith.constant 0 : index
    %183 = vector.load %arg7[%c0_183, %c0_184, %c0_185, %c0_186] : memref<2x16x16x128xf32, #tpu.memory_space<vmem>>, vector<2x16x16x128xf32>
    tpu.vector_store %arg7[%c0_183, %c0_184, %c0_185, %c0_186], %182 {strides = array<i32>} : memref<2x16x16x128xf32, #tpu.memory_space<vmem>>, vector<2x16x16x128xf32>,
    return
  }
}

</mosaic_0001>

<llo_original>
// kernel: basic_block_forward.1
$region0: #{basic_block_forward.1}
  #allocation0 [shape = 'u32[]', space=smem, size = 0x4, offset = 0x4, fixed_abs, tag = 'smem constant byte address 0x4 - core index']
  #allocation1 [shape = 'u32[144,128]{1,0:T(1,128)}', space=vmem, size = 0x12000, scoped, tag = 'internal scratch']
  #allocation2 [shape = 'f32[2,18,18,128]{3,2,1,0:T(8,128)}', space=vmem, size = 0x6c000, scoped, tag = 'scratch operand']
  %s0 = inlined_call_operand.vmem [shape: f32[2,16,16,128], index: 0, kind: input, shape index: {}]
  %s1 = inlined_call_operand.vmem [shape: bf16[9,128,128], index: 1, kind: input, shape index: {}]
  %s2 = inlined_call_operand.vmem [shape: f32[1,128], index: 2, kind: input, shape index: {}]
  %s3 = inlined_call_operand.vmem [shape: f32[1,128], index: 3, kind: input, shape index: {}]
  %s4 = inlined_call_operand.vmem [shape: bf16[9,128,128], index: 4, kind: input, shape index: {}]
  %s5 = inlined_call_operand.vmem [shape: f32[1,128], index: 5, kind: input, shape index: {}]
  %s6 = inlined_call_operand.vmem [shape: f32[1,128], index: 6, kind: input, shape index: {}]
  %s7 = inlined_call_operand.vmem [shape: f32[2,16,16,128], index: 7, kind: output, shape index: {}]
  %s8 = sld [smem:[#allocation0]]
  $region38: #{basic_block_forward.1} parent=0
    _
  %s10 = ssub.s32 1, %s8
  %s11 = scalar_select 0, %s10, %s8
  // Predicated region
  $region2: #{basic_block_forward.1} parent=0 // pred_check
    _
  $region3: #{basic_block_forward.1} parent=0 // pred_check_branch
    %13 = sbr.rel (0) target = $region5
  $region4: #{basic_block_forward.1} parent=0 // pred_region
    _
  $region5: #{basic_block_forward.1} parent=0 // pred_fallthru
    _
  // Predicated region
  $region6: #{basic_block_forward.1} parent=0 // pred_check
    _
  $region7: #{basic_block_forward.1} parent=0 // pred_check_branch
    %15 = sbr.rel (0) target = $region9
  $region8: #{basic_block_forward.1} parent=0 // pred_region
    _
  $region9: #{basic_block_forward.1} parent=0 // pred_fallthru
    _
  // Predicated region
  $region10: #{basic_block_forward.1} parent=0 // pred_check
    _
  $region11: #{basic_block_forward.1} parent=0 // pred_check_branch
    %17 = sbr.rel (0) target = $region13
  $region12: #{basic_block_forward.1} parent=0 // pred_region
    _
  $region13: #{basic_block_forward.1} parent=0 // pred_fallthru
    _
  // Predicated region
  $region14: #{basic_block_forward.1} parent=0 // pred_check
    _
  $region15: #{basic_block_forward.1} parent=0 // pred_check_branch
    %19 = sbr.rel (0) target = $region17
  $region16: #{basic_block_forward.1} parent=0 // pred_region
    _
  $region17: #{basic_block_forward.1} parent=0 // pred_fallthru
    _
  // Predicated region
  $region18: #{basic_block_forward.1} parent=0 // pred_check
    _
  $region19: #{basic_block_forward.1} parent=0 // pred_check_branch
    %21 = sbr.rel (0) target = $region21
  $region20: #{basic_block_forward.1} parent=0 // pred_region
    _
  $region21: #{basic_block_forward.1} parent=0 // pred_fallthru
    _
  // Predicated region
  $region22: #{basic_block_forward.1} parent=0 // pred_check
    _
  $region23: #{basic_block_forward.1} parent=0 // pred_check_branch
    %23 = sbr.rel (0) target = $region25
  $region24: #{basic_block_forward.1} parent=0 // pred_region
    _
  $region25: #{basic_block_forward.1} parent=0 // pred_fallthru
    _
  // Predicated region
  $region26: #{basic_block_forward.1} parent=0 // pred_check
    _
  $region27: #{basic_block_forward.1} parent=0 // pred_check_branch
    %25 = sbr.rel (0) target = $region29
  $region28: #{basic_block_forward.1} parent=0 // pred_region
    _
  $region29: #{basic_block_forward.1} parent=0 // pred_fallthru
    _
  %27 = vst [vmem:[#allocation2] sm:$0xff] 0.0
  %28 = vst [vmem:[#allocation2 + $0x8] sm:$0xff] 0.0
  %29 = vst [vmem:[#allocation2 + $0x10] sm:$0x3] 0.0
  %30 = vst [vmem:[#allocation2 + $0x1b0] sm:$0xff] 0.0
  %31 = vst [vmem:[#allocation2 + $0x1b8] sm:$0xff] 0.0
  %32 = vst [vmem:[#allocation2 + $0x1c0] sm:$0x3] 0.0
  %s33 = scalar_lea.vmem [#allocation2], 408
  %34 = vst [vmem:[%s33] sm:$0xff] 0.0
  %35 = vst [vmem:[%s33 + $0x8] sm:$0xff] 0.0
  %36 = vst [vmem:[%s33 + $0x10] sm:$0x3] 0.0
  %37 = vst [vmem:[%s33 + $0x1b0] sm:$0xff] 0.0
  %38 = vst [vmem:[%s33 + $0x1b8] sm:$0xff] 0.0
  %39 = vst [vmem:[%s33 + $0x1c0] sm:$0x3] 0.0
  %40 = vst [vmem:[#allocation2] sm:$0x1] 0.0
  %41 = vst [vmem:[#allocation2 + $0x18] sm:$0x1] 0.0
  %42 = vst [vmem:[#allocation2 + $0x30] sm:$0x1] 0.0
  %43 = vst [vmem:[#allocation2 + $0x48] sm:$0x1] 0.0
  %44 = vst [vmem:[#allocation2 + $0x60] sm:$0x1] 0.0
  %45 = vst [vmem:[#allocation2 + $0x78] sm:$0x1] 0.0
  %46 = vst [vmem:[#allocation2 + $0x90] sm:$0x1] 0.0
  %47 = vst [vmem:[#allocation2 + $0xa8] sm:$0x1] 0.0
  %48 = vst [vmem:[#allocation2 + $0xc0] sm:$0x1] 0.0
  %49 = vst [vmem:[#allocation2 + $0xd8] sm:$0x1] 0.0
  %50 = vst [vmem:[#allocation2 + $0xf0] sm:$0x1] 0.0
  %51 = vst [vmem:[#allocation2 + $0x108] sm:$0x1] 0.0
  %52 = vst [vmem:[#allocation2 + $0x120] sm:$0x1] 0.0
  %53 = vst [vmem:[#allocation2 + $0x138] sm:$0x1] 0.0
  %54 = vst [vmem:[#allocation2 + $0x150] sm:$0x1] 0.0
  %55 = vst [vmem:[#allocation2 + $0x168] sm:$0x1] 0.0
  %56 = vst [vmem:[#allocation2 + $0x180] sm:$0x1] 0.0
  %57 = vst [vmem:[#allocation2 + $0x198] sm:$0x1] 0.0
  %58 = vst [vmem:[#allocation2 + $0x1b0] sm:$0x1] 0.0
  %59 = vst [vmem:[#allocation2 + $0x1c8] sm:$0x1] 0.0
  %60 = vst [vmem:[#allocation2 + $0x1e0] sm:$0x1] 0.0
  %61 = vst [vmem:[#allocation2 + $0x1f8] sm:$0x1] 0.0
  %62 = vst [vmem:[#allocation2 + $0x210] sm:$0x1] 0.0
  %63 = vst [vmem:[#allocation2 + $0x228] sm:$0x1] 0.0
  %64 = vst [vmem:[#allocation2 + $0x240] sm:$0x1] 0.0
  %65 = vst [vmem:[#allocation2 + $0x258] sm:$0x1] 0.0
  %66 = vst [vmem:[#allocation2 + $0x270] sm:$0x1] 0.0
  %67 = vst [vmem:[#allocation2 + $0x288] sm:$0x1] 0.0
  %68 = vst [vmem:[#allocation2 + $0x2a0] sm:$0x1] 0.0
  %69 = vst [vmem:[#allocation2 + $0x2b8] sm:$0x1] 0.0
  %70 = vst [vmem:[#allocation2 + $0x2d0] sm:$0x1] 0.0
  %71 = vst [vmem:[#allocation2 + $0x2e8] sm:$0x1] 0.0
  %72 = vst [vmem:[#allocation2 + $0x300] sm:$0x1] 0.0
  %73 = vst [vmem:[#allocation2 + $0x318] sm:$0x1] 0.0
  %74 = vst [vmem:[#allocation2 + $0x330] sm:$0x1] 0.0
  %75 = vst [vmem:[#allocation2 + $0x348] sm:$0x1] 0.0
  %76 = vst [vmem:[#allocation2 + $0x11] sm:$0x1] 0.0
  %77 = vst [vmem:[#allocation2 + $0x29] sm:$0x1] 0.0
  %78 = vst [vmem:[#allocation2 + $0x41] sm:$0x1] 0.0
  %79 = vst [vmem:[#allocation2 + $0x59] sm:$0x1] 0.0
  %80 = vst [vmem:[#allocation2 + $0x71] sm:$0x1] 0.0
  %81 = vst [vmem:[#allocation2 + $0x89] sm:$0x1] 0.0
  %82 = vst [vmem:[#allocation2 + $0xa1] sm:$0x1] 0.0
  %83 = vst [vmem:[#allocation2 + $0xb9] sm:$0x1] 0.0
  %84 = vst [vmem:[#allocation2 + $0xd1] sm:$0x1] 0.0
  %85 = vst [vmem:[#allocation2 + $0xe9] sm:$0x1] 0.0
  %86 = vst [vmem:[#allocation2 + $0x101] sm:$0x1] 0.0
  %87 = vst [vmem:[#allocation2 + $0x119] sm:$0x1] 0.0
  %88 = vst [vmem:[#allocation2 + $0x131] sm:$0x1] 0.0
  %89 = vst [vmem:[#allocation2 + $0x149] sm:$0x1] 0.0
  %90 = vst [vmem:[#allocation2 + $0x161] sm:$0x1] 0.0
  %91 = vst [vmem:[#allocation2 + $0x179] sm:$0x1] 0.0
  %92 = vst [vmem:[#allocation2 + $0x191] sm:$0x1] 0.0
  %93 = vst [vmem:[#allocation2 + $0x1a9] sm:$0x1] 0.0
  %94 = vst [vmem:[#allocation2 + $0x1c1] sm:$0x1] 0.0
  %95 = vst [vmem:[#allocation2 + $0x1d9] sm:$0x1] 0.0
  %96 = vst [vmem:[#allocation2 + $0x1f1] sm:$0x1] 0.0
  %97 = vst [vmem:[#allocation2 + $0x209] sm:$0x1] 0.0
  %98 = vst [vmem:[#allocation2 + $0x221] sm:$0x1] 0.0
  %99 = vst [vmem:[#allocation2 + $0x239] sm:$0x1] 0.0
  %100 = vst [vmem:[#allocation2 + $0x251] sm:$0x1] 0.0
  %101 = vst [vmem:[#allocation2 + $0x269] sm:$0x1] 0.0
  %102 = vst [vmem:[#allocation2 + $0x281] sm:$0x1] 0.0
  %103 = vst [vmem:[#allocation2 + $0x299] sm:$0x1] 0.0
  %104 = vst [vmem:[#allocation2 + $0x2b1] sm:$0x1] 0.0
  %105 = vst [vmem:[#allocation2 + $0x2c9] sm:$0x1] 0.0
  %106 = vst [vmem:[#allocation2 + $0x2e1] sm:$0x1] 0.0
  %107 = vst [vmem:[#allocation2 + $0x2f9] sm:$0x1] 0.0
  %108 = vst [vmem:[#allocation2 + $0x311] sm:$0x1] 0.0
  %109 = vst [vmem:[#allocation2 + $0x329] sm:$0x1] 0.0
  %110 = vst [vmem:[#allocation2 + $0x341] sm:$0x1] 0.0
  %111 = vst [vmem:[#allocation2 + $0x359] sm:$0x1] 0.0
  %v112 = vld [vmem:[%s0] sm:$0xff]
  %v113 = vld [vmem:[%s0 + $0x8] sm:$0xff]
  %v114 = vld [vmem:[%s0 + $0x10] sm:$0xff]
  %v115 = vld [vmem:[%s0 + $0x18] sm:$0xff]
  %v116 = vld [vmem:[%s0 + $0x20] sm:$0xff]
  %v117 = vld [vmem:[%s0 + $0x28] sm:$0xff]
  %v118 = vld [vmem:[%s0 + $0x30] sm:$0xff]
  %v119 = vld [vmem:[%s0 + $0x38] sm:$0xff]
  %v120 = vld [vmem:[%s0 + $0x40] sm:$0xff]
  %v121 = vld [vmem:[%s0 + $0x48] sm:$0xff]
  %v122 = vld [vmem:[%s0 + $0x50] sm:$0xff]
  %v123 = vld [vmem:[%s0 + $0x58] sm:$0xff]
  %v124 = vld [vmem:[%s0 + $0x60] sm:$0xff]
  %v125 = vld [vmem:[%s0 + $0x68] sm:$0xff]
  %v126 = vld [vmem:[%s0 + $0x70] sm:$0xff]
  %v127 = vld [vmem:[%s0 + $0x78] sm:$0xff]
  %v128 = vld [vmem:[%s0 + $0x80] sm:$0xff]
  %v129 = vld [vmem:[%s0 + $0x88] sm:$0xff]
  %v130 = vld [vmem:[%s0 + $0x90] sm:$0xff]
  %v131 = vld [vmem:[%s0 + $0x98] sm:$0xff]
  %v132 = vld [vmem:[%s0 + $0xa0] sm:$0xff]
  %v133 = vld [vmem:[%s0 + $0xa8] sm:$0xff]
  %v134 = vld [vmem:[%s0 + $0xb0] sm:$0xff]
  %v135 = vld [vmem:[%s0 + $0xb8] sm:$0xff]
  %v136 = vld [vmem:[%s0 + $0xc0] sm:$0xff]
  %v137 = vld [vmem:[%s0 + $0xc8] sm:$0xff]
  %v138 = vld [vmem:[%s0 + $0xd0] sm:$0xff]
  %v139 = vld [vmem:[%s0 + $0xd8] sm:$0xff]
  %v140 = vld [vmem:[%s0 + $0xe0] sm:$0xff]
  %v141 = vld [vmem:[%s0 + $0xe8] sm:$0xff]
  %v142 = vld [vmem:[%s0 + $0xf0] sm:$0xff]
  %v143 = vld [vmem:[%s0 + $0xf8] sm:$0xff]
  %v144 = vld [vmem:[%s0 + $0x100] sm:$0xff]
  %v145 = vld [vmem:[%s0 + $0x108] sm:$0xff]
  %v146 = vld [vmem:[%s0 + $0x110] sm:$0xff]
  %v147 = vld [vmem:[%s0 + $0x118] sm:$0xff]
  %v148 = vld [vmem:[%s0 + $0x120] sm:$0xff]
  %v149 = vld [vmem:[%s0 + $0x128] sm:$0xff]
  %v150 = vld [vmem:[%s0 + $0x130] sm:$0xff]
  %v151 = vld [vmem:[%s0 + $0x138] sm:$0xff]
  %v152 = vld [vmem:[%s0 + $0x140] sm:$0xff]
  %v153 = vld [vmem:[%s0 + $0x148] sm:$0xff]
  %v154 = vld [vmem:[%s0 + $0x150] sm:$0xff]
  %v155 = vld [vmem:[%s0 + $0x158] sm:$0xff]
  %v156 = vld [vmem:[%s0 + $0x160] sm:$0xff]
  %v157 = vld [vmem:[%s0 + $0x168] sm:$0xff]
  %v158 = vld [vmem:[%s0 + $0x170] sm:$0xff]
  %v159 = vld [vmem:[%s0 + $0x178] sm:$0xff]
  %v160 = vld [vmem:[%s0 + $0x180] sm:$0xff]
  %v161 = vld [vmem:[%s0 + $0x188] sm:$0xff]
  %v162 = vld [vmem:[%s0 + $0x190] sm:$0xff]
  %v163 = vld [vmem:[%s0 + $0x198] sm:$0xff]
  %v164 = vld [vmem:[%s0 + $0x1a0] sm:$0xff]
  %v165 = vld [vmem:[%s0 + $0x1a8] sm:$0xff]
  %v166 = vld [vmem:[%s0 + $0x1b0] sm:$0xff]
  %v167 = vld [vmem:[%s0 + $0x1b8] sm:$0xff]
  %v168 = vld [vmem:[%s0 + $0x1c0] sm:$0xff]
  %v169 = vld [vmem:[%s0 + $0x1c8] sm:$0xff]
  %v170 = vld [vmem:[%s0 + $0x1d0] sm:$0xff]
  %v171 = vld [vmem:[%s0 + $0x1d8] sm:$0xff]
  %v172 = vld [vmem:[%s0 + $0x1e0] sm:$0xff]
  %v173 = vld [vmem:[%s0 + $0x1e8] sm:$0xff]
  %v174 = vld [vmem:[%s0 + $0x1f0] sm:$0xff]
  %v175 = vld [vmem:[%s0 + $0x1f8] sm:$0xff]
  %s176 = scalar_lea.vmem [#allocation2], 24
  %177 = vst [vmem:[%s176 + $0x1] sm:$0xff] %v112
  %178 = vst [vmem:[%s176 + $0x9] sm:$0xff] %v113
  %179 = vst [vmem:[%s176 + $0x19] sm:$0xff] %v114
  %180 = vst [vmem:[%s176 + $0x21] sm:$0xff] %v115
  %181 = vst [vmem:[%s176 + $0x31] sm:$0xff] %v116
  %182 = vst [vmem:[%s176 + $0x39] sm:$0xff] %v117
  %183 = vst [vmem:[%s176 + $0x49] sm:$0xff] %v118
  %184 = vst [vmem:[%s176 + $0x51] sm:$0xff] %v119
  %185 = vst [vmem:[%s176 + $0x61] sm:$0xff] %v120
  %186 = vst [vmem:[%s176 + $0x69] sm:$0xff] %v121
  %187 = vst [vmem:[%s176 + $0x79] sm:$0xff] %v122
  %188 = vst [vmem:[%s176 + $0x81] sm:$0xff] %v123
  %189 = vst [vmem:[%s176 + $0x91] sm:$0xff] %v124
  %190 = vst [vmem:[%s176 + $0x99] sm:$0xff] %v125
  %191 = vst [vmem:[%s176 + $0xa9] sm:$0xff] %v126
  %192 = vst [vmem:[%s176 + $0xb1] sm:$0xff] %v127
  %193 = vst [vmem:[%s176 + $0xc1] sm:$0xff] %v128
  %194 = vst [vmem:[%s176 + $0xc9] sm:$0xff] %v129
  %195 = vst [vmem:[%s176 + $0xd9] sm:$0xff] %v130
  %196 = vst [vmem:[%s176 + $0xe1] sm:$0xff] %v131
  %197 = vst [vmem:[%s176 + $0xf1] sm:$0xff] %v132
  %198 = vst [vmem:[%s176 + $0xf9] sm:$0xff] %v133
  %199 = vst [vmem:[%s176 + $0x109] sm:$0xff] %v134
  %200 = vst [vmem:[%s176 + $0x111] sm:$0xff] %v135
  %201 = vst [vmem:[%s176 + $0x121] sm:$0xff] %v136
  %202 = vst [vmem:[%s176 + $0x129] sm:$0xff] %v137
  %203 = vst [vmem:[%s176 + $0x139] sm:$0xff] %v138
  %204 = vst [vmem:[%s176 + $0x141] sm:$0xff] %v139
  %205 = vst [vmem:[%s176 + $0x151] sm:$0xff] %v140
  %206 = vst [vmem:[%s176 + $0x159] sm:$0xff] %v141
  %207 = vst [vmem:[%s176 + $0x169] sm:$0xff] %v142
  %208 = vst [vmem:[%s176 + $0x171] sm:$0xff] %v143
  %209 = vst [vmem:[%s176 + $0x1b1] sm:$0xff] %v144
  %210 = vst [vmem:[%s176 + $0x1b9] sm:$0xff] %v145
  %211 = vst [vmem:[%s176 + $0x1c9] sm:$0xff] %v146
  %212 = vst [vmem:[%s176 + $0x1d1] sm:$0xff] %v147
  %213 = vst [vmem:[%s176 + $0x1e1] sm:$0xff] %v148
  %214 = vst [vmem:[%s176 + $0x1e9] sm:$0xff] %v149
  %215 = vst [vmem:[%s176 + $0x1f9] sm:$0xff] %v150
  %216 = vst [vmem:[%s176 + $0x201] sm:$0xff] %v151
  %217 = vst [vmem:[%s176 + $0x211] sm:$0xff] %v152
  %218 = vst [vmem:[%s176 + $0x219] sm:$0xff] %v153
  %219 = vst [vmem:[%s176 + $0x229] sm:$0xff] %v154
  %220 = vst [vmem:[%s176 + $0x231] sm:$0xff] %v155
  %221 = vst [vmem:[%s176 + $0x241] sm:$0xff] %v156
  %222 = vst [vmem:[%s176 + $0x249] sm:$0xff] %v157
  %223 = vst [vmem:[%s176 + $0x259] sm:$0xff] %v158
  %224 = vst [vmem:[%s176 + $0x261] sm:$0xff] %v159
  %225 = vst [vmem:[%s176 + $0x271] sm:$0xff] %v160
  %226 = vst [vmem:[%s176 + $0x279] sm:$0xff] %v161
  %227 = vst [vmem:[%s176 + $0x289] sm:$0xff] %v162
  %228 = vst [vmem:[%s176 + $0x291] sm:$0xff] %v163
  %229 = vst [vmem:[%s176 + $0x2a1] sm:$0xff] %v164
  %230 = vst [vmem:[%s176 + $0x2a9] sm:$0xff] %v165
  %231 = vst [vmem:[%s176 + $0x2b9] sm:$0xff] %v166
  %232 = vst [vmem:[%s176 + $0x2c1] sm:$0xff] %v167
  %233 = vst [vmem:[%s176 + $0x2d1] sm:$0xff] %v168
  %234 = vst [vmem:[%s176 + $0x2d9] sm:$0xff] %v169
  %235 = vst [vmem:[%s176 + $0x2e9] sm:$0xff] %v170
  %236 = vst [vmem:[%s176 + $0x2f1] sm:$0xff] %v171
  %237 = vst [vmem:[%s176 + $0x301] sm:$0xff] %v172
  %238 = vst [vmem:[%s176 + $0x309] sm:$0xff] %v173
  %239 = vst [vmem:[%s176 + $0x319] sm:$0xff] %v174
  %240 = vst [vmem:[%s176 + $0x321] sm:$0xff] %v175
  %v241 = vld [vmem:[#allocation2] sm:$0xff]
  %v242 = vld [vmem:[#allocation2 + $0x8] sm:$0xff]
  %v243 = vld [vmem:[#allocation2 + $0x18] sm:$0xff]
  %v244 = vld [vmem:[#allocation2 + $0x20] sm:$0xff]
  %v245 = vld [vmem:[#allocation2 + $0x30] sm:$0xff]
  %v246 = vld [vmem:[#allocation2 + $0x38] sm:$0xff]
  %v247 = vld [vmem:[#allocation2 + $0x48] sm:$0xff]
  %v248 = vld [vmem:[#allocation2 + $0x50] sm:$0xff]
  %v249 = vld [vmem:[#allocation2 + $0x60] sm:$0xff]
  %v250 = vld [vmem:[#allocation2 + $0x68] sm:$0xff]
  %v251 = vld [vmem:[#allocation2 + $0x78] sm:$0xff]
  %v252 = vld [vmem:[#allocation2 + $0x80] sm:$0xff]
  %v253 = vld [vmem:[#allocation2 + $0x90] sm:$0xff]
  %v254 = vld [vmem:[#allocation2 + $0x98] sm:$0xff]
  %v255 = vld [vmem:[#allocation2 + $0xa8] sm:$0xff]
  %v256 = vld [vmem:[#allocation2 + $0xb0] sm:$0xff]
  %v257 = vld [vmem:[#allocation2 + $0xc0] sm:$0xff]
  %v258 = vld [vmem:[#allocation2 + $0xc8] sm:$0xff]
  %v259 = vld [vmem:[#allocation2 + $0xd8] sm:$0xff]
  %v260 = vld [vmem:[#allocation2 + $0xe0] sm:$0xff]
  %v261 = vld [vmem:[#allocation2 + $0xf0] sm:$0xff]
  %v262 = vld [vmem:[#allocation2 + $0xf8] sm:$0xff]
  %v263 = vld [vmem:[#allocation2 + $0x108] sm:$0xff]
  %v264 = vld [vmem:[#allocation2 + $0x110] sm:$0xff]
  %v265 = vld [vmem:[#allocation2 + $0x120] sm:$0xff]
  %v266 = vld [vmem:[#allocation2 + $0x128] sm:$0xff]
  %v267 = vld [vmem:[#allocation2 + $0x138] sm:$0xff]
  %v268 = vld [vmem:[#allocation2 + $0x140] sm:$0xff]
  %v269 = vld [vmem:[#allocation2 + $0x150] sm:$0xff]
  %v270 = vld [vmem:[#allocation2 + $0x158] sm:$0xff]
  %v271 = vld [vmem:[#allocation2 + $0x168] sm:$0xff]
  %v272 = vld [vmem:[#allocation2 + $0x170] sm:$0xff]
  %v273 = vld [vmem:[#allocation2 + $0x1b0] sm:$0xff]
  %v274 = vld [vmem:[#allocation2 + $0x1b8] sm:$0xff]
  %v275 = vld [vmem:[#allocation2 + $0x1c8] sm:$0xff]
  %v276 = vld [vmem:[#allocation2 + $0x1d0] sm:$0xff]
  %v277 = vld [vmem:[#allocation2 + $0x1e0] sm:$0xff]
  %v278 = vld [vmem:[#allocation2 + $0x1e8] sm:$0xff]
  %v279 = vld [vmem:[#allocation2 + $0x1f8] sm:$0xff]
  %v280 = vld [vmem:[#allocation2 + $0x200] sm:$0xff]
  %v281 = vld [vmem:[#allocation2 + $0x210] sm:$0xff]
  %v282 = vld [vmem:[#allocation2 + $0x218] sm:$0xff]
  %v283 = vld [vmem:[#allocation2 + $0x228] sm:$0xff]
  %v284 = vld [vmem:[#allocation2 + $0x230] sm:$0xff]
  %v285 = vld [vmem:[#allocation2 + $0x240] sm:$0xff]
  %v286 = vld [vmem:[#allocation2 + $0x248] sm:$0xff]
  %v287 = vld [vmem:[#allocation2 + $0x258] sm:$0xff]
  %v288 = vld [vmem:[#allocation2 + $0x260] sm:$0xff]
  %v289 = vld [vmem:[#allocation2 + $0x270] sm:$0xff]
  %v290 = vld [vmem:[#allocation2 + $0x278] sm:$0xff]
  %v291 = vld [vmem:[#allocation2 + $0x288] sm:$0xff]
  %v292 = vld [vmem:[#allocation2 + $0x290] sm:$0xff]
  %v293 = vld [vmem:[#allocation2 + $0x2a0] sm:$0xff]
  %v294 = vld [vmem:[#allocation2 + $0x2a8] sm:$0xff]
  %v295 = vld [vmem:[#allocation2 + $0x2b8] sm:$0xff]
  %v296 = vld [vmem:[#allocation2 + $0x2c0] sm:$0xff]
  %v297 = vld [vmem:[#allocation2 + $0x2d0] sm:$0xff]
  %v298 = vld [vmem:[#allocation2 + $0x2d8] sm:$0xff]
  %v299 = vld [vmem:[#allocation2 + $0x2e8] sm:$0xff]
  %v300 = vld [vmem:[#allocation2 + $0x2f0] sm:$0xff]
  %v301 = vld [vmem:[#allocation2 + $0x300] sm:$0xff]
  %v302 = vld [vmem:[#allocation2 + $0x308] sm:$0xff]
  %v303 = vld [vmem:[#allocation2 + $0x318] sm:$0xff]
  %v304 = vld [vmem:[#allocation2 + $0x320] sm:$0xff]
  %v305 = vpack.c.bf16 %v242, %v241
  %v306 = vpack.c.bf16 %v244, %v243
  %v307 = vpack.c.bf16 %v246, %v245
  %v308 = vpack.c.bf16 %v248, %v247
  %v309 = vpack.c.bf16 %v250, %v249
  %v310 = vpack.c.bf16 %v252, %v251
  %v311 = vpack.c.bf16 %v254, %v253
  %v312 = vpack.c.bf16 %v256, %v255
  %v313 = vpack.c.bf16 %v258, %v257
  %v314 = vpack.c.bf16 %v260, %v259
  %v315 = vpack.c.bf16 %v262, %v261
  %v316 = vpack.c.bf16 %v264, %v263
  %v317 = vpack.c.bf16 %v266, %v265
  %v318 = vpack.c.bf16 %v268, %v267
  %v319 = vpack.c.bf16 %v270, %v269
  %v320 = vpack.c.bf16 %v272, %v271
  %v321 = vpack.c.bf16 %v274, %v273
  %v322 = vpack.c.bf16 %v276, %v275
  %v323 = vpack.c.bf16 %v278, %v277
  %v324 = vpack.c.bf16 %v280, %v279
  %v325 = vpack.c.bf16 %v282, %v281
  %v326 = vpack.c.bf16 %v284, %v283
  %v327 = vpack.c.bf16 %v286, %v285
  %v328 = vpack.c.bf16 %v288, %v287
  %v329 = vpack.c.bf16 %v290, %v289
  %v330 = vpack.c.bf16 %v292, %v291
  %v331 = vpack.c.bf16 %v294, %v293
  %v332 = vpack.c.bf16 %v296, %v295
  %v333 = vpack.c.bf16 %v298, %v297
  %v334 = vpack.c.bf16 %v300, %v299
  %v335 = vpack.c.bf16 %v302, %v301
  %v336 = vpack.c.bf16 %v304, %v303
  %v337 = vld [vmem:[%s1] sm:$0xf]
  %v338 = vld [vmem:[%s1 + $0x4] sm:$0xf]
  %v339 = vld [vmem:[%s1 + $0x8] sm:$0xf]
  %v340 = vld [vmem:[%s1 + $0xc] sm:$0xf]
  %v341 = vld [vmem:[%s1 + $0x10] sm:$0xf]
  %v342 = vld [vmem:[%s1 + $0x14] sm:$0xf]
  %v343 = vld [vmem:[%s1 + $0x18] sm:$0xf]
  %v344 = vld [vmem:[%s1 + $0x1c] sm:$0xf]
  %v345 = vld [vmem:[%s1 + $0x20] sm:$0xf]
  %v346 = vld [vmem:[%s1 + $0x24] sm:$0xf]
  %v347 = vld [vmem:[%s1 + $0x28] sm:$0xf]
  %v348 = vld [vmem:[%s1 + $0x2c] sm:$0xf]
  %v349 = vld [vmem:[%s1 + $0x30] sm:$0xf]
  %v350 = vld [vmem:[%s1 + $0x34] sm:$0xf]
  %v351 = vld [vmem:[%s1 + $0x38] sm:$0xf]
  %v352 = vld [vmem:[%s1 + $0x3c] sm:$0xf]
  %v353 = vld [vmem:[#allocation2 + $0x1] sm:$0xff]
  %v354 = vld [vmem:[#allocation2 + $0x9] sm:$0xff]
  %v355 = vld [vmem:[#allocation2 + $0x19] sm:$0xff]
  %v356 = vld [vmem:[#allocation2 + $0x21] sm:$0xff]
  %v357 = vld [vmem:[#allocation2 + $0x31] sm:$0xff]
  %v358 = vld [vmem:[#allocation2 + $0x39] sm:$0xff]
  %v359 = vld [vmem:[#allocation2 + $0x49] sm:$0xff]
  %v360 = vld [vmem:[#allocation2 + $0x51] sm:$0xff]
  %v361 = vld [vmem:[#allocation2 + $0x61] sm:$0xff]
  %v362 = vld [vmem:[#allocation2 + $0x69] sm:$0xff]
  %v363 = vld [vmem:[#allocation2 + $0x79] sm:$0xff]
  %v364 = vld [vmem:[#allocation2 + $0x81] sm:$0xff]
  %v365 = vld [vmem:[#allocation2 + $0x91] sm:$0xff]
  %v366 = vld [vmem:[#allocation2 + $0x99] sm:$0xff]
  %v367 = vld [vmem:[#allocation2 + $0xa9] sm:$0xff]
  %v368 = vld [vmem:[#allocation2 + $0xb1] sm:$0xff]
  %v369 = vld [vmem:[#allocation2 + $0xc1] sm:$0xff]
  %v370 = vld [vmem:[#allocation2 + $0xc9] sm:$0xff]
  %v371 = vld [vmem:[#allocation2 + $0xd9] sm:$0xff]
  %v372 = vld [vmem:[#allocation2 + $0xe1] sm:$0xff]
  %v373 = vld [vmem:[#allocation2 + $0xf1] sm:$0xff]
  %v374 = vld [vmem:[#allocation2 + $0xf9] sm:$0xff]
  %v375 = vld [vmem:[#allocation2 + $0x109] sm:$0xff]
  %v376 = vld [vmem:[#allocation2 + $0x111] sm:$0xff]
  %v377 = vld [vmem:[#allocation2 + $0x121] sm:$0xff]
  %v378 = vld [vmem:[#allocation2 + $0x129] sm:$0xff]
  %v379 = vld [vmem:[#allocation2 + $0x139] sm:$0xff]
  %v380 = vld [vmem:[#allocation2 + $0x141] sm:$0xff]
  %v381 = vld [vmem:[#allocation2 + $0x151] sm:$0xff]
  %v382 = vld [vmem:[#allocation2 + $0x159] sm:$0xff]
  %v383 = vld [vmem:[#allocation2 + $0x169] sm:$0xff]
  %v384 = vld [vmem:[#allocation2 + $0x171] sm:$0xff]
  %v385 = vld [vmem:[#allocation2 + $0x1b1] sm:$0xff]
  %v386 = vld [vmem:[#allocation2 + $0x1b9] sm:$0xff]
  %v387 = vld [vmem:[#allocation2 + $0x1c9] sm:$0xff]
  %v388 = vld [vmem:[#allocation2 + $0x1d1] sm:$0xff]
  %v389 = vld [vmem:[#allocation2 + $0x1e1] sm:$0xff]
  %v390 = vld [vmem:[#allocation2 + $0x1e9] sm:$0xff]
  %v391 = vld [vmem:[#allocation2 + $0x1f9] sm:$0xff]
  %v392 = vld [vmem:[#allocation2 + $0x201] sm:$0xff]
  %v393 = vld [vmem:[#allocation2 + $0x211] sm:$0xff]
  %v394 = vld [vmem:[#allocation2 + $0x219] sm:$0xff]
  %v395 = vld [vmem:[#allocation2 + $0x229] sm:$0xff]
  %v396 = vld [vmem:[#allocation2 + $0x231] sm:$0xff]
  %v397 = vld [vmem:[#allocation2 + $0x241] sm:$0xff]
  %v398 = vld [vmem:[#allocation2 + $0x249] sm:$0xff]
  %v399 = vld [vmem:[#allocation2 + $0x259] sm:$0xff]
  %v400 = vld [vmem:[#allocation2 + $0x261] sm:$0xff]
  %v401 = vld [vmem:[#allocation2 + $0x271] sm:$0xff]
  %v402 = vld [vmem:[#allocation2 + $0x279] sm:$0xff]
  %v403 = vld [vmem:[#allocation2 + $0x289] sm:$0xff]
  %v404 = vld [vmem:[#allocation2 + $0x291] sm:$0xff]
  %v405 = vld [vmem:[#allocation2 + $0x2a1] sm:$0xff]
  %v406 = vld [vmem:[#allocation2 + $0x2a9] sm:$0xff]
  %v407 = vld [vmem:[#allocation2 + $0x2b9] sm:$0xff]
  %v408 = vld [vmem:[#allocation2 + $0x2c1] sm:$0xff]
  %v409 = vld [vmem:[#allocation2 + $0x2d1] sm:$0xff]
  %v410 = vld [vmem:[#allocation2 + $0x2d9] sm:$0xff]
  %v411 = vld [vmem:[#allocation2 + $0x2e9] sm:$0xff]
  %v412 = vld [vmem:[#allocation2 + $0x2f1] sm:$0xff]
  %v413 = vld [vmem:[#allocation2 + $0x301] sm:$0xff]
  %v414 = vld [vmem:[#allocation2 + $0x309] sm:$0xff]
  %v415 = vld [vmem:[#allocation2 + $0x319] sm:$0xff]
  %v416 = vld [vmem:[#allocation2 + $0x321] sm:$0xff]
  %v417 = vpack.c.bf16 %v354, %v353
  %v418 = vpack.c.bf16 %v356, %v355
  %v419 = vpack.c.bf16 %v358, %v357
  %v420 = vpack.c.bf16 %v360, %v359
  %v421 = vpack.c.bf16 %v362, %v361
  %v422 = vpack.c.bf16 %v364, %v363
  %v423 = vpack.c.bf16 %v366, %v365
  %v424 = vpack.c.bf16 %v368, %v367
  %v425 = vpack.c.bf16 %v370, %v369
  %v426 = vpack.c.bf16 %v372, %v371
  %v427 = vpack.c.bf16 %v374, %v373
  %v428 = vpack.c.bf16 %v376, %v375
  %v429 = vpack.c.bf16 %v378, %v377
  %v430 = vpack.c.bf16 %v380, %v379
  %v431 = vpack.c.bf16 %v382, %v381
  %v432 = vpack.c.bf16 %v384, %v383
  %v433 = vpack.c.bf16 %v386, %v385
  %v434 = vpack.c.bf16 %v388, %v387
  %v435 = vpack.c.bf16 %v390, %v389
  %v436 = vpack.c.bf16 %v392, %v391
  %v437 = vpack.c.bf16 %v394, %v393
  %v438 = vpack.c.bf16 %v396, %v395
  %v439 = vpack.c.bf16 %v398, %v397
  %v440 = vpack.c.bf16 %v400, %v399
  %v441 = vpack.c.bf16 %v402, %v401
  %v442 = vpack.c.bf16 %v404, %v403
  %v443 = vpack.c.bf16 %v406, %v405
  %v444 = vpack.c.bf16 %v408, %v407
  %v445 = vpack.c.bf16 %v410, %v409
  %v446 = vpack.c.bf16 %v412, %v411
  %v447 = vpack.c.bf16 %v414, %v413
  %v448 = vpack.c.bf16 %v416, %v415
  %s449 = scalar_lea.vmem %s1, 64
  %v450 = vld [vmem:[%s449] sm:$0xf]
  %v451 = vld [vmem:[%s449 + $0x4] sm:$0xf]
  %v452 = vld [vmem:[%s449 + $0x8] sm:$0xf]
  %v453 = vld [vmem:[%s449 + $0xc] sm:$0xf]
  %v454 = vld [vmem:[%s449 + $0x10] sm:$0xf]
  %v455 = vld [vmem:[%s449 + $0x14] sm:$0xf]
  %v456 = vld [vmem:[%s449 + $0x18] sm:$0xf]
  %v457 = vld [vmem:[%s449 + $0x1c] sm:$0xf]
  %v458 = vld [vmem:[%s449 + $0x20] sm:$0xf]
  %v459 = vld [vmem:[%s449 + $0x24] sm:$0xf]
  %v460 = vld [vmem:[%s449 + $0x28] sm:$0xf]
  %v461 = vld [vmem:[%s449 + $0x2c] sm:$0xf]
  %v462 = vld [vmem:[%s449 + $0x30] sm:$0xf]
  %v463 = vld [vmem:[%s449 + $0x34] sm:$0xf]
  %v464 = vld [vmem:[%s449 + $0x38] sm:$0xf]
  %v465 = vld [vmem:[%s449 + $0x3c] sm:$0xf]
  %v482 = vunpack.c.l.b16 %v450
  %v483 = vunpack.c.l.b16 %v451
  %v484 = vunpack.c.l.b16 %v452
  %v485 = vunpack.c.l.b16 %v453
  %v486 = vunpack.c.l.b16 %v454
  %v487 = vunpack.c.l.b16 %v455
  %v488 = vunpack.c.l.b16 %v456
  %v489 = vunpack.c.l.b16 %v457
  %v490 = vunpack.c.l.b16 %v458
  %v491 = vunpack.c.l.b16 %v459
  %v492 = vunpack.c.l.b16 %v460
  %v493 = vunpack.c.l.b16 %v461
  %v494 = vunpack.c.l.b16 %v462
  %v495 = vunpack.c.l.b16 %v463
  %v496 = vunpack.c.l.b16 %v464
  %v497 = vunpack.c.l.b16 %v465
  %v498 = vpack.c.b16 %v483, %v482
  %v499 = vpack.c.b16 %v485, %v484
  %v500 = vpack.c.b16 %v487, %v486
  %v501 = vpack.c.b16 %v489, %v488
  %v502 = vpack.c.b16 %v491, %v490
  %v503 = vpack.c.b16 %v493, %v492
  %v504 = vpack.c.b16 %v495, %v494
  %v505 = vpack.c.b16 %v497, %v496
  %514 = vmatprep.subr.bf16.mxu0 0
  %515 = vmatpush1.bf16.msra.mxu0 %v498
  %516 = vmatprep.subr.bf16.mxu0 0
  %517 = vmatpush1.bf16.msra.mxu0 %v499
  %518 = vmatprep.subr.bf16.mxu0 0
  %519 = vmatpush1.bf16.msra.mxu0 %v500
  %520 = vmatprep.subr.bf16.mxu0 0
  %521 = vmatpush1.bf16.msra.mxu0 %v501
  %522 = vmatprep.subr.bf16.mxu0 0
  %523 = vmatpush1.bf16.msra.mxu0 %v502
  %524 = vmatprep.subr.bf16.mxu0 0
  %525 = vmatpush1.bf16.msra.mxu0 %v503
  %526 = vmatprep.subr.bf16.mxu0 0
  %527 = vmatpush1.bf16.msra.mxu0 %v504
  %528 = vmatprep.subr.bf16.mxu0 0
  %529 = vmatpush1.bf16.msra.mxu0 %v505
  %530 = vmatprep.subr.bf16.mxu0 0
  %531 = vmatpush1.bf16.msra.mxu0 0
  %532 = vmatprep.subr.bf16.mxu0 0
  %533 = vmatpush1.bf16.msra.mxu0 0
  %534 = vmatprep.subr.bf16.mxu0 0
  %535 = vmatpush1.bf16.msra.mxu0 0
  %536 = vmatprep.subr.bf16.mxu0 0
  %537 = vmatpush1.bf16.msra.mxu0 0
  %538 = vmatprep.subr.bf16.mxu0 0
  %539 = vmatpush1.bf16.msra.mxu0 0
  %540 = vmatprep.subr.bf16.mxu0 0
  %541 = vmatpush1.bf16.msra.mxu0 0
  %542 = vmatprep.subr.bf16.mxu0 0
  %543 = vmatpush1.bf16.msra.mxu0 0
  %544 = vmatprep.subr.bf16.mxu0 0
  %545 = vmatpush1.bf16.msra.mxu0 0
  %546 = vmatprep.mubr.bf16.mxu0 0
  %547 = vmatmul.mubr.bf16.gmra.mrb[0].mxu0 %v417
  %v548 = vpop.f32.mrb[0].mxu0
  %v549 = vadd.f32 0.0, %v548
  %v550 = vpop.f32.mrb[0].mxu0
  %v551 = vpop.f32.mrb[0].mxu0
  %v552 = vadd.f32 0.0, %v551
  %v553 = vpop.f32.mrb[0].mxu0
  %554 = vmatprep.mubr.bf16.mxu0 0
  %555 = vmatmul.mubr.bf16.gmra.mrb[0].mxu0 %v418
  %v556 = vpop.f32.mrb[0].mxu0
  %v557 = vadd.f32 0.0, %v556
  %v558 = vpop.f32.mrb[0].mxu0
  %v559 = vpop.f32.mrb[0].mxu0
  %v560 = vadd.f32 0.0, %v559
  %v561 = vpop.f32.mrb[0].mxu0
  %562 = vmatprep.mubr.bf16.mxu0 0
  %563 = vmatmul.mubr.bf16.gmra.mrb[0].mxu0 %v419
  %v564 = vpop.f32.mrb[0].mxu0
  %v565 = vadd.f32 0.0, %v564
  %v566 = vpop.f32.mrb[0].mxu0
  %v567 = vpop.f32.mrb[0].mxu0
  %v568 = vadd.f32 0.0, %v567
  %v569 = vpop.f32.mrb[0].mxu0
  %570 = vmatprep.mubr.bf16.mxu0 0
  %571 = vmatmul.mubr.bf16.gmra.mrb[0].mxu0 %v420
  %v572 = vpop.f32.mrb[0].mxu0
  %v573 = vadd.f32 0.0, %v572
  %v574 = vpop.f32.mrb[0].mxu0
  %v575 = vpop.f32.mrb[0].mxu0
  %v576 = vadd.f32 0.0, %v575
  %v577 = vpop.f32.mrb[0].mxu0
  %578 = vmatprep.mubr.bf16.mxu0 0
  %579 = vmatmul.mubr.bf16.gmra.mrb[0].mxu0 %v421
  %v580 = vpop.f32.mrb[0].mxu0
  %v581 = vadd.f32 0.0, %v580
  %v582 = vpop.f32.mrb[0].mxu0
  %v583 = vpop.f32.mrb[0].mxu0
  %v584 = vadd.f32 0.0, %v583
  %v585 = vpop.f32.mrb[0].mxu0
  %586 = vmatprep.mubr.bf16.mxu0 0
  %587 = vmatmul.mubr.bf16.gmra.mrb[0].mxu0 %v422
  %v588 = vpop.f32.mrb[0].mxu0
  %v589 = vadd.f32 0.0, %v588
  %v590 = vpop.f32.mrb[0].mxu0
  %v591 = vpop.f32.mrb[0].mxu0
  %v592 = vadd.f32 0.0, %v591
  %v593 = vpop.f32.mrb[0].mxu0
  %594 = vmatprep.mubr.bf16.mxu0 0
  %595 = vmatmul.mubr.bf16.gmra.mrb[0].mxu0 %v423
  %v596 = vpop.f32.mrb[0].mxu0
  %v597 = vadd.f32 0.0, %v596
  %v598 = vpop.f32.mrb[0].mxu0
  %v599 = vpop.f32.mrb[0].mxu0
  %v600 = vadd.f32 0.0, %v599
  %v601 = vpop.f32.mrb[0].mxu0
  %602 = vmatprep.mubr.bf16.mxu0 0
  %603 = vmatmul.mubr.bf16.gmra.mrb[0].mxu0 %v424
  %v604 = vpop.f32.mrb[0].mxu0
  %v605 = vadd.f32 0.0, %v604
  %v606 = vpop.f32.mrb[0].mxu0
  %v607 = vpop.f32.mrb[0].mxu0
  %v608 = vadd.f32 0.0, %v607
  %v609 = vpop.f32.mrb[0].mxu0
  %610 = vmatprep.mubr.bf16.mxu0 0
  %611 = vmatmul.mubr.bf16.gmra.mrb[0].mxu0 %v425
  %v612 = vpop.f32.mrb[0].mxu0
  %v613 = vadd.f32 0.0, %v612
  %v614 = vpop.f32.mrb[0].mxu0
  %v615 = vpop.f32.mrb[0].mxu0
  %v616 = vadd.f32 0.0, %v615
  %v617 = vpop.f32.mrb[0].mxu0
  %618 = vmatprep.mubr.bf16.mxu0 0
  %619 = vmatmul.mubr.bf16.gmra.mrb[0].mxu0 %v426
  %v620 = vpop.f32.mrb[0].mxu0
  %v621 = vadd.f32 0.0, %v620
  %v622 = vpop.f32.mrb[0].mxu0
  %v623 = vpop.f32.mrb[0].mxu0
  %v624 = vadd.f32 0.0, %v623
  %v625 = vpop.f32.mrb[0].mxu0
  %626 = vmatprep.mubr.bf16.mxu0 0
  %627 = vmatmul.mubr.bf16.gmra.mrb[0].mxu0 %v427
  %v628 = vpop.f32.mrb[0].mxu0
  %v629 = vadd.f32 0.0, %v628
  %v630 = vpop.f32.mrb[0].mxu0
  %v631 = vpop.f32.mrb[0].mxu0
  %v632 = vadd.f32 0.0, %v631
  %v633 = vpop.f32.mrb[0].mxu0
  %634 = vmatprep.mubr.bf16.mxu0 0
  %635 = vmatmul.mubr.bf16.gmra.mrb[0].mxu0 %v428
  %v636 = vpop.f32.mrb[0].mxu0
  %v637 = vadd.f32 0.0, %v636
  %v638 = vpop.f32.mrb[0].mxu0
  %v639 = vpop.f32.mrb[0].mxu0
  %v640 = vadd.f32 0.0, %v639
  %v641 = vpop.f32.mrb[0].mxu0
  %642 = vmatprep.mubr.bf16.mxu0 0
  %643 = vmatmul.mubr.bf16.gmra.mrb[0].mxu0 %v429
  %v644 = vpop.f32.mrb[0].mxu0
  %v645 = vadd.f32 0.0, %v644
  %v646 = vpop.f32.mrb[0].mxu0
  %v647 = vpop.f32.mrb[0].mxu0
  %v648 = vadd.f32 0.0, %v647
  %v649 = vpop.f32.mrb[0].mxu0
  %650 = vmatprep.mubr.bf16.mxu0 0
  %651 = vmatmul.mubr.bf16.gmra.mrb[0].mxu0 %v430
  %v652 = vpop.f32.mrb[0].mxu0
  %v653 = vadd.f32 0.0, %v652
  %v654 = vpop.f32.mrb[0].mxu0
  %v655 = vpop.f32.mrb[0].mxu0
  %v656 = vadd.f32 0.0, %v655
  %v657 = vpop.f32.mrb[0].mxu0
  %658 = vmatprep.mubr.bf16.mxu0 0
  %659 = vmatmul.mubr.bf16.gmra.mrb[0].mxu0 %v431
  %v660 = vpop.f32.mrb[0].mxu0
  %v661 = vadd.f32 0.0, %v660
  %v662 = vpop.f32.mrb[0].mxu0
  %v663 = vpop.f32.mrb[0].mxu0
  %v664 = vadd.f32 0.0, %v663
  %v665 = vpop.f32.mrb[0].mxu0
  %666 = vmatprep.mubr.bf16.mxu0 0
  %667 = vmatmul.mubr.bf16.gmra.mrb[0].mxu0 %v432
  %v668 = vpop.f32.mrb[0].mxu0
  %v669 = vadd.f32 0.0, %v668
  %v670 = vpop.f32.mrb[0].mxu0
  %v671 = vpop.f32.mrb[0].mxu0
  %v672 = vadd.f32 0.0, %v671
  %v673 = vpop.f32.mrb[0].mxu0
  %674 = vmatprep.mubr.bf16.mxu0 0
  %675 = vmatmul.mubr.bf16.gmra.mrb[0].mxu0 %v433
  %v676 = vpop.f32.mrb[0].mxu0
  %v677 = vadd.f32 0.0, %v676
  %v678 = vpop.f32.mrb[0].mxu0
  %v679 = vpop.f32.mrb[0].mxu0
  %v680 = vadd.f32 0.0, %v679
  %v681 = vpop.f32.mrb[0].mxu0
  %682 = vmatprep.mubr.bf16.mxu0 0
  %683 = vmatmul.mubr.bf16.gmra.mrb[0].mxu0 %v434
  %v684 = vpop.f32.mrb[0].mxu0
  %v685 = vadd.f32 0.0, %v684
  %v686 = vpop.f32.mrb[0].mxu0
  %v687 = vpop.f32.mrb[0].mxu0
  %v688 = vadd.f32 0.0, %v687
  %v689 = vpop.f32.mrb[0].mxu0
  %690 = vmatprep.mubr.bf16.mxu0 0
  %691 = vmatmul.mubr.bf16.gmra.mrb[0].mxu0 %v435
  %v692 = vpop.f32.mrb[0].mxu0
  %v693 = vadd.f32 0.0, %v692
  %v694 = vpop.f32.mrb[0].mxu0
  %v695 = vpop.f32.mrb[0].mxu0
  %v696 = vadd.f32 0.0, %v695
  %v697 = vpop.f32.mrb[0].mxu0
  %698 = vmatprep.mubr.bf16.mxu0 0
  %699 = vmatmul.mubr.bf16.gmra.mrb[0].mxu0 %v436
  %v700 = vpop.f32.mrb[0].mxu0
  %v701 = vadd.f32 0.0, %v700
  %v702 = vpop.f32.mrb[0].mxu0
  %v703 = vpop.f32.mrb[0].mxu0
  %v704 = vadd.f32 0.0, %v703
  %v705 = vpop.f32.mrb[0].mxu0
  %706 = vmatprep.mubr.bf16.mxu0 0
  %707 = vmatmul.mubr.bf16.gmra.mrb[0].mxu0 %v437
  %v708 = vpop.f32.mrb[0].mxu0
  %v709 = vadd.f32 0.0, %v708
  %v710 = vpop.f32.mrb[0].mxu0
  %v711 = vpop.f32.mrb[0].mxu0
  %v712 = vadd.f32 0.0, %v711
  %v713 = vpop.f32.mrb[0].mxu0
  %714 = vmatprep.mubr.bf16.mxu0 0
  %715 = vmatmul.mubr.bf16.gmra.mrb[0].mxu0 %v438
  %v716 = vpop.f32.mrb[0].mxu0
  %v717 = vadd.f32 0.0, %v716
  %v718 = vpop.f32.mrb[0].mxu0
  %v719 = vpop.f32.mrb[0].mxu0
  %v720 = vadd.f32 0.0, %v719
  %v721 = vpop.f32.mrb[0].mxu0
  %722 = vmatprep.mubr.bf16.mxu0 0
  %723 = vmatmul.mubr.bf16.gmra.mrb[0].mxu0 %v439
  %v724 = vpop.f32.mrb[0].mxu0
  %v725 = vadd.f32 0.0, %v724
  %v726 = vpop.f32.mrb[0].mxu0
  %v727 = vpop.f32.mrb[0].mxu0
  %v728 = vadd.f32 0.0, %v727
  %v729 = vpop.f32.mrb[0].mxu0
  %730 = vmatprep.mubr.bf16.mxu0 0
  %731 = vmatmul.mubr.bf16.gmra.mrb[0].mxu0 %v440
  %v732 = vpop.f32.mrb[0].mxu0
  %v733 = vadd.f32 0.0, %v732
  %v734 = vpop.f32.mrb[0].mxu0
  %v735 = vpop.f32.mrb[0].mxu0
  %v736 = vadd.f32 0.0, %v735
  %v737 = vpop.f32.mrb[0].mxu0
  %738 = vmatprep.mubr.bf16.mxu0 0
  %739 = vmatmul.mubr.bf16.gmra.mrb[0].mxu0 %v441
  %v740 = vpop.f32.mrb[0].mxu0
  %v741 = vadd.f32 0.0, %v740
  %v742 = vpop.f32.mrb[0].mxu0
  %v743 = vpop.f32.mrb[0].mxu0
  %v744 = vadd.f32 0.0, %v743
  %v745 = vpop.f32.mrb[0].mxu0
  %746 = vmatprep.mubr.bf16.mxu0 0
  %747 = vmatmul.mubr.bf16.gmra.mrb[0].mxu0 %v442
  %v748 = vpop.f32.mrb[0].mxu0
  %v749 = vadd.f32 0.0, %v748
  %v750 = vpop.f32.mrb[0].mxu0
  %v751 = vpop.f32.mrb[0].mxu0
  %v752 = vadd.f32 0.0, %v751
  %v753 = vpop.f32.mrb[0].mxu0
  %754 = vmatprep.mubr.bf16.mxu0 0
  %755 = vmatmul.mubr.bf16.gmra.mrb[0].mxu0 %v443
  %v756 = vpop.f32.mrb[0].mxu0
  %v757 = vadd.f32 0.0, %v756
  %v758 = vpop.f32.mrb[0].mxu0
  %v759 = vpop.f32.mrb[0].mxu0
  %v760 = vadd.f32 0.0, %v759
  %v761 = vpop.f32.mrb[0].mxu0
  %762 = vmatprep.mubr.bf16.mxu0 0
  %763 = vmatmul.mubr.bf16.gmra.mrb[0].mxu0 %v444
  %v764 = vpop.f32.mrb[0].mxu0
  %v765 = vadd.f32 0.0, %v764
  %v766 = vpop.f32.mrb[0].mxu0
  %v767 = vpop.f32.mrb[0].mxu0
  %v768 = vadd.f32 0.0, %v767
  %v769 = vpop.f32.mrb[0].mxu0
  %770 = vmatprep.mubr.bf16.mxu0 0
  %771 = vmatmul.mubr.bf16.gmra.mrb[0].mxu0 %v445
  %v772 = vpop.f32.mrb[0].mxu0
  %v773 = vadd.f32 0.0, %v772
  %v774 = vpop.f32.mrb[0].mxu0
  %v775 = vpop.f32.mrb[0].mxu0
  %v776 = vadd.f32 0.0, %v775
  %v777 = vpop.f32.mrb[0].mxu0
  %778 = vmatprep.mubr.bf16.mxu0 0
  %779 = vmatmul.mubr.bf16.gmra.mrb[0].mxu0 %v446
  %v780 = vpop.f32.mrb[0].mxu0
  %v781 = vadd.f32 0.0, %v780
  %v782 = vpop.f32.mrb[0].mxu0
  %v783 = vpop.f32.mrb[0].mxu0
  %v784 = vadd.f32 0.0, %v783
  %v785 = vpop.f32.mrb[0].mxu0
  %786 = vmatprep.mubr.bf16.mxu0 0
  %787 = vmatmul.mubr.bf16.gmra.mrb[0].mxu0 %v447
  %v788 = vpop.f32.mrb[0].mxu0
  %v789 = vadd.f32 0.0, %v788
  %v790 = vpop.f32.mrb[0].mxu0
  %v791 = vpop.f32.mrb[0].mxu0
  %v792 = vadd.f32 0.0, %v791
  %v793 = vpop.f32.mrb[0].mxu0
  %794 = vmatprep.mubr.bf16.mxu0 0
  %795 = vmatmul.mubr.bf16.gmra.mrb[0].mxu0 %v448
  %v796 = vpop.f32.mrb[0].mxu0
  %v797 = vadd.f32 0.0, %v796
  %v798 = vpop.f32.mrb[0].mxu0
  %v799 = vpop.f32.mrb[0].mxu0
  %v800 = vadd.f32 0.0, %v799
  %v801 = vpop.f32.mrb[0].mxu0
  %802 = vdwg.mxu0
  %v819 = vunpack.c.l.b16 %v337
  %v820 = vunpack.c.l.b16 %v338
  %v821 = vunpack.c.l.b16 %v339
  %v822 = vunpack.c.l.b16 %v340
  %v823 = vunpack.c.l.b16 %v341
  %v824 = vunpack.c.l.b16 %v342
  %v825 = vunpack.c.l.b16 %v343
  %v826 = vunpack.c.l.b16 %v344
  %v827 = vunpack.c.l.b16 %v345
  %v828 = vunpack.c.l.b16 %v346
  %v829 = vunpack.c.l.b16 %v347
  %v830 = vunpack.c.l.b16 %v348
  %v831 = vunpack.c.l.b16 %v349
  %v832 = vunpack.c.l.b16 %v350
  %v833 = vunpack.c.l.b16 %v351
  %v834 = vunpack.c.l.b16 %v352
  %v835 = vpack.c.b16 %v820, %v819
  %v836 = vpack.c.b16 %v822, %v821
  %v837 = vpack.c.b16 %v824, %v823
  %v838 = vpack.c.b16 %v826, %v825
  %v839 = vpack.c.b16 %v828, %v827
  %v840 = vpack.c.b16 %v830, %v829
  %v841 = vpack.c.b16 %v832, %v831
  %v842 = vpack.c.b16 %v834, %v833
  %851 = vmatprep.subr.bf16.mxu0 0
  %852 = vmatpush1.bf16.msra.mxu0 %v835
  %853 = vmatprep.subr.bf16.mxu0 0
  %854 = vmatpush1.bf16.msra.mxu0 %v836
  %855 = vmatprep.subr.bf16.mxu0 0
  %856 = vmatpush1.bf16.msra.mxu0 %v837
  %857 = vmatprep.subr.bf16.mxu0 0
  %858 = vmatpush1.bf16.msra.mxu0 %v838
  %859 = vmatprep.subr.bf16.mxu0 0
  %860 = vmatpush1.bf16.msra.mxu0 %v839
  %861 = vmatprep.subr.bf16.mxu0 0
  %862 = vmatpush1.bf16.msra.mxu0 %v840
  %863 = vmatprep.subr.bf16.mxu0 0
  %864 = vmatpush1.bf16.msra.mxu0 %v841
  %865 = vmatprep.subr.bf16.mxu0 0
  %866 = vmatpush1.bf16.msra.mxu0 %v842
  %867 = vmatprep.subr.bf16.mxu0 0
  %868 = vmatpush1.bf16.msra.mxu0 0
  %869 = vmatprep.subr.bf16.mxu0 0
  %870 = vmatpush1.bf16.msra.mxu0 0
  %871 = vmatprep.subr.bf16.mxu0 0
  %872 = vmatpush1.bf16.msra.mxu0 0
  %873 = vmatprep.subr.bf16.mxu0 0
  %874 = vmatpush1.bf16.msra.mxu0 0
  %875 = vmatprep.subr.bf16.mxu0 0
  %876 = vmatpush1.bf16.msra.mxu0 0
  %877 = vmatprep.subr.bf16.mxu0 0
  %878 = vmatpush1.bf16.msra.mxu0 0
  %879 = vmatprep.subr.bf16.mxu0 0
  %880 = vmatpush1.bf16.msra.mxu0 0
  %881 = vmatprep.subr.bf16.mxu0 0
  %882 = vmatpush1.bf16.msra.mxu0 0
  %883 = vmatprep.mubr.bf16.mxu0 0
  %884 = vmatmul.mubr.bf16.gmra.mrb[0].mxu0 %v305
  %v885 = vpop.f32.mrb[0].mxu0
  %v886 = vadd.f32 %v549, %v885
  %v887 = vpop.f32.mrb[0].mxu0
  %v888 = vpop.f32.mrb[0].mxu0
  %v889 = vadd.f32 %v552, %v888
  %v890 = vpop.f32.mrb[0].mxu0
  %891 = vmatprep.mubr.bf16.mxu0 0
  %892 = vmatmul.mubr.bf16.gmra.mrb[0].mxu0 %v306
  %v893 = vpop.f32.mrb[0].mxu0
  %v894 = vadd.f32 %v557, %v893
  %v895 = vpop.f32.mrb[0].mxu0
  %v896 = vpop.f32.mrb[0].mxu0
  %v897 = vadd.f32 %v560, %v896
  %v898 = vpop.f32.mrb[0].mxu0
  %899 = vmatprep.mubr.bf16.mxu0 0
  %900 = vmatmul.mubr.bf16.gmra.mrb[0].mxu0 %v307
  %v901 = vpop.f32.mrb[0].mxu0
  %v902 = vadd.f32 %v565, %v901
  %v903 = vpop.f32.mrb[0].mxu0
  %v904 = vpop.f32.mrb[0].mxu0
  %v905 = vadd.f32 %v568, %v904
  %v906 = vpop.f32.mrb[0].mxu0
  %907 = vmatprep.mubr.bf16.mxu0 0
  %908 = vmatmul.mubr.bf16.gmra.mrb[0].mxu0 %v308
  %v909 = vpop.f32.mrb[0].mxu0
  %v910 = vadd.f32 %v573, %v909
  %v911 = vpop.f32.mrb[0].mxu0
  %v912 = vpop.f32.mrb[0].mxu0
  %v913 = vadd.f32 %v576, %v912
  %v914 = vpop.f32.mrb[0].mxu0
  %915 = vmatprep.mubr.bf16.mxu0 0
  %916 = vmatmul.mubr.bf16.gmra.mrb[0].mxu0 %v309
  %v917 = vpop.f32.mrb[0].mxu0
  %v918 = vadd.f32 %v581, %v917
  %v919 = vpop.f32.mrb[0].mxu0
  %v920 = vpop.f32.mrb[0].mxu0
  %v921 = vadd.f32 %v584, %v920
  %v922 = vpop.f32.mrb[0].mxu0
  %923 = vmatprep.mubr.bf16.mxu0 0
  %924 = vmatmul.mubr.bf16.gmra.mrb[0].mxu0 %v310
  %v925 = vpop.f32.mrb[0].mxu0
  %v926 = vadd.f32 %v589, %v925
  %v927 = vpop.f32.mrb[0].mxu0
  %v928 = vpop.f32.mrb[0].mxu0
  %v929 = vadd.f32 %v592, %v928
  %v930 = vpop.f32.mrb[0].mxu0
  %931 = vmatprep.mubr.bf16.mxu0 0
  %932 = vmatmul.mubr.bf16.gmra.mrb[0].mxu0 %v311
  %v933 = vpop.f32.mrb[0].mxu0
  %v934 = vadd.f32 %v597, %v933
  %v935 = vpop.f32.mrb[0].mxu0
  %v936 = vpop.f32.mrb[0].mxu0
  %v937 = vadd.f32 %v600, %v936
  %v938 = vpop.f32.mrb[0].mxu0
  %939 = vmatprep.mubr.bf16.mxu0 0
  %940 = vmatmul.mubr.bf16.gmra.mrb[0].mxu0 %v312
  %v941 = vpop.f32.mrb[0].mxu0
  %v942 = vadd.f32 %v605, %v941
  %v943 = vpop.f32.mrb[0].mxu0
  %v944 = vpop.f32.mrb[0].mxu0
  %v945 = vadd.f32 %v608, %v944
  %v946 = vpop.f32.mrb[0].mxu0
  %947 = vmatprep.mubr.bf16.mxu0 0
  %948 = vmatmul.mubr.bf16.gmra.mrb[0].mxu0 %v313
  %v949 = vpop.f32.mrb[0].mxu0
  %v950 = vadd.f32 %v613, %v949
  %v951 = vpop.f32.mrb[0].mxu0
  %v952 = vpop.f32.mrb[0].mxu0
  %v953 = vadd.f32 %v616, %v952
  %v954 = vpop.f32.mrb[0].mxu0
  %955 = vmatprep.mubr.bf16.mxu0 0
  %956 = vmatmul.mubr.bf16.gmra.mrb[0].mxu0 %v314
  %v957 = vpop.f32.mrb[0].mxu0
  %v958 = vadd.f32 %v621, %v957
  %v959 = vpop.f32.mrb[0].mxu0
  %v960 = vpop.f32.mrb[0].mxu0
  %v961 = vadd.f32 %v624, %v960
  %v962 = vpop.f32.mrb[0].mxu0
  %963 = vmatprep.mubr.bf16.mxu0 0
  %964 = vmatmul.mubr.bf16.gmra.mrb[0].mxu0 %v315
  %v965 = vpop.f32.mrb[0].mxu0
  %v966 = vadd.f32 %v629, %v965
  %v967 = vpop.f32.mrb[0].mxu0
  %v968 = vpop.f32.mrb[0].mxu0
  %v969 = vadd.f32 %v632, %v968
  %v970 = vpop.f32.mrb[0].mxu0
  %971 = vmatprep.mubr.bf16.mxu0 0
  %972 = vmatmul.mubr.bf16.gmra.mrb[0].mxu0 %v316
  %v973 = vpop.f32.mrb[0].mxu0
  %v974 = vadd.f32 %v637, %v973
  %v975 = vpop.f32.mrb[0].mxu0
  %v976 = vpop.f32.mrb[0].mxu0
  %v977 = vadd.f32 %v640, %v976
  %v978 = vpop.f32.mrb[0].mxu0
  %979 = vmatprep.mubr.bf16.mxu0 0
  %980 = vmatmul.mubr.bf16.gmra.mrb[0].mxu0 %v317
  %v981 = vpop.f32.mrb[0].mxu0
  %v982 = vadd.f32 %v645, %v981
  %v983 = vpop.f32.mrb[0].mxu0
  %v984 = vpop.f32.mrb[0].mxu0
  %v985 = vadd.f32 %v648, %v984
  %v986 = vpop.f32.mrb[0].mxu0
  %987 = vmatprep.mubr.bf16.mxu0 0
  %988 = vmatmul.mubr.bf16.gmra.mrb[0].mxu0 %v318
  %v989 = vpop.f32.mrb[0].mxu0
  %v990 = vadd.f32 %v653, %v989
  %v991 = vpop.f32.mrb[0].mxu0
  %v992 = vpop.f32.mrb[0].mxu0
  %v993 = vadd.f32 %v656, %v992
  %v994 = vpop.f32.mrb[0].mxu0
  %995 = vmatprep.mubr.bf16.mxu0 0
  %996 = vmatmul.mubr.bf16.gmra.mrb[0].mxu0 %v319
  %v997 = vpop.f32.mrb[0].mxu0
  %v998 = vadd.f32 %v661, %v997
  %v999 = vpop.f32.mrb[0].mxu0
  %v1000 = vpop.f32.mrb[0].mxu0
  %v1001 = vadd.f32 %v664, %v1000
  %v1002 = vpop.f32.mrb[0].mxu0
  %1003 = vmatprep.mubr.bf16.mxu0 0
  %1004 = vmatmul.mubr.bf16.gmra.mrb[0].mxu0 %v320
  %v1005 = vpop.f32.mrb[0].mxu0
  %v1006 = vadd.f32 %v669, %v1005
  %v1007 = vpop.f32.mrb[0].mxu0
  %v1008 = vpop.f32.mrb[0].mxu0
  %v1009 = vadd.f32 %v672, %v1008
  %v1010 = vpop.f32.mrb[0].mxu0
  %1011 = vmatprep.mubr.bf16.mxu0 0
  %1012 = vmatmul.mubr.bf16.gmra.mrb[0].mxu0 %v321
  %v1013 = vpop.f32.mrb[0].mxu0
  %v1014 = vadd.f32 %v677, %v1013
  %v1015 = vpop.f32.mrb[0].mxu0
  %v1016 = vpop.f32.mrb[0].mxu0
  %v1017 = vadd.f32 %v680, %v1016
  %v1018 = vpop.f32.mrb[0].mxu0
  %1019 = vmatprep.mubr.bf16.mxu0 0
  %1020 = vmatmul.mubr.bf16.gmra.mrb[0].mxu0 %v322
  %v1021 = vpop.f32.mrb[0].mxu0
  %v1022 = vadd.f32 %v685, %v1021
  %v1023 = vpop.f32.mrb[0].mxu0
  %v1024 = vpop.f32.mrb[0].mxu0
  %v1025 = vadd.f32 %v688, %v1024
  %v1026 = vpop.f32.mrb[0].mxu0
  %1027 = vmatprep.mubr.bf16.mxu0 0
  %1028 = vmatmul.mubr.bf16.gmra.mrb[0].mxu0 %v323
  %v1029 = vpop.f32.mrb[0].mxu0
  %v1030 = vadd.f32 %v693, %v1029
  %v1031 = vpop.f32.mrb[0].mxu0
  %v1032 = vpop.f32.mrb[0].mxu0
  %v1033 = vadd.f32 %v696, %v1032
  %v1034 = vpop.f32.mrb[0].mxu0
  %1035 = vmatprep.mubr.bf16.mxu0 0
  %1036 = vmatmul.mubr.bf16.gmra.mrb[0].mxu0 %v324
  %v1037 = vpop.f32.mrb[0].mxu0
  %v1038 = vadd.f32 %v701, %v1037
  %v1039 = vpop.f32.mrb[0].mxu0
  %v1040 = vpop.f32.mrb[0].mxu0
  %v1041 = vadd.f32 %v704, %v1040
  %v1042 = vpop.f32.mrb[0].mxu0
  %1043 = vmatprep.mubr.bf16.mxu0 0
  %1044 = vmatmul.mubr.bf16.gmra.mrb[0].mxu0 %v325
  %v1045 = vpop.f32.mrb[0].mxu0
  %v1046 = vadd.f32 %v709, %v1045
  %v1047 = vpop.f32.mrb[0].mxu0
  %v1048 = vpop.f32.mrb[0].mxu0
  %v1049 = vadd.f32 %v712, %v1048
  %v1050 = vpop.f32.mrb[0].mxu0
  %1051 = vmatprep.mubr.bf16.mxu0 0
  %1052 = vmatmul.mubr.bf16.gmra.mrb[0].mxu0 %v326
  %v1053 = vpop.f32.mrb[0].mxu0
  %v1054 = vadd.f32 %v717, %v1053
  %v1055 = vpop.f32.mrb[0].mxu0
  %v1056 = vpop.f32.mrb[0].mxu0
  %v1057 = vadd.f32 %v720, %v1056
  %v1058 = vpop.f32.mrb[0].mxu0
  %1059 = vmatprep.mubr.bf16.mxu0 0
  %1060 = vmatmul.mubr.bf16.gmra.mrb[0].mxu0 %v327
  %v1061 = vpop.f32.mrb[0].mxu0
  %v1062 = vadd.f32 %v725, %v1061
  %v1063 = vpop.f32.mrb[0].mxu0
  %v1064 = vpop.f32.mrb[0].mxu0
  %v1065 = vadd.f32 %v728, %v1064
  %v1066 = vpop.f32.mrb[0].mxu0
  %1067 = vmatprep.mubr.bf16.mxu0 0
  %1068 = vmatmul.mubr.bf16.gmra.mrb[0].mxu0 %v328
  %v1069 = vpop.f32.mrb[0].mxu0
  %v1070 = vadd.f32 %v733, %v1069
  %v1071 = vpop.f32.mrb[0].mxu0
  %v1072 = vpop.f32.mrb[0].mxu0
  %v1073 = vadd.f32 %v736, %v1072
  %v1074 = vpop.f32.mrb[0].mxu0
  %1075 = vmatprep.mubr.bf16.mxu0 0
  %1076 = vmatmul.mubr.bf16.gmra.mrb[0].mxu0 %v329
  %v1077 = vpop.f32.mrb[0].mxu0
  %v1078 = vadd.f32 %v741, %v1077
  %v1079 = vpop.f32.mrb[0].mxu0
  %v1080 = vpop.f32.mrb[0].mxu0
  %v1081 = vadd.f32 %v744, %v1080
  %v1082 = vpop.f32.mrb[0].mxu0
  %1083 = vmatprep.mubr.bf16.mxu0 0
  %1084 = vmatmul.mubr.bf16.gmra.mrb[0].mxu0 %v330
  %v1085 = vpop.f32.mrb[0].mxu0
  %v1086 = vadd.f32 %v749, %v1085
  %v1087 = vpop.f32.mrb[0].mxu0
  %v1088 = vpop.f32.mrb[0].mxu0
  %v1089 = vadd.f32 %v752, %v1088
  %v1090 = vpop.f32.mrb[0].mxu0
  %1091 = vmatprep.mubr.bf16.mxu0 0
  %1092 = vmatmul.mubr.bf16.gmra.mrb[0].mxu0 %v331
  %v1093 = vpop.f32.mrb[0].mxu0
  %v1094 = vadd.f32 %v757, %v1093
  %v1095 = vpop.f32.mrb[0].mxu0
  %v1096 = vpop.f32.mrb[0].mxu0
  %v1097 = vadd.f32 %v760, %v1096
  %v1098 = vpop.f32.mrb[0].mxu0
  %1099 = vmatprep.mubr.bf16.mxu0 0
  %1100 = vmatmul.mubr.bf16.gmra.mrb[0].mxu0 %v332
  %v1101 = vpop.f32.mrb[0].mxu0
  %v1102 = vadd.f32 %v765, %v1101
  %v1103 = vpop.f32.mrb[0].mxu0
  %v1104 = vpop.f32.mrb[0].mxu0
  %v1105 = vadd.f32 %v768, %v1104
  %v1106 = vpop.f32.mrb[0].mxu0
  %1107 = vmatprep.mubr.bf16.mxu0 0
  %1108 = vmatmul.mubr.bf16.gmra.mrb[0].mxu0 %v333
  %v1109 = vpop.f32.mrb[0].mxu0
  %v1110 = vadd.f32 %v773, %v1109
  %v1111 = vpop.f32.mrb[0].mxu0
  %v1112 = vpop.f32.mrb[0].mxu0
  %v1113 = vadd.f32 %v776, %v1112
  %v1114 = vpop.f32.mrb[0].mxu0
  %1115 = vmatprep.mubr.bf16.mxu0 0
  %1116 = vmatmul.mubr.bf16.gmra.mrb[0].mxu0 %v334
  %v1117 = vpop.f32.mrb[0].mxu0
  %v1118 = vadd.f32 %v781, %v1117
  %v1119 = vpop.f32.mrb[0].mxu0
  %v1120 = vpop.f32.mrb[0].mxu0
  %v1121 = vadd.f32 %v784, %v1120
  %v1122 = vpop.f32.mrb[0].mxu0
  %1123 = vmatprep.mubr.bf16.mxu0 0
  %1124 = vmatmul.mubr.bf16.gmra.mrb[0].mxu0 %v335
  %v1125 = vpop.f32.mrb[0].mxu0
  %v1126 = vadd.f32 %v789, %v1125
  %v1127 = vpop.f32.mrb[0].mxu0
  %v1128 = vpop.f32.mrb[0].mxu0
  %v1129 = vadd.f32 %v792, %v1128
  %v1130 = vpop.f32.mrb[0].mxu0
  %1131 = vmatprep.mubr.bf16.mxu0 0
  %1132 = vmatmul.mubr.bf16.gmra.mrb[0].mxu0 %v336
  %v1133 = vpop.f32.mrb[0].mxu0
  %v1134 = vadd.f32 %v797, %v1133
  %v1135 = vpop.f32.mrb[0].mxu0
  %v1136 = vpop.f32.mrb[0].mxu0
  %v1137 = vadd.f32 %v800, %v1136
  %v1138 = vpop.f32.mrb[0].mxu0
  %1139 = vdwg.mxu0
  %v1140 = vld [vmem:[#allocation2 + $0x2] sm:$0xff]
  %v1141 = vld [vmem:[#allocation2 + $0xa] sm:$0xff]
  %v1142 = vld [vmem:[#allocation2 + $0x1a] sm:$0xff]
  %v1143 = vld [vmem:[#allocation2 + $0x22] sm:$0xff]
  %v1144 = vld [vmem:[#allocation2 + $0x32] sm:$0xff]
  %v1145 = vld [vmem:[#allocation2 + $0x3a] sm:$0xff]
  %v1146 = vld [vmem:[#allocation2 + $0x4a] sm:$0xff]
  %v1147 = vld [vmem:[#allocation2 + $0x52] sm:$0xff]
  %v1148 = vld [vmem:[#allocation2 + $0x62] sm:$0xff]
  %v1149 = vld [vmem:[#allocation2 + $0x6a] sm:$0xff]
  %v1150 = vld [vmem:[#allocation2 + $0x7a] sm:$0xff]
  %v1151 = vld [vmem:[#allocation2 + $0x82] sm:$0xff]
  %v1152 = vld [vmem:[#allocation2 + $0x92] sm:$0xff]
  %v1153 = vld [vmem:[#allocation2 + $0x9a] sm:$0xff]
  %v1154 = vld [vmem:[#allocation2 + $0xaa] sm:$0xff]
  %v1155 = vld [vmem:[#allocation2 + $0xb2] sm:$0xff]
  %v1156 = vld [vmem:[#allocation2 + $0xc2] sm:$0xff]
  %v1157 = vld [vmem:[#allocation2 + $0xca] sm:$0xff]
  %v1158 = vld [vmem:[#allocation2 + $0xda] sm:$0xff]
  %v1159 = vld [vmem:[#allocation2 + $0xe2] sm:$0xff]
  %v1160 = vld [vmem:[#allocation2 + $0xf2] sm:$0xff]
  %v1161 = vld [vmem:[#allocation2 + $0xfa] sm:$0xff]
  %v1162 = vld [vmem:[#allocation2 + $0x10a] sm:$0xff]
  %v1163 = vld [vmem:[#allocation2 + $0x112] sm:$0xff]
  %v1164 = vld [vmem:[#allocation2 + $0x122] sm:$0xff]
  %v1165 = vld [vmem:[#allocation2 + $0x12a] sm:$0xff]
  %v1166 = vld [vmem:[#allocation2 + $0x13a] sm:$0xff]
  %v1167 = vld [vmem:[#allocation2 + $0x142] sm:$0xff]
  %v1168 = vld [vmem:[#allocation2 + $0x152] sm:$0xff]
  %v1169 = vld [vmem:[#allocation2 + $0x15a] sm:$0xff]
  %v1170 = vld [vmem:[#allocation2 + $0x16a] sm:$0xff]
  %v1171 = vld [vmem:[#allocation2 + $0x172] sm:$0xff]
  %v1172 = vld [vmem:[#allocation2 + $0x1b2] sm:$0xff]
  %v1173 = vld [vmem:[#allocation2 + $0x1ba] sm:$0xff]
  %v1174 = vld [vmem:[#allocation2 + $0x1ca] sm:$0xff]
  %v1175 = vld [vmem:[#allocation2 + $0x1d2] sm:$0xff]
  %v1176 = vld [vmem:[#allocation2 + $0x1e2] sm:$0xff]
  %v1177 = vld [vmem:[#allocation2 + $0x1ea] sm:$0xff]
  %v1178 = vld [vmem:[#allocation2 + $0x1fa] sm:$0xff]
  %v1179 = vld [vmem:[#allocation2 + $0x202] sm:$0xff]
  %v1180 = vld [vmem:[#allocation2 + $0x212] sm:$0xff]
  %v1181 = vld [vmem:[#allocation2 + $0x21a] sm:$0xff]
  %v1182 = vld [vmem:[#allocation2 + $0x22a] sm:$0xff]
  %v1183 = vld [vmem:[#allocation2 + $0x232] sm:$0xff]
  %v1184 = vld [vmem:[#allocation2 + $0x242] sm:$0xff]
  %v1185 = vld [vmem:[#allocation2 + $0x24a] sm:$0xff]
  %v1186 = vld [vmem:[#allocation2 + $0x25a] sm:$0xff]
  %v1187 = vld [vmem:[#allocation2 + $0x262] sm:$0xff]
  %v1188 = vld [vmem:[#allocation2 + $0x272] sm:$0xff]
  %v1189 = vld [vmem:[#allocation2 + $0x27a] sm:$0xff]
  %v1190 = vld [vmem:[#allocation2 + $0x28a] sm:$0xff]
  %v1191 = vld [vmem:[#allocation2 + $0x292] sm:$0xff]
  %v1192 = vld [vmem:[#allocation2 + $0x2a2] sm:$0xff]
  %v1193 = vld [vmem:[#allocation2 + $0x2aa] sm:$0xff]
  %v1194 = vld [vmem:[#allocation2 + $0x2ba] sm:$0xff]
  %v1195 = vld [vmem:[#allocation2 + $0x2c2] sm:$0xff]
  %v1196 = vld [vmem:[#allocation2 + $0x2d2] sm:$0xff]
  %v1197 = vld [vmem:[#allocation2 + $0x2da] sm:$0xff]
  %v1198 = vld [vmem:[#allocation2 + $0x2ea] sm:$0xff]
  %v1199 = vld [vmem:[#allocation2 + $0x2f2] sm:$0xff]
  %v1200 = vld [vmem:[#allocation2 + $0x302] sm:$0xff]
  %v1201 = vld [vmem:[#allocation2 + $0x30a] sm:$0xff]
  %v1202 = vld [vmem:[#allocation2 + $0x31a] sm:$0xff]
  %v1203 = vld [vmem:[#allocation2 + $0x322] sm:$0xff]
  %v1204 = vpack.c.bf16 %v1141, %v1140
  %v1205 = vpack.c.bf16 %v1143, %v1142
  %v1206 = vpack.c.bf16 %v1145, %v1144
  %v1207 = vpack.c.bf16 %v1147, %v1146
  %v1208 = vpack.c.bf16 %v1149, %v1148
  %v1209 = vpack.c.bf16 %v1151, %v1150
  %v1210 = vpack.c.bf16 %v1153, %v1152
  %v1211 = vpack.c.bf16 %v1155, %v1154
  %v1212 = vpack.c.bf16 %v1157, %v1156
  %v1213 = vpack.c.bf16 %v1159, %v1158
  %v1214 = vpack.c.bf16 %v1161, %v1160
  %v1215 = vpack.c.bf16 %v1163, %v1162
  %v1216 = vpack.c.bf16 %v1165, %v1164
  %v1217 = vpack.c.bf16 %v1167, %v1166
  %v1218 = vpack.c.bf16 %v1169, %v1168
  %v1219 = vpack.c.bf16 %v1171, %v1170
  %v1220 = vpack.c.bf16 %v1173, %v1172
  %v1221 = vpack.c.bf16 %v1175, %v1174
  %v1222 = vpack.c.bf16 %v1177, %v1176
  %v1223 = vpack.c.bf16 %v1179, %v1178
  %v1224 = vpack.c.bf16 %v1181, %v1180
  %v1225 = vpack.c.bf16 %v1183, %v1182
  %v1226 = vpack.c.bf16 %v1185, %v1184
  %v1227 = vpack.c.bf16 %v1187, %v1186
  %v1228 = vpack.c.bf16 %v1189, %v1188
  %v1229 = vpack.c.bf16 %v1191, %v1190
  %v1230 = vpack.c.bf16 %v1193, %v1192
  %v1231 = vpack.c.bf16 %v1195, %v1194
  %v1232 = vpack.c.bf16 %v1197, %v1196
  %v1233 = vpack.c.bf16 %v1199, %v1198
  %v1234 = vpack.c.bf16 %v1201, %v1200
  %v1235 = vpack.c.bf16 %v1203, %v1202
  %s1236 = scalar_lea.vmem %s1, 128
  %v1237 = vld [vmem:[%s1236] sm:$0xf]
  %v1238 = vld [vmem:[%s1236 + $0x4] sm:$0xf]
  %v1239 = vld [vmem:[%s1236 + $0x8] sm:$0xf]
  %v1240 = vld [vmem:[%s1236 + $0xc] sm:$0xf]
  %v1241 = vld [vmem:[%s1236 + $0x10] sm:$0xf]
  %v1242 = vld [vmem:[%s1236 + $0x14] sm:$0xf]
  %v1243 = vld [vmem:[%s1236 + $0x18] sm:$0xf]
  %v1244 = vld [vmem:[%s1236 + $0x1c] sm:$0xf]
  %v1245 = vld [vmem:[%s1236 + $0x20] sm:$0xf]
  %v1246 = vld [vmem:[%s1236 + $0x24] sm:$0xf]
  %v1247 = vld [vmem:[%s1236 + $0x28] sm:$0xf]
  %v1248 = vld [vmem:[%s1236 + $0x2c] sm:$0xf]
  %v1249 = vld [vmem:[%s1236 + $0x30] sm:$0xf]
  %v1250 = vld [vmem:[%s1236 + $0x34] sm:$0xf]
  %v1251 = vld [vmem:[%s1236 + $0x38] sm:$0xf]
  %v1252 = vld [vmem:[%s1236 + $0x3c] sm:$0xf]
  %v1269 = vunpack.c.l.b16 %v1237
  %v1270 = vunpack.c.l.b16 %v1238
  %v1271 = vunpack.c.l.b16 %v1239
  %v1272 = vunpack.c.l.b16 %v1240
  %v1273 = vunpack.c.l.b16 %v1241
  %v1274 = vunpack.c.l.b16 %v1242
  %v1275 = vunpack.c.l.b16 %v1243
  %v1276 = vunpack.c.l.b16 %v1244
  %v1277 = vunpack.c.l.b16 %v1245
  %v1278 = vunpack.c.l.b16 %v1246
  %v1279 = vunpack.c.l.b16 %v1247
  %v1280 = vunpack.c.l.b16 %v1248
  %v1281 = vunpack.c.l.b16 %v1249
  %v1282 = vunpack.c.l.b16 %v1250
  %v1283 = vunpack.c.l.b16 %v1251
  %v1284 = vunpack.c.l.b16 %v1252
  %v1285 = vpack.c.b16 %v1270, %v1269
  %v1286 = vpack.c.b16 %v1272, %v1271
  %v1287 = vpack.c.b16 %v1274, %v1273
  %v1288 = vpack.c.b16 %v1276, %v1275
  %v1289 = vpack.c.b16 %v1278, %v1277
  %v1290 = vpack.c.b16 %v1280, %v1279
  %v1291 = vpack.c.b16 %v1282, %v1281
  %v1292 = vpack.c.b16 %v1284, %v1283
  %1301 = vmatprep.subr.bf16.mxu0 0
  %1302 = vmatpush1.bf16.msra.mxu0 %v1285
  %1303 = vmatprep.subr.bf16.mxu0 0
  %1304 = vmatpush1.bf16.msra.mxu0 %v1286
  %1305 = vmatprep.subr.bf16.mxu0 0
  %1306 = vmatpush1.bf16.msra.mxu0 %v1287
  %1307 = vmatprep.subr.bf16.mxu0 0
  %1308 = vmatpush1.bf16.msra.mxu0 %v1288
  %1309 = vmatprep.subr.bf16.mxu0 0
  %1310 = vmatpush1.bf16.msra.mxu0 %v1289
  %1311 = vmatprep.subr.bf16.mxu0 0
  %1312 = vmatpush1.bf16.msra.mxu0 %v1290
  %1313 = vmatprep.subr.bf16.mxu0 0
  %1314 = vmatpush1.bf16.msra.mxu0 %v1291
  %1315 = vmatprep.subr.bf16.mxu0 0
  %1316 = vmatpush1.bf16.msra.mxu0 %v1292
  %1317 = vmatprep.subr.bf16.mxu0 0
  %1318 = vmatpush1.bf16.msra.mxu0 0
  %1319 = vmatprep.subr.bf16.mxu0 0
  %1320 = vmatpush1.bf16.msra.mxu0 0
  %1321 = vmatprep.subr.bf16.mxu0 0
  %1322 = vmatpush1.bf16.msra.mxu0 0
  %1323 = vmatprep.subr.bf16.mxu0 0
  %1324 = vmatpush1.bf16.msra.mxu0 0
  %1325 = vmatprep.subr.bf16.mxu0 0
  %1326 = vmatpush1.bf16.msra.mxu0 0
  %1327 = vmatprep.subr.bf16.mxu0 0
  %1328 = vmatpush1.bf16.msra.mxu0 0
  %1329 = vmatprep.subr.bf16.mxu0 0
  %1330 = vmatpush1.bf16.msra.mxu0 0
  %1331 = vmatprep.subr.bf16.mxu0 0
  %1332 = vmatpush1.bf16.msra.mxu0 0
  %1333 = vmatprep.mubr.bf16.mxu0 0
  %1334 = vmatmul.mubr.bf16.gmra.mrb[0].mxu0 %v1204
  %v1335 = vpop.f32.mrb[0].mxu0
  %v1336 = vadd.f32 0.0, %v1335
  %v1337 = vpop.f32.mrb[0].mxu0
  %v1338 = vpop.f32.mrb[0].mxu0
  %v1339 = vadd.f32 0.0, %v1338
  %v1340 = vpop.f32.mrb[0].mxu0
  %1341 = vmatprep.mubr.bf16.mxu0 0
  %1342 = vmatmul.mubr.bf16.gmra.mrb[0].mxu0 %v1205
  %v1343 = vpop.f32.mrb[0].mxu0
  %v1344 = vadd.f32 0.0, %v1343
  %v1345 = vpop.f32.mrb[0].mxu0
  %v1346 = vpop.f32.mrb[0].mxu0
  %v1347 = vadd.f32 0.0, %v1346
  %v1348 = vpop.f32.mrb[0].mxu0
  %1349 = vmatprep.mubr.bf16.mxu0 0
  %1350 = vmatmul.mubr.bf16.gmra.mrb[0].mxu0 %v1206
  %v1351 = vpop.f32.mrb[0].mxu0
  %v1352 = vadd.f32 0.0, %v1351
  %v1353 = vpop.f32.mrb[0].mxu0
  %v1354 = vpop.f32.mrb[0].mxu0
  %v1355 = vadd.f32 0.0, %v1354
  %v1356 = vpop.f32.mrb[0].mxu0
  %1357 = vmatprep.mubr.bf16.mxu0 0
  %1358 = vmatmul.mubr.bf16.gmra.mrb[0].mxu0 %v1207
  %v1359 = vpop.f32.mrb[0].mxu0
  %v1360 = vadd.f32 0.0, %v1359
  %v1361 = vpop.f32.mrb[0].mxu0
  %v1362 = vpop.f32.mrb[0].mxu0
  %v1363 = vadd.f32 0.0, %v1362
  %v1364 = vpop.f32.mrb[0].mxu0
  %1365 = vmatprep.mubr.bf16.mxu0 0
  %1366 = vmatmul.mubr.bf16.gmra.mrb[0].mxu0 %v1208
  %v1367 = vpop.f32.mrb[0].mxu0
  %v1368 = vadd.f32 0.0, %v1367
  %v1369 = vpop.f32.mrb[0].mxu0
  %v1370 = vpop.f32.mrb[0].mxu0
  %v1371 = vadd.f32 0.0, %v1370
  %v1372 = vpop.f32.mrb[0].mxu0
  %1373 = vmatprep.mubr.bf16.mxu0 0
  %1374 = vmatmul.mubr.bf16.gmra.mrb[0].mxu0 %v1209
  %v1375 = vpop.f32.mrb[0].mxu0
  %v1376 = vadd.f32 0.0, %v1375
  %v1377 = vpop.f32.mrb[0].mxu0
  %v1378 = vpop.f32.mrb[0].mxu0
  %v1379 = vadd.f32 0.0, %v1378
  %v1380 = vpop.f32.mrb[0].mxu0
  %1381 = vmatprep.mubr.bf16.mxu0 0
  %1382 = vmatmul.mubr.bf16.gmra.mrb[0].mxu0 %v1210
  %v1383 = vpop.f32.mrb[0].mxu0
  %v1384 = vadd.f32 0.0, %v1383
  %v1385 = vpop.f32.mrb[0].mxu0
  %v1386 = vpop.f32.mrb[0].mxu0
  %v1387 = vadd.f32 0.0, %v1386
  %v1388 = vpop.f32.mrb[0].mxu0
  %1389 = vmatprep.mubr.bf16.mxu0 0
  %1390 = vmatmul.mubr.bf16.gmra.mrb[0].mxu0 %v1211
  %v1391 = vpop.f32.mrb[0].mxu0
  %v1392 = vadd.f32 0.0, %v1391
  %v1393 = vpop.f32.mrb[0].mxu0
  %v1394 = vpop.f32.mrb[0].mxu0
  %v1395 = vadd.f32 0.0, %v1394
  %v1396 = vpop.f32.mrb[0].mxu0
  %1397 = vmatprep.mubr.bf16.mxu0 0
  %1398 = vmatmul.mubr.bf16.gmra.mrb[0].mxu0 %v1212
  %v1399 = vpop.f32.mrb[0].mxu0
  %v1400 = vadd.f32 0.0, %v1399
  %v1401 = vpop.f32.mrb[0].mxu0
  %v1402 = vpop.f32.mrb[0].mxu0
  %v1403 = vadd.f32 0.0, %v1402
  %v1404 = vpop.f32.mrb[0].mxu0
  %1405 = vmatprep.mubr.bf16.mxu0 0
  %1406 = vmatmul.mubr.bf16.gmra.mrb[0].mxu0 %v1213
  %v1407 = vpop.f32.mrb[0].mxu0
  %v1408 = vadd.f32 0.0, %v1407
  %v1409 = vpop.f32.mrb[0].mxu0
  %v1410 = vpop.f32.mrb[0].mxu0
  %v1411 = vadd.f32 0.0, %v1410
  %v1412 = vpop.f32.mrb[0].mxu0
  %1413 = vmatprep.mubr.bf16.mxu0 0
  %1414 = vmatmul.mubr.bf16.gmra.mrb[0].mxu0 %v1214
  %v1415 = vpop.f32.mrb[0].mxu0
  %v1416 = vadd.f32 0.0, %v1415
  %v1417 = vpop.f32.mrb[0].mxu0
  %v1418 = vpop.f32.mrb[0].mxu0
  %v1419 = vadd.f32 0.0, %v1418
  %v1420 = vpop.f32.mrb[0].mxu0
  %1421 = vmatprep.mubr.bf16.mxu0 0
  %1422 = vmatmul.mubr.bf16.gmra.mrb[0].mxu0 %v1215
  %v1423 = vpop.f32.mrb[0].mxu0
  %v1424 = vadd.f32 0.0, %v1423
  %v1425 = vpop.f32.mrb[0].mxu0
  %v1426 = vpop.f32.mrb[0].mxu0
  %v1427 = vadd.f32 0.0, %v1426
  %v1428 = vpop.f32.mrb[0].mxu0
  %1429 = vmatprep.mubr.bf16.mxu0 0
  %1430 = vmatmul.mubr.bf16.gmra.mrb[0].mxu0 %v1216
  %v1431 = vpop.f32.mrb[0].mxu0
  %v1432 = vadd.f32 0.0, %v1431
  %v1433 = vpop.f32.mrb[0].mxu0
  %v1434 = vpop.f32.mrb[0].mxu0
  %v1435 = vadd.f32 0.0, %v1434
  %v1436 = vpop.f32.mrb[0].mxu0
  %1437 = vmatprep.mubr.bf16.mxu0 0
  %1438 = vmatmul.mubr.bf16.gmra.mrb[0].mxu0 %v1217
  %v1439 = vpop.f32.mrb[0].mxu0
  %v1440 = vadd.f32 0.0, %v1439
  %v1441 = vpop.f32.mrb[0].mxu0
  %v1442 = vpop.f32.mrb[0].mxu0
  %v1443 = vadd.f32 0.0, %v1442
  %v1444 = vpop.f32.mrb[0].mxu0
  %1445 = vmatprep.mubr.bf16.mxu0 0
  %1446 = vmatmul.mubr.bf16.gmra.mrb[0].mxu0 %v1218
  %v1447 = vpop.f32.mrb[0].mxu0
  %v1448 = vadd.f32 0.0, %v1447
  %v1449 = vpop.f32.mrb[0].mxu0
  %v1450 = vpop.f32.mrb[0].mxu0
  %v1451 = vadd.f32 0.0, %v1450
  %v1452 = vpop.f32.mrb[0].mxu0
  %1453 = vmatprep.mubr.bf16.mxu0 0
  %1454 = vmatmul.mubr.bf16.gmra.mrb[0].mxu0 %v1219
  %v1455 = vpop.f32.mrb[0].mxu0
  %v1456 = vadd.f32 0.0, %v1455
  %v1457 = vpop.f32.mrb[0].mxu0
  %v1458 = vpop.f32.mrb[0].mxu0
  %v1459 = vadd.f32 0.0, %v1458
  %v1460 = vpop.f32.mrb[0].mxu0
  %1461 = vmatprep.mubr.bf16.mxu0 0
  %1462 = vmatmul.mubr.bf16.gmra.mrb[0].mxu0 %v1220
  %v1463 = vpop.f32.mrb[0].mxu0
  %v1464 = vadd.f32 0.0, %v1463
  %v1465 = vpop.f32.mrb[0].mxu0
  %v1466 = vpop.f32.mrb[0].mxu0
  %v1467 = vadd.f32 0.0, %v1466
  %v1468 = vpop.f32.mrb[0].mxu0
  %1469 = vmatprep.mubr.bf16.mxu0 0
  %1470 = vmatmul.mubr.bf16.gmra.mrb[0].mxu0 %v1221
  %v1471 = vpop.f32.mrb[0].mxu0
  %v1472 = vadd.f32 0.0, %v1471
  %v1473 = vpop.f32.mrb[0].mxu0
  %v1474 = vpop.f32.mrb[0].mxu0
  %v1475 = vadd.f32 0.0, %v1474
  %v1476 = vpop.f32.mrb[0].mxu0
  %1477 = vmatprep.mubr.bf16.mxu0 0
  %1478 = vmatmul.mubr.bf16.gmra.mrb[0].mxu0 %v1222
  %v1479 = vpop.f32.mrb[0].mxu0
  %v1480 = vadd.f32 0.0, %v1479
  %v1481 = vpop.f32.mrb[0].mxu0
  %v1482 = vpop.f32.mrb[0].mxu0
  %v1483 = vadd.f32 0.0, %v1482
  %v1484 = vpop.f32.mrb[0].mxu0
  %1485 = vmatprep.mubr.bf16.mxu0 0
  %1486 = vmatmul.mubr.bf16.gmra.mrb[0].mxu0 %v1223
  %v1487 = vpop.f32.mrb[0].mxu0
  %v1488 = vadd.f32 0.0, %v1487
  %v1489 = vpop.f32.mrb[0].mxu0
  %v1490 = vpop.f32.mrb[0].mxu0
  %v1491 = vadd.f32 0.0, %v1490
  %v1492 = vpop.f32.mrb[0].mxu0
  %1493 = vmatprep.mubr.bf16.mxu0 0
  %1494 = vmatmul.mubr.bf16.gmra.mrb[0].mxu0 %v1224
  %v1495 = vpop.f32.mrb[0].mxu0
  %v1496 = vadd.f32 0.0, %v1495
  %v1497 = vpop.f32.mrb[0].mxu0
  %v1498 = vpop.f32.mrb[0].mxu0
  %v1499 = vadd.f32 0.0, %v1498
  %v1500 = vpop.f32.mrb[0].mxu0
  %1501 = vmatprep.mubr.bf16.mxu0 0
  %1502 = vmatmul.mubr.bf16.gmra.mrb[0].mxu0 %v1225
  %v1503 = vpop.f32.mrb[0].mxu0
  %v1504 = vadd.f32 0.0, %v1503
  %v1505 = vpop.f32.mrb[0].mxu0
  %v1506 = vpop.f32.mrb[0].mxu0
  %v1507 = vadd.f32 0.0, %v1506
  %v1508 = vpop.f32.mrb[0].mxu0
  %1509 = vmatprep.mubr.bf16.mxu0 0
  %1510 = vmatmul.mubr.bf16.gmra.mrb[0].mxu0 %v1226
  %v1511 = vpop.f32.mrb[0].mxu0
  %v1512 = vadd.f32 0.0, %v1511
  %v1513 = vpop.f32.mrb[0].mxu0
  %v1514 = vpop.f32.mrb[0].mxu0
  %v1515 = vadd.f32 0.0, %v1514
  %v1516 = vpop.f32.mrb[0].mxu0
  %1517 = vmatprep.mubr.bf16.mxu0 0
  %1518 = vmatmul.mubr.bf16.gmra.mrb[0].mxu0 %v1227
  %v1519 = vpop.f32.mrb[0].mxu0
  %v1520 = vadd.f32 0.0, %v1519
  %v1521 = vpop.f32.mrb[0].mxu0
  %v1522 = vpop.f32.mrb[0].mxu0
  %v1523 = vadd.f32 0.0, %v1522
  %v1524 = vpop.f32.mrb[0].mxu0
  %1525 = vmatprep.mubr.bf16.mxu0 0
  %1526 = vmatmul.mubr.bf16.gmra.mrb[0].mxu0 %v1228
  %v1527 = vpop.f32.mrb[0].mxu0
  %v1528 = vadd.f32 0.0, %v1527
  %v1529 = vpop.f32.mrb[0].mxu0
  %v1530 = vpop.f32.mrb[0].mxu0
  %v1531 = vadd.f32 0.0, %v1530
  %v1532 = vpop.f32.mrb[0].mxu0
  %1533 = vmatprep.mubr.bf16.mxu0 0
  %1534 = vmatmul.mubr.bf16.gmra.mrb[0].mxu0 %v1229
  %v1535 = vpop.f32.mrb[0].mxu0
  %v1536 = vadd.f32 0.0, %v1535
  %v1537 = vpop.f32.mrb[0].mxu0
  %v1538 = vpop.f32.mrb[0].mxu0
  %v1539 = vadd.f32 0.0, %v1538
  %v1540 = vpop.f32.mrb[0].mxu0
  %1541 = vmatprep.mubr.bf16.mxu0 0
  %1542 = vmatmul.mubr.bf16.gmra.mrb[0].mxu0 %v1230
  %v1543 = vpop.f32.mrb[0].mxu0
  %v1544 = vadd.f32 0.0, %v1543
  %v1545 = vpop.f32.mrb[0].mxu0
  %v1546 = vpop.f32.mrb[0].mxu0
  %v1547 = vadd.f32 0.0, %v1546
  %v1548 = vpop.f32.mrb[0].mxu0
  %1549 = vmatprep.mubr.bf16.mxu0 0
  %1550 = vmatmul.mubr.bf16.gmra.mrb[0].mxu0 %v1231
  %v1551 = vpop.f32.mrb[0].mxu0
  %v1552 = vadd.f32 0.0, %v1551
  %v1553 = vpop.f32.mrb[0].mxu0
  %v1554 = vpop.f32.mrb[0].mxu0
  %v1555 = vadd.f32 0.0, %v1554
  %v1556 = vpop.f32.mrb[0].mxu0
  %1557 = vmatprep.mubr.bf16.mxu0 0
  %1558 = vmatmul.mubr.bf16.gmra.mrb[0].mxu0 %v1232
  %v1559 = vpop.f32.mrb[0].mxu0
  %v1560 = vadd.f32 0.0, %v1559
  %v1561 = vpop.f32.mrb[0].mxu0
  %v1562 = vpop.f32.mrb[0].mxu0
  %v1563 = vadd.f32 0.0, %v1562
  %v1564 = vpop.f32.mrb[0].mxu0
  %1565 = vmatprep.mubr.bf16.mxu0 0
  %1566 = vmatmul.mubr.bf16.gmra.mrb[0].mxu0 %v1233
  %v1567 = vpop.f32.mrb[0].mxu0
  %v1568 = vadd.f32 0.0, %v1567
  %v1569 = vpop.f32.mrb[0].mxu0
  %v1570 = vpop.f32.mrb[0].mxu0
  %v1571 = vadd.f32 0.0, %v1570
  %v1572 = vpop.f32.mrb[0].mxu0
  %1573 = vmatprep.mubr.bf16.mxu0 0
  %1574 = vmatmul.mubr.bf16.gmra.mrb[0].mxu0 %v1234
  %v1575 = vpop.f32.mrb[0].mxu0
  %v1576 = vadd.f32 0.0, %v1575
  %v1577 = vpop.f32.mrb[0].mxu0
  %v1578 = vpop.f32.mrb[0].mxu0
  %v1579 = vadd.f32 0.0, %v1578
  %v1580 = vpop.f32.mrb[0].mxu0
  %1581 = vmatprep.mubr.bf16.mxu0 0
  %1582 = vmatmul.mubr.bf16.gmra.mrb[0].mxu0 %v1235
  %v1583 = vpop.f32.mrb[0].mxu0
  %v1584 = vadd.f32 0.0, %v1583
  %v1585 = vpop.f32.mrb[0].mxu0
  %v1586 = vpop.f32.mrb[0].mxu0
  %v1587 = vadd.f32 0.0, %v1586
  %v1588 = vpop.f32.mrb[0].mxu0
  %1589 = vdwg.mxu0
  %v1590 = vadd.f32 %v886, %v1336
  %v1591 = vadd.f32 %v889, %v1339
  %v1592 = vadd.f32 %v894, %v1344
  %v1593 = vadd.f32 %v897, %v1347
  %v1594 = vadd.f32 %v902, %v1352
  %v1595 = vadd.f32 %v905, %v1355
  %v1596 = vadd.f32 %v910, %v1360
  %v1597 = vadd.f32 %v913, %v1363
  %v1598 = vadd.f32 %v918, %v1368
  %v1599 = vadd.f32 %v921, %v1371
  %v1600 = vadd.f32 %v926, %v1376
  %v1601 = vadd.f32 %v929, %v1379
  %v1602 = vadd.f32 %v934, %v1384
  %v1603 = vadd.f32 %v937, %v1387
  %v1604 = vadd.f32 %v942, %v1392
  %v1605 = vadd.f32 %v945, %v1395
  %v1606 = vadd.f32 %v950, %v1400
  %v1607 = vadd.f32 %v953, %v1403
  %v1608 = vadd.f32 %v958, %v1408
  %v1609 = vadd.f32 %v961, %v1411
  %v1610 = vadd.f32 %v966, %v1416
  %v1611 = vadd.f32 %v969, %v1419
  %v1612 = vadd.f32 %v974, %v1424
  %v1613 = vadd.f32 %v977, %v1427
  %v1614 = vadd.f32 %v982, %v1432
  %v1615 = vadd.f32 %v985, %v1435
  %v1616 = vadd.f32 %v990, %v1440
  %v1617 = vadd.f32 %v993, %v1443
  %v1618 = vadd.f32 %v998, %v1448
  %v1619 = vadd.f32 %v1001, %v1451
  %v1620 = vadd.f32 %v1006, %v1456
  %v1621 = vadd.f32 %v1009, %v1459
  %v1622 = vadd.f32 %v1014, %v1464
  %v1623 = vadd.f32 %v1017, %v1467
  %v1624 = vadd.f32 %v1022, %v1472
  %v1625 = vadd.f32 %v1025, %v1475
  %v1626 = vadd.f32 %v1030, %v1480
  %v1627 = vadd.f32 %v1033, %v1483
  %v1628 = vadd.f32 %v1038, %v1488
  %v1629 = vadd.f32 %v1041, %v1491
  %v1630 = vadd.f32 %v1046, %v1496
  %v1631 = vadd.f32 %v1049, %v1499
  %v1632 = vadd.f32 %v1054, %v1504
  %v1633 = vadd.f32 %v1057, %v1507
  %v1634 = vadd.f32 %v1062, %v1512
  %v1635 = vadd.f32 %v1065, %v1515
  %v1636 = vadd.f32 %v1070, %v1520
  %v1637 = vadd.f32 %v1073, %v1523
  %v1638 = vadd.f32 %v1078, %v1528
  %v1639 = vadd.f32 %v1081, %v1531
  %v1640 = vadd.f32 %v1086, %v1536
  %v1641 = vadd.f32 %v1089, %v1539
  %v1642 = vadd.f32 %v1094, %v1544
  %v1643 = vadd.f32 %v1097, %v1547
  %v1644 = vadd.f32 %v1102, %v1552
  %v1645 = vadd.f32 %v1105, %v1555
  %v1646 = vadd.f32 %v1110, %v1560
  %v1647 = vadd.f32 %v1113, %v1563
  %v1648 = vadd.f32 %v1118, %v1568
  %v1649 = vadd.f32 %v1121, %v1571
  %v1650 = vadd.f32 %v1126, %v1576
  %v1651 = vadd.f32 %v1129, %v1579
  %v1652 = vadd.f32 %v1134, %v1584
  %v1653 = vadd.f32 %v1137, %v1587
  %v1654 = vld [vmem:[%s176] sm:$0xff]
  %v1655 = vld [vmem:[%s176 + $0x8] sm:$0xff]
  %v1656 = vld [vmem:[%s176 + $0x18] sm:$0xff]
  %v1657 = vld [vmem:[%s176 + $0x20] sm:$0xff]
  %v1658 = vld [vmem:[%s176 + $0x30] sm:$0xff]
  %v1659 = vld [vmem:[%s176 + $0x38] sm:$0xff]
  %v1660 = vld [vmem:[%s176 + $0x48] sm:$0xff]
  %v1661 = vld [vmem:[%s176 + $0x50] sm:$0xff]
  %v1662 = vld [vmem:[%s176 + $0x60] sm:$0xff]
  %v1663 = vld [vmem:[%s176 + $0x68] sm:$0xff]
  %v1664 = vld [vmem:[%s176 + $0x78] sm:$0xff]
  %v1665 = vld [vmem:[%s176 + $0x80] sm:$0xff]
  %v1666 = vld [vmem:[%s176 + $0x90] sm:$0xff]
  %v1667 = vld [vmem:[%s176 + $0x98] sm:$0xff]
  %v1668 = vld [vmem:[%s176 + $0xa8] sm:$0xff]
  %v1669 = vld [vmem:[%s176 + $0xb0] sm:$0xff]
  %v1670 = vld [vmem:[%s176 + $0xc0] sm:$0xff]
  %v1671 = vld [vmem:[%s176 + $0xc8] sm:$0xff]
  %v1672 = vld [vmem:[%s176 + $0xd8] sm:$0xff]
  %v1673 = vld [vmem:[%s176 + $0xe0] sm:$0xff]
  %v1674 = vld [vmem:[%s176 + $0xf0] sm:$0xff]
  %v1675 = vld [vmem:[%s176 + $0xf8] sm:$0xff]
  %v1676 = vld [vmem:[%s176 + $0x108] sm:$0xff]
  %v1677 = vld [vmem:[%s176 + $0x110] sm:$0xff]
  %v1678 = vld [vmem:[%s176 + $0x120] sm:$0xff]
  %v1679 = vld [vmem:[%s176 + $0x128] sm:$0xff]
  %v1680 = vld [vmem:[%s176 + $0x138] sm:$0xff]
  %v1681 = vld [vmem:[%s176 + $0x140] sm:$0xff]
  %v1682 = vld [vmem:[%s176 + $0x150] sm:$0xff]
  %v1683 = vld [vmem:[%s176 + $0x158] sm:$0xff]
  %v1684 = vld [vmem:[%s176 + $0x168] sm:$0xff]
  %v1685 = vld [vmem:[%s176 + $0x170] sm:$0xff]
  %v1686 = vld [vmem:[%s176 + $0x1b0] sm:$0xff]
  %v1687 = vld [vmem:[%s176 + $0x1b8] sm:$0xff]
  %v1688 = vld [vmem:[%s176 + $0x1c8] sm:$0xff]
  %v1689 = vld [vmem:[%s176 + $0x1d0] sm:$0xff]
  %v1690 = vld [vmem:[%s176 + $0x1e0] sm:$0xff]
  %v1691 = vld [vmem:[%s176 + $0x1e8] sm:$0xff]
  %v1692 = vld [vmem:[%s176 + $0x1f8] sm:$0xff]
  %v1693 = vld [vmem:[%s176 + $0x200] sm:$0xff]
  %v1694 = vld [vmem:[%s176 + $0x210] sm:$0xff]
  %v1695 = vld [vmem:[%s176 + $0x218] sm:$0xff]
  %v1696 = vld [vmem:[%s176 + $0x228] sm:$0xff]
  %v1697 = vld [vmem:[%s176 + $0x230] sm:$0xff]
  %v1698 = vld [vmem:[%s176 + $0x240] sm:$0xff]
  %v1699 = vld [vmem:[%s176 + $0x248] sm:$0xff]
  %v1700 = vld [vmem:[%s176 + $0x258] sm:$0xff]
  %v1701 = vld [vmem:[%s176 + $0x260] sm:$0xff]
  %v1702 = vld [vmem:[%s176 + $0x270] sm:$0xff]
  %v1703 = vld [vmem:[%s176 + $0x278] sm:$0xff]
  %v1704 = vld [vmem:[%s176 + $0x288] sm:$0xff]
  %v1705 = vld [vmem:[%s176 + $0x290] sm:$0xff]
  %v1706 = vld [vmem:[%s176 + $0x2a0] sm:$0xff]
  %v1707 = vld [vmem:[%s176 + $0x2a8] sm:$0xff]
  %v1708 = vld [vmem:[%s176 + $0x2b8] sm:$0xff]
  %v1709 = vld [vmem:[%s176 + $0x2c0] sm:$0xff]
  %v1710 = vld [vmem:[%s176 + $0x2d0] sm:$0xff]
  %v1711 = vld [vmem:[%s176 + $0x2d8] sm:$0xff]
  %v1712 = vld [vmem:[%s176 + $0x2e8] sm:$0xff]
  %v1713 = vld [vmem:[%s176 + $0x2f0] sm:$0xff]
  %v1714 = vld [vmem:[%s176 + $0x300] sm:$0xff]
  %v1715 = vld [vmem:[%s176 + $0x308] sm:$0xff]
  %v1716 = vld [vmem:[%s176 + $0x318] sm:$0xff]
  %v1717 = vld [vmem:[%s176 + $0x320] sm:$0xff]
  %v1718 = vpack.c.bf16 %v1655, %v1654
  %v1719 = vpack.c.bf16 %v1657, %v1656
  %v1720 = vpack.c.bf16 %v1659, %v1658
  %v1721 = vpack.c.bf16 %v1661, %v1660
  %v1722 = vpack.c.bf16 %v1663, %v1662
  %v1723 = vpack.c.bf16 %v1665, %v1664
  %v1724 = vpack.c.bf16 %v1667, %v1666
  %v1725 = vpack.c.bf16 %v1669, %v1668
  %v1726 = vpack.c.bf16 %v1671, %v1670
  %v1727 = vpack.c.bf16 %v1673, %v1672
  %v1728 = vpack.c.bf16 %v1675, %v1674
  %v1729 = vpack.c.bf16 %v1677, %v1676
  %v1730 = vpack.c.bf16 %v1679, %v1678
  %v1731 = vpack.c.bf16 %v1681, %v1680
  %v1732 = vpack.c.bf16 %v1683, %v1682
  %v1733 = vpack.c.bf16 %v1685, %v1684
  %v1734 = vpack.c.bf16 %v1687, %v1686
  %v1735 = vpack.c.bf16 %v1689, %v1688
  %v1736 = vpack.c.bf16 %v1691, %v1690
  %v1737 = vpack.c.bf16 %v1693, %v1692
  %v1738 = vpack.c.bf16 %v1695, %v1694
  %v1739 = vpack.c.bf16 %v1697, %v1696
  %v1740 = vpack.c.bf16 %v1699, %v1698
  %v1741 = vpack.c.bf16 %v1701, %v1700
  %v1742 = vpack.c.bf16 %v1703, %v1702
  %v1743 = vpack.c.bf16 %v1705, %v1704
  %v1744 = vpack.c.bf16 %v1707, %v1706
  %v1745 = vpack.c.bf16 %v1709, %v1708
  %v1746 = vpack.c.bf16 %v1711, %v1710
  %v1747 = vpack.c.bf16 %v1713, %v1712
  %v1748 = vpack.c.bf16 %v1715, %v1714
  %v1749 = vpack.c.bf16 %v1717, %v1716
  %s1750 = scalar_lea.vmem %s1, 192
  %v1751 = vld [vmem:[%s1750] sm:$0xf]
  %v1752 = vld [vmem:[%s1750 + $0x4] sm:$0xf]
  %v1753 = vld [vmem:[%s1750 + $0x8] sm:$0xf]
  %v1754 = vld [vmem:[%s1750 + $0xc] sm:$0xf]
  %v1755 = vld [vmem:[%s1750 + $0x10] sm:$0xf]
  %v1756 = vld [vmem:[%s1750 + $0x14] sm:$0xf]
  %v1757 = vld [vmem:[%s1750 + $0x18] sm:$0xf]
  %v1758 = vld [vmem:[%s1750 + $0x1c] sm:$0xf]
  %v1759 = vld [vmem:[%s1750 + $0x20] sm:$0xf]
  %v1760 = vld [vmem:[%s1750 + $0x24] sm:$0xf]
  %v1761 = vld [vmem:[%s1750 + $0x28] sm:$0xf]
  %v1762 = vld [vmem:[%s1750 + $0x2c] sm:$0xf]
  %v1763 = vld [vmem:[%s1750 + $0x30] sm:$0xf]
  %v1764 = vld [vmem:[%s1750 + $0x34] sm:$0xf]
  %v1765 = vld [vmem:[%s1750 + $0x38] sm:$0xf]
  %v1766 = vld [vmem:[%s1750 + $0x3c] sm:$0xf]
  %v1783 = vunpack.c.l.b16 %v1751
  %v1784 = vunpack.c.l.b16 %v1752
  %v1785 = vunpack.c.l.b16 %v1753
  %v1786 = vunpack.c.l.b16 %v1754
  %v1787 = vunpack.c.l.b16 %v1755
  %v1788 = vunpack.c.l.b16 %v1756
  %v1789 = vunpack.c.l.b16 %v1757
  %v1790 = vunpack.c.l.b16 %v1758
  %v1791 = vunpack.c.l.b16 %v1759
  %v1792 = vunpack.c.l.b16 %v1760
  %v1793 = vunpack.c.l.b16 %v1761
  %v1794 = vunpack.c.l.b16 %v1762
  %v1795 = vunpack.c.l.b16 %v1763
  %v1796 = vunpack.c.l.b16 %v1764
  %v1797 = vunpack.c.l.b16 %v1765
  %v1798 = vunpack.c.l.b16 %v1766
  %v1799 = vpack.c.b16 %v1784, %v1783
  %v1800 = vpack.c.b16 %v1786, %v1785
  %v1801 = vpack.c.b16 %v1788, %v1787
  %v1802 = vpack.c.b16 %v1790, %v1789
  %v1803 = vpack.c.b16 %v1792, %v1791
  %v1804 = vpack.c.b16 %v1794, %v1793
  %v1805 = vpack.c.b16 %v1796, %v1795
  %v1806 = vpack.c.b16 %v1798, %v1797
  %1815 = vmatprep.subr.bf16.mxu0 0
  %1816 = vmatpush1.bf16.msra.mxu0 %v1799
  %1817 = vmatprep.subr.bf16.mxu0 0
  %1818 = vmatpush1.bf16.msra.mxu0 %v1800
  %1819 = vmatprep.subr.bf16.mxu0 0
  %1820 = vmatpush1.bf16.msra.mxu0 %v1801
  %1821 = vmatprep.subr.bf16.mxu0 0
  %1822 = vmatpush1.bf16.msra.mxu0 %v1802
  %1823 = vmatprep.subr.bf16.mxu0 0
  %1824 = vmatpush1.bf16.msra.mxu0 %v1803
  %1825 = vmatprep.subr.bf16.mxu0 0
  %1826 = vmatpush1.bf16.msra.mxu0 %v1804
  %1827 = vmatprep.subr.bf16.mxu0 0
  %1828 = vmatpush1.bf16.msra.mxu0 %v1805
  %1829 = vmatprep.subr.bf16.mxu0 0
  %1830 = vmatpush1.bf16.msra.mxu0 %v1806
  %1831 = vmatprep.subr.bf16.mxu0 0
  %1832 = vmatpush1.bf16.msra.mxu0 0
  %1833 = vmatprep.subr.bf16.mxu0 0
  %1834 = vmatpush1.bf16.msra.mxu0 0
  %1835 = vmatprep.subr.bf16.mxu0 0
  %1836 = vmatpush1.bf16.msra.mxu0 0
  %1837 = vmatprep.subr.bf16.mxu0 0
  %1838 = vmatpush1.bf16.msra.mxu0 0
  %1839 = vmatprep.subr.bf16.mxu0 0
  %1840 = vmatpush1.bf16.msra.mxu0 0
  %1841 = vmatprep.subr.bf16.mxu0 0
  %1842 = vmatpush1.bf16.msra.mxu0 0
  %1843 = vmatprep.subr.bf16.mxu0 0
  %1844 = vmatpush1.bf16.msra.mxu0 0
  %1845 = vmatprep.subr.bf16.mxu0 0
  %1846 = vmatpush1.bf16.msra.mxu0 0
  %1847 = vmatprep.mubr.bf16.mxu0 0
  %1848 = vmatmul.mubr.bf16.gmra.mrb[0].mxu0 %v1718
  %v1849 = vpop.f32.mrb[0].mxu0
  %v1850 = vadd.f32 0.0, %v1849
  %v1851 = vpop.f32.mrb[0].mxu0
  %v1852 = vpop.f32.mrb[0].mxu0
  %v1853 = vadd.f32 0.0, %v1852
  %v1854 = vpop.f32.mrb[0].mxu0
  %1855 = vmatprep.mubr.bf16.mxu0 0
  %1856 = vmatmul.mubr.bf16.gmra.mrb[0].mxu0 %v1719
  %v1857 = vpop.f32.mrb[0].mxu0
  %v1858 = vadd.f32 0.0, %v1857
  %v1859 = vpop.f32.mrb[0].mxu0
  %v1860 = vpop.f32.mrb[0].mxu0
  %v1861 = vadd.f32 0.0, %v1860
  %v1862 = vpop.f32.mrb[0].mxu0
  %1863 = vmatprep.mubr.bf16.mxu0 0
  %1864 = vmatmul.mubr.bf16.gmra.mrb[0].mxu0 %v1720
  %v1865 = vpop.f32.mrb[0].mxu0
  %v1866 = vadd.f32 0.0, %v1865
  %v1867 = vpop.f32.mrb[0].mxu0
  %v1868 = vpop.f32.mrb[0].mxu0
  %v1869 = vadd.f32 0.0, %v1868
  %v1870 = vpop.f32.mrb[0].mxu0
  %1871 = vmatprep.mubr.bf16.mxu0 0
  %1872 = vmatmul.mubr.bf16.gmra.mrb[0].mxu0 %v1721
  %v1873 = vpop.f32.mrb[0].mxu0
  %v1874 = vadd.f32 0.0, %v1873
  %v1875 = vpop.f32.mrb[0].mxu0
  %v1876 = vpop.f32.mrb[0].mxu0
  %v1877 = vadd.f32 0.0, %v1876
  %v1878 = vpop.f32.mrb[0].mxu0
  %1879 = vmatprep.mubr.bf16.mxu0 0
  %1880 = vmatmul.mubr.bf16.gmra.mrb[0].mxu0 %v1722
  %v1881 = vpop.f32.mrb[0].mxu0
  %v1882 = vadd.f32 0.0, %v1881
  %v1883 = vpop.f32.mrb[0].mxu0
  %v1884 = vpop.f32.mrb[0].mxu0
  %v1885 = vadd.f32 0.0, %v1884
  %v1886 = vpop.f32.mrb[0].mxu0
  %1887 = vmatprep.mubr.bf16.mxu0 0
  %1888 = vmatmul.mubr.bf16.gmra.mrb[0].mxu0 %v1723
  %v1889 = vpop.f32.mrb[0].mxu0
  %v1890 = vadd.f32 0.0, %v1889
  %v1891 = vpop.f32.mrb[0].mxu0
  %v1892 = vpop.f32.mrb[0].mxu0
  %v1893 = vadd.f32 0.0, %v1892
  %v1894 = vpop.f32.mrb[0].mxu0
  %1895 = vmatprep.mubr.bf16.mxu0 0
  %1896 = vmatmul.mubr.bf16.gmra.mrb[0].mxu0 %v1724
  %v1897 = vpop.f32.mrb[0].mxu0
  %v1898 = vadd.f32 0.0, %v1897
  %v1899 = vpop.f32.mrb[0].mxu0
  %v1900 = vpop.f32.mrb[0].mxu0
  %v1901 = vadd.f32 0.0, %v1900
  %v1902 = vpop.f32.mrb[0].mxu0
  %1903 = vmatprep.mubr.bf16.mxu0 0
  %1904 = vmatmul.mubr.bf16.gmra.mrb[0].mxu0 %v1725
  %v1905 = vpop.f32.mrb[0].mxu0
  %v1906 = vadd.f32 0.0, %v1905
  %v1907 = vpop.f32.mrb[0].mxu0
  %v1908 = vpop.f32.mrb[0].mxu0
  %v1909 = vadd.f32 0.0, %v1908
  %v1910 = vpop.f32.mrb[0].mxu0
  %1911 = vmatprep.mubr.bf16.mxu0 0
  %1912 = vmatmul.mubr.bf16.gmra.mrb[0].mxu0 %v1726
  %v1913 = vpop.f32.mrb[0].mxu0
  %v1914 = vadd.f32 0.0, %v1913
  %v1915 = vpop.f32.mrb[0].mxu0
  %v1916 = vpop.f32.mrb[0].mxu0
  %v1917 = vadd.f32 0.0, %v1916
  %v1918 = vpop.f32.mrb[0].mxu0
  %1919 = vmatprep.mubr.bf16.mxu0 0
  %1920 = vmatmul.mubr.bf16.gmra.mrb[0].mxu0 %v1727
  %v1921 = vpop.f32.mrb[0].mxu0
  %v1922 = vadd.f32 0.0, %v1921
  %v1923 = vpop.f32.mrb[0].mxu0
  %v1924 = vpop.f32.mrb[0].mxu0
  %v1925 = vadd.f32 0.0, %v1924
  %v1926 = vpop.f32.mrb[0].mxu0
  %1927 = vmatprep.mubr.bf16.mxu0 0
  %1928 = vmatmul.mubr.bf16.gmra.mrb[0].mxu0 %v1728
  %v1929 = vpop.f32.mrb[0].mxu0
  %v1930 = vadd.f32 0.0, %v1929
  %v1931 = vpop.f32.mrb[0].mxu0
  %v1932 = vpop.f32.mrb[0].mxu0
  %v1933 = vadd.f32 0.0, %v1932
  %v1934 = vpop.f32.mrb[0].mxu0
  %1935 = vmatprep.mubr.bf16.mxu0 0
  %1936 = vmatmul.mubr.bf16.gmra.mrb[0].mxu0 %v1729
  %v1937 = vpop.f32.mrb[0].mxu0
  %v1938 = vadd.f32 0.0, %v1937
  %v1939 = vpop.f32.mrb[0].mxu0
  %v1940 = vpop.f32.mrb[0].mxu0
  %v1941 = vadd.f32 0.0, %v1940
  %v1942 = vpop.f32.mrb[0].mxu0
  %1943 = vmatprep.mubr.bf16.mxu0 0
  %1944 = vmatmul.mubr.bf16.gmra.mrb[0].mxu0 %v1730
  %v1945 = vpop.f32.mrb[0].mxu0
  %v1946 = vadd.f32 0.0, %v1945
  %v1947 = vpop.f32.mrb[0].mxu0
  %v1948 = vpop.f32.mrb[0].mxu0
  %v1949 = vadd.f32 0.0, %v1948
  %v1950 = vpop.f32.mrb[0].mxu0
  %1951 = vmatprep.mubr.bf16.mxu0 0
  %1952 = vmatmul.mubr.bf16.gmra.mrb[0].mxu0 %v1731
  %v1953 = vpop.f32.mrb[0].mxu0
  %v1954 = vadd.f32 0.0, %v1953
  %v1955 = vpop.f32.mrb[0].mxu0
  %v1956 = vpop.f32.mrb[0].mxu0
  %v1957 = vadd.f32 0.0, %v1956
  %v1958 = vpop.f32.mrb[0].mxu0
  %1959 = vmatprep.mubr.bf16.mxu0 0
  %1960 = vmatmul.mubr.bf16.gmra.mrb[0].mxu0 %v1732
  %v1961 = vpop.f32.mrb[0].mxu0
  %v1962 = vadd.f32 0.0, %v1961
  %v1963 = vpop.f32.mrb[0].mxu0
  %v1964 = vpop.f32.mrb[0].mxu0
  %v1965 = vadd.f32 0.0, %v1964
  %v1966 = vpop.f32.mrb[0].mxu0
  %1967 = vmatprep.mubr.bf16.mxu0 0
  %1968 = vmatmul.mubr.bf16.gmra.mrb[0].mxu0 %v1733
  %v1969 = vpop.f32.mrb[0].mxu0
  %v1970 = vadd.f32 0.0, %v1969
  %v1971 = vpop.f32.mrb[0].mxu0
  %v1972 = vpop.f32.mrb[0].mxu0
  %v1973 = vadd.f32 0.0, %v1972
  %v1974 = vpop.f32.mrb[0].mxu0
  %1975 = vmatprep.mubr.bf16.mxu0 0
  %1976 = vmatmul.mubr.bf16.gmra.mrb[0].mxu0 %v1734
  %v1977 = vpop.f32.mrb[0].mxu0
  %v1978 = vadd.f32 0.0, %v1977
  %v1979 = vpop.f32.mrb[0].mxu0
  %v1980 = vpop.f32.mrb[0].mxu0
  %v1981 = vadd.f32 0.0, %v1980
  %v1982 = vpop.f32.mrb[0].mxu0
  %1983 = vmatprep.mubr.bf16.mxu0 0
  %1984 = vmatmul.mubr.bf16.gmra.mrb[0].mxu0 %v1735
  %v1985 = vpop.f32.mrb[0].mxu0
  %v1986 = vadd.f32 0.0, %v1985
  %v1987 = vpop.f32.mrb[0].mxu0
  %v1988 = vpop.f32.mrb[0].mxu0
  %v1989 = vadd.f32 0.0, %v1988
  %v1990 = vpop.f32.mrb[0].mxu0
  %1991 = vmatprep.mubr.bf16.mxu0 0
  %1992 = vmatmul.mubr.bf16.gmra.mrb[0].mxu0 %v1736
  %v1993 = vpop.f32.mrb[0].mxu0
  %v1994 = vadd.f32 0.0, %v1993
  %v1995 = vpop.f32.mrb[0].mxu0
  %v1996 = vpop.f32.mrb[0].mxu0
  %v1997 = vadd.f32 0.0, %v1996
  %v1998 = vpop.f32.mrb[0].mxu0
  %1999 = vmatprep.mubr.bf16.mxu0 0
  %2000 = vmatmul.mubr.bf16.gmra.mrb[0].mxu0 %v1737
  %v2001 = vpop.f32.mrb[0].mxu0
  %v2002 = vadd.f32 0.0, %v2001
  %v2003 = vpop.f32.mrb[0].mxu0
  %v2004 = vpop.f32.mrb[0].mxu0
  %v2005 = vadd.f32 0.0, %v2004
  %v2006 = vpop.f32.mrb[0].mxu0
  %2007 = vmatprep.mubr.bf16.mxu0 0
  %2008 = vmatmul.mubr.bf16.gmra.mrb[0].mxu0 %v1738
  %v2009 = vpop.f32.mrb[0].mxu0
  %v2010 = vadd.f32 0.0, %v2009
  %v2011 = vpop.f32.mrb[0].mxu0
  %v2012 = vpop.f32.mrb[0].mxu0
  %v2013 = vadd.f32 0.0, %v2012
  %v2014 = vpop.f32.mrb[0].mxu0
  %2015 = vmatprep.mubr.bf16.mxu0 0
  %2016 = vmatmul.mubr.bf16.gmra.mrb[0].mxu0 %v1739
  %v2017 = vpop.f32.mrb[0].mxu0
  %v2018 = vadd.f32 0.0, %v2017
  %v2019 = vpop.f32.mrb[0].mxu0
  %v2020 = vpop.f32.mrb[0].mxu0
  %v2021 = vadd.f32 0.0, %v2020
  %v2022 = vpop.f32.mrb[0].mxu0
  %2023 = vmatprep.mubr.bf16.mxu0 0
  %2024 = vmatmul.mubr.bf16.gmra.mrb[0].mxu0 %v1740
  %v2025 = vpop.f32.mrb[0].mxu0
  %v2026 = vadd.f32 0.0, %v2025
  %v2027 = vpop.f32.mrb[0].mxu0
  %v2028 = vpop.f32.mrb[0].mxu0
  %v2029 = vadd.f32 0.0, %v2028
  %v2030 = vpop.f32.mrb[0].mxu0
  %2031 = vmatprep.mubr.bf16.mxu0 0
  %2032 = vmatmul.mubr.bf16.gmra.mrb[0].mxu0 %v1741
  %v2033 = vpop.f32.mrb[0].mxu0
  %v2034 = vadd.f32 0.0, %v2033
  %v2035 = vpop.f32.mrb[0].mxu0
  %v2036 = vpop.f32.mrb[0].mxu0
  %v2037 = vadd.f32 0.0, %v2036
  %v2038 = vpop.f32.mrb[0].mxu0
  %2039 = vmatprep.mubr.bf16.mxu0 0
  %2040 = vmatmul.mubr.bf16.gmra.mrb[0].mxu0 %v1742
  %v2041 = vpop.f32.mrb[0].mxu0
  %v2042 = vadd.f32 0.0, %v2041
  %v2043 = vpop.f32.mrb[0].mxu0
  %v2044 = vpop.f32.mrb[0].mxu0
  %v2045 = vadd.f32 0.0, %v2044
  %v2046 = vpop.f32.mrb[0].mxu0
  %2047 = vmatprep.mubr.bf16.mxu0 0
  %2048 = vmatmul.mubr.bf16.gmra.mrb[0].mxu0 %v1743
  %v2049 = vpop.f32.mrb[0].mxu0
  %v2050 = vadd.f32 0.0, %v2049
  %v2051 = vpop.f32.mrb[0].mxu0
  %v2052 = vpop.f32.mrb[0].mxu0
  %v2053 = vadd.f32 0.0, %v2052
  %v2054 = vpop.f32.mrb[0].mxu0
  %2055 = vmatprep.mubr.bf16.mxu0 0
  %2056 = vmatmul.mubr.bf16.gmra.mrb[0].mxu0 %v1744
  %v2057 = vpop.f32.mrb[0].mxu0
  %v2058 = vadd.f32 0.0, %v2057
  %v2059 = vpop.f32.mrb[0].mxu0
  %v2060 = vpop.f32.mrb[0].mxu0
  %v2061 = vadd.f32 0.0, %v2060
  %v2062 = vpop.f32.mrb[0].mxu0
  %2063 = vmatprep.mubr.bf16.mxu0 0
  %2064 = vmatmul.mubr.bf16.gmra.mrb[0].mxu0 %v1745
  %v2065 = vpop.f32.mrb[0].mxu0
  %v2066 = vadd.f32 0.0, %v2065
  %v2067 = vpop.f32.mrb[0].mxu0
  %v2068 = vpop.f32.mrb[0].mxu0
  %v2069 = vadd.f32 0.0, %v2068
  %v2070 = vpop.f32.mrb[0].mxu0
  %2071 = vmatprep.mubr.bf16.mxu0 0
  %2072 = vmatmul.mubr.bf16.gmra.mrb[0].mxu0 %v1746
  %v2073 = vpop.f32.mrb[0].mxu0
  %v2074 = vadd.f32 0.0, %v2073
  %v2075 = vpop.f32.mrb[0].mxu0
  %v2076 = vpop.f32.mrb[0].mxu0
  %v2077 = vadd.f32 0.0, %v2076
  %v2078 = vpop.f32.mrb[0].mxu0
  %2079 = vmatprep.mubr.bf16.mxu0 0
  %2080 = vmatmul.mubr.bf16.gmra.mrb[0].mxu0 %v1747
  %v2081 = vpop.f32.mrb[0].mxu0
  %v2082 = vadd.f32 0.0, %v2081
  %v2083 = vpop.f32.mrb[0].mxu0
  %v2084 = vpop.f32.mrb[0].mxu0
  %v2085 = vadd.f32 0.0, %v2084
  %v2086 = vpop.f32.mrb[0].mxu0
  %2087 = vmatprep.mubr.bf16.mxu0 0
  %2088 = vmatmul.mubr.bf16.gmra.mrb[0].mxu0 %v1748
  %v2089 = vpop.f32.mrb[0].mxu0
  %v2090 = vadd.f32 0.0, %v2089
  %v2091 = vpop.f32.mrb[0].mxu0
  %v2092 = vpop.f32.mrb[0].mxu0
  %v2093 = vadd.f32 0.0, %v2092
  %v2094 = vpop.f32.mrb[0].mxu0
  %2095 = vmatprep.mubr.bf16.mxu0 0
  %2096 = vmatmul.mubr.bf16.gmra.mrb[0].mxu0 %v1749
  %v2097 = vpop.f32.mrb[0].mxu0
  %v2098 = vadd.f32 0.0, %v2097
  %v2099 = vpop.f32.mrb[0].mxu0
  %v2100 = vpop.f32.mrb[0].mxu0
  %v2101 = vadd.f32 0.0, %v2100
  %v2102 = vpop.f32.mrb[0].mxu0
  %2103 = vdwg.mxu0
  %v2104 = vadd.f32 %v1590, %v1850
  %v2105 = vadd.f32 %v1591, %v1853
  %v2106 = vadd.f32 %v1592, %v1858
  %v2107 = vadd.f32 %v1593, %v1861
  %v2108 = vadd.f32 %v1594, %v1866
  %v2109 = vadd.f32 %v1595, %v1869
  %v2110 = vadd.f32 %v1596, %v1874
  %v2111 = vadd.f32 %v1597, %v1877
  %v2112 = vadd.f32 %v1598, %v1882
  %v2113 = vadd.f32 %v1599, %v1885
  %v2114 = vadd.f32 %v1600, %v1890
  %v2115 = vadd.f32 %v1601, %v1893
  %v2116 = vadd.f32 %v1602, %v1898
  %v2117 = vadd.f32 %v1603, %v1901
  %v2118 = vadd.f32 %v1604, %v1906
  %v2119 = vadd.f32 %v1605, %v1909
  %v2120 = vadd.f32 %v1606, %v1914
  %v2121 = vadd.f32 %v1607, %v1917
  %v2122 = vadd.f32 %v1608, %v1922
  %v2123 = vadd.f32 %v1609, %v1925
  %v2124 = vadd.f32 %v1610, %v1930
  %v2125 = vadd.f32 %v1611, %v1933
  %v2126 = vadd.f32 %v1612, %v1938
  %v2127 = vadd.f32 %v1613, %v1941
  %v2128 = vadd.f32 %v1614, %v1946
  %v2129 = vadd.f32 %v1615, %v1949
  %v2130 = vadd.f32 %v1616, %v1954
  %v2131 = vadd.f32 %v1617, %v1957
  %v2132 = vadd.f32 %v1618, %v1962
  %v2133 = vadd.f32 %v1619, %v1965
  %v2134 = vadd.f32 %v1620, %v1970
  %v2135 = vadd.f32 %v1621, %v1973
  %v2136 = vadd.f32 %v1622, %v1978
  %v2137 = vadd.f32 %v1623, %v1981
  %v2138 = vadd.f32 %v1624, %v1986
  %v2139 = vadd.f32 %v1625, %v1989
  %v2140 = vadd.f32 %v1626, %v1994
  %v2141 = vadd.f32 %v1627, %v1997
  %v2142 = vadd.f32 %v1628, %v2002
  %v2143 = vadd.f32 %v1629, %v2005
  %v2144 = vadd.f32 %v1630, %v2010
  %v2145 = vadd.f32 %v1631, %v2013
  %v2146 = vadd.f32 %v1632, %v2018
  %v2147 = vadd.f32 %v1633, %v2021
  %v2148 = vadd.f32 %v1634, %v2026
  %v2149 = vadd.f32 %v1635, %v2029
  %v2150 = vadd.f32 %v1636, %v2034
  %v2151 = vadd.f32 %v1637, %v2037
  %v2152 = vadd.f32 %v1638, %v2042
  %v2153 = vadd.f32 %v1639, %v2045
  %v2154 = vadd.f32 %v1640, %v2050
  %v2155 = vadd.f32 %v1641, %v2053
  %v2156 = vadd.f32 %v1642, %v2058
  %v2157 = vadd.f32 %v1643, %v2061
  %v2158 = vadd.f32 %v1644, %v2066
  %v2159 = vadd.f32 %v1645, %v2069
  %v2160 = vadd.f32 %v1646, %v2074
  %v2161 = vadd.f32 %v1647, %v2077
  %v2162 = vadd.f32 %v1648, %v2082
  %v2163 = vadd.f32 %v1649, %v2085
  %v2164 = vadd.f32 %v1650, %v2090
  %v2165 = vadd.f32 %v1651, %v2093
  %v2166 = vadd.f32 %v1652, %v2098
  %v2167 = vadd.f32 %v1653, %v2101
  %v2168 = vld [vmem:[%s176 + $0x1] sm:$0xff]
  %v2169 = vld [vmem:[%s176 + $0x9] sm:$0xff]
  %v2170 = vld [vmem:[%s176 + $0x19] sm:$0xff]
  %v2171 = vld [vmem:[%s176 + $0x21] sm:$0xff]
  %v2172 = vld [vmem:[%s176 + $0x31] sm:$0xff]
  %v2173 = vld [vmem:[%s176 + $0x39] sm:$0xff]
  %v2174 = vld [vmem:[%s176 + $0x49] sm:$0xff]
  %v2175 = vld [vmem:[%s176 + $0x51] sm:$0xff]
  %v2176 = vld [vmem:[%s176 + $0x61] sm:$0xff]
  %v2177 = vld [vmem:[%s176 + $0x69] sm:$0xff]
  %v2178 = vld [vmem:[%s176 + $0x79] sm:$0xff]
  %v2179 = vld [vmem:[%s176 + $0x81] sm:$0xff]
  %v2180 = vld [vmem:[%s176 + $0x91] sm:$0xff]
  %v2181 = vld [vmem:[%s176 + $0x99] sm:$0xff]
  %v2182 = vld [vmem:[%s176 + $0xa9] sm:$0xff]
  %v2183 = vld [vmem:[%s176 + $0xb1] sm:$0xff]
  %v2184 = vld [vmem:[%s176 + $0xc1] sm:$0xff]
  %v2185 = vld [vmem:[%s176 + $0xc9] sm:$0xff]
  %v2186 = vld [vmem:[%s176 + $0xd9] sm:$0xff]
  %v2187 = vld [vmem:[%s176 + $0xe1] sm:$0xff]
  %v2188 = vld [vmem:[%s176 + $0xf1] sm:$0xff]
  %v2189 = vld [vmem:[%s176 + $0xf9] sm:$0xff]
  %v2190 = vld [vmem:[%s176 + $0x109] sm:$0xff]
  %v2191 = vld [vmem:[%s176 + $0x111] sm:$0xff]
  %v2192 = vld [vmem:[%s176 + $0x121] sm:$0xff]
  %v2193 = vld [vmem:[%s176 + $0x129] sm:$0xff]
  %v2194 = vld [vmem:[%s176 + $0x139] sm:$0xff]
  %v2195 = vld [vmem:[%s176 + $0x141] sm:$0xff]
  %v2196 = vld [vmem:[%s176 + $0x151] sm:$0xff]
  %v2197 = vld [vmem:[%s176 + $0x159] sm:$0xff]
  %v2198 = vld [vmem:[%s176 + $0x169] sm:$0xff]
  %v2199 = vld [vmem:[%s176 + $0x171] sm:$0xff]
  %v2200 = vld [vmem:[%s176 + $0x1b1] sm:$0xff]
  %v2201 = vld [vmem:[%s176 + $0x1b9] sm:$0xff]
  %v2202 = vld [vmem:[%s176 + $0x1c9] sm:$0xff]
  %v2203 = vld [vmem:[%s176 + $0x1d1] sm:$0xff]
  %v2204 = vld [vmem:[%s176 + $0x1e1] sm:$0xff]
  %v2205 = vld [vmem:[%s176 + $0x1e9] sm:$0xff]
  %v2206 = vld [vmem:[%s176 + $0x1f9] sm:$0xff]
  %v2207 = vld [vmem:[%s176 + $0x201] sm:$0xff]
  %v2208 = vld [vmem:[%s176 + $0x211] sm:$0xff]
  %v2209 = vld [vmem:[%s176 + $0x219] sm:$0xff]
  %v2210 = vld [vmem:[%s176 + $0x229] sm:$0xff]
  %v2211 = vld [vmem:[%s176 + $0x231] sm:$0xff]
  %v2212 = vld [vmem:[%s176 + $0x241] sm:$0xff]
  %v2213 = vld [vmem:[%s176 + $0x249] sm:$0xff]
  %v2214 = vld [vmem:[%s176 + $0x259] sm:$0xff]
  %v2215 = vld [vmem:[%s176 + $0x261] sm:$0xff]
  %v2216 = vld [vmem:[%s176 + $0x271] sm:$0xff]
  %v2217 = vld [vmem:[%s176 + $0x279] sm:$0xff]
  %v2218 = vld [vmem:[%s176 + $0x289] sm:$0xff]
  %v2219 = vld [vmem:[%s176 + $0x291] sm:$0xff]
  %v2220 = vld [vmem:[%s176 + $0x2a1] sm:$0xff]
  %v2221 = vld [vmem:[%s176 + $0x2a9] sm:$0xff]
  %v2222 = vld [vmem:[%s176 + $0x2b9] sm:$0xff]
  %v2223 = vld [vmem:[%s176 + $0x2c1] sm:$0xff]
  %v2224 = vld [vmem:[%s176 + $0x2d1] sm:$0xff]
  %v2225 = vld [vmem:[%s176 + $0x2d9] sm:$0xff]
  %v2226 = vld [vmem:[%s176 + $0x2e9] sm:$0xff]
  %v2227 = vld [vmem:[%s176 + $0x2f1] sm:$0xff]
  %v2228 = vld [vmem:[%s176 + $0x301] sm:$0xff]
  %v2229 = vld [vmem:[%s176 + $0x309] sm:$0xff]
  %v2230 = vld [vmem:[%s176 + $0x319] sm:$0xff]
  %v2231 = vld [vmem:[%s176 + $0x321] sm:$0xff]
  %v2232 = vpack.c.bf16 %v2169, %v2168
  %v2233 = vpack.c.bf16 %v2171, %v2170
  %v2234 = vpack.c.bf16 %v2173, %v2172
  %v2235 = vpack.c.bf16 %v2175, %v2174
  %v2236 = vpack.c.bf16 %v2177, %v2176
  %v2237 = vpack.c.bf16 %v2179, %v2178
  %v2238 = vpack.c.bf16 %v2181, %v2180
  %v2239 = vpack.c.bf16 %v2183, %v2182
  %v2240 = vpack.c.bf16 %v2185, %v2184
  %v2241 = vpack.c.bf16 %v2187, %v2186
  %v2242 = vpack.c.bf16 %v2189, %v2188
  %v2243 = vpack.c.bf16 %v2191, %v2190
  %v2244 = vpack.c.bf16 %v2193, %v2192
  %v2245 = vpack.c.bf16 %v2195, %v2194
  %v2246 = vpack.c.bf16 %v2197, %v2196
  %v2247 = vpack.c.bf16 %v2199, %v2198
  %v2248 = vpack.c.bf16 %v2201, %v2200
  %v2249 = vpack.c.bf16 %v2203, %v2202
  %v2250 = vpack.c.bf16 %v2205, %v2204
  %v2251 = vpack.c.bf16 %v2207, %v2206
  %v2252 = vpack.c.bf16 %v2209, %v2208
  %v2253 = vpack.c.bf16 %v2211, %v2210
  %v2254 = vpack.c.bf16 %v2213, %v2212
  %v2255 = vpack.c.bf16 %v2215, %v2214
  %v2256 = vpack.c.bf16 %v2217, %v2216
  %v2257 = vpack.c.bf16 %v2219, %v2218
  %v2258 = vpack.c.bf16 %v2221, %v2220
  %v2259 = vpack.c.bf16 %v2223, %v2222
  %v2260 = vpack.c.bf16 %v2225, %v2224
  %v2261 = vpack.c.bf16 %v2227, %v2226
  %v2262 = vpack.c.bf16 %v2229, %v2228
  %v2263 = vpack.c.bf16 %v2231, %v2230
  %s2264 = scalar_lea.vmem %s1, 256
  %v2265 = vld [vmem:[%s2264] sm:$0xf]
  %v2266 = vld [vmem:[%s2264 + $0x4] sm:$0xf]
  %v2267 = vld [vmem:[%s2264 + $0x8] sm:$0xf]
  %v2268 = vld [vmem:[%s2264 + $0xc] sm:$0xf]
  %v2269 = vld [vmem:[%s2264 + $0x10] sm:$0xf]
  %v2270 = vld [vmem:[%s2264 + $0x14] sm:$0xf]
  %v2271 = vld [vmem:[%s2264 + $0x18] sm:$0xf]
  %v2272 = vld [vmem:[%s2264 + $0x1c] sm:$0xf]
  %v2273 = vld [vmem:[%s2264 + $0x20] sm:$0xf]
  %v2274 = vld [vmem:[%s2264 + $0x24] sm:$0xf]
  %v2275 = vld [vmem:[%s2264 + $0x28] sm:$0xf]
  %v2276 = vld [vmem:[%s2264 + $0x2c] sm:$0xf]
  %v2277 = vld [vmem:[%s2264 + $0x30] sm:$0xf]
  %v2278 = vld [vmem:[%s2264 + $0x34] sm:$0xf]
  %v2279 = vld [vmem:[%s2264 + $0x38] sm:$0xf]
  %v2280 = vld [vmem:[%s2264 + $0x3c] sm:$0xf]
  %v2297 = vunpack.c.l.b16 %v2265
  %v2298 = vunpack.c.l.b16 %v2266
  %v2299 = vunpack.c.l.b16 %v2267
  %v2300 = vunpack.c.l.b16 %v2268
  %v2301 = vunpack.c.l.b16 %v2269
  %v2302 = vunpack.c.l.b16 %v2270
  %v2303 = vunpack.c.l.b16 %v2271
  %v2304 = vunpack.c.l.b16 %v2272
  %v2305 = vunpack.c.l.b16 %v2273
  %v2306 = vunpack.c.l.b16 %v2274
  %v2307 = vunpack.c.l.b16 %v2275
  %v2308 = vunpack.c.l.b16 %v2276
  %v2309 = vunpack.c.l.b16 %v2277
  %v2310 = vunpack.c.l.b16 %v2278
  %v2311 = vunpack.c.l.b16 %v2279
  %v2312 = vunpack.c.l.b16 %v2280
  %v2313 = vpack.c.b16 %v2298, %v2297
  %v2314 = vpack.c.b16 %v2300, %v2299
  %v2315 = vpack.c.b16 %v2302, %v2301
  %v2316 = vpack.c.b16 %v2304, %v2303
  %v2317 = vpack.c.b16 %v2306, %v2305
  %v2318 = vpack.c.b16 %v2308, %v2307
  %v2319 = vpack.c.b16 %v2310, %v2309
  %v2320 = vpack.c.b16 %v2312, %v2311
  %2329 = vmatprep.subr.bf16.mxu0 0
  %2330 = vmatpush1.bf16.msra.mxu0 %v2313
  %2331 = vmatprep.subr.bf16.mxu0 0
  %2332 = vmatpush1.bf16.msra.mxu0 %v2314
  %2333 = vmatprep.subr.bf16.mxu0 0
  %2334 = vmatpush1.bf16.msra.mxu0 %v2315
  %2335 = vmatprep.subr.bf16.mxu0 0
  %2336 = vmatpush1.bf16.msra.mxu0 %v2316
  %2337 = vmatprep.subr.bf16.mxu0 0
  %2338 = vmatpush1.bf16.msra.mxu0 %v2317
  %2339 = vmatprep.subr.bf16.mxu0 0
  %2340 = vmatpush1.bf16.msra.mxu0 %v2318
  %2341 = vmatprep.subr.bf16.mxu0 0
  %2342 = vmatpush1.bf16.msra.mxu0 %v2319
  %2343 = vmatprep.subr.bf16.mxu0 0
  %2344 = vmatpush1.bf16.msra.mxu0 %v2320
  %2345 = vmatprep.subr.bf16.mxu0 0
  %2346 = vmatpush1.bf16.msra.mxu0 0
  %2347 = vmatprep.subr.bf16.mxu0 0
  %2348 = vmatpush1.bf16.msra.mxu0 0
  %2349 = vmatprep.subr.bf16.mxu0 0
  %2350 = vmatpush1.bf16.msra.mxu0 0
  %2351 = vmatprep.subr.bf16.mxu0 0
  %2352 = vmatpush1.bf16.msra.mxu0 0
  %2353 = vmatprep.subr.bf16.mxu0 0
  %2354 = vmatpush1.bf16.msra.mxu0 0
  %2355 = vmatprep.subr.bf16.mxu0 0
  %2356 = vmatpush1.bf16.msra.mxu0 0
  %2357 = vmatprep.subr.bf16.mxu0 0
  %2358 = vmatpush1.bf16.msra.mxu0 0
  %2359 = vmatprep.subr.bf16.mxu0 0
  %2360 = vmatpush1.bf16.msra.mxu0 0
  %2361 = vmatprep.mubr.bf16.mxu0 0
  %2362 = vmatmul.mubr.bf16.gmra.mrb[0].mxu0 %v2232
  %v2363 = vpop.f32.mrb[0].mxu0
  %v2364 = vadd.f32 0.0, %v2363
  %v2365 = vpop.f32.mrb[0].mxu0
  %v2366 = vpop.f32.mrb[0].mxu0
  %v2367 = vadd.f32 0.0, %v2366
  %v2368 = vpop.f32.mrb[0].mxu0
  %2369 = vmatprep.mubr.bf16.mxu0 0
  %2370 = vmatmul.mubr.bf16.gmra.mrb[0].mxu0 %v2233
  %v2371 = vpop.f32.mrb[0].mxu0
  %v2372 = vadd.f32 0.0, %v2371
  %v2373 = vpop.f32.mrb[0].mxu0
  %v2374 = vpop.f32.mrb[0].mxu0
  %v2375 = vadd.f32 0.0, %v2374
  %v2376 = vpop.f32.mrb[0].mxu0
  %2377 = vmatprep.mubr.bf16.mxu0 0
  %2378 = vmatmul.mubr.bf16.gmra.mrb[0].mxu0 %v2234
  %v2379 = vpop.f32.mrb[0].mxu0
  %v2380 = vadd.f32 0.0, %v2379
  %v2381 = vpop.f32.mrb[0].mxu0
  %v2382 = vpop.f32.mrb[0].mxu0
  %v2383 = vadd.f32 0.0, %v2382
  %v2384 = vpop.f32.mrb[0].mxu0
  %2385 = vmatprep.mubr.bf16.mxu0 0
  %2386 = vmatmul.mubr.bf16.gmra.mrb[0].mxu0 %v2235
  %v2387 = vpop.f32.mrb[0].mxu0
  %v2388 = vadd.f32 0.0, %v2387
  %v2389 = vpop.f32.mrb[0].mxu0
  %v2390 = vpop.f32.mrb[0].mxu0
  %v2391 = vadd.f32 0.0, %v2390
  %v2392 = vpop.f32.mrb[0].mxu0
  %2393 = vmatprep.mubr.bf16.mxu0 0
  %2394 = vmatmul.mubr.bf16.gmra.mrb[0].mxu0 %v2236
  %v2395 = vpop.f32.mrb[0].mxu0
  %v2396 = vadd.f32 0.0, %v2395
  %v2397 = vpop.f32.mrb[0].mxu0
  %v2398 = vpop.f32.mrb[0].mxu0
  %v2399 = vadd.f32 0.0, %v2398
  %v2400 = vpop.f32.mrb[0].mxu0
  %2401 = vmatprep.mubr.bf16.mxu0 0
  %2402 = vmatmul.mubr.bf16.gmra.mrb[0].mxu0 %v2237
  %v2403 = vpop.f32.mrb[0].mxu0
  %v2404 = vadd.f32 0.0, %v2403
  %v2405 = vpop.f32.mrb[0].mxu0
  %v2406 = vpop.f32.mrb[0].mxu0
  %v2407 = vadd.f32 0.0, %v2406
  %v2408 = vpop.f32.mrb[0].mxu0
  %2409 = vmatprep.mubr.bf16.mxu0 0
  %2410 = vmatmul.mubr.bf16.gmra.mrb[0].mxu0 %v2238
  %v2411 = vpop.f32.mrb[0].mxu0
  %v2412 = vadd.f32 0.0, %v2411
  %v2413 = vpop.f32.mrb[0].mxu0
  %v2414 = vpop.f32.mrb[0].mxu0
  %v2415 = vadd.f32 0.0, %v2414
  %v2416 = vpop.f32.mrb[0].mxu0
  %2417 = vmatprep.mubr.bf16.mxu0 0
  %2418 = vmatmul.mubr.bf16.gmra.mrb[0].mxu0 %v2239
  %v2419 = vpop.f32.mrb[0].mxu0
  %v2420 = vadd.f32 0.0, %v2419
  %v2421 = vpop.f32.mrb[0].mxu0
  %v2422 = vpop.f32.mrb[0].mxu0
  %v2423 = vadd.f32 0.0, %v2422
  %v2424 = vpop.f32.mrb[0].mxu0
  %2425 = vmatprep.mubr.bf16.mxu0 0
  %2426 = vmatmul.mubr.bf16.gmra.mrb[0].mxu0 %v2240
  %v2427 = vpop.f32.mrb[0].mxu0
  %v2428 = vadd.f32 0.0, %v2427
  %v2429 = vpop.f32.mrb[0].mxu0
  %v2430 = vpop.f32.mrb[0].mxu0
  %v2431 = vadd.f32 0.0, %v2430
  %v2432 = vpop.f32.mrb[0].mxu0
  %2433 = vmatprep.mubr.bf16.mxu0 0
  %2434 = vmatmul.mubr.bf16.gmra.mrb[0].mxu0 %v2241
  %v2435 = vpop.f32.mrb[0].mxu0
  %v2436 = vadd.f32 0.0, %v2435
  %v2437 = vpop.f32.mrb[0].mxu0
  %v2438 = vpop.f32.mrb[0].mxu0
  %v2439 = vadd.f32 0.0, %v2438
  %v2440 = vpop.f32.mrb[0].mxu0
  %2441 = vmatprep.mubr.bf16.mxu0 0
  %2442 = vmatmul.mubr.bf16.gmra.mrb[0].mxu0 %v2242
  %v2443 = vpop.f32.mrb[0].mxu0
  %v2444 = vadd.f32 0.0, %v2443
  %v2445 = vpop.f32.mrb[0].mxu0
  %v2446 = vpop.f32.mrb[0].mxu0
  %v2447 = vadd.f32 0.0, %v2446
  %v2448 = vpop.f32.mrb[0].mxu0
  %2449 = vmatprep.mubr.bf16.mxu0 0
  %2450 = vmatmul.mubr.bf16.gmra.mrb[0].mxu0 %v2243
  %v2451 = vpop.f32.mrb[0].mxu0
  %v2452 = vadd.f32 0.0, %v2451
  %v2453 = vpop.f32.mrb[0].mxu0
  %v2454 = vpop.f32.mrb[0].mxu0
  %v2455 = vadd.f32 0.0, %v2454
  %v2456 = vpop.f32.mrb[0].mxu0
  %2457 = vmatprep.mubr.bf16.mxu0 0
  %2458 = vmatmul.mubr.bf16.gmra.mrb[0].mxu0 %v2244
  %v2459 = vpop.f32.mrb[0].mxu0
  %v2460 = vadd.f32 0.0, %v2459
  %v2461 = vpop.f32.mrb[0].mxu0
  %v2462 = vpop.f32.mrb[0].mxu0
  %v2463 = vadd.f32 0.0, %v2462
  %v2464 = vpop.f32.mrb[0].mxu0
  %2465 = vmatprep.mubr.bf16.mxu0 0
  %2466 = vmatmul.mubr.bf16.gmra.mrb[0].mxu0 %v2245
  %v2467 = vpop.f32.mrb[0].mxu0
  %v2468 = vadd.f32 0.0, %v2467
  %v2469 = vpop.f32.mrb[0].mxu0
  %v2470 = vpop.f32.mrb[0].mxu0
  %v2471 = vadd.f32 0.0, %v2470
  %v2472 = vpop.f32.mrb[0].mxu0
  %2473 = vmatprep.mubr.bf16.mxu0 0
  %2474 = vmatmul.mubr.bf16.gmra.mrb[0].mxu0 %v2246
  %v2475 = vpop.f32.mrb[0].mxu0
  %v2476 = vadd.f32 0.0, %v2475
  %v2477 = vpop.f32.mrb[0].mxu0
  %v2478 = vpop.f32.mrb[0].mxu0
  %v2479 = vadd.f32 0.0, %v2478
  %v2480 = vpop.f32.mrb[0].mxu0
  %2481 = vmatprep.mubr.bf16.mxu0 0
  %2482 = vmatmul.mubr.bf16.gmra.mrb[0].mxu0 %v2247
  %v2483 = vpop.f32.mrb[0].mxu0
  %v2484 = vadd.f32 0.0, %v2483
  %v2485 = vpop.f32.mrb[0].mxu0
  %v2486 = vpop.f32.mrb[0].mxu0
  %v2487 = vadd.f32 0.0, %v2486
  %v2488 = vpop.f32.mrb[0].mxu0
  %2489 = vmatprep.mubr.bf16.mxu0 0
  %2490 = vmatmul.mubr.bf16.gmra.mrb[0].mxu0 %v2248
  %v2491 = vpop.f32.mrb[0].mxu0
  %v2492 = vadd.f32 0.0, %v2491
  %v2493 = vpop.f32.mrb[0].mxu0
  %v2494 = vpop.f32.mrb[0].mxu0
  %v2495 = vadd.f32 0.0, %v2494
  %v2496 = vpop.f32.mrb[0].mxu0
  %2497 = vmatprep.mubr.bf16.mxu0 0
  %2498 = vmatmul.mubr.bf16.gmra.mrb[0].mxu0 %v2249
  %v2499 = vpop.f32.mrb[0].mxu0
  %v2500 = vadd.f32 0.0, %v2499
  %v2501 = vpop.f32.mrb[0].mxu0
  %v2502 = vpop.f32.mrb[0].mxu0
  %v2503 = vadd.f32 0.0, %v2502
  %v2504 = vpop.f32.mrb[0].mxu0
  %2505 = vmatprep.mubr.bf16.mxu0 0
  %2506 = vmatmul.mubr.bf16.gmra.mrb[0].mxu0 %v2250
  %v2507 = vpop.f32.mrb[0].mxu0
  %v2508 = vadd.f32 0.0, %v2507
  %v2509 = vpop.f32.mrb[0].mxu0
  %v2510 = vpop.f32.mrb[0].mxu0
  %v2511 = vadd.f32 0.0, %v2510
  %v2512 = vpop.f32.mrb[0].mxu0
  %2513 = vmatprep.mubr.bf16.mxu0 0
  %2514 = vmatmul.mubr.bf16.gmra.mrb[0].mxu0 %v2251
  %v2515 = vpop.f32.mrb[0].mxu0
  %v2516 = vadd.f32 0.0, %v2515
  %v2517 = vpop.f32.mrb[0].mxu0
  %v2518 = vpop.f32.mrb[0].mxu0
  %v2519 = vadd.f32 0.0, %v2518
  %v2520 = vpop.f32.mrb[0].mxu0
  %2521 = vmatprep.mubr.bf16.mxu0 0
  %2522 = vmatmul.mubr.bf16.gmra.mrb[0].mxu0 %v2252
  %v2523 = vpop.f32.mrb[0].mxu0
  %v2524 = vadd.f32 0.0, %v2523
  %v2525 = vpop.f32.mrb[0].mxu0
  %v2526 = vpop.f32.mrb[0].mxu0
  %v2527 = vadd.f32 0.0, %v2526
  %v2528 = vpop.f32.mrb[0].mxu0
  %2529 = vmatprep.mubr.bf16.mxu0 0
  %2530 = vmatmul.mubr.bf16.gmra.mrb[0].mxu0 %v2253
  %v2531 = vpop.f32.mrb[0].mxu0
  %v2532 = vadd.f32 0.0, %v2531
  %v2533 = vpop.f32.mrb[0].mxu0
  %v2534 = vpop.f32.mrb[0].mxu0
  %v2535 = vadd.f32 0.0, %v2534
  %v2536 = vpop.f32.mrb[0].mxu0
  %2537 = vmatprep.mubr.bf16.mxu0 0
  %2538 = vmatmul.mubr.bf16.gmra.mrb[0].mxu0 %v2254
  %v2539 = vpop.f32.mrb[0].mxu0
  %v2540 = vadd.f32 0.0, %v2539
  %v2541 = vpop.f32.mrb[0].mxu0
  %v2542 = vpop.f32.mrb[0].mxu0
  %v2543 = vadd.f32 0.0, %v2542
  %v2544 = vpop.f32.mrb[0].mxu0
  %2545 = vmatprep.mubr.bf16.mxu0 0
  %2546 = vmatmul.mubr.bf16.gmra.mrb[0].mxu0 %v2255
  %v2547 = vpop.f32.mrb[0].mxu0
  %v2548 = vadd.f32 0.0, %v2547
  %v2549 = vpop.f32.mrb[0].mxu0
  %v2550 = vpop.f32.mrb[0].mxu0
  %v2551 = vadd.f32 0.0, %v2550
  %v2552 = vpop.f32.mrb[0].mxu0
  %2553 = vmatprep.mubr.bf16.mxu0 0
  %2554 = vmatmul.mubr.bf16.gmra.mrb[0].mxu0 %v2256
  %v2555 = vpop.f32.mrb[0].mxu0
  %v2556 = vadd.f32 0.0, %v2555
  %v2557 = vpop.f32.mrb[0].mxu0
  %v2558 = vpop.f32.mrb[0].mxu0
  %v2559 = vadd.f32 0.0, %v2558
  %v2560 = vpop.f32.mrb[0].mxu0
  %2561 = vmatprep.mubr.bf16.mxu0 0
  %2562 = vmatmul.mubr.bf16.gmra.mrb[0].mxu0 %v2257
  %v2563 = vpop.f32.mrb[0].mxu0
  %v2564 = vadd.f32 0.0, %v2563
  %v2565 = vpop.f32.mrb[0].mxu0
  %v2566 = vpop.f32.mrb[0].mxu0
  %v2567 = vadd.f32 0.0, %v2566
  %v2568 = vpop.f32.mrb[0].mxu0
  %2569 = vmatprep.mubr.bf16.mxu0 0
  %2570 = vmatmul.mubr.bf16.gmra.mrb[0].mxu0 %v2258
  %v2571 = vpop.f32.mrb[0].mxu0
  %v2572 = vadd.f32 0.0, %v2571
  %v2573 = vpop.f32.mrb[0].mxu0
  %v2574 = vpop.f32.mrb[0].mxu0
  %v2575 = vadd.f32 0.0, %v2574
  %v2576 = vpop.f32.mrb[0].mxu0
  %2577 = vmatprep.mubr.bf16.mxu0 0
  %2578 = vmatmul.mubr.bf16.gmra.mrb[0].mxu0 %v2259
  %v2579 = vpop.f32.mrb[0].mxu0
  %v2580 = vadd.f32 0.0, %v2579
  %v2581 = vpop.f32.mrb[0].mxu0
  %v2582 = vpop.f32.mrb[0].mxu0
  %v2583 = vadd.f32 0.0, %v2582
  %v2584 = vpop.f32.mrb[0].mxu0
  %2585 = vmatprep.mubr.bf16.mxu0 0
  %2586 = vmatmul.mubr.bf16.gmra.mrb[0].mxu0 %v2260
  %v2587 = vpop.f32.mrb[0].mxu0
  %v2588 = vadd.f32 0.0, %v2587
  %v2589 = vpop.f32.mrb[0].mxu0
  %v2590 = vpop.f32.mrb[0].mxu0
  %v2591 = vadd.f32 0.0, %v2590
  %v2592 = vpop.f32.mrb[0].mxu0
  %2593 = vmatprep.mubr.bf16.mxu0 0
  %2594 = vmatmul.mubr.bf16.gmra.mrb[0].mxu0 %v2261
  %v2595 = vpop.f32.mrb[0].mxu0
  %v2596 = vadd.f32 0.0, %v2595
  %v2597 = vpop.f32.mrb[0].mxu0
  %v2598 = vpop.f32.mrb[0].mxu0
  %v2599 = vadd.f32 0.0, %v2598
  %v2600 = vpop.f32.mrb[0].mxu0
  %2601 = vmatprep.mubr.bf16.mxu0 0
  %2602 = vmatmul.mubr.bf16.gmra.mrb[0].mxu0 %v2262
  %v2603 = vpop.f32.mrb[0].mxu0
  %v2604 = vadd.f32 0.0, %v2603
  %v2605 = vpop.f32.mrb[0].mxu0
  %v2606 = vpop.f32.mrb[0].mxu0
  %v2607 = vadd.f32 0.0, %v2606
  %v2608 = vpop.f32.mrb[0].mxu0
  %2609 = vmatprep.mubr.bf16.mxu0 0
  %2610 = vmatmul.mubr.bf16.gmra.mrb[0].mxu0 %v2263
  %v2611 = vpop.f32.mrb[0].mxu0
  %v2612 = vadd.f32 0.0, %v2611
  %v2613 = vpop.f32.mrb[0].mxu0
  %v2614 = vpop.f32.mrb[0].mxu0
  %v2615 = vadd.f32 0.0, %v2614
  %v2616 = vpop.f32.mrb[0].mxu0
  %2617 = vdwg.mxu0
  %v2618 = vadd.f32 %v2104, %v2364
  %v2619 = vadd.f32 %v2105, %v2367
  %v2620 = vadd.f32 %v2106, %v2372
  %v2621 = vadd.f32 %v2107, %v2375
  %v2622 = vadd.f32 %v2108, %v2380
  %v2623 = vadd.f32 %v2109, %v2383
  %v2624 = vadd.f32 %v2110, %v2388
  %v2625 = vadd.f32 %v2111, %v2391
  %v2626 = vadd.f32 %v2112, %v2396
  %v2627 = vadd.f32 %v2113, %v2399
  %v2628 = vadd.f32 %v2114, %v2404
  %v2629 = vadd.f32 %v2115, %v2407
  %v2630 = vadd.f32 %v2116, %v2412
  %v2631 = vadd.f32 %v2117, %v2415
  %v2632 = vadd.f32 %v2118, %v2420
  %v2633 = vadd.f32 %v2119, %v2423
  %v2634 = vadd.f32 %v2120, %v2428
  %v2635 = vadd.f32 %v2121, %v2431
  %v2636 = vadd.f32 %v2122, %v2436
  %v2637 = vadd.f32 %v2123, %v2439
  %v2638 = vadd.f32 %v2124, %v2444
  %v2639 = vadd.f32 %v2125, %v2447
  %v2640 = vadd.f32 %v2126, %v2452
  %v2641 = vadd.f32 %v2127, %v2455
  %v2642 = vadd.f32 %v2128, %v2460
  %v2643 = vadd.f32 %v2129, %v2463
  %v2644 = vadd.f32 %v2130, %v2468
  %v2645 = vadd.f32 %v2131, %v2471
  %v2646 = vadd.f32 %v2132, %v2476
  %v2647 = vadd.f32 %v2133, %v2479
  %v2648 = vadd.f32 %v2134, %v2484
  %v2649 = vadd.f32 %v2135, %v2487
  %v2650 = vadd.f32 %v2136, %v2492
  %v2651 = vadd.f32 %v2137, %v2495
  %v2652 = vadd.f32 %v2138, %v2500
  %v2653 = vadd.f32 %v2139, %v2503
  %v2654 = vadd.f32 %v2140, %v2508
  %v2655 = vadd.f32 %v2141, %v2511
  %v2656 = vadd.f32 %v2142, %v2516
  %v2657 = vadd.f32 %v2143, %v2519
  %v2658 = vadd.f32 %v2144, %v2524
  %v2659 = vadd.f32 %v2145, %v2527
  %v2660 = vadd.f32 %v2146, %v2532
  %v2661 = vadd.f32 %v2147, %v2535
  %v2662 = vadd.f32 %v2148, %v2540
  %v2663 = vadd.f32 %v2149, %v2543
  %v2664 = vadd.f32 %v2150, %v2548
  %v2665 = vadd.f32 %v2151, %v2551
  %v2666 = vadd.f32 %v2152, %v2556
  %v2667 = vadd.f32 %v2153, %v2559
  %v2668 = vadd.f32 %v2154, %v2564
  %v2669 = vadd.f32 %v2155, %v2567
  %v2670 = vadd.f32 %v2156, %v2572
  %v2671 = vadd.f32 %v2157, %v2575
  %v2672 = vadd.f32 %v2158, %v2580
  %v2673 = vadd.f32 %v2159, %v2583
  %v2674 = vadd.f32 %v2160, %v2588
  %v2675 = vadd.f32 %v2161, %v2591
  %v2676 = vadd.f32 %v2162, %v2596
  %v2677 = vadd.f32 %v2163, %v2599
  %v2678 = vadd.f32 %v2164, %v2604
  %v2679 = vadd.f32 %v2165, %v2607
  %v2680 = vadd.f32 %v2166, %v2612
  %v2681 = vadd.f32 %v2167, %v2615
  %v2682 = vld [vmem:[%s176 + $0x2] sm:$0xff]
  %v2683 = vld [vmem:[%s176 + $0xa] sm:$0xff]
  %v2684 = vld [vmem:[%s176 + $0x1a] sm:$0xff]
  %v2685 = vld [vmem:[%s176 + $0x22] sm:$0xff]
  %v2686 = vld [vmem:[%s176 + $0x32] sm:$0xff]
  %v2687 = vld [vmem:[%s176 + $0x3a] sm:$0xff]
  %v2688 = vld [vmem:[%s176 + $0x4a] sm:$0xff]
  %v2689 = vld [vmem:[%s176 + $0x52] sm:$0xff]
  %v2690 = vld [vmem:[%s176 + $0x62] sm:$0xff]
  %v2691 = vld [vmem:[%s176 + $0x6a] sm:$0xff]
  %v2692 = vld [vmem:[%s176 + $0x7a] sm:$0xff]
  %v2693 = vld [vmem:[%s176 + $0x82] sm:$0xff]
  %v2694 = vld [vmem:[%s176 + $0x92] sm:$0xff]
  %v2695 = vld [vmem:[%s176 + $0x9a] sm:$0xff]
  %v2696 = vld [vmem:[%s176 + $0xaa] sm:$0xff]
  %v2697 = vld [vmem:[%s176 + $0xb2] sm:$0xff]
  %v2698 = vld [vmem:[%s176 + $0xc2] sm:$0xff]
  %v2699 = vld [vmem:[%s176 + $0xca] sm:$0xff]
  %v2700 = vld [vmem:[%s176 + $0xda] sm:$0xff]
  %v2701 = vld [vmem:[%s176 + $0xe2] sm:$0xff]
  %v2702 = vld [vmem:[%s176 + $0xf2] sm:$0xff]
  %v2703 = vld [vmem:[%s176 + $0xfa] sm:$0xff]
  %v2704 = vld [vmem:[%s176 + $0x10a] sm:$0xff]
  %v2705 = vld [vmem:[%s176 + $0x112] sm:$0xff]
  %v2706 = vld [vmem:[%s176 + $0x122] sm:$0xff]
  %v2707 = vld [vmem:[%s176 + $0x12a] sm:$0xff]
  %v2708 = vld [vmem:[%s176 + $0x13a] sm:$0xff]
  %v2709 = vld [vmem:[%s176 + $0x142] sm:$0xff]
  %v2710 = vld [vmem:[%s176 + $0x152] sm:$0xff]
  %v2711 = vld [vmem:[%s176 + $0x15a] sm:$0xff]
  %v2712 = vld [vmem:[%s176 + $0x16a] sm:$0xff]
  %v2713 = vld [vmem:[%s176 + $0x172] sm:$0xff]
  %v2714 = vld [vmem:[%s176 + $0x1b2] sm:$0xff]
  %v2715 = vld [vmem:[%s176 + $0x1ba] sm:$0xff]
  %v2716 = vld [vmem:[%s176 + $0x1ca] sm:$0xff]
  %v2717 = vld [vmem:[%s176 + $0x1d2] sm:$0xff]
  %v2718 = vld [vmem:[%s176 + $0x1e2] sm:$0xff]
  %v2719 = vld [vmem:[%s176 + $0x1ea] sm:$0xff]
  %v2720 = vld [vmem:[%s176 + $0x1fa] sm:$0xff]
  %v2721 = vld [vmem:[%s176 + $0x202] sm:$0xff]
  %v2722 = vld [vmem:[%s176 + $0x212] sm:$0xff]
  %v2723 = vld [vmem:[%s176 + $0x21a] sm:$0xff]
  %v2724 = vld [vmem:[%s176 + $0x22a] sm:$0xff]
  %v2725 = vld [vmem:[%s176 + $0x232] sm:$0xff]
  %v2726 = vld [vmem:[%s176 + $0x242] sm:$0xff]
  %v2727 = vld [vmem:[%s176 + $0x24a] sm:$0xff]
  %v2728 = vld [vmem:[%s176 + $0x25a] sm:$0xff]
  %v2729 = vld [vmem:[%s176 + $0x262] sm:$0xff]
  %v2730 = vld [vmem:[%s176 + $0x272] sm:$0xff]
  %v2731 = vld [vmem:[%s176 + $0x27a] sm:$0xff]
  %v2732 = vld [vmem:[%s176 + $0x28a] sm:$0xff]
  %v2733 = vld [vmem:[%s176 + $0x292] sm:$0xff]
  %v2734 = vld [vmem:[%s176 + $0x2a2] sm:$0xff]
  %v2735 = vld [vmem:[%s176 + $0x2aa] sm:$0xff]
  %v2736 = vld [vmem:[%s176 + $0x2ba] sm:$0xff]
  %v2737 = vld [vmem:[%s176 + $0x2c2] sm:$0xff]
  %v2738 = vld [vmem:[%s176 + $0x2d2] sm:$0xff]
  %v2739 = vld [vmem:[%s176 + $0x2da] sm:$0xff]
  %v2740 = vld [vmem:[%s176 + $0x2ea] sm:$0xff]
  %v2741 = vld [vmem:[%s176 + $0x2f2] sm:$0xff]
  %v2742 = vld [vmem:[%s176 + $0x302] sm:$0xff]
  %v2743 = vld [vmem:[%s176 + $0x30a] sm:$0xff]
  %v2744 = vld [vmem:[%s176 + $0x31a] sm:$0xff]
  %v2745 = vld [vmem:[%s176 + $0x322] sm:$0xff]
  %v2746 = vpack.c.bf16 %v2683, %v2682
  %v2747 = vpack.c.bf16 %v2685, %v2684
  %v2748 = vpack.c.bf16 %v2687, %v2686
  %v2749 = vpack.c.bf16 %v2689, %v2688
  %v2750 = vpack.c.bf16 %v2691, %v2690
  %v2751 = vpack.c.bf16 %v2693, %v2692
  %v2752 = vpack.c.bf16 %v2695, %v2694
  %v2753 = vpack.c.bf16 %v2697, %v2696
  %v2754 = vpack.c.bf16 %v2699, %v2698
  %v2755 = vpack.c.bf16 %v2701, %v2700
  %v2756 = vpack.c.bf16 %v2703, %v2702
  %v2757 = vpack.c.bf16 %v2705, %v2704
  %v2758 = vpack.c.bf16 %v2707, %v2706
  %v2759 = vpack.c.bf16 %v2709, %v2708
  %v2760 = vpack.c.bf16 %v2711, %v2710
  %v2761 = vpack.c.bf16 %v2713, %v2712
  %v2762 = vpack.c.bf16 %v2715, %v2714
  %v2763 = vpack.c.bf16 %v2717, %v2716
  %v2764 = vpack.c.bf16 %v2719, %v2718
  %v2765 = vpack.c.bf16 %v2721, %v2720
  %v2766 = vpack.c.bf16 %v2723, %v2722
  %v2767 = vpack.c.bf16 %v2725, %v2724
  %v2768 = vpack.c.bf16 %v2727, %v2726
  %v2769 = vpack.c.bf16 %v2729, %v2728
  %v2770 = vpack.c.bf16 %v2731, %v2730
  %v2771 = vpack.c.bf16 %v2733, %v2732
  %v2772 = vpack.c.bf16 %v2735, %v2734
  %v2773 = vpack.c.bf16 %v2737, %v2736
  %v2774 = vpack.c.bf16 %v2739, %v2738
  %v2775 = vpack.c.bf16 %v2741, %v2740
  %v2776 = vpack.c.bf16 %v2743, %v2742
  %v2777 = vpack.c.bf16 %v2745, %v2744
  %s2778 = scalar_lea.vmem %s1, 320
  %v2779 = vld [vmem:[%s2778] sm:$0xf]
  %v2780 = vld [vmem:[%s2778 + $0x4] sm:$0xf]
  %v2781 = vld [vmem:[%s2778 + $0x8] sm:$0xf]
  %v2782 = vld [vmem:[%s2778 + $0xc] sm:$0xf]
  %v2783 = vld [vmem:[%s2778 + $0x10] sm:$0xf]
  %v2784 = vld [vmem:[%s2778 + $0x14] sm:$0xf]
  %v2785 = vld [vmem:[%s2778 + $0x18] sm:$0xf]
  %v2786 = vld [vmem:[%s2778 + $0x1c] sm:$0xf]
  %v2787 = vld [vmem:[%s2778 + $0x20] sm:$0xf]
  %v2788 = vld [vmem:[%s2778 + $0x24] sm:$0xf]
  %v2789 = vld [vmem:[%s2778 + $0x28] sm:$0xf]
  %v2790 = vld [vmem:[%s2778 + $0x2c] sm:$0xf]
  %v2791 = vld [vmem:[%s2778 + $0x30] sm:$0xf]
  %v2792 = vld [vmem:[%s2778 + $0x34] sm:$0xf]
  %v2793 = vld [vmem:[%s2778 + $0x38] sm:$0xf]
  %v2794 = vld [vmem:[%s2778 + $0x3c] sm:$0xf]
  %v2811 = vunpack.c.l.b16 %v2779
  %v2812 = vunpack.c.l.b16 %v2780
  %v2813 = vunpack.c.l.b16 %v2781
  %v2814 = vunpack.c.l.b16 %v2782
  %v2815 = vunpack.c.l.b16 %v2783
  %v2816 = vunpack.c.l.b16 %v2784
  %v2817 = vunpack.c.l.b16 %v2785
  %v2818 = vunpack.c.l.b16 %v2786
  %v2819 = vunpack.c.l.b16 %v2787
  %v2820 = vunpack.c.l.b16 %v2788
  %v2821 = vunpack.c.l.b16 %v2789
  %v2822 = vunpack.c.l.b16 %v2790
  %v2823 = vunpack.c.l.b16 %v2791
  %v2824 = vunpack.c.l.b16 %v2792
  %v2825 = vunpack.c.l.b16 %v2793
  %v2826 = vunpack.c.l.b16 %v2794
  %v2827 = vpack.c.b16 %v2812, %v2811
  %v2828 = vpack.c.b16 %v2814, %v2813
  %v2829 = vpack.c.b16 %v2816, %v2815
  %v2830 = vpack.c.b16 %v2818, %v2817
  %v2831 = vpack.c.b16 %v2820, %v2819
  %v2832 = vpack.c.b16 %v2822, %v2821
  %v2833 = vpack.c.b16 %v2824, %v2823
  %v2834 = vpack.c.b16 %v2826, %v2825
  %2843 = vmatprep.subr.bf16.mxu0 0
  %2844 = vmatpush1.bf16.msra.mxu0 %v2827
  %2845 = vmatprep.subr.bf16.mxu0 0
  %2846 = vmatpush1.bf16.msra.mxu0 %v2828
  %2847 = vmatprep.subr.bf16.mxu0 0
  %2848 = vmatpush1.bf16.msra.mxu0 %v2829
  %2849 = vmatprep.subr.bf16.mxu0 0
  %2850 = vmatpush1.bf16.msra.mxu0 %v2830
  %2851 = vmatprep.subr.bf16.mxu0 0
  %2852 = vmatpush1.bf16.msra.mxu0 %v2831
  %2853 = vmatprep.subr.bf16.mxu0 0
  %2854 = vmatpush1.bf16.msra.mxu0 %v2832
  %2855 = vmatprep.subr.bf16.mxu0 0
  %2856 = vmatpush1.bf16.msra.mxu0 %v2833
  %2857 = vmatprep.subr.bf16.mxu0 0
  %2858 = vmatpush1.bf16.msra.mxu0 %v2834
  %2859 = vmatprep.subr.bf16.mxu0 0
  %2860 = vmatpush1.bf16.msra.mxu0 0
  %2861 = vmatprep.subr.bf16.mxu0 0
  %2862 = vmatpush1.bf16.msra.mxu0 0
  %2863 = vmatprep.subr.bf16.mxu0 0
  %2864 = vmatpush1.bf16.msra.mxu0 0
  %2865 = vmatprep.subr.bf16.mxu0 0
  %2866 = vmatpush1.bf16.msra.mxu0 0
  %2867 = vmatprep.subr.bf16.mxu0 0
  %2868 = vmatpush1.bf16.msra.mxu0 0
  %2869 = vmatprep.subr.bf16.mxu0 0
  %2870 = vmatpush1.bf16.msra.mxu0 0
  %2871 = vmatprep.subr.bf16.mxu0 0
  %2872 = vmatpush1.bf16.msra.mxu0 0
  %2873 = vmatprep.subr.bf16.mxu0 0
  %2874 = vmatpush1.bf16.msra.mxu0 0
  %2875 = vmatprep.mubr.bf16.mxu0 0
  %2876 = vmatmul.mubr.bf16.gmra.mrb[0].mxu0 %v2746
  %v2877 = vpop.f32.mrb[0].mxu0
  %v2878 = vadd.f32 0.0, %v2877
  %v2879 = vpop.f32.mrb[0].mxu0
  %v2880 = vpop.f32.mrb[0].mxu0
  %v2881 = vadd.f32 0.0, %v2880
  %v2882 = vpop.f32.mrb[0].mxu0
  %2883 = vmatprep.mubr.bf16.mxu0 0
  %2884 = vmatmul.mubr.bf16.gmra.mrb[0].mxu0 %v2747
  %v2885 = vpop.f32.mrb[0].mxu0
  %v2886 = vadd.f32 0.0, %v2885
  %v2887 = vpop.f32.mrb[0].mxu0
  %v2888 = vpop.f32.mrb[0].mxu0
  %v2889 = vadd.f32 0.0, %v2888
  %v2890 = vpop.f32.mrb[0].mxu0
  %2891 = vmatprep.mubr.bf16.mxu0 0
  %2892 = vmatmul.mubr.bf16.gmra.mrb[0].mxu0 %v2748
  %v2893 = vpop.f32.mrb[0].mxu0
  %v2894 = vadd.f32 0.0, %v2893
  %v2895 = vpop.f32.mrb[0].mxu0
  %v2896 = vpop.f32.mrb[0].mxu0
  %v2897 = vadd.f32 0.0, %v2896
  %v2898 = vpop.f32.mrb[0].mxu0
  %2899 = vmatprep.mubr.bf16.mxu0 0
  %2900 = vmatmul.mubr.bf16.gmra.mrb[0].mxu0 %v2749
  %v2901 = vpop.f32.mrb[0].mxu0
  %v2902 = vadd.f32 0.0, %v2901
  %v2903 = vpop.f32.mrb[0].mxu0
  %v2904 = vpop.f32.mrb[0].mxu0
  %v2905 = vadd.f32 0.0, %v2904
  %v2906 = vpop.f32.mrb[0].mxu0
  %2907 = vmatprep.mubr.bf16.mxu0 0
  %2908 = vmatmul.mubr.bf16.gmra.mrb[0].mxu0 %v2750
  %v2909 = vpop.f32.mrb[0].mxu0
  %v2910 = vadd.f32 0.0, %v2909
  %v2911 = vpop.f32.mrb[0].mxu0
  %v2912 = vpop.f32.mrb[0].mxu0
  %v2913 = vadd.f32 0.0, %v2912
  %v2914 = vpop.f32.mrb[0].mxu0
  %2915 = vmatprep.mubr.bf16.mxu0 0
  %2916 = vmatmul.mubr.bf16.gmra.mrb[0].mxu0 %v2751
  %v2917 = vpop.f32.mrb[0].mxu0
  %v2918 = vadd.f32 0.0, %v2917
  %v2919 = vpop.f32.mrb[0].mxu0
  %v2920 = vpop.f32.mrb[0].mxu0
  %v2921 = vadd.f32 0.0, %v2920
  %v2922 = vpop.f32.mrb[0].mxu0
  %2923 = vmatprep.mubr.bf16.mxu0 0
  %2924 = vmatmul.mubr.bf16.gmra.mrb[0].mxu0 %v2752
  %v2925 = vpop.f32.mrb[0].mxu0
  %v2926 = vadd.f32 0.0, %v2925
  %v2927 = vpop.f32.mrb[0].mxu0
  %v2928 = vpop.f32.mrb[0].mxu0
  %v2929 = vadd.f32 0.0, %v2928
  %v2930 = vpop.f32.mrb[0].mxu0
  %2931 = vmatprep.mubr.bf16.mxu0 0
  %2932 = vmatmul.mubr.bf16.gmra.mrb[0].mxu0 %v2753
  %v2933 = vpop.f32.mrb[0].mxu0
  %v2934 = vadd.f32 0.0, %v2933
  %v2935 = vpop.f32.mrb[0].mxu0
  %v2936 = vpop.f32.mrb[0].mxu0
  %v2937 = vadd.f32 0.0, %v2936
  %v2938 = vpop.f32.mrb[0].mxu0
  %2939 = vmatprep.mubr.bf16.mxu0 0
  %2940 = vmatmul.mubr.bf16.gmra.mrb[0].mxu0 %v2754
  %v2941 = vpop.f32.mrb[0].mxu0
  %v2942 = vadd.f32 0.0, %v2941
  %v2943 = vpop.f32.mrb[0].mxu0
  %v2944 = vpop.f32.mrb[0].mxu0
  %v2945 = vadd.f32 0.0, %v2944
  %v2946 = vpop.f32.mrb[0].mxu0
  %2947 = vmatprep.mubr.bf16.mxu0 0
  %2948 = vmatmul.mubr.bf16.gmra.mrb[0].mxu0 %v2755
  %v2949 = vpop.f32.mrb[0].mxu0
  %v2950 = vadd.f32 0.0, %v2949
  %v2951 = vpop.f32.mrb[0].mxu0
  %v2952 = vpop.f32.mrb[0].mxu0
  %v2953 = vadd.f32 0.0, %v2952
  %v2954 = vpop.f32.mrb[0].mxu0
  %2955 = vmatprep.mubr.bf16.mxu0 0
  %2956 = vmatmul.mubr.bf16.gmra.mrb[0].mxu0 %v2756
  %v2957 = vpop.f32.mrb[0].mxu0
  %v2958 = vadd.f32 0.0, %v2957
  %v2959 = vpop.f32.mrb[0].mxu0
  %v2960 = vpop.f32.mrb[0].mxu0
  %v2961 = vadd.f32 0.0, %v2960
  %v2962 = vpop.f32.mrb[0].mxu0
  %2963 = vmatprep.mubr.bf16.mxu0 0
  %2964 = vmatmul.mubr.bf16.gmra.mrb[0].mxu0 %v2757
  %v2965 = vpop.f32.mrb[0].mxu0
  %v2966 = vadd.f32 0.0, %v2965
  %v2967 = vpop.f32.mrb[0].mxu0
  %v2968 = vpop.f32.mrb[0].mxu0
  %v2969 = vadd.f32 0.0, %v2968
  %v2970 = vpop.f32.mrb[0].mxu0
  %2971 = vmatprep.mubr.bf16.mxu0 0
  %2972 = vmatmul.mubr.bf16.gmra.mrb[0].mxu0 %v2758
  %v2973 = vpop.f32.mrb[0].mxu0
  %v2974 = vadd.f32 0.0, %v2973
  %v2975 = vpop.f32.mrb[0].mxu0
  %v2976 = vpop.f32.mrb[0].mxu0
  %v2977 = vadd.f32 0.0, %v2976
  %v2978 = vpop.f32.mrb[0].mxu0
  %2979 = vmatprep.mubr.bf16.mxu0 0
  %2980 = vmatmul.mubr.bf16.gmra.mrb[0].mxu0 %v2759
  %v2981 = vpop.f32.mrb[0].mxu0
  %v2982 = vadd.f32 0.0, %v2981
  %v2983 = vpop.f32.mrb[0].mxu0
  %v2984 = vpop.f32.mrb[0].mxu0
  %v2985 = vadd.f32 0.0, %v2984
  %v2986 = vpop.f32.mrb[0].mxu0
  %2987 = vmatprep.mubr.bf16.mxu0 0
  %2988 = vmatmul.mubr.bf16.gmra.mrb[0].mxu0 %v2760
  %v2989 = vpop.f32.mrb[0].mxu0
  %v2990 = vadd.f32 0.0, %v2989
  %v2991 = vpop.f32.mrb[0].mxu0
  %v2992 = vpop.f32.mrb[0].mxu0
  %v2993 = vadd.f32 0.0, %v2992
  %v2994 = vpop.f32.mrb[0].mxu0
  %2995 = vmatprep.mubr.bf16.mxu0 0
  %2996 = vmatmul.mubr.bf16.gmra.mrb[0].mxu0 %v2761
  %v2997 = vpop.f32.mrb[0].mxu0
  %v2998 = vadd.f32 0.0, %v2997
  %v2999 = vpop.f32.mrb[0].mxu0
  %v3000 = vpop.f32.mrb[0].mxu0
  %v3001 = vadd.f32 0.0, %v3000
  %v3002 = vpop.f32.mrb[0].mxu0
  %3003 = vmatprep.mubr.bf16.mxu0 0
  %3004 = vmatmul.mubr.bf16.gmra.mrb[0].mxu0 %v2762
  %v3005 = vpop.f32.mrb[0].mxu0
  %v3006 = vadd.f32 0.0, %v3005
  %v3007 = vpop.f32.mrb[0].mxu0
  %v3008 = vpop.f32.mrb[0].mxu0
  %v3009 = vadd.f32 0.0, %v3008
  %v3010 = vpop.f32.mrb[0].mxu0
  %3011 = vmatprep.mubr.bf16.mxu0 0
  %3012 = vmatmul.mubr.bf16.gmra.mrb[0].mxu0 %v2763
  %v3013 = vpop.f32.mrb[0].mxu0
  %v3014 = vadd.f32 0.0, %v3013
  %v3015 = vpop.f32.mrb[0].mxu0
  %v3016 = vpop.f32.mrb[0].mxu0
  %v3017 = vadd.f32 0.0, %v3016
  %v3018 = vpop.f32.mrb[0].mxu0
  %3019 = vmatprep.mubr.bf16.mxu0 0
  %3020 = vmatmul.mubr.bf16.gmra.mrb[0].mxu0 %v2764
  %v3021 = vpop.f32.mrb[0].mxu0
  %v3022 = vadd.f32 0.0, %v3021
  %v3023 = vpop.f32.mrb[0].mxu0
  %v3024 = vpop.f32.mrb[0].mxu0
  %v3025 = vadd.f32 0.0, %v3024
  %v3026 = vpop.f32.mrb[0].mxu0
  %3027 = vmatprep.mubr.bf16.mxu0 0
  %3028 = vmatmul.mubr.bf16.gmra.mrb[0].mxu0 %v2765
  %v3029 = vpop.f32.mrb[0].mxu0
  %v3030 = vadd.f32 0.0, %v3029
  %v3031 = vpop.f32.mrb[0].mxu0
  %v3032 = vpop.f32.mrb[0].mxu0
  %v3033 = vadd.f32 0.0, %v3032
  %v3034 = vpop.f32.mrb[0].mxu0
  %3035 = vmatprep.mubr.bf16.mxu0 0
  %3036 = vmatmul.mubr.bf16.gmra.mrb[0].mxu0 %v2766
  %v3037 = vpop.f32.mrb[0].mxu0
  %v3038 = vadd.f32 0.0, %v3037
  %v3039 = vpop.f32.mrb[0].mxu0
  %v3040 = vpop.f32.mrb[0].mxu0
  %v3041 = vadd.f32 0.0, %v3040
  %v3042 = vpop.f32.mrb[0].mxu0
  %3043 = vmatprep.mubr.bf16.mxu0 0
  %3044 = vmatmul.mubr.bf16.gmra.mrb[0].mxu0 %v2767
  %v3045 = vpop.f32.mrb[0].mxu0
  %v3046 = vadd.f32 0.0, %v3045
  %v3047 = vpop.f32.mrb[0].mxu0
  %v3048 = vpop.f32.mrb[0].mxu0
  %v3049 = vadd.f32 0.0, %v3048
  %v3050 = vpop.f32.mrb[0].mxu0
  %3051 = vmatprep.mubr.bf16.mxu0 0
  %3052 = vmatmul.mubr.bf16.gmra.mrb[0].mxu0 %v2768
  %v3053 = vpop.f32.mrb[0].mxu0
  %v3054 = vadd.f32 0.0, %v3053
  %v3055 = vpop.f32.mrb[0].mxu0
  %v3056 = vpop.f32.mrb[0].mxu0
  %v3057 = vadd.f32 0.0, %v3056
  %v3058 = vpop.f32.mrb[0].mxu0
  %3059 = vmatprep.mubr.bf16.mxu0 0
  %3060 = vmatmul.mubr.bf16.gmra.mrb[0].mxu0 %v2769
  %v3061 = vpop.f32.mrb[0].mxu0
  %v3062 = vadd.f32 0.0, %v3061
  %v3063 = vpop.f32.mrb[0].mxu0
  %v3064 = vpop.f32.mrb[0].mxu0
  %v3065 = vadd.f32 0.0, %v3064
  %v3066 = vpop.f32.mrb[0].mxu0
  %3067 = vmatprep.mubr.bf16.mxu0 0
  %3068 = vmatmul.mubr.bf16.gmra.mrb[0].mxu0 %v2770
  %v3069 = vpop.f32.mrb[0].mxu0
  %v3070 = vadd.f32 0.0, %v3069
  %v3071 = vpop.f32.mrb[0].mxu0
  %v3072 = vpop.f32.mrb[0].mxu0
  %v3073 = vadd.f32 0.0, %v3072
  %v3074 = vpop.f32.mrb[0].mxu0
  %3075 = vmatprep.mubr.bf16.mxu0 0
  %3076 = vmatmul.mubr.bf16.gmra.mrb[0].mxu0 %v2771
  %v3077 = vpop.f32.mrb[0].mxu0
  %v3078 = vadd.f32 0.0, %v3077
  %v3079 = vpop.f32.mrb[0].mxu0
  %v3080 = vpop.f32.mrb[0].mxu0
  %v3081 = vadd.f32 0.0, %v3080
  %v3082 = vpop.f32.mrb[0].mxu0
  %3083 = vmatprep.mubr.bf16.mxu0 0
  %3084 = vmatmul.mubr.bf16.gmra.mrb[0].mxu0 %v2772
  %v3085 = vpop.f32.mrb[0].mxu0
  %v3086 = vadd.f32 0.0, %v3085
  %v3087 = vpop.f32.mrb[0].mxu0
  %v3088 = vpop.f32.mrb[0].mxu0
  %v3089 = vadd.f32 0.0, %v3088
  %v3090 = vpop.f32.mrb[0].mxu0
  %3091 = vmatprep.mubr.bf16.mxu0 0
  %3092 = vmatmul.mubr.bf16.gmra.mrb[0].mxu0 %v2773
  %v3093 = vpop.f32.mrb[0].mxu0
  %v3094 = vadd.f32 0.0, %v3093
  %v3095 = vpop.f32.mrb[0].mxu0
  %v3096 = vpop.f32.mrb[0].mxu0
  %v3097 = vadd.f32 0.0, %v3096
  %v3098 = vpop.f32.mrb[0].mxu0
  %3099 = vmatprep.mubr.bf16.mxu0 0
  %3100 = vmatmul.mubr.bf16.gmra.mrb[0].mxu0 %v2774
  %v3101 = vpop.f32.mrb[0].mxu0
  %v3102 = vadd.f32 0.0, %v3101
  %v3103 = vpop.f32.mrb[0].mxu0
  %v3104 = vpop.f32.mrb[0].mxu0
  %v3105 = vadd.f32 0.0, %v3104
  %v3106 = vpop.f32.mrb[0].mxu0
  %3107 = vmatprep.mubr.bf16.mxu0 0
  %3108 = vmatmul.mubr.bf16.gmra.mrb[0].mxu0 %v2775
  %v3109 = vpop.f32.mrb[0].mxu0
  %v3110 = vadd.f32 0.0, %v3109
  %v3111 = vpop.f32.mrb[0].mxu0
  %v3112 = vpop.f32.mrb[0].mxu0
  %v3113 = vadd.f32 0.0, %v3112
  %v3114 = vpop.f32.mrb[0].mxu0
  %3115 = vmatprep.mubr.bf16.mxu0 0
  %3116 = vmatmul.mubr.bf16.gmra.mrb[0].mxu0 %v2776
  %v3117 = vpop.f32.mrb[0].mxu0
  %v3118 = vadd.f32 0.0, %v3117
  %v3119 = vpop.f32.mrb[0].mxu0
  %v3120 = vpop.f32.mrb[0].mxu0
  %v3121 = vadd.f32 0.0, %v3120
  %v3122 = vpop.f32.mrb[0].mxu0
  %3123 = vmatprep.mubr.bf16.mxu0 0
  %3124 = vmatmul.mubr.bf16.gmra.mrb[0].mxu0 %v2777
  %v3125 = vpop.f32.mrb[0].mxu0
  %v3126 = vadd.f32 0.0, %v3125
  %v3127 = vpop.f32.mrb[0].mxu0
  %v3128 = vpop.f32.mrb[0].mxu0
  %v3129 = vadd.f32 0.0, %v3128
  %v3130 = vpop.f32.mrb[0].mxu0
  %3131 = vdwg.mxu0
  %v3132 = vadd.f32 %v2618, %v2878
  %v3133 = vadd.f32 %v2619, %v2881
  %v3134 = vadd.f32 %v2620, %v2886
  %v3135 = vadd.f32 %v2621, %v2889
  %v3136 = vadd.f32 %v2622, %v2894
  %v3137 = vadd.f32 %v2623, %v2897
  %v3138 = vadd.f32 %v2624, %v2902
  %v3139 = vadd.f32 %v2625, %v2905
  %v3140 = vadd.f32 %v2626, %v2910
  %v3141 = vadd.f32 %v2627, %v2913
  %v3142 = vadd.f32 %v2628, %v2918
  %v3143 = vadd.f32 %v2629, %v2921
  %v3144 = vadd.f32 %v2630, %v2926
  %v3145 = vadd.f32 %v2631, %v2929
  %v3146 = vadd.f32 %v2632, %v2934
  %v3147 = vadd.f32 %v2633, %v2937
  %v3148 = vadd.f32 %v2634, %v2942
  %v3149 = vadd.f32 %v2635, %v2945
  %v3150 = vadd.f32 %v2636, %v2950
  %v3151 = vadd.f32 %v2637, %v2953
  %v3152 = vadd.f32 %v2638, %v2958
  %v3153 = vadd.f32 %v2639, %v2961
  %v3154 = vadd.f32 %v2640, %v2966
  %v3155 = vadd.f32 %v2641, %v2969
  %v3156 = vadd.f32 %v2642, %v2974
  %v3157 = vadd.f32 %v2643, %v2977
  %v3158 = vadd.f32 %v2644, %v2982
  %v3159 = vadd.f32 %v2645, %v2985
  %v3160 = vadd.f32 %v2646, %v2990
  %v3161 = vadd.f32 %v2647, %v2993
  %v3162 = vadd.f32 %v2648, %v2998
  %v3163 = vadd.f32 %v2649, %v3001
  %v3164 = vadd.f32 %v2650, %v3006
  %v3165 = vadd.f32 %v2651, %v3009
  %v3166 = vadd.f32 %v2652, %v3014
  %v3167 = vadd.f32 %v2653, %v3017
  %v3168 = vadd.f32 %v2654, %v3022
  %v3169 = vadd.f32 %v2655, %v3025
  %v3170 = vadd.f32 %v2656, %v3030
  %v3171 = vadd.f32 %v2657, %v3033
  %v3172 = vadd.f32 %v2658, %v3038
  %v3173 = vadd.f32 %v2659, %v3041
  %v3174 = vadd.f32 %v2660, %v3046
  %v3175 = vadd.f32 %v2661, %v3049
  %v3176 = vadd.f32 %v2662, %v3054
  %v3177 = vadd.f32 %v2663, %v3057
  %v3178 = vadd.f32 %v2664, %v3062
  %v3179 = vadd.f32 %v2665, %v3065
  %v3180 = vadd.f32 %v2666, %v3070
  %v3181 = vadd.f32 %v2667, %v3073
  %v3182 = vadd.f32 %v2668, %v3078
  %v3183 = vadd.f32 %v2669, %v3081
  %v3184 = vadd.f32 %v2670, %v3086
  %v3185 = vadd.f32 %v2671, %v3089
  %v3186 = vadd.f32 %v2672, %v3094
  %v3187 = vadd.f32 %v2673, %v3097
  %v3188 = vadd.f32 %v2674, %v3102
  %v3189 = vadd.f32 %v2675, %v3105
  %v3190 = vadd.f32 %v2676, %v3110
  %v3191 = vadd.f32 %v2677, %v3113
  %v3192 = vadd.f32 %v2678, %v3118
  %v3193 = vadd.f32 %v2679, %v3121
  %v3194 = vadd.f32 %v2680, %v3126
  %v3195 = vadd.f32 %v2681, %v3129
  %s3196 = scalar_lea.vmem [#allocation2], 48
  %v3197 = vld [vmem:[%s3196] sm:$0xff]
  %v3198 = vld [vmem:[%s3196 + $0x8] sm:$0xff]
  %v3199 = vld [vmem:[%s3196 + $0x18] sm:$0xff]
  %v3200 = vld [vmem:[%s3196 + $0x20] sm:$0xff]
  %v3201 = vld [vmem:[%s3196 + $0x30] sm:$0xff]
  %v3202 = vld [vmem:[%s3196 + $0x38] sm:$0xff]
  %v3203 = vld [vmem:[%s3196 + $0x48] sm:$0xff]
  %v3204 = vld [vmem:[%s3196 + $0x50] sm:$0xff]
  %v3205 = vld [vmem:[%s3196 + $0x60] sm:$0xff]
  %v3206 = vld [vmem:[%s3196 + $0x68] sm:$0xff]
  %v3207 = vld [vmem:[%s3196 + $0x78] sm:$0xff]
  %v3208 = vld [vmem:[%s3196 + $0x80] sm:$0xff]
  %v3209 = vld [vmem:[%s3196 + $0x90] sm:$0xff]
  %v3210 = vld [vmem:[%s3196 + $0x98] sm:$0xff]
  %v3211 = vld [vmem:[%s3196 + $0xa8] sm:$0xff]
  %v3212 = vld [vmem:[%s3196 + $0xb0] sm:$0xff]
  %v3213 = vld [vmem:[%s3196 + $0xc0] sm:$0xff]
  %v3214 = vld [vmem:[%s3196 + $0xc8] sm:$0xff]
  %v3215 = vld [vmem:[%s3196 + $0xd8] sm:$0xff]
  %v3216 = vld [vmem:[%s3196 + $0xe0] sm:$0xff]
  %v3217 = vld [vmem:[%s3196 + $0xf0] sm:$0xff]
  %v3218 = vld [vmem:[%s3196 + $0xf8] sm:$0xff]
  %v3219 = vld [vmem:[%s3196 + $0x108] sm:$0xff]
  %v3220 = vld [vmem:[%s3196 + $0x110] sm:$0xff]
  %v3221 = vld [vmem:[%s3196 + $0x120] sm:$0xff]
  %v3222 = vld [vmem:[%s3196 + $0x128] sm:$0xff]
  %v3223 = vld [vmem:[%s3196 + $0x138] sm:$0xff]
  %v3224 = vld [vmem:[%s3196 + $0x140] sm:$0xff]
  %v3225 = vld [vmem:[%s3196 + $0x150] sm:$0xff]
  %v3226 = vld [vmem:[%s3196 + $0x158] sm:$0xff]
  %v3227 = vld [vmem:[%s3196 + $0x168] sm:$0xff]
  %v3228 = vld [vmem:[%s3196 + $0x170] sm:$0xff]
  %v3229 = vld [vmem:[%s3196 + $0x1b0] sm:$0xff]
  %v3230 = vld [vmem:[%s3196 + $0x1b8] sm:$0xff]
  %v3231 = vld [vmem:[%s3196 + $0x1c8] sm:$0xff]
  %v3232 = vld [vmem:[%s3196 + $0x1d0] sm:$0xff]
  %v3233 = vld [vmem:[%s3196 + $0x1e0] sm:$0xff]
  %v3234 = vld [vmem:[%s3196 + $0x1e8] sm:$0xff]
  %v3235 = vld [vmem:[%s3196 + $0x1f8] sm:$0xff]
  %v3236 = vld [vmem:[%s3196 + $0x200] sm:$0xff]
  %v3237 = vld [vmem:[%s3196 + $0x210] sm:$0xff]
  %v3238 = vld [vmem:[%s3196 + $0x218] sm:$0xff]
  %v3239 = vld [vmem:[%s3196 + $0x228] sm:$0xff]
  %v3240 = vld [vmem:[%s3196 + $0x230] sm:$0xff]
  %v3241 = vld [vmem:[%s3196 + $0x240] sm:$0xff]
  %v3242 = vld [vmem:[%s3196 + $0x248] sm:$0xff]
  %v3243 = vld [vmem:[%s3196 + $0x258] sm:$0xff]
  %v3244 = vld [vmem:[%s3196 + $0x260] sm:$0xff]
  %v3245 = vld [vmem:[%s3196 + $0x270] sm:$0xff]
  %v3246 = vld [vmem:[%s3196 + $0x278] sm:$0xff]
  %v3247 = vld [vmem:[%s3196 + $0x288] sm:$0xff]
  %v3248 = vld [vmem:[%s3196 + $0x290] sm:$0xff]
  %v3249 = vld [vmem:[%s3196 + $0x2a0] sm:$0xff]
  %v3250 = vld [vmem:[%s3196 + $0x2a8] sm:$0xff]
  %v3251 = vld [vmem:[%s3196 + $0x2b8] sm:$0xff]
  %v3252 = vld [vmem:[%s3196 + $0x2c0] sm:$0xff]
  %v3253 = vld [vmem:[%s3196 + $0x2d0] sm:$0xff]
  %v3254 = vld [vmem:[%s3196 + $0x2d8] sm:$0xff]
  %v3255 = vld [vmem:[%s3196 + $0x2e8] sm:$0xff]
  %v3256 = vld [vmem:[%s3196 + $0x2f0] sm:$0xff]
  %v3257 = vld [vmem:[%s3196 + $0x300] sm:$0xff]
  %v3258 = vld [vmem:[%s3196 + $0x308] sm:$0xff]
  %v3259 = vld [vmem:[%s3196 + $0x318] sm:$0xff]
  %v3260 = vld [vmem:[%s3196 + $0x320] sm:$0xff]
  %v3261 = vpack.c.bf16 %v3198, %v3197
  %v3262 = vpack.c.bf16 %v3200, %v3199
  %v3263 = vpack.c.bf16 %v3202, %v3201
  %v3264 = vpack.c.bf16 %v3204, %v3203
  %v3265 = vpack.c.bf16 %v3206, %v3205
  %v3266 = vpack.c.bf16 %v3208, %v3207
  %v3267 = vpack.c.bf16 %v3210, %v3209
  %v3268 = vpack.c.bf16 %v3212, %v3211
  %v3269 = vpack.c.bf16 %v3214, %v3213
  %v3270 = vpack.c.bf16 %v3216, %v3215
  %v3271 = vpack.c.bf16 %v3218, %v3217
  %v3272 = vpack.c.bf16 %v3220, %v3219
  %v3273 = vpack.c.bf16 %v3222, %v3221
  %v3274 = vpack.c.bf16 %v3224, %v3223
  %v3275 = vpack.c.bf16 %v3226, %v3225
  %v3276 = vpack.c.bf16 %v3228, %v3227
  %v3277 = vpack.c.bf16 %v3230, %v3229
  %v3278 = vpack.c.bf16 %v3232, %v3231
  %v3279 = vpack.c.bf16 %v3234, %v3233
  %v3280 = vpack.c.bf16 %v3236, %v3235
  %v3281 = vpack.c.bf16 %v3238, %v3237
  %v3282 = vpack.c.bf16 %v3240, %v3239
  %v3283 = vpack.c.bf16 %v3242, %v3241
  %v3284 = vpack.c.bf16 %v3244, %v3243
  %v3285 = vpack.c.bf16 %v3246, %v3245
  %v3286 = vpack.c.bf16 %v3248, %v3247
  %v3287 = vpack.c.bf16 %v3250, %v3249
  %v3288 = vpack.c.bf16 %v3252, %v3251
  %v3289 = vpack.c.bf16 %v3254, %v3253
  %v3290 = vpack.c.bf16 %v3256, %v3255
  %v3291 = vpack.c.bf16 %v3258, %v3257
  %v3292 = vpack.c.bf16 %v3260, %v3259
  %s3293 = scalar_lea.vmem %s1, 384
  %v3294 = vld [vmem:[%s3293] sm:$0xf]
  %v3295 = vld [vmem:[%s3293 + $0x4] sm:$0xf]
  %v3296 = vld [vmem:[%s3293 + $0x8] sm:$0xf]
  %v3297 = vld [vmem:[%s3293 + $0xc] sm:$0xf]
  %v3298 = vld [vmem:[%s3293 + $0x10] sm:$0xf]
  %v3299 = vld [vmem:[%s3293 + $0x14] sm:$0xf]
  %v3300 = vld [vmem:[%s3293 + $0x18] sm:$0xf]
  %v3301 = vld [vmem:[%s3293 + $0x1c] sm:$0xf]
  %v3302 = vld [vmem:[%s3293 + $0x20] sm:$0xf]
  %v3303 = vld [vmem:[%s3293 + $0x24] sm:$0xf]
  %v3304 = vld [vmem:[%s3293 + $0x28] sm:$0xf]
  %v3305 = vld [vmem:[%s3293 + $0x2c] sm:$0xf]
  %v3306 = vld [vmem:[%s3293 + $0x30] sm:$0xf]
  %v3307 = vld [vmem:[%s3293 + $0x34] sm:$0xf]
  %v3308 = vld [vmem:[%s3293 + $0x38] sm:$0xf]
  %v3309 = vld [vmem:[%s3293 + $0x3c] sm:$0xf]
  %v3326 = vunpack.c.l.b16 %v3294
  %v3327 = vunpack.c.l.b16 %v3295
  %v3328 = vunpack.c.l.b16 %v3296
  %v3329 = vunpack.c.l.b16 %v3297
  %v3330 = vunpack.c.l.b16 %v3298
  %v3331 = vunpack.c.l.b16 %v3299
  %v3332 = vunpack.c.l.b16 %v3300
  %v3333 = vunpack.c.l.b16 %v3301
  %v3334 = vunpack.c.l.b16 %v3302
  %v3335 = vunpack.c.l.b16 %v3303
  %v3336 = vunpack.c.l.b16 %v3304
  %v3337 = vunpack.c.l.b16 %v3305
  %v3338 = vunpack.c.l.b16 %v3306
  %v3339 = vunpack.c.l.b16 %v3307
  %v3340 = vunpack.c.l.b16 %v3308
  %v3341 = vunpack.c.l.b16 %v3309
  %v3342 = vpack.c.b16 %v3327, %v3326
  %v3343 = vpack.c.b16 %v3329, %v3328
  %v3344 = vpack.c.b16 %v3331, %v3330
  %v3345 = vpack.c.b16 %v3333, %v3332
  %v3346 = vpack.c.b16 %v3335, %v3334
  %v3347 = vpack.c.b16 %v3337, %v3336
  %v3348 = vpack.c.b16 %v3339, %v3338
  %v3349 = vpack.c.b16 %v3341, %v3340
  %3358 = vmatprep.subr.bf16.mxu0 0
  %3359 = vmatpush1.bf16.msra.mxu0 %v3342
  %3360 = vmatprep.subr.bf16.mxu0 0
  %3361 = vmatpush1.bf16.msra.mxu0 %v3343
  %3362 = vmatprep.subr.bf16.mxu0 0
  %3363 = vmatpush1.bf16.msra.mxu0 %v3344
  %3364 = vmatprep.subr.bf16.mxu0 0
  %3365 = vmatpush1.bf16.msra.mxu0 %v3345
  %3366 = vmatprep.subr.bf16.mxu0 0
  %3367 = vmatpush1.bf16.msra.mxu0 %v3346
  %3368 = vmatprep.subr.bf16.mxu0 0
  %3369 = vmatpush1.bf16.msra.mxu0 %v3347
  %3370 = vmatprep.subr.bf16.mxu0 0
  %3371 = vmatpush1.bf16.msra.mxu0 %v3348
  %3372 = vmatprep.subr.bf16.mxu0 0
  %3373 = vmatpush1.bf16.msra.mxu0 %v3349
  %3374 = vmatprep.subr.bf16.mxu0 0
  %3375 = vmatpush1.bf16.msra.mxu0 0
  %3376 = vmatprep.subr.bf16.mxu0 0
  %3377 = vmatpush1.bf16.msra.mxu0 0
  %3378 = vmatprep.subr.bf16.mxu0 0
  %3379 = vmatpush1.bf16.msra.mxu0 0
  %3380 = vmatprep.subr.bf16.mxu0 0
  %3381 = vmatpush1.bf16.msra.mxu0 0
  %3382 = vmatprep.subr.bf16.mxu0 0
  %3383 = vmatpush1.bf16.msra.mxu0 0
  %3384 = vmatprep.subr.bf16.mxu0 0
  %3385 = vmatpush1.bf16.msra.mxu0 0
  %3386 = vmatprep.subr.bf16.mxu0 0
  %3387 = vmatpush1.bf16.msra.mxu0 0
  %3388 = vmatprep.subr.bf16.mxu0 0
  %3389 = vmatpush1.bf16.msra.mxu0 0
  %3390 = vmatprep.mubr.bf16.mxu0 0
  %3391 = vmatmul.mubr.bf16.gmra.mrb[0].mxu0 %v3261
  %v3392 = vpop.f32.mrb[0].mxu0
  %v3393 = vadd.f32 0.0, %v3392
  %v3394 = vpop.f32.mrb[0].mxu0
  %v3395 = vpop.f32.mrb[0].mxu0
  %v3396 = vadd.f32 0.0, %v3395
  %v3397 = vpop.f32.mrb[0].mxu0
  %3398 = vmatprep.mubr.bf16.mxu0 0
  %3399 = vmatmul.mubr.bf16.gmra.mrb[0].mxu0 %v3262
  %v3400 = vpop.f32.mrb[0].mxu0
  %v3401 = vadd.f32 0.0, %v3400
  %v3402 = vpop.f32.mrb[0].mxu0
  %v3403 = vpop.f32.mrb[0].mxu0
  %v3404 = vadd.f32 0.0, %v3403
  %v3405 = vpop.f32.mrb[0].mxu0
  %3406 = vmatprep.mubr.bf16.mxu0 0
  %3407 = vmatmul.mubr.bf16.gmra.mrb[0].mxu0 %v3263
  %v3408 = vpop.f32.mrb[0].mxu0
  %v3409 = vadd.f32 0.0, %v3408
  %v3410 = vpop.f32.mrb[0].mxu0
  %v3411 = vpop.f32.mrb[0].mxu0
  %v3412 = vadd.f32 0.0, %v3411
  %v3413 = vpop.f32.mrb[0].mxu0
  %3414 = vmatprep.mubr.bf16.mxu0 0
  %3415 = vmatmul.mubr.bf16.gmra.mrb[0].mxu0 %v3264
  %v3416 = vpop.f32.mrb[0].mxu0
  %v3417 = vadd.f32 0.0, %v3416
  %v3418 = vpop.f32.mrb[0].mxu0
  %v3419 = vpop.f32.mrb[0].mxu0
  %v3420 = vadd.f32 0.0, %v3419
  %v3421 = vpop.f32.mrb[0].mxu0
  %3422 = vmatprep.mubr.bf16.mxu0 0
  %3423 = vmatmul.mubr.bf16.gmra.mrb[0].mxu0 %v3265
  %v3424 = vpop.f32.mrb[0].mxu0
  %v3425 = vadd.f32 0.0, %v3424
  %v3426 = vpop.f32.mrb[0].mxu0
  %v3427 = vpop.f32.mrb[0].mxu0
  %v3428 = vadd.f32 0.0, %v3427
  %v3429 = vpop.f32.mrb[0].mxu0
  %3430 = vmatprep.mubr.bf16.mxu0 0
  %3431 = vmatmul.mubr.bf16.gmra.mrb[0].mxu0 %v3266
  %v3432 = vpop.f32.mrb[0].mxu0
  %v3433 = vadd.f32 0.0, %v3432
  %v3434 = vpop.f32.mrb[0].mxu0
  %v3435 = vpop.f32.mrb[0].mxu0
  %v3436 = vadd.f32 0.0, %v3435
  %v3437 = vpop.f32.mrb[0].mxu0
  %3438 = vmatprep.mubr.bf16.mxu0 0
  %3439 = vmatmul.mubr.bf16.gmra.mrb[0].mxu0 %v3267
  %v3440 = vpop.f32.mrb[0].mxu0
  %v3441 = vadd.f32 0.0, %v3440
  %v3442 = vpop.f32.mrb[0].mxu0
  %v3443 = vpop.f32.mrb[0].mxu0
  %v3444 = vadd.f32 0.0, %v3443
  %v3445 = vpop.f32.mrb[0].mxu0
  %3446 = vmatprep.mubr.bf16.mxu0 0
  %3447 = vmatmul.mubr.bf16.gmra.mrb[0].mxu0 %v3268
  %v3448 = vpop.f32.mrb[0].mxu0
  %v3449 = vadd.f32 0.0, %v3448
  %v3450 = vpop.f32.mrb[0].mxu0
  %v3451 = vpop.f32.mrb[0].mxu0
  %v3452 = vadd.f32 0.0, %v3451
  %v3453 = vpop.f32.mrb[0].mxu0
  %3454 = vmatprep.mubr.bf16.mxu0 0
  %3455 = vmatmul.mubr.bf16.gmra.mrb[0].mxu0 %v3269
  %v3456 = vpop.f32.mrb[0].mxu0
  %v3457 = vadd.f32 0.0, %v3456
  %v3458 = vpop.f32.mrb[0].mxu0
  %v3459 = vpop.f32.mrb[0].mxu0
  %v3460 = vadd.f32 0.0, %v3459
  %v3461 = vpop.f32.mrb[0].mxu0
  %3462 = vmatprep.mubr.bf16.mxu0 0
  %3463 = vmatmul.mubr.bf16.gmra.mrb[0].mxu0 %v3270
  %v3464 = vpop.f32.mrb[0].mxu0
  %v3465 = vadd.f32 0.0, %v3464
  %v3466 = vpop.f32.mrb[0].mxu0
  %v3467 = vpop.f32.mrb[0].mxu0
  %v3468 = vadd.f32 0.0, %v3467
  %v3469 = vpop.f32.mrb[0].mxu0
  %3470 = vmatprep.mubr.bf16.mxu0 0
  %3471 = vmatmul.mubr.bf16.gmra.mrb[0].mxu0 %v3271
  %v3472 = vpop.f32.mrb[0].mxu0
  %v3473 = vadd.f32 0.0, %v3472
  %v3474 = vpop.f32.mrb[0].mxu0
  %v3475 = vpop.f32.mrb[0].mxu0
  %v3476 = vadd.f32 0.0, %v3475
  %v3477 = vpop.f32.mrb[0].mxu0
  %3478 = vmatprep.mubr.bf16.mxu0 0
  %3479 = vmatmul.mubr.bf16.gmra.mrb[0].mxu0 %v3272
  %v3480 = vpop.f32.mrb[0].mxu0
  %v3481 = vadd.f32 0.0, %v3480
  %v3482 = vpop.f32.mrb[0].mxu0
  %v3483 = vpop.f32.mrb[0].mxu0
  %v3484 = vadd.f32 0.0, %v3483
  %v3485 = vpop.f32.mrb[0].mxu0
  %3486 = vmatprep.mubr.bf16.mxu0 0
  %3487 = vmatmul.mubr.bf16.gmra.mrb[0].mxu0 %v3273
  %v3488 = vpop.f32.mrb[0].mxu0
  %v3489 = vadd.f32 0.0, %v3488
  %v3490 = vpop.f32.mrb[0].mxu0
  %v3491 = vpop.f32.mrb[0].mxu0
  %v3492 = vadd.f32 0.0, %v3491
  %v3493 = vpop.f32.mrb[0].mxu0
  %3494 = vmatprep.mubr.bf16.mxu0 0
  %3495 = vmatmul.mubr.bf16.gmra.mrb[0].mxu0 %v3274
  %v3496 = vpop.f32.mrb[0].mxu0
  %v3497 = vadd.f32 0.0, %v3496
  %v3498 = vpop.f32.mrb[0].mxu0
  %v3499 = vpop.f32.mrb[0].mxu0
  %v3500 = vadd.f32 0.0, %v3499
  %v3501 = vpop.f32.mrb[0].mxu0
  %3502 = vmatprep.mubr.bf16.mxu0 0
  %3503 = vmatmul.mubr.bf16.gmra.mrb[0].mxu0 %v3275
  %v3504 = vpop.f32.mrb[0].mxu0
  %v3505 = vadd.f32 0.0, %v3504
  %v3506 = vpop.f32.mrb[0].mxu0
  %v3507 = vpop.f32.mrb[0].mxu0
  %v3508 = vadd.f32 0.0, %v3507
  %v3509 = vpop.f32.mrb[0].mxu0
  %3510 = vmatprep.mubr.bf16.mxu0 0
  %3511 = vmatmul.mubr.bf16.gmra.mrb[0].mxu0 %v3276
  %v3512 = vpop.f32.mrb[0].mxu0
  %v3513 = vadd.f32 0.0, %v3512
  %v3514 = vpop.f32.mrb[0].mxu0
  %v3515 = vpop.f32.mrb[0].mxu0
  %v3516 = vadd.f32 0.0, %v3515
  %v3517 = vpop.f32.mrb[0].mxu0
  %3518 = vmatprep.mubr.bf16.mxu0 0
  %3519 = vmatmul.mubr.bf16.gmra.mrb[0].mxu0 %v3277
  %v3520 = vpop.f32.mrb[0].mxu0
  %v3521 = vadd.f32 0.0, %v3520
  %v3522 = vpop.f32.mrb[0].mxu0
  %v3523 = vpop.f32.mrb[0].mxu0
  %v3524 = vadd.f32 0.0, %v3523
  %v3525 = vpop.f32.mrb[0].mxu0
  %3526 = vmatprep.mubr.bf16.mxu0 0
  %3527 = vmatmul.mubr.bf16.gmra.mrb[0].mxu0 %v3278
  %v3528 = vpop.f32.mrb[0].mxu0
  %v3529 = vadd.f32 0.0, %v3528
  %v3530 = vpop.f32.mrb[0].mxu0
  %v3531 = vpop.f32.mrb[0].mxu0
  %v3532 = vadd.f32 0.0, %v3531
  %v3533 = vpop.f32.mrb[0].mxu0
  %3534 = vmatprep.mubr.bf16.mxu0 0
  %3535 = vmatmul.mubr.bf16.gmra.mrb[0].mxu0 %v3279
  %v3536 = vpop.f32.mrb[0].mxu0
  %v3537 = vadd.f32 0.0, %v3536
  %v3538 = vpop.f32.mrb[0].mxu0
  %v3539 = vpop.f32.mrb[0].mxu0
  %v3540 = vadd.f32 0.0, %v3539
  %v3541 = vpop.f32.mrb[0].mxu0
  %3542 = vmatprep.mubr.bf16.mxu0 0
  %3543 = vmatmul.mubr.bf16.gmra.mrb[0].mxu0 %v3280
  %v3544 = vpop.f32.mrb[0].mxu0
  %v3545 = vadd.f32 0.0, %v3544
  %v3546 = vpop.f32.mrb[0].mxu0
  %v3547 = vpop.f32.mrb[0].mxu0
  %v3548 = vadd.f32 0.0, %v3547
  %v3549 = vpop.f32.mrb[0].mxu0
  %3550 = vmatprep.mubr.bf16.mxu0 0
  %3551 = vmatmul.mubr.bf16.gmra.mrb[0].mxu0 %v3281
  %v3552 = vpop.f32.mrb[0].mxu0
  %v3553 = vadd.f32 0.0, %v3552
  %v3554 = vpop.f32.mrb[0].mxu0
  %v3555 = vpop.f32.mrb[0].mxu0
  %v3556 = vadd.f32 0.0, %v3555
  %v3557 = vpop.f32.mrb[0].mxu0
  %3558 = vmatprep.mubr.bf16.mxu0 0
  %3559 = vmatmul.mubr.bf16.gmra.mrb[0].mxu0 %v3282
  %v3560 = vpop.f32.mrb[0].mxu0
  %v3561 = vadd.f32 0.0, %v3560
  %v3562 = vpop.f32.mrb[0].mxu0
  %v3563 = vpop.f32.mrb[0].mxu0
  %v3564 = vadd.f32 0.0, %v3563
  %v3565 = vpop.f32.mrb[0].mxu0
  %3566 = vmatprep.mubr.bf16.mxu0 0
  %3567 = vmatmul.mubr.bf16.gmra.mrb[0].mxu0 %v3283
  %v3568 = vpop.f32.mrb[0].mxu0
  %v3569 = vadd.f32 0.0, %v3568
  %v3570 = vpop.f32.mrb[0].mxu0
  %v3571 = vpop.f32.mrb[0].mxu0
  %v3572 = vadd.f32 0.0, %v3571
  %v3573 = vpop.f32.mrb[0].mxu0
  %3574 = vmatprep.mubr.bf16.mxu0 0
  %3575 = vmatmul.mubr.bf16.gmra.mrb[0].mxu0 %v3284
  %v3576 = vpop.f32.mrb[0].mxu0
  %v3577 = vadd.f32 0.0, %v3576
  %v3578 = vpop.f32.mrb[0].mxu0
  %v3579 = vpop.f32.mrb[0].mxu0
  %v3580 = vadd.f32 0.0, %v3579
  %v3581 = vpop.f32.mrb[0].mxu0
  %3582 = vmatprep.mubr.bf16.mxu0 0
  %3583 = vmatmul.mubr.bf16.gmra.mrb[0].mxu0 %v3285
  %v3584 = vpop.f32.mrb[0].mxu0
  %v3585 = vadd.f32 0.0, %v3584
  %v3586 = vpop.f32.mrb[0].mxu0
  %v3587 = vpop.f32.mrb[0].mxu0
  %v3588 = vadd.f32 0.0, %v3587
  %v3589 = vpop.f32.mrb[0].mxu0
  %3590 = vmatprep.mubr.bf16.mxu0 0
  %3591 = vmatmul.mubr.bf16.gmra.mrb[0].mxu0 %v3286
  %v3592 = vpop.f32.mrb[0].mxu0
  %v3593 = vadd.f32 0.0, %v3592
  %v3594 = vpop.f32.mrb[0].mxu0
  %v3595 = vpop.f32.mrb[0].mxu0
  %v3596 = vadd.f32 0.0, %v3595
  %v3597 = vpop.f32.mrb[0].mxu0
  %3598 = vmatprep.mubr.bf16.mxu0 0
  %3599 = vmatmul.mubr.bf16.gmra.mrb[0].mxu0 %v3287
  %v3600 = vpop.f32.mrb[0].mxu0
  %v3601 = vadd.f32 0.0, %v3600
  %v3602 = vpop.f32.mrb[0].mxu0
  %v3603 = vpop.f32.mrb[0].mxu0
  %v3604 = vadd.f32 0.0, %v3603
  %v3605 = vpop.f32.mrb[0].mxu0
  %3606 = vmatprep.mubr.bf16.mxu0 0
  %3607 = vmatmul.mubr.bf16.gmra.mrb[0].mxu0 %v3288
  %v3608 = vpop.f32.mrb[0].mxu0
  %v3609 = vadd.f32 0.0, %v3608
  %v3610 = vpop.f32.mrb[0].mxu0
  %v3611 = vpop.f32.mrb[0].mxu0
  %v3612 = vadd.f32 0.0, %v3611
  %v3613 = vpop.f32.mrb[0].mxu0
  %3614 = vmatprep.mubr.bf16.mxu0 0
  %3615 = vmatmul.mubr.bf16.gmra.mrb[0].mxu0 %v3289
  %v3616 = vpop.f32.mrb[0].mxu0
  %v3617 = vadd.f32 0.0, %v3616
  %v3618 = vpop.f32.mrb[0].mxu0
  %v3619 = vpop.f32.mrb[0].mxu0
  %v3620 = vadd.f32 0.0, %v3619
  %v3621 = vpop.f32.mrb[0].mxu0
  %3622 = vmatprep.mubr.bf16.mxu0 0
  %3623 = vmatmul.mubr.bf16.gmra.mrb[0].mxu0 %v3290
  %v3624 = vpop.f32.mrb[0].mxu0
  %v3625 = vadd.f32 0.0, %v3624
  %v3626 = vpop.f32.mrb[0].mxu0
  %v3627 = vpop.f32.mrb[0].mxu0
  %v3628 = vadd.f32 0.0, %v3627
  %v3629 = vpop.f32.mrb[0].mxu0
  %3630 = vmatprep.mubr.bf16.mxu0 0
  %3631 = vmatmul.mubr.bf16.gmra.mrb[0].mxu0 %v3291
  %v3632 = vpop.f32.mrb[0].mxu0
  %v3633 = vadd.f32 0.0, %v3632
  %v3634 = vpop.f32.mrb[0].mxu0
  %v3635 = vpop.f32.mrb[0].mxu0
  %v3636 = vadd.f32 0.0, %v3635
  %v3637 = vpop.f32.mrb[0].mxu0
  %3638 = vmatprep.mubr.bf16.mxu0 0
  %3639 = vmatmul.mubr.bf16.gmra.mrb[0].mxu0 %v3292
  %v3640 = vpop.f32.mrb[0].mxu0
  %v3641 = vadd.f32 0.0, %v3640
  %v3642 = vpop.f32.mrb[0].mxu0
  %v3643 = vpop.f32.mrb[0].mxu0
  %v3644 = vadd.f32 0.0, %v3643
  %v3645 = vpop.f32.mrb[0].mxu0
  %3646 = vdwg.mxu0
  %v3647 = vadd.f32 %v3132, %v3393
  %v3648 = vadd.f32 %v3133, %v3396
  %v3649 = vadd.f32 %v3134, %v3401
  %v3650 = vadd.f32 %v3135, %v3404
  %v3651 = vadd.f32 %v3136, %v3409
  %v3652 = vadd.f32 %v3137, %v3412
  %v3653 = vadd.f32 %v3138, %v3417
  %v3654 = vadd.f32 %v3139, %v3420
  %v3655 = vadd.f32 %v3140, %v3425
  %v3656 = vadd.f32 %v3141, %v3428
  %v3657 = vadd.f32 %v3142, %v3433
  %v3658 = vadd.f32 %v3143, %v3436
  %v3659 = vadd.f32 %v3144, %v3441
  %v3660 = vadd.f32 %v3145, %v3444
  %v3661 = vadd.f32 %v3146, %v3449
  %v3662 = vadd.f32 %v3147, %v3452
  %v3663 = vadd.f32 %v3148, %v3457
  %v3664 = vadd.f32 %v3149, %v3460
  %v3665 = vadd.f32 %v3150, %v3465
  %v3666 = vadd.f32 %v3151, %v3468
  %v3667 = vadd.f32 %v3152, %v3473
  %v3668 = vadd.f32 %v3153, %v3476
  %v3669 = vadd.f32 %v3154, %v3481
  %v3670 = vadd.f32 %v3155, %v3484
  %v3671 = vadd.f32 %v3156, %v3489
  %v3672 = vadd.f32 %v3157, %v3492
  %v3673 = vadd.f32 %v3158, %v3497
  %v3674 = vadd.f32 %v3159, %v3500
  %v3675 = vadd.f32 %v3160, %v3505
  %v3676 = vadd.f32 %v3161, %v3508
  %v3677 = vadd.f32 %v3162, %v3513
  %v3678 = vadd.f32 %v3163, %v3516
  %v3679 = vadd.f32 %v3164, %v3521
  %v3680 = vadd.f32 %v3165, %v3524
  %v3681 = vadd.f32 %v3166, %v3529
  %v3682 = vadd.f32 %v3167, %v3532
  %v3683 = vadd.f32 %v3168, %v3537
  %v3684 = vadd.f32 %v3169, %v3540
  %v3685 = vadd.f32 %v3170, %v3545
  %v3686 = vadd.f32 %v3171, %v3548
  %v3687 = vadd.f32 %v3172, %v3553
  %v3688 = vadd.f32 %v3173, %v3556
  %v3689 = vadd.f32 %v3174, %v3561
  %v3690 = vadd.f32 %v3175, %v3564
  %v3691 = vadd.f32 %v3176, %v3569
  %v3692 = vadd.f32 %v3177, %v3572
  %v3693 = vadd.f32 %v3178, %v3577
  %v3694 = vadd.f32 %v3179, %v3580
  %v3695 = vadd.f32 %v3180, %v3585
  %v3696 = vadd.f32 %v3181, %v3588
  %v3697 = vadd.f32 %v3182, %v3593
  %v3698 = vadd.f32 %v3183, %v3596
  %v3699 = vadd.f32 %v3184, %v3601
  %v3700 = vadd.f32 %v3185, %v3604
  %v3701 = vadd.f32 %v3186, %v3609
  %v3702 = vadd.f32 %v3187, %v3612
  %v3703 = vadd.f32 %v3188, %v3617
  %v3704 = vadd.f32 %v3189, %v3620
  %v3705 = vadd.f32 %v3190, %v3625
  %v3706 = vadd.f32 %v3191, %v3628
  %v3707 = vadd.f32 %v3192, %v3633
  %v3708 = vadd.f32 %v3193, %v3636
  %v3709 = vadd.f32 %v3194, %v3641
  %v3710 = vadd.f32 %v3195, %v3644
  %v3711 = vld [vmem:[%s3196 + $0x1] sm:$0xff]
  %v3712 = vld [vmem:[%s3196 + $0x9] sm:$0xff]
  %v3713 = vld [vmem:[%s3196 + $0x19] sm:$0xff]
  %v3714 = vld [vmem:[%s3196 + $0x21] sm:$0xff]
  %v3715 = vld [vmem:[%s3196 + $0x31] sm:$0xff]
  %v3716 = vld [vmem:[%s3196 + $0x39] sm:$0xff]
  %v3717 = vld [vmem:[%s3196 + $0x49] sm:$0xff]
  %v3718 = vld [vmem:[%s3196 + $0x51] sm:$0xff]
  %v3719 = vld [vmem:[%s3196 + $0x61] sm:$0xff]
  %v3720 = vld [vmem:[%s3196 + $0x69] sm:$0xff]
  %v3721 = vld [vmem:[%s3196 + $0x79] sm:$0xff]
  %v3722 = vld [vmem:[%s3196 + $0x81] sm:$0xff]
  %v3723 = vld [vmem:[%s3196 + $0x91] sm:$0xff]
  %v3724 = vld [vmem:[%s3196 + $0x99] sm:$0xff]
  %v3725 = vld [vmem:[%s3196 + $0xa9] sm:$0xff]
  %v3726 = vld [vmem:[%s3196 + $0xb1] sm:$0xff]
  %v3727 = vld [vmem:[%s3196 + $0xc1] sm:$0xff]
  %v3728 = vld [vmem:[%s3196 + $0xc9] sm:$0xff]
  %v3729 = vld [vmem:[%s3196 + $0xd9] sm:$0xff]
  %v3730 = vld [vmem:[%s3196 + $0xe1] sm:$0xff]
  %v3731 = vld [vmem:[%s3196 + $0xf1] sm:$0xff]
  %v3732 = vld [vmem:[%s3196 + $0xf9] sm:$0xff]
  %v3733 = vld [vmem:[%s3196 + $0x109] sm:$0xff]
  %v3734 = vld [vmem:[%s3196 + $0x111] sm:$0xff]
  %v3735 = vld [vmem:[%s3196 + $0x121] sm:$0xff]
  %v3736 = vld [vmem:[%s3196 + $0x129] sm:$0xff]
  %v3737 = vld [vmem:[%s3196 + $0x139] sm:$0xff]
  %v3738 = vld [vmem:[%s3196 + $0x141] sm:$0xff]
  %v3739 = vld [vmem:[%s3196 + $0x151] sm:$0xff]
  %v3740 = vld [vmem:[%s3196 + $0x159] sm:$0xff]
  %v3741 = vld [vmem:[%s3196 + $0x169] sm:$0xff]
  %v3742 = vld [vmem:[%s3196 + $0x171] sm:$0xff]
  %v3743 = vld [vmem:[%s3196 + $0x1b1] sm:$0xff]
  %v3744 = vld [vmem:[%s3196 + $0x1b9] sm:$0xff]
  %v3745 = vld [vmem:[%s3196 + $0x1c9] sm:$0xff]
  %v3746 = vld [vmem:[%s3196 + $0x1d1] sm:$0xff]
  %v3747 = vld [vmem:[%s3196 + $0x1e1] sm:$0xff]
  %v3748 = vld [vmem:[%s3196 + $0x1e9] sm:$0xff]
  %v3749 = vld [vmem:[%s3196 + $0x1f9] sm:$0xff]
  %v3750 = vld [vmem:[%s3196 + $0x201] sm:$0xff]
  %v3751 = vld [vmem:[%s3196 + $0x211] sm:$0xff]
  %v3752 = vld [vmem:[%s3196 + $0x219] sm:$0xff]
  %v3753 = vld [vmem:[%s3196 + $0x229] sm:$0xff]
  %v3754 = vld [vmem:[%s3196 + $0x231] sm:$0xff]
  %v3755 = vld [vmem:[%s3196 + $0x241] sm:$0xff]
  %v3756 = vld [vmem:[%s3196 + $0x249] sm:$0xff]
  %v3757 = vld [vmem:[%s3196 + $0x259] sm:$0xff]
  %v3758 = vld [vmem:[%s3196 + $0x261] sm:$0xff]
  %v3759 = vld [vmem:[%s3196 + $0x271] sm:$0xff]
  %v3760 = vld [vmem:[%s3196 + $0x279] sm:$0xff]
  %v3761 = vld [vmem:[%s3196 + $0x289] sm:$0xff]
  %v3762 = vld [vmem:[%s3196 + $0x291] sm:$0xff]
  %v3763 = vld [vmem:[%s3196 + $0x2a1] sm:$0xff]
  %v3764 = vld [vmem:[%s3196 + $0x2a9] sm:$0xff]
  %v3765 = vld [vmem:[%s3196 + $0x2b9] sm:$0xff]
  %v3766 = vld [vmem:[%s3196 + $0x2c1] sm:$0xff]
  %v3767 = vld [vmem:[%s3196 + $0x2d1] sm:$0xff]
  %v3768 = vld [vmem:[%s3196 + $0x2d9] sm:$0xff]
  %v3769 = vld [vmem:[%s3196 + $0x2e9] sm:$0xff]
  %v3770 = vld [vmem:[%s3196 + $0x2f1] sm:$0xff]
  %v3771 = vld [vmem:[%s3196 + $0x301] sm:$0xff]
  %v3772 = vld [vmem:[%s3196 + $0x309] sm:$0xff]
  %v3773 = vld [vmem:[%s3196 + $0x319] sm:$0xff]
  %v3774 = vld [vmem:[%s3196 + $0x321] sm:$0xff]
  %v3775 = vpack.c.bf16 %v3712, %v3711
  %v3776 = vpack.c.bf16 %v3714, %v3713
  %v3777 = vpack.c.bf16 %v3716, %v3715
  %v3778 = vpack.c.bf16 %v3718, %v3717
  %v3779 = vpack.c.bf16 %v3720, %v3719
  %v3780 = vpack.c.bf16 %v3722, %v3721
  %v3781 = vpack.c.bf16 %v3724, %v3723
  %v3782 = vpack.c.bf16 %v3726, %v3725
  %v3783 = vpack.c.bf16 %v3728, %v3727
  %v3784 = vpack.c.bf16 %v3730, %v3729
  %v3785 = vpack.c.bf16 %v3732, %v3731
  %v3786 = vpack.c.bf16 %v3734, %v3733
  %v3787 = vpack.c.bf16 %v3736, %v3735
  %v3788 = vpack.c.bf16 %v3738, %v3737
  %v3789 = vpack.c.bf16 %v3740, %v3739
  %v3790 = vpack.c.bf16 %v3742, %v3741
  %v3791 = vpack.c.bf16 %v3744, %v3743
  %v3792 = vpack.c.bf16 %v3746, %v3745
  %v3793 = vpack.c.bf16 %v3748, %v3747
  %v3794 = vpack.c.bf16 %v3750, %v3749
  %v3795 = vpack.c.bf16 %v3752, %v3751
  %v3796 = vpack.c.bf16 %v3754, %v3753
  %v3797 = vpack.c.bf16 %v3756, %v3755
  %v3798 = vpack.c.bf16 %v3758, %v3757
  %v3799 = vpack.c.bf16 %v3760, %v3759
  %v3800 = vpack.c.bf16 %v3762, %v3761
  %v3801 = vpack.c.bf16 %v3764, %v3763
  %v3802 = vpack.c.bf16 %v3766, %v3765
  %v3803 = vpack.c.bf16 %v3768, %v3767
  %v3804 = vpack.c.bf16 %v3770, %v3769
  %v3805 = vpack.c.bf16 %v3772, %v3771
  %v3806 = vpack.c.bf16 %v3774, %v3773
  %s3807 = scalar_lea.vmem %s1, 448
  %v3808 = vld [vmem:[%s3807] sm:$0xf]
  %v3809 = vld [vmem:[%s3807 + $0x4] sm:$0xf]
  %v3810 = vld [vmem:[%s3807 + $0x8] sm:$0xf]
  %v3811 = vld [vmem:[%s3807 + $0xc] sm:$0xf]
  %v3812 = vld [vmem:[%s3807 + $0x10] sm:$0xf]
  %v3813 = vld [vmem:[%s3807 + $0x14] sm:$0xf]
  %v3814 = vld [vmem:[%s3807 + $0x18] sm:$0xf]
  %v3815 = vld [vmem:[%s3807 + $0x1c] sm:$0xf]
  %v3816 = vld [vmem:[%s3807 + $0x20] sm:$0xf]
  %v3817 = vld [vmem:[%s3807 + $0x24] sm:$0xf]
  %v3818 = vld [vmem:[%s3807 + $0x28] sm:$0xf]
  %v3819 = vld [vmem:[%s3807 + $0x2c] sm:$0xf]
  %v3820 = vld [vmem:[%s3807 + $0x30] sm:$0xf]
  %v3821 = vld [vmem:[%s3807 + $0x34] sm:$0xf]
  %v3822 = vld [vmem:[%s3807 + $0x38] sm:$0xf]
  %v3823 = vld [vmem:[%s3807 + $0x3c] sm:$0xf]
  %v3840 = vunpack.c.l.b16 %v3808
  %v3841 = vunpack.c.l.b16 %v3809
  %v3842 = vunpack.c.l.b16 %v3810
  %v3843 = vunpack.c.l.b16 %v3811
  %v3844 = vunpack.c.l.b16 %v3812
  %v3845 = vunpack.c.l.b16 %v3813
  %v3846 = vunpack.c.l.b16 %v3814
  %v3847 = vunpack.c.l.b16 %v3815
  %v3848 = vunpack.c.l.b16 %v3816
  %v3849 = vunpack.c.l.b16 %v3817
  %v3850 = vunpack.c.l.b16 %v3818
  %v3851 = vunpack.c.l.b16 %v3819
  %v3852 = vunpack.c.l.b16 %v3820
  %v3853 = vunpack.c.l.b16 %v3821
  %v3854 = vunpack.c.l.b16 %v3822
  %v3855 = vunpack.c.l.b16 %v3823
  %v3856 = vpack.c.b16 %v3841, %v3840
  %v3857 = vpack.c.b16 %v3843, %v3842
  %v3858 = vpack.c.b16 %v3845, %v3844
  %v3859 = vpack.c.b16 %v3847, %v3846
  %v3860 = vpack.c.b16 %v3849, %v3848
  %v3861 = vpack.c.b16 %v3851, %v3850
  %v3862 = vpack.c.b16 %v3853, %v3852
  %v3863 = vpack.c.b16 %v3855, %v3854
  %3872 = vmatprep.subr.bf16.mxu0 0
  %3873 = vmatpush1.bf16.msra.mxu0 %v3856
  %3874 = vmatprep.subr.bf16.mxu0 0
  %3875 = vmatpush1.bf16.msra.mxu0 %v3857
  %3876 = vmatprep.subr.bf16.mxu0 0
  %3877 = vmatpush1.bf16.msra.mxu0 %v3858
  %3878 = vmatprep.subr.bf16.mxu0 0
  %3879 = vmatpush1.bf16.msra.mxu0 %v3859
  %3880 = vmatprep.subr.bf16.mxu0 0
  %3881 = vmatpush1.bf16.msra.mxu0 %v3860
  %3882 = vmatprep.subr.bf16.mxu0 0
  %3883 = vmatpush1.bf16.msra.mxu0 %v3861
  %3884 = vmatprep.subr.bf16.mxu0 0
  %3885 = vmatpush1.bf16.msra.mxu0 %v3862
  %3886 = vmatprep.subr.bf16.mxu0 0
  %3887 = vmatpush1.bf16.msra.mxu0 %v3863
  %3888 = vmatprep.subr.bf16.mxu0 0
  %3889 = vmatpush1.bf16.msra.mxu0 0
  %3890 = vmatprep.subr.bf16.mxu0 0
  %3891 = vmatpush1.bf16.msra.mxu0 0
  %3892 = vmatprep.subr.bf16.mxu0 0
  %3893 = vmatpush1.bf16.msra.mxu0 0
  %3894 = vmatprep.subr.bf16.mxu0 0
  %3895 = vmatpush1.bf16.msra.mxu0 0
  %3896 = vmatprep.subr.bf16.mxu0 0
  %3897 = vmatpush1.bf16.msra.mxu0 0
  %3898 = vmatprep.subr.bf16.mxu0 0
  %3899 = vmatpush1.bf16.msra.mxu0 0
  %3900 = vmatprep.subr.bf16.mxu0 0
  %3901 = vmatpush1.bf16.msra.mxu0 0
  %3902 = vmatprep.subr.bf16.mxu0 0
  %3903 = vmatpush1.bf16.msra.mxu0 0
  %3904 = vmatprep.mubr.bf16.mxu0 0
  %3905 = vmatmul.mubr.bf16.gmra.mrb[0].mxu0 %v3775
  %v3906 = vpop.f32.mrb[0].mxu0
  %v3907 = vadd.f32 0.0, %v3906
  %v3908 = vpop.f32.mrb[0].mxu0
  %v3909 = vpop.f32.mrb[0].mxu0
  %v3910 = vadd.f32 0.0, %v3909
  %v3911 = vpop.f32.mrb[0].mxu0
  %3912 = vmatprep.mubr.bf16.mxu0 0
  %3913 = vmatmul.mubr.bf16.gmra.mrb[0].mxu0 %v3776
  %v3914 = vpop.f32.mrb[0].mxu0
  %v3915 = vadd.f32 0.0, %v3914
  %v3916 = vpop.f32.mrb[0].mxu0
  %v3917 = vpop.f32.mrb[0].mxu0
  %v3918 = vadd.f32 0.0, %v3917
  %v3919 = vpop.f32.mrb[0].mxu0
  %3920 = vmatprep.mubr.bf16.mxu0 0
  %3921 = vmatmul.mubr.bf16.gmra.mrb[0].mxu0 %v3777
  %v3922 = vpop.f32.mrb[0].mxu0
  %v3923 = vadd.f32 0.0, %v3922
  %v3924 = vpop.f32.mrb[0].mxu0
  %v3925 = vpop.f32.mrb[0].mxu0
  %v3926 = vadd.f32 0.0, %v3925
  %v3927 = vpop.f32.mrb[0].mxu0
  %3928 = vmatprep.mubr.bf16.mxu0 0
  %3929 = vmatmul.mubr.bf16.gmra.mrb[0].mxu0 %v3778
  %v3930 = vpop.f32.mrb[0].mxu0
  %v3931 = vadd.f32 0.0, %v3930
  %v3932 = vpop.f32.mrb[0].mxu0
  %v3933 = vpop.f32.mrb[0].mxu0
  %v3934 = vadd.f32 0.0, %v3933
  %v3935 = vpop.f32.mrb[0].mxu0
  %3936 = vmatprep.mubr.bf16.mxu0 0
  %3937 = vmatmul.mubr.bf16.gmra.mrb[0].mxu0 %v3779
  %v3938 = vpop.f32.mrb[0].mxu0
  %v3939 = vadd.f32 0.0, %v3938
  %v3940 = vpop.f32.mrb[0].mxu0
  %v3941 = vpop.f32.mrb[0].mxu0
  %v3942 = vadd.f32 0.0, %v3941
  %v3943 = vpop.f32.mrb[0].mxu0
  %3944 = vmatprep.mubr.bf16.mxu0 0
  %3945 = vmatmul.mubr.bf16.gmra.mrb[0].mxu0 %v3780
  %v3946 = vpop.f32.mrb[0].mxu0
  %v3947 = vadd.f32 0.0, %v3946
  %v3948 = vpop.f32.mrb[0].mxu0
  %v3949 = vpop.f32.mrb[0].mxu0
  %v3950 = vadd.f32 0.0, %v3949
  %v3951 = vpop.f32.mrb[0].mxu0
  %3952 = vmatprep.mubr.bf16.mxu0 0
  %3953 = vmatmul.mubr.bf16.gmra.mrb[0].mxu0 %v3781
  %v3954 = vpop.f32.mrb[0].mxu0
  %v3955 = vadd.f32 0.0, %v3954
  %v3956 = vpop.f32.mrb[0].mxu0
  %v3957 = vpop.f32.mrb[0].mxu0
  %v3958 = vadd.f32 0.0, %v3957
  %v3959 = vpop.f32.mrb[0].mxu0
  %3960 = vmatprep.mubr.bf16.mxu0 0
  %3961 = vmatmul.mubr.bf16.gmra.mrb[0].mxu0 %v3782
  %v3962 = vpop.f32.mrb[0].mxu0
  %v3963 = vadd.f32 0.0, %v3962
  %v3964 = vpop.f32.mrb[0].mxu0
  %v3965 = vpop.f32.mrb[0].mxu0
  %v3966 = vadd.f32 0.0, %v3965
  %v3967 = vpop.f32.mrb[0].mxu0
  %3968 = vmatprep.mubr.bf16.mxu0 0
  %3969 = vmatmul.mubr.bf16.gmra.mrb[0].mxu0 %v3783
  %v3970 = vpop.f32.mrb[0].mxu0
  %v3971 = vadd.f32 0.0, %v3970
  %v3972 = vpop.f32.mrb[0].mxu0
  %v3973 = vpop.f32.mrb[0].mxu0
  %v3974 = vadd.f32 0.0, %v3973
  %v3975 = vpop.f32.mrb[0].mxu0
  %3976 = vmatprep.mubr.bf16.mxu0 0
  %3977 = vmatmul.mubr.bf16.gmra.mrb[0].mxu0 %v3784
  %v3978 = vpop.f32.mrb[0].mxu0
  %v3979 = vadd.f32 0.0, %v3978
  %v3980 = vpop.f32.mrb[0].mxu0
  %v3981 = vpop.f32.mrb[0].mxu0
  %v3982 = vadd.f32 0.0, %v3981
  %v3983 = vpop.f32.mrb[0].mxu0
  %3984 = vmatprep.mubr.bf16.mxu0 0
  %3985 = vmatmul.mubr.bf16.gmra.mrb[0].mxu0 %v3785
  %v3986 = vpop.f32.mrb[0].mxu0
  %v3987 = vadd.f32 0.0, %v3986
  %v3988 = vpop.f32.mrb[0].mxu0
  %v3989 = vpop.f32.mrb[0].mxu0
  %v3990 = vadd.f32 0.0, %v3989
  %v3991 = vpop.f32.mrb[0].mxu0
  %3992 = vmatprep.mubr.bf16.mxu0 0
  %3993 = vmatmul.mubr.bf16.gmra.mrb[0].mxu0 %v3786
  %v3994 = vpop.f32.mrb[0].mxu0
  %v3995 = vadd.f32 0.0, %v3994
  %v3996 = vpop.f32.mrb[0].mxu0
  %v3997 = vpop.f32.mrb[0].mxu0
  %v3998 = vadd.f32 0.0, %v3997
  %v3999 = vpop.f32.mrb[0].mxu0
  %4000 = vmatprep.mubr.bf16.mxu0 0
  %4001 = vmatmul.mubr.bf16.gmra.mrb[0].mxu0 %v3787
  %v4002 = vpop.f32.mrb[0].mxu0
  %v4003 = vadd.f32 0.0, %v4002
  %v4004 = vpop.f32.mrb[0].mxu0
  %v4005 = vpop.f32.mrb[0].mxu0
  %v4006 = vadd.f32 0.0, %v4005
  %v4007 = vpop.f32.mrb[0].mxu0
  %4008 = vmatprep.mubr.bf16.mxu0 0
  %4009 = vmatmul.mubr.bf16.gmra.mrb[0].mxu0 %v3788
  %v4010 = vpop.f32.mrb[0].mxu0
  %v4011 = vadd.f32 0.0, %v4010
  %v4012 = vpop.f32.mrb[0].mxu0
  %v4013 = vpop.f32.mrb[0].mxu0
  %v4014 = vadd.f32 0.0, %v4013
  %v4015 = vpop.f32.mrb[0].mxu0
  %4016 = vmatprep.mubr.bf16.mxu0 0
  %4017 = vmatmul.mubr.bf16.gmra.mrb[0].mxu0 %v3789
  %v4018 = vpop.f32.mrb[0].mxu0
  %v4019 = vadd.f32 0.0, %v4018
  %v4020 = vpop.f32.mrb[0].mxu0
  %v4021 = vpop.f32.mrb[0].mxu0
  %v4022 = vadd.f32 0.0, %v4021
  %v4023 = vpop.f32.mrb[0].mxu0
  %4024 = vmatprep.mubr.bf16.mxu0 0
  %4025 = vmatmul.mubr.bf16.gmra.mrb[0].mxu0 %v3790
  %v4026 = vpop.f32.mrb[0].mxu0
  %v4027 = vadd.f32 0.0, %v4026
  %v4028 = vpop.f32.mrb[0].mxu0
  %v4029 = vpop.f32.mrb[0].mxu0
  %v4030 = vadd.f32 0.0, %v4029
  %v4031 = vpop.f32.mrb[0].mxu0
  %4032 = vmatprep.mubr.bf16.mxu0 0
  %4033 = vmatmul.mubr.bf16.gmra.mrb[0].mxu0 %v3791
  %v4034 = vpop.f32.mrb[0].mxu0
  %v4035 = vadd.f32 0.0, %v4034
  %v4036 = vpop.f32.mrb[0].mxu0
  %v4037 = vpop.f32.mrb[0].mxu0
  %v4038 = vadd.f32 0.0, %v4037
  %v4039 = vpop.f32.mrb[0].mxu0
  %4040 = vmatprep.mubr.bf16.mxu0 0
  %4041 = vmatmul.mubr.bf16.gmra.mrb[0].mxu0 %v3792
  %v4042 = vpop.f32.mrb[0].mxu0
  %v4043 = vadd.f32 0.0, %v4042
  %v4044 = vpop.f32.mrb[0].mxu0
  %v4045 = vpop.f32.mrb[0].mxu0
  %v4046 = vadd.f32 0.0, %v4045
  %v4047 = vpop.f32.mrb[0].mxu0
  %4048 = vmatprep.mubr.bf16.mxu0 0
  %4049 = vmatmul.mubr.bf16.gmra.mrb[0].mxu0 %v3793
  %v4050 = vpop.f32.mrb[0].mxu0
  %v4051 = vadd.f32 0.0, %v4050
  %v4052 = vpop.f32.mrb[0].mxu0
  %v4053 = vpop.f32.mrb[0].mxu0
  %v4054 = vadd.f32 0.0, %v4053
  %v4055 = vpop.f32.mrb[0].mxu0
  %4056 = vmatprep.mubr.bf16.mxu0 0
  %4057 = vmatmul.mubr.bf16.gmra.mrb[0].mxu0 %v3794
  %v4058 = vpop.f32.mrb[0].mxu0
  %v4059 = vadd.f32 0.0, %v4058
  %v4060 = vpop.f32.mrb[0].mxu0
  %v4061 = vpop.f32.mrb[0].mxu0
  %v4062 = vadd.f32 0.0, %v4061
  %v4063 = vpop.f32.mrb[0].mxu0
  %4064 = vmatprep.mubr.bf16.mxu0 0
  %4065 = vmatmul.mubr.bf16.gmra.mrb[0].mxu0 %v3795
  %v4066 = vpop.f32.mrb[0].mxu0
  %v4067 = vadd.f32 0.0, %v4066
  %v4068 = vpop.f32.mrb[0].mxu0
  %v4069 = vpop.f32.mrb[0].mxu0
  %v4070 = vadd.f32 0.0, %v4069
  %v4071 = vpop.f32.mrb[0].mxu0
  %4072 = vmatprep.mubr.bf16.mxu0 0
  %4073 = vmatmul.mubr.bf16.gmra.mrb[0].mxu0 %v3796
  %v4074 = vpop.f32.mrb[0].mxu0
  %v4075 = vadd.f32 0.0, %v4074
  %v4076 = vpop.f32.mrb[0].mxu0
  %v4077 = vpop.f32.mrb[0].mxu0
  %v4078 = vadd.f32 0.0, %v4077
  %v4079 = vpop.f32.mrb[0].mxu0
  %4080 = vmatprep.mubr.bf16.mxu0 0
  %4081 = vmatmul.mubr.bf16.gmra.mrb[0].mxu0 %v3797
  %v4082 = vpop.f32.mrb[0].mxu0
  %v4083 = vadd.f32 0.0, %v4082
  %v4084 = vpop.f32.mrb[0].mxu0
  %v4085 = vpop.f32.mrb[0].mxu0
  %v4086 = vadd.f32 0.0, %v4085
  %v4087 = vpop.f32.mrb[0].mxu0
  %4088 = vmatprep.mubr.bf16.mxu0 0
  %4089 = vmatmul.mubr.bf16.gmra.mrb[0].mxu0 %v3798
  %v4090 = vpop.f32.mrb[0].mxu0
  %v4091 = vadd.f32 0.0, %v4090
  %v4092 = vpop.f32.mrb[0].mxu0
  %v4093 = vpop.f32.mrb[0].mxu0
  %v4094 = vadd.f32 0.0, %v4093
  %v4095 = vpop.f32.mrb[0].mxu0
  %4096 = vmatprep.mubr.bf16.mxu0 0
  %4097 = vmatmul.mubr.bf16.gmra.mrb[0].mxu0 %v3799
  %v4098 = vpop.f32.mrb[0].mxu0
  %v4099 = vadd.f32 0.0, %v4098
  %v4100 = vpop.f32.mrb[0].mxu0
  %v4101 = vpop.f32.mrb[0].mxu0
  %v4102 = vadd.f32 0.0, %v4101
  %v4103 = vpop.f32.mrb[0].mxu0
  %4104 = vmatprep.mubr.bf16.mxu0 0
  %4105 = vmatmul.mubr.bf16.gmra.mrb[0].mxu0 %v3800
  %v4106 = vpop.f32.mrb[0].mxu0
  %v4107 = vadd.f32 0.0, %v4106
  %v4108 = vpop.f32.mrb[0].mxu0
  %v4109 = vpop.f32.mrb[0].mxu0
  %v4110 = vadd.f32 0.0, %v4109
  %v4111 = vpop.f32.mrb[0].mxu0
  %4112 = vmatprep.mubr.bf16.mxu0 0
  %4113 = vmatmul.mubr.bf16.gmra.mrb[0].mxu0 %v3801
  %v4114 = vpop.f32.mrb[0].mxu0
  %v4115 = vadd.f32 0.0, %v4114
  %v4116 = vpop.f32.mrb[0].mxu0
  %v4117 = vpop.f32.mrb[0].mxu0
  %v4118 = vadd.f32 0.0, %v4117
  %v4119 = vpop.f32.mrb[0].mxu0
  %4120 = vmatprep.mubr.bf16.mxu0 0
  %4121 = vmatmul.mubr.bf16.gmra.mrb[0].mxu0 %v3802
  %v4122 = vpop.f32.mrb[0].mxu0
  %v4123 = vadd.f32 0.0, %v4122
  %v4124 = vpop.f32.mrb[0].mxu0
  %v4125 = vpop.f32.mrb[0].mxu0
  %v4126 = vadd.f32 0.0, %v4125
  %v4127 = vpop.f32.mrb[0].mxu0
  %4128 = vmatprep.mubr.bf16.mxu0 0
  %4129 = vmatmul.mubr.bf16.gmra.mrb[0].mxu0 %v3803
  %v4130 = vpop.f32.mrb[0].mxu0
  %v4131 = vadd.f32 0.0, %v4130
  %v4132 = vpop.f32.mrb[0].mxu0
  %v4133 = vpop.f32.mrb[0].mxu0
  %v4134 = vadd.f32 0.0, %v4133
  %v4135 = vpop.f32.mrb[0].mxu0
  %4136 = vmatprep.mubr.bf16.mxu0 0
  %4137 = vmatmul.mubr.bf16.gmra.mrb[0].mxu0 %v3804
  %v4138 = vpop.f32.mrb[0].mxu0
  %v4139 = vadd.f32 0.0, %v4138
  %v4140 = vpop.f32.mrb[0].mxu0
  %v4141 = vpop.f32.mrb[0].mxu0
  %v4142 = vadd.f32 0.0, %v4141
  %v4143 = vpop.f32.mrb[0].mxu0
  %4144 = vmatprep.mubr.bf16.mxu0 0
  %4145 = vmatmul.mubr.bf16.gmra.mrb[0].mxu0 %v3805
  %v4146 = vpop.f32.mrb[0].mxu0
  %v4147 = vadd.f32 0.0, %v4146
  %v4148 = vpop.f32.mrb[0].mxu0
  %v4149 = vpop.f32.mrb[0].mxu0
  %v4150 = vadd.f32 0.0, %v4149
  %v4151 = vpop.f32.mrb[0].mxu0
  %4152 = vmatprep.mubr.bf16.mxu0 0
  %4153 = vmatmul.mubr.bf16.gmra.mrb[0].mxu0 %v3806
  %v4154 = vpop.f32.mrb[0].mxu0
  %v4155 = vadd.f32 0.0, %v4154
  %v4156 = vpop.f32.mrb[0].mxu0
  %v4157 = vpop.f32.mrb[0].mxu0
  %v4158 = vadd.f32 0.0, %v4157
  %v4159 = vpop.f32.mrb[0].mxu0
  %4160 = vdwg.mxu0
  %v4161 = vadd.f32 %v3647, %v3907
  %v4162 = vadd.f32 %v3648, %v3910
  %v4163 = vadd.f32 %v3649, %v3915
  %v4164 = vadd.f32 %v3650, %v3918
  %v4165 = vadd.f32 %v3651, %v3923
  %v4166 = vadd.f32 %v3652, %v3926
  %v4167 = vadd.f32 %v3653, %v3931
  %v4168 = vadd.f32 %v3654, %v3934
  %v4169 = vadd.f32 %v3655, %v3939
  %v4170 = vadd.f32 %v3656, %v3942
  %v4171 = vadd.f32 %v3657, %v3947
  %v4172 = vadd.f32 %v3658, %v3950
  %v4173 = vadd.f32 %v3659, %v3955
  %v4174 = vadd.f32 %v3660, %v3958
  %v4175 = vadd.f32 %v3661, %v3963
  %v4176 = vadd.f32 %v3662, %v3966
  %v4177 = vadd.f32 %v3663, %v3971
  %v4178 = vadd.f32 %v3664, %v3974
  %v4179 = vadd.f32 %v3665, %v3979
  %v4180 = vadd.f32 %v3666, %v3982
  %v4181 = vadd.f32 %v3667, %v3987
  %v4182 = vadd.f32 %v3668, %v3990
  %v4183 = vadd.f32 %v3669, %v3995
  %v4184 = vadd.f32 %v3670, %v3998
  %v4185 = vadd.f32 %v3671, %v4003
  %v4186 = vadd.f32 %v3672, %v4006
  %v4187 = vadd.f32 %v3673, %v4011
  %v4188 = vadd.f32 %v3674, %v4014
  %v4189 = vadd.f32 %v3675, %v4019
  %v4190 = vadd.f32 %v3676, %v4022
  %v4191 = vadd.f32 %v3677, %v4027
  %v4192 = vadd.f32 %v3678, %v4030
  %v4193 = vadd.f32 %v3679, %v4035
  %v4194 = vadd.f32 %v3680, %v4038
  %v4195 = vadd.f32 %v3681, %v4043
  %v4196 = vadd.f32 %v3682, %v4046
  %v4197 = vadd.f32 %v3683, %v4051
  %v4198 = vadd.f32 %v3684, %v4054
  %v4199 = vadd.f32 %v3685, %v4059
  %v4200 = vadd.f32 %v3686, %v4062
  %v4201 = vadd.f32 %v3687, %v4067
  %v4202 = vadd.f32 %v3688, %v4070
  %v4203 = vadd.f32 %v3689, %v4075
  %v4204 = vadd.f32 %v3690, %v4078
  %v4205 = vadd.f32 %v3691, %v4083
  %v4206 = vadd.f32 %v3692, %v4086
  %v4207 = vadd.f32 %v3693, %v4091
  %v4208 = vadd.f32 %v3694, %v4094
  %v4209 = vadd.f32 %v3695, %v4099
  %v4210 = vadd.f32 %v3696, %v4102
  %v4211 = vadd.f32 %v3697, %v4107
  %v4212 = vadd.f32 %v3698, %v4110
  %v4213 = vadd.f32 %v3699, %v4115
  %v4214 = vadd.f32 %v3700, %v4118
  %v4215 = vadd.f32 %v3701, %v4123
  %v4216 = vadd.f32 %v3702, %v4126
  %v4217 = vadd.f32 %v3703, %v4131
  %v4218 = vadd.f32 %v3704, %v4134
  %v4219 = vadd.f32 %v3705, %v4139
  %v4220 = vadd.f32 %v3706, %v4142
  %v4221 = vadd.f32 %v3707, %v4147
  %v4222 = vadd.f32 %v3708, %v4150
  %v4223 = vadd.f32 %v3709, %v4155
  %v4224 = vadd.f32 %v3710, %v4158
  %v4225 = vld [vmem:[%s3196 + $0x2] sm:$0xff]
  %v4226 = vld [vmem:[%s3196 + $0xa] sm:$0xff]
  %v4227 = vld [vmem:[%s3196 + $0x1a] sm:$0xff]
  %v4228 = vld [vmem:[%s3196 + $0x22] sm:$0xff]
  %v4229 = vld [vmem:[%s3196 + $0x32] sm:$0xff]
  %v4230 = vld [vmem:[%s3196 + $0x3a] sm:$0xff]
  %v4231 = vld [vmem:[%s3196 + $0x4a] sm:$0xff]
  %v4232 = vld [vmem:[%s3196 + $0x52] sm:$0xff]
  %v4233 = vld [vmem:[%s3196 + $0x62] sm:$0xff]
  %v4234 = vld [vmem:[%s3196 + $0x6a] sm:$0xff]
  %v4235 = vld [vmem:[%s3196 + $0x7a] sm:$0xff]
  %v4236 = vld [vmem:[%s3196 + $0x82] sm:$0xff]
  %v4237 = vld [vmem:[%s3196 + $0x92] sm:$0xff]
  %v4238 = vld [vmem:[%s3196 + $0x9a] sm:$0xff]
  %v4239 = vld [vmem:[%s3196 + $0xaa] sm:$0xff]
  %v4240 = vld [vmem:[%s3196 + $0xb2] sm:$0xff]
  %v4241 = vld [vmem:[%s3196 + $0xc2] sm:$0xff]
  %v4242 = vld [vmem:[%s3196 + $0xca] sm:$0xff]
  %v4243 = vld [vmem:[%s3196 + $0xda] sm:$0xff]
  %v4244 = vld [vmem:[%s3196 + $0xe2] sm:$0xff]
  %v4245 = vld [vmem:[%s3196 + $0xf2] sm:$0xff]
  %v4246 = vld [vmem:[%s3196 + $0xfa] sm:$0xff]
  %v4247 = vld [vmem:[%s3196 + $0x10a] sm:$0xff]
  %v4248 = vld [vmem:[%s3196 + $0x112] sm:$0xff]
  %v4249 = vld [vmem:[%s3196 + $0x122] sm:$0xff]
  %v4250 = vld [vmem:[%s3196 + $0x12a] sm:$0xff]
  %v4251 = vld [vmem:[%s3196 + $0x13a] sm:$0xff]
  %v4252 = vld [vmem:[%s3196 + $0x142] sm:$0xff]
  %v4253 = vld [vmem:[%s3196 + $0x152] sm:$0xff]
  %v4254 = vld [vmem:[%s3196 + $0x15a] sm:$0xff]
  %v4255 = vld [vmem:[%s3196 + $0x16a] sm:$0xff]
  %v4256 = vld [vmem:[%s3196 + $0x172] sm:$0xff]
  %v4257 = vld [vmem:[%s3196 + $0x1b2] sm:$0xff]
  %v4258 = vld [vmem:[%s3196 + $0x1ba] sm:$0xff]
  %v4259 = vld [vmem:[%s3196 + $0x1ca] sm:$0xff]
  %v4260 = vld [vmem:[%s3196 + $0x1d2] sm:$0xff]
  %v4261 = vld [vmem:[%s3196 + $0x1e2] sm:$0xff]
  %v4262 = vld [vmem:[%s3196 + $0x1ea] sm:$0xff]
  %v4263 = vld [vmem:[%s3196 + $0x1fa] sm:$0xff]
  %v4264 = vld [vmem:[%s3196 + $0x202] sm:$0xff]
  %v4265 = vld [vmem:[%s3196 + $0x212] sm:$0xff]
  %v4266 = vld [vmem:[%s3196 + $0x21a] sm:$0xff]
  %v4267 = vld [vmem:[%s3196 + $0x22a] sm:$0xff]
  %v4268 = vld [vmem:[%s3196 + $0x232] sm:$0xff]
  %v4269 = vld [vmem:[%s3196 + $0x242] sm:$0xff]
  %v4270 = vld [vmem:[%s3196 + $0x24a] sm:$0xff]
  %v4271 = vld [vmem:[%s3196 + $0x25a] sm:$0xff]
  %v4272 = vld [vmem:[%s3196 + $0x262] sm:$0xff]
  %v4273 = vld [vmem:[%s3196 + $0x272] sm:$0xff]
  %v4274 = vld [vmem:[%s3196 + $0x27a] sm:$0xff]
  %v4275 = vld [vmem:[%s3196 + $0x28a] sm:$0xff]
  %v4276 = vld [vmem:[%s3196 + $0x292] sm:$0xff]
  %v4277 = vld [vmem:[%s3196 + $0x2a2] sm:$0xff]
  %v4278 = vld [vmem:[%s3196 + $0x2aa] sm:$0xff]
  %v4279 = vld [vmem:[%s3196 + $0x2ba] sm:$0xff]
  %v4280 = vld [vmem:[%s3196 + $0x2c2] sm:$0xff]
  %v4281 = vld [vmem:[%s3196 + $0x2d2] sm:$0xff]
  %v4282 = vld [vmem:[%s3196 + $0x2da] sm:$0xff]
  %v4283 = vld [vmem:[%s3196 + $0x2ea] sm:$0xff]
  %v4284 = vld [vmem:[%s3196 + $0x2f2] sm:$0xff]
  %v4285 = vld [vmem:[%s3196 + $0x302] sm:$0xff]
  %v4286 = vld [vmem:[%s3196 + $0x30a] sm:$0xff]
  %v4287 = vld [vmem:[%s3196 + $0x31a] sm:$0xff]
  %v4288 = vld [vmem:[%s3196 + $0x322] sm:$0xff]
  %v4289 = vpack.c.bf16 %v4226, %v4225
  %v4290 = vpack.c.bf16 %v4228, %v4227
  %v4291 = vpack.c.bf16 %v4230, %v4229
  %v4292 = vpack.c.bf16 %v4232, %v4231
  %v4293 = vpack.c.bf16 %v4234, %v4233
  %v4294 = vpack.c.bf16 %v4236, %v4235
  %v4295 = vpack.c.bf16 %v4238, %v4237
  %v4296 = vpack.c.bf16 %v4240, %v4239
  %v4297 = vpack.c.bf16 %v4242, %v4241
  %v4298 = vpack.c.bf16 %v4244, %v4243
  %v4299 = vpack.c.bf16 %v4246, %v4245
  %v4300 = vpack.c.bf16 %v4248, %v4247
  %v4301 = vpack.c.bf16 %v4250, %v4249
  %v4302 = vpack.c.bf16 %v4252, %v4251
  %v4303 = vpack.c.bf16 %v4254, %v4253
  %v4304 = vpack.c.bf16 %v4256, %v4255
  %v4305 = vpack.c.bf16 %v4258, %v4257
  %v4306 = vpack.c.bf16 %v4260, %v4259
  %v4307 = vpack.c.bf16 %v4262, %v4261
  %v4308 = vpack.c.bf16 %v4264, %v4263
  %v4309 = vpack.c.bf16 %v4266, %v4265
  %v4310 = vpack.c.bf16 %v4268, %v4267
  %v4311 = vpack.c.bf16 %v4270, %v4269
  %v4312 = vpack.c.bf16 %v4272, %v4271
  %v4313 = vpack.c.bf16 %v4274, %v4273
  %v4314 = vpack.c.bf16 %v4276, %v4275
  %v4315 = vpack.c.bf16 %v4278, %v4277
  %v4316 = vpack.c.bf16 %v4280, %v4279
  %v4317 = vpack.c.bf16 %v4282, %v4281
  %v4318 = vpack.c.bf16 %v4284, %v4283
  %v4319 = vpack.c.bf16 %v4286, %v4285
  %v4320 = vpack.c.bf16 %v4288, %v4287
  %s4321 = scalar_lea.vmem %s1, 512
  %v4322 = vld [vmem:[%s4321] sm:$0xf]
  %v4323 = vld [vmem:[%s4321 + $0x4] sm:$0xf]
  %v4324 = vld [vmem:[%s4321 + $0x8] sm:$0xf]
  %v4325 = vld [vmem:[%s4321 + $0xc] sm:$0xf]
  %v4326 = vld [vmem:[%s4321 + $0x10] sm:$0xf]
  %v4327 = vld [vmem:[%s4321 + $0x14] sm:$0xf]
  %v4328 = vld [vmem:[%s4321 + $0x18] sm:$0xf]
  %v4329 = vld [vmem:[%s4321 + $0x1c] sm:$0xf]
  %v4330 = vld [vmem:[%s4321 + $0x20] sm:$0xf]
  %v4331 = vld [vmem:[%s4321 + $0x24] sm:$0xf]
  %v4332 = vld [vmem:[%s4321 + $0x28] sm:$0xf]
  %v4333 = vld [vmem:[%s4321 + $0x2c] sm:$0xf]
  %v4334 = vld [vmem:[%s4321 + $0x30] sm:$0xf]
  %v4335 = vld [vmem:[%s4321 + $0x34] sm:$0xf]
  %v4336 = vld [vmem:[%s4321 + $0x38] sm:$0xf]
  %v4337 = vld [vmem:[%s4321 + $0x3c] sm:$0xf]
  %v4354 = vunpack.c.l.b16 %v4322
  %v4355 = vunpack.c.l.b16 %v4323
  %v4356 = vunpack.c.l.b16 %v4324
  %v4357 = vunpack.c.l.b16 %v4325
  %v4358 = vunpack.c.l.b16 %v4326
  %v4359 = vunpack.c.l.b16 %v4327
  %v4360 = vunpack.c.l.b16 %v4328
  %v4361 = vunpack.c.l.b16 %v4329
  %v4362 = vunpack.c.l.b16 %v4330
  %v4363 = vunpack.c.l.b16 %v4331
  %v4364 = vunpack.c.l.b16 %v4332
  %v4365 = vunpack.c.l.b16 %v4333
  %v4366 = vunpack.c.l.b16 %v4334
  %v4367 = vunpack.c.l.b16 %v4335
  %v4368 = vunpack.c.l.b16 %v4336
  %v4369 = vunpack.c.l.b16 %v4337
  %v4370 = vpack.c.b16 %v4355, %v4354
  %v4371 = vpack.c.b16 %v4357, %v4356
  %v4372 = vpack.c.b16 %v4359, %v4358
  %v4373 = vpack.c.b16 %v4361, %v4360
  %v4374 = vpack.c.b16 %v4363, %v4362
  %v4375 = vpack.c.b16 %v4365, %v4364
  %v4376 = vpack.c.b16 %v4367, %v4366
  %v4377 = vpack.c.b16 %v4369, %v4368
  %4386 = vmatprep.subr.bf16.mxu0 0
  %4387 = vmatpush1.bf16.msra.mxu0 %v4370
  %4388 = vmatprep.subr.bf16.mxu0 0
  %4389 = vmatpush1.bf16.msra.mxu0 %v4371
  %4390 = vmatprep.subr.bf16.mxu0 0
  %4391 = vmatpush1.bf16.msra.mxu0 %v4372
  %4392 = vmatprep.subr.bf16.mxu0 0
  %4393 = vmatpush1.bf16.msra.mxu0 %v4373
  %4394 = vmatprep.subr.bf16.mxu0 0
  %4395 = vmatpush1.bf16.msra.mxu0 %v4374
  %4396 = vmatprep.subr.bf16.mxu0 0
  %4397 = vmatpush1.bf16.msra.mxu0 %v4375
  %4398 = vmatprep.subr.bf16.mxu0 0
  %4399 = vmatpush1.bf16.msra.mxu0 %v4376
  %4400 = vmatprep.subr.bf16.mxu0 0
  %4401 = vmatpush1.bf16.msra.mxu0 %v4377
  %4402 = vmatprep.subr.bf16.mxu0 0
  %4403 = vmatpush1.bf16.msra.mxu0 0
  %4404 = vmatprep.subr.bf16.mxu0 0
  %4405 = vmatpush1.bf16.msra.mxu0 0
  %4406 = vmatprep.subr.bf16.mxu0 0
  %4407 = vmatpush1.bf16.msra.mxu0 0
  %4408 = vmatprep.subr.bf16.mxu0 0
  %4409 = vmatpush1.bf16.msra.mxu0 0
  %4410 = vmatprep.subr.bf16.mxu0 0
  %4411 = vmatpush1.bf16.msra.mxu0 0
  %4412 = vmatprep.subr.bf16.mxu0 0
  %4413 = vmatpush1.bf16.msra.mxu0 0
  %4414 = vmatprep.subr.bf16.mxu0 0
  %4415 = vmatpush1.bf16.msra.mxu0 0
  %4416 = vmatprep.subr.bf16.mxu0 0
  %4417 = vmatpush1.bf16.msra.mxu0 0
  %4418 = vmatprep.mubr.bf16.mxu0 0
  %4419 = vmatmul.mubr.bf16.gmra.mrb[0].mxu0 %v4289
  %v4420 = vpop.f32.mrb[0].mxu0
  %v4421 = vadd.f32 0.0, %v4420
  %v4422 = vpop.f32.mrb[0].mxu0
  %v4423 = vpop.f32.mrb[0].mxu0
  %v4424 = vadd.f32 0.0, %v4423
  %v4425 = vpop.f32.mrb[0].mxu0
  %4426 = vmatprep.mubr.bf16.mxu0 0
  %4427 = vmatmul.mubr.bf16.gmra.mrb[0].mxu0 %v4290
  %v4428 = vpop.f32.mrb[0].mxu0
  %v4429 = vadd.f32 0.0, %v4428
  %v4430 = vpop.f32.mrb[0].mxu0
  %v4431 = vpop.f32.mrb[0].mxu0
  %v4432 = vadd.f32 0.0, %v4431
  %v4433 = vpop.f32.mrb[0].mxu0
  %4434 = vmatprep.mubr.bf16.mxu0 0
  %4435 = vmatmul.mubr.bf16.gmra.mrb[0].mxu0 %v4291
  %v4436 = vpop.f32.mrb[0].mxu0
  %v4437 = vadd.f32 0.0, %v4436
  %v4438 = vpop.f32.mrb[0].mxu0
  %v4439 = vpop.f32.mrb[0].mxu0
  %v4440 = vadd.f32 0.0, %v4439
  %v4441 = vpop.f32.mrb[0].mxu0
  %4442 = vmatprep.mubr.bf16.mxu0 0
  %4443 = vmatmul.mubr.bf16.gmra.mrb[0].mxu0 %v4292
  %v4444 = vpop.f32.mrb[0].mxu0
  %v4445 = vadd.f32 0.0, %v4444
  %v4446 = vpop.f32.mrb[0].mxu0
  %v4447 = vpop.f32.mrb[0].mxu0
  %v4448 = vadd.f32 0.0, %v4447
  %v4449 = vpop.f32.mrb[0].mxu0
  %4450 = vmatprep.mubr.bf16.mxu0 0
  %4451 = vmatmul.mubr.bf16.gmra.mrb[0].mxu0 %v4293
  %v4452 = vpop.f32.mrb[0].mxu0
  %v4453 = vadd.f32 0.0, %v4452
  %v4454 = vpop.f32.mrb[0].mxu0
  %v4455 = vpop.f32.mrb[0].mxu0
  %v4456 = vadd.f32 0.0, %v4455
  %v4457 = vpop.f32.mrb[0].mxu0
  %4458 = vmatprep.mubr.bf16.mxu0 0
  %4459 = vmatmul.mubr.bf16.gmra.mrb[0].mxu0 %v4294
  %v4460 = vpop.f32.mrb[0].mxu0
  %v4461 = vadd.f32 0.0, %v4460
  %v4462 = vpop.f32.mrb[0].mxu0
  %v4463 = vpop.f32.mrb[0].mxu0
  %v4464 = vadd.f32 0.0, %v4463
  %v4465 = vpop.f32.mrb[0].mxu0
  %4466 = vmatprep.mubr.bf16.mxu0 0
  %4467 = vmatmul.mubr.bf16.gmra.mrb[0].mxu0 %v4295
  %v4468 = vpop.f32.mrb[0].mxu0
  %v4469 = vadd.f32 0.0, %v4468
  %v4470 = vpop.f32.mrb[0].mxu0
  %v4471 = vpop.f32.mrb[0].mxu0
  %v4472 = vadd.f32 0.0, %v4471
  %v4473 = vpop.f32.mrb[0].mxu0
  %4474 = vmatprep.mubr.bf16.mxu0 0
  %4475 = vmatmul.mubr.bf16.gmra.mrb[0].mxu0 %v4296
  %v4476 = vpop.f32.mrb[0].mxu0
  %v4477 = vadd.f32 0.0, %v4476
  %v4478 = vpop.f32.mrb[0].mxu0
  %v4479 = vpop.f32.mrb[0].mxu0
  %v4480 = vadd.f32 0.0, %v4479
  %v4481 = vpop.f32.mrb[0].mxu0
  %4482 = vmatprep.mubr.bf16.mxu0 0
  %4483 = vmatmul.mubr.bf16.gmra.mrb[0].mxu0 %v4297
  %v4484 = vpop.f32.mrb[0].mxu0
  %v4485 = vadd.f32 0.0, %v4484
  %v4486 = vpop.f32.mrb[0].mxu0
  %v4487 = vpop.f32.mrb[0].mxu0
  %v4488 = vadd.f32 0.0, %v4487
  %v4489 = vpop.f32.mrb[0].mxu0
  %4490 = vmatprep.mubr.bf16.mxu0 0
  %4491 = vmatmul.mubr.bf16.gmra.mrb[0].mxu0 %v4298
  %v4492 = vpop.f32.mrb[0].mxu0
  %v4493 = vadd.f32 0.0, %v4492
  %v4494 = vpop.f32.mrb[0].mxu0
  %v4495 = vpop.f32.mrb[0].mxu0
  %v4496 = vadd.f32 0.0, %v4495
  %v4497 = vpop.f32.mrb[0].mxu0
  %4498 = vmatprep.mubr.bf16.mxu0 0
  %4499 = vmatmul.mubr.bf16.gmra.mrb[0].mxu0 %v4299
  %v4500 = vpop.f32.mrb[0].mxu0
  %v4501 = vadd.f32 0.0, %v4500
  %v4502 = vpop.f32.mrb[0].mxu0
  %v4503 = vpop.f32.mrb[0].mxu0
  %v4504 = vadd.f32 0.0, %v4503
  %v4505 = vpop.f32.mrb[0].mxu0
  %4506 = vmatprep.mubr.bf16.mxu0 0
  %4507 = vmatmul.mubr.bf16.gmra.mrb[0].mxu0 %v4300
  %v4508 = vpop.f32.mrb[0].mxu0
  %v4509 = vadd.f32 0.0, %v4508
  %v4510 = vpop.f32.mrb[0].mxu0
  %v4511 = vpop.f32.mrb[0].mxu0
  %v4512 = vadd.f32 0.0, %v4511
  %v4513 = vpop.f32.mrb[0].mxu0
  %4514 = vmatprep.mubr.bf16.mxu0 0
  %4515 = vmatmul.mubr.bf16.gmra.mrb[0].mxu0 %v4301
  %v4516 = vpop.f32.mrb[0].mxu0
  %v4517 = vadd.f32 0.0, %v4516
  %v4518 = vpop.f32.mrb[0].mxu0
  %v4519 = vpop.f32.mrb[0].mxu0
  %v4520 = vadd.f32 0.0, %v4519
  %v4521 = vpop.f32.mrb[0].mxu0
  %4522 = vmatprep.mubr.bf16.mxu0 0
  %4523 = vmatmul.mubr.bf16.gmra.mrb[0].mxu0 %v4302
  %v4524 = vpop.f32.mrb[0].mxu0
  %v4525 = vadd.f32 0.0, %v4524
  %v4526 = vpop.f32.mrb[0].mxu0
  %v4527 = vpop.f32.mrb[0].mxu0
  %v4528 = vadd.f32 0.0, %v4527
  %v4529 = vpop.f32.mrb[0].mxu0
  %4530 = vmatprep.mubr.bf16.mxu0 0
  %4531 = vmatmul.mubr.bf16.gmra.mrb[0].mxu0 %v4303
  %v4532 = vpop.f32.mrb[0].mxu0
  %v4533 = vadd.f32 0.0, %v4532
  %v4534 = vpop.f32.mrb[0].mxu0
  %v4535 = vpop.f32.mrb[0].mxu0
  %v4536 = vadd.f32 0.0, %v4535
  %v4537 = vpop.f32.mrb[0].mxu0
  %4538 = vmatprep.mubr.bf16.mxu0 0
  %4539 = vmatmul.mubr.bf16.gmra.mrb[0].mxu0 %v4304
  %v4540 = vpop.f32.mrb[0].mxu0
  %v4541 = vadd.f32 0.0, %v4540
  %v4542 = vpop.f32.mrb[0].mxu0
  %v4543 = vpop.f32.mrb[0].mxu0
  %v4544 = vadd.f32 0.0, %v4543
  %v4545 = vpop.f32.mrb[0].mxu0
  %4546 = vmatprep.mubr.bf16.mxu0 0
  %4547 = vmatmul.mubr.bf16.gmra.mrb[0].mxu0 %v4305
  %v4548 = vpop.f32.mrb[0].mxu0
  %v4549 = vadd.f32 0.0, %v4548
  %v4550 = vpop.f32.mrb[0].mxu0
  %v4551 = vpop.f32.mrb[0].mxu0
  %v4552 = vadd.f32 0.0, %v4551
  %v4553 = vpop.f32.mrb[0].mxu0
  %4554 = vmatprep.mubr.bf16.mxu0 0
  %4555 = vmatmul.mubr.bf16.gmra.mrb[0].mxu0 %v4306
  %v4556 = vpop.f32.mrb[0].mxu0
  %v4557 = vadd.f32 0.0, %v4556
  %v4558 = vpop.f32.mrb[0].mxu0
  %v4559 = vpop.f32.mrb[0].mxu0
  %v4560 = vadd.f32 0.0, %v4559
  %v4561 = vpop.f32.mrb[0].mxu0
  %4562 = vmatprep.mubr.bf16.mxu0 0
  %4563 = vmatmul.mubr.bf16.gmra.mrb[0].mxu0 %v4307
  %v4564 = vpop.f32.mrb[0].mxu0
  %v4565 = vadd.f32 0.0, %v4564
  %v4566 = vpop.f32.mrb[0].mxu0
  %v4567 = vpop.f32.mrb[0].mxu0
  %v4568 = vadd.f32 0.0, %v4567
  %v4569 = vpop.f32.mrb[0].mxu0
  %4570 = vmatprep.mubr.bf16.mxu0 0
  %4571 = vmatmul.mubr.bf16.gmra.mrb[0].mxu0 %v4308
  %v4572 = vpop.f32.mrb[0].mxu0
  %v4573 = vadd.f32 0.0, %v4572
  %v4574 = vpop.f32.mrb[0].mxu0
  %v4575 = vpop.f32.mrb[0].mxu0
  %v4576 = vadd.f32 0.0, %v4575
  %v4577 = vpop.f32.mrb[0].mxu0
  %4578 = vmatprep.mubr.bf16.mxu0 0
  %4579 = vmatmul.mubr.bf16.gmra.mrb[0].mxu0 %v4309
  %v4580 = vpop.f32.mrb[0].mxu0
  %v4581 = vadd.f32 0.0, %v4580
  %v4582 = vpop.f32.mrb[0].mxu0
  %v4583 = vpop.f32.mrb[0].mxu0
  %v4584 = vadd.f32 0.0, %v4583
  %v4585 = vpop.f32.mrb[0].mxu0
  %4586 = vmatprep.mubr.bf16.mxu0 0
  %4587 = vmatmul.mubr.bf16.gmra.mrb[0].mxu0 %v4310
  %v4588 = vpop.f32.mrb[0].mxu0
  %v4589 = vadd.f32 0.0, %v4588
  %v4590 = vpop.f32.mrb[0].mxu0
  %v4591 = vpop.f32.mrb[0].mxu0
  %v4592 = vadd.f32 0.0, %v4591
  %v4593 = vpop.f32.mrb[0].mxu0
  %4594 = vmatprep.mubr.bf16.mxu0 0
  %4595 = vmatmul.mubr.bf16.gmra.mrb[0].mxu0 %v4311
  %v4596 = vpop.f32.mrb[0].mxu0
  %v4597 = vadd.f32 0.0, %v4596
  %v4598 = vpop.f32.mrb[0].mxu0
  %v4599 = vpop.f32.mrb[0].mxu0
  %v4600 = vadd.f32 0.0, %v4599
  %v4601 = vpop.f32.mrb[0].mxu0
  %4602 = vmatprep.mubr.bf16.mxu0 0
  %4603 = vmatmul.mubr.bf16.gmra.mrb[0].mxu0 %v4312
  %v4604 = vpop.f32.mrb[0].mxu0
  %v4605 = vadd.f32 0.0, %v4604
  %v4606 = vpop.f32.mrb[0].mxu0
  %v4607 = vpop.f32.mrb[0].mxu0
  %v4608 = vadd.f32 0.0, %v4607
  %v4609 = vpop.f32.mrb[0].mxu0
  %4610 = vmatprep.mubr.bf16.mxu0 0
  %4611 = vmatmul.mubr.bf16.gmra.mrb[0].mxu0 %v4313
  %v4612 = vpop.f32.mrb[0].mxu0
  %v4613 = vadd.f32 0.0, %v4612
  %v4614 = vpop.f32.mrb[0].mxu0
  %v4615 = vpop.f32.mrb[0].mxu0
  %v4616 = vadd.f32 0.0, %v4615
  %v4617 = vpop.f32.mrb[0].mxu0
  %4618 = vmatprep.mubr.bf16.mxu0 0
  %4619 = vmatmul.mubr.bf16.gmra.mrb[0].mxu0 %v4314
  %v4620 = vpop.f32.mrb[0].mxu0
  %v4621 = vadd.f32 0.0, %v4620
  %v4622 = vpop.f32.mrb[0].mxu0
  %v4623 = vpop.f32.mrb[0].mxu0
  %v4624 = vadd.f32 0.0, %v4623
  %v4625 = vpop.f32.mrb[0].mxu0
  %4626 = vmatprep.mubr.bf16.mxu0 0
  %4627 = vmatmul.mubr.bf16.gmra.mrb[0].mxu0 %v4315
  %v4628 = vpop.f32.mrb[0].mxu0
  %v4629 = vadd.f32 0.0, %v4628
  %v4630 = vpop.f32.mrb[0].mxu0
  %v4631 = vpop.f32.mrb[0].mxu0
  %v4632 = vadd.f32 0.0, %v4631
  %v4633 = vpop.f32.mrb[0].mxu0
  %4634 = vmatprep.mubr.bf16.mxu0 0
  %4635 = vmatmul.mubr.bf16.gmra.mrb[0].mxu0 %v4316
  %v4636 = vpop.f32.mrb[0].mxu0
  %v4637 = vadd.f32 0.0, %v4636
  %v4638 = vpop.f32.mrb[0].mxu0
  %v4639 = vpop.f32.mrb[0].mxu0
  %v4640 = vadd.f32 0.0, %v4639
  %v4641 = vpop.f32.mrb[0].mxu0
  %4642 = vmatprep.mubr.bf16.mxu0 0
  %4643 = vmatmul.mubr.bf16.gmra.mrb[0].mxu0 %v4317
  %v4644 = vpop.f32.mrb[0].mxu0
  %v4645 = vadd.f32 0.0, %v4644
  %v4646 = vpop.f32.mrb[0].mxu0
  %v4647 = vpop.f32.mrb[0].mxu0
  %v4648 = vadd.f32 0.0, %v4647
  %v4649 = vpop.f32.mrb[0].mxu0
  %4650 = vmatprep.mubr.bf16.mxu0 0
  %4651 = vmatmul.mubr.bf16.gmra.mrb[0].mxu0 %v4318
  %v4652 = vpop.f32.mrb[0].mxu0
  %v4653 = vadd.f32 0.0, %v4652
  %v4654 = vpop.f32.mrb[0].mxu0
  %v4655 = vpop.f32.mrb[0].mxu0
  %v4656 = vadd.f32 0.0, %v4655
  %v4657 = vpop.f32.mrb[0].mxu0
  %4658 = vmatprep.mubr.bf16.mxu0 0
  %4659 = vmatmul.mubr.bf16.gmra.mrb[0].mxu0 %v4319
  %v4660 = vpop.f32.mrb[0].mxu0
  %v4661 = vadd.f32 0.0, %v4660
  %v4662 = vpop.f32.mrb[0].mxu0
  %v4663 = vpop.f32.mrb[0].mxu0
  %v4664 = vadd.f32 0.0, %v4663
  %v4665 = vpop.f32.mrb[0].mxu0
  %4666 = vmatprep.mubr.bf16.mxu0 0
  %4667 = vmatmul.mubr.bf16.gmra.mrb[0].mxu0 %v4320
  %v4668 = vpop.f32.mrb[0].mxu0
  %v4669 = vadd.f32 0.0, %v4668
  %v4670 = vpop.f32.mrb[0].mxu0
  %v4671 = vpop.f32.mrb[0].mxu0
  %v4672 = vadd.f32 0.0, %v4671
  %v4673 = vpop.f32.mrb[0].mxu0
  %4674 = vdwg.mxu0
  %v4675 = vadd.f32 %v4161, %v4421
  %v4676 = vadd.f32 %v4162, %v4424
  %v4677 = vadd.f32 %v4163, %v4429
  %v4678 = vadd.f32 %v4164, %v4432
  %v4679 = vadd.f32 %v4165, %v4437
  %v4680 = vadd.f32 %v4166, %v4440
  %v4681 = vadd.f32 %v4167, %v4445
  %v4682 = vadd.f32 %v4168, %v4448
  %v4683 = vadd.f32 %v4169, %v4453
  %v4684 = vadd.f32 %v4170, %v4456
  %v4685 = vadd.f32 %v4171, %v4461
  %v4686 = vadd.f32 %v4172, %v4464
  %v4687 = vadd.f32 %v4173, %v4469
  %v4688 = vadd.f32 %v4174, %v4472
  %v4689 = vadd.f32 %v4175, %v4477
  %v4690 = vadd.f32 %v4176, %v4480
  %v4691 = vadd.f32 %v4177, %v4485
  %v4692 = vadd.f32 %v4178, %v4488
  %v4693 = vadd.f32 %v4179, %v4493
  %v4694 = vadd.f32 %v4180, %v4496
  %v4695 = vadd.f32 %v4181, %v4501
  %v4696 = vadd.f32 %v4182, %v4504
  %v4697 = vadd.f32 %v4183, %v4509
  %v4698 = vadd.f32 %v4184, %v4512
  %v4699 = vadd.f32 %v4185, %v4517
  %v4700 = vadd.f32 %v4186, %v4520
  %v4701 = vadd.f32 %v4187, %v4525
  %v4702 = vadd.f32 %v4188, %v4528
  %v4703 = vadd.f32 %v4189, %v4533
  %v4704 = vadd.f32 %v4190, %v4536
  %v4705 = vadd.f32 %v4191, %v4541
  %v4706 = vadd.f32 %v4192, %v4544
  %v4707 = vadd.f32 %v4193, %v4549
  %v4708 = vadd.f32 %v4194, %v4552
  %v4709 = vadd.f32 %v4195, %v4557
  %v4710 = vadd.f32 %v4196, %v4560
  %v4711 = vadd.f32 %v4197, %v4565
  %v4712 = vadd.f32 %v4198, %v4568
  %v4713 = vadd.f32 %v4199, %v4573
  %v4714 = vadd.f32 %v4200, %v4576
  %v4715 = vadd.f32 %v4201, %v4581
  %v4716 = vadd.f32 %v4202, %v4584
  %v4717 = vadd.f32 %v4203, %v4589
  %v4718 = vadd.f32 %v4204, %v4592
  %v4719 = vadd.f32 %v4205, %v4597
  %v4720 = vadd.f32 %v4206, %v4600
  %v4721 = vadd.f32 %v4207, %v4605
  %v4722 = vadd.f32 %v4208, %v4608
  %v4723 = vadd.f32 %v4209, %v4613
  %v4724 = vadd.f32 %v4210, %v4616
  %v4725 = vadd.f32 %v4211, %v4621
  %v4726 = vadd.f32 %v4212, %v4624
  %v4727 = vadd.f32 %v4213, %v4629
  %v4728 = vadd.f32 %v4214, %v4632
  %v4729 = vadd.f32 %v4215, %v4637
  %v4730 = vadd.f32 %v4216, %v4640
  %v4731 = vadd.f32 %v4217, %v4645
  %v4732 = vadd.f32 %v4218, %v4648
  %v4733 = vadd.f32 %v4219, %v4653
  %v4734 = vadd.f32 %v4220, %v4656
  %v4735 = vadd.f32 %v4221, %v4661
  %v4736 = vadd.f32 %v4222, %v4664
  %v4737 = vadd.f32 %v4223, %v4669
  %v4738 = vadd.f32 %v4224, %v4672
  %v4739 = vadd.f32 %v4675, %v4676
  %v4740 = vadd.f32 %v4739, %v4677
  %v4741 = vadd.f32 %v4740, %v4678
  %v4742 = vadd.f32 %v4741, %v4679
  %v4743 = vadd.f32 %v4742, %v4680
  %v4744 = vadd.f32 %v4743, %v4681
  %v4745 = vadd.f32 %v4744, %v4682
  %v4746 = vadd.f32 %v4745, %v4683
  %v4747 = vadd.f32 %v4746, %v4684
  %v4748 = vadd.f32 %v4747, %v4685
  %v4749 = vadd.f32 %v4748, %v4686
  %v4750 = vadd.f32 %v4749, %v4687
  %v4751 = vadd.f32 %v4750, %v4688
  %v4752 = vadd.f32 %v4751, %v4689
  %v4753 = vadd.f32 %v4752, %v4690
  %v4754 = vadd.f32 %v4753, %v4691
  %v4755 = vadd.f32 %v4754, %v4692
  %v4756 = vadd.f32 %v4755, %v4693
  %v4757 = vadd.f32 %v4756, %v4694
  %v4758 = vadd.f32 %v4757, %v4695
  %v4759 = vadd.f32 %v4758, %v4696
  %v4760 = vadd.f32 %v4759, %v4697
  %v4761 = vadd.f32 %v4760, %v4698
  %v4762 = vadd.f32 %v4761, %v4699
  %v4763 = vadd.f32 %v4762, %v4700
  %v4764 = vadd.f32 %v4763, %v4701
  %v4765 = vadd.f32 %v4764, %v4702
  %v4766 = vadd.f32 %v4765, %v4703
  %v4767 = vadd.f32 %v4766, %v4704
  %v4768 = vadd.f32 %v4767, %v4705
  %v4769 = vadd.f32 %v4768, %v4706
  %v4770 = vadd.f32 %v4769, %v4707
  %v4771 = vadd.f32 %v4770, %v4708
  %v4772 = vadd.f32 %v4771, %v4709
  %v4773 = vadd.f32 %v4772, %v4710
  %v4774 = vadd.f32 %v4773, %v4711
  %v4775 = vadd.f32 %v4774, %v4712
  %v4776 = vadd.f32 %v4775, %v4713
  %v4777 = vadd.f32 %v4776, %v4714
  %v4778 = vadd.f32 %v4777, %v4715
  %v4779 = vadd.f32 %v4778, %v4716
  %v4780 = vadd.f32 %v4779, %v4717
  %v4781 = vadd.f32 %v4780, %v4718
  %v4782 = vadd.f32 %v4781, %v4719
  %v4783 = vadd.f32 %v4782, %v4720
  %v4784 = vadd.f32 %v4783, %v4721
  %v4785 = vadd.f32 %v4784, %v4722
  %v4786 = vadd.f32 %v4785, %v4723
  %v4787 = vadd.f32 %v4786, %v4724
  %v4788 = vadd.f32 %v4787, %v4725
  %v4789 = vadd.f32 %v4788, %v4726
  %v4790 = vadd.f32 %v4789, %v4727
  %v4791 = vadd.f32 %v4790, %v4728
  %v4792 = vadd.f32 %v4791, %v4729
  %v4793 = vadd.f32 %v4792, %v4730
  %v4794 = vadd.f32 %v4793, %v4731
  %v4795 = vadd.f32 %v4794, %v4732
  %v4796 = vadd.f32 %v4795, %v4733
  %v4797 = vadd.f32 %v4796, %v4734
  %v4798 = vadd.f32 %v4797, %v4735
  %v4799 = vadd.f32 %v4798, %v4736
  %v4800 = vadd.f32 %v4799, %v4737
  %v4801 = vadd.f32 %v4800, %v4738
  %v4802 = vrot.slane %v4801, 4
  %v4803 = vadd.f32 %v4801, %v4802
  %v4804 = vrot.slane %v4803, 2
  %v4805 = vadd.f32 %v4803, %v4804
  %v4806 = vrot.slane %v4805, 1
  %v4807 = vadd.f32 %v4805, %v4806
  %v4808 = vmul.f32 %v4807, 0.001953125
  %v4809 = vsub.f32 %v4675, %v4808
  %v4810 = vsub.f32 %v4676, %v4808
  %v4811 = vsub.f32 %v4677, %v4808
  %v4812 = vsub.f32 %v4678, %v4808
  %v4813 = vsub.f32 %v4679, %v4808
  %v4814 = vsub.f32 %v4680, %v4808
  %v4815 = vsub.f32 %v4681, %v4808
  %v4816 = vsub.f32 %v4682, %v4808
  %v4817 = vsub.f32 %v4683, %v4808
  %v4818 = vsub.f32 %v4684, %v4808
  %v4819 = vsub.f32 %v4685, %v4808
  %v4820 = vsub.f32 %v4686, %v4808
  %v4821 = vsub.f32 %v4687, %v4808
  %v4822 = vsub.f32 %v4688, %v4808
  %v4823 = vsub.f32 %v4689, %v4808
  %v4824 = vsub.f32 %v4690, %v4808
  %v4825 = vsub.f32 %v4691, %v4808
  %v4826 = vsub.f32 %v4692, %v4808
  %v4827 = vsub.f32 %v4693, %v4808
  %v4828 = vsub.f32 %v4694, %v4808
  %v4829 = vsub.f32 %v4695, %v4808
  %v4830 = vsub.f32 %v4696, %v4808
  %v4831 = vsub.f32 %v4697, %v4808
  %v4832 = vsub.f32 %v4698, %v4808
  %v4833 = vsub.f32 %v4699, %v4808
  %v4834 = vsub.f32 %v4700, %v4808
  %v4835 = vsub.f32 %v4701, %v4808
  %v4836 = vsub.f32 %v4702, %v4808
  %v4837 = vsub.f32 %v4703, %v4808
  %v4838 = vsub.f32 %v4704, %v4808
  %v4839 = vsub.f32 %v4705, %v4808
  %v4840 = vsub.f32 %v4706, %v4808
  %v4841 = vsub.f32 %v4707, %v4808
  %v4842 = vsub.f32 %v4708, %v4808
  %v4843 = vsub.f32 %v4709, %v4808
  %v4844 = vsub.f32 %v4710, %v4808
  %v4845 = vsub.f32 %v4711, %v4808
  %v4846 = vsub.f32 %v4712, %v4808
  %v4847 = vsub.f32 %v4713, %v4808
  %v4848 = vsub.f32 %v4714, %v4808
  %v4849 = vsub.f32 %v4715, %v4808
  %v4850 = vsub.f32 %v4716, %v4808
  %v4851 = vsub.f32 %v4717, %v4808
  %v4852 = vsub.f32 %v4718, %v4808
  %v4853 = vsub.f32 %v4719, %v4808
  %v4854 = vsub.f32 %v4720, %v4808
  %v4855 = vsub.f32 %v4721, %v4808
  %v4856 = vsub.f32 %v4722, %v4808
  %v4857 = vsub.f32 %v4723, %v4808
  %v4858 = vsub.f32 %v4724, %v4808
  %v4859 = vsub.f32 %v4725, %v4808
  %v4860 = vsub.f32 %v4726, %v4808
  %v4861 = vsub.f32 %v4727, %v4808
  %v4862 = vsub.f32 %v4728, %v4808
  %v4863 = vsub.f32 %v4729, %v4808
  %v4864 = vsub.f32 %v4730, %v4808
  %v4865 = vsub.f32 %v4731, %v4808
  %v4866 = vsub.f32 %v4732, %v4808
  %v4867 = vsub.f32 %v4733, %v4808
  %v4868 = vsub.f32 %v4734, %v4808
  %v4869 = vsub.f32 %v4735, %v4808
  %v4870 = vsub.f32 %v4736, %v4808
  %v4871 = vsub.f32 %v4737, %v4808
  %v4872 = vsub.f32 %v4738, %v4808
  %v4873 = vmul.f32 %v4809, %v4809
  %v4874 = vmul.f32 %v4810, %v4810
  %v4875 = vmul.f32 %v4811, %v4811
  %v4876 = vmul.f32 %v4812, %v4812
  %v4877 = vmul.f32 %v4813, %v4813
  %v4878 = vmul.f32 %v4814, %v4814
  %v4879 = vmul.f32 %v4815, %v4815
  %v4880 = vmul.f32 %v4816, %v4816
  %v4881 = vmul.f32 %v4817, %v4817
  %v4882 = vmul.f32 %v4818, %v4818
  %v4883 = vmul.f32 %v4819, %v4819
  %v4884 = vmul.f32 %v4820, %v4820
  %v4885 = vmul.f32 %v4821, %v4821
  %v4886 = vmul.f32 %v4822, %v4822
  %v4887 = vmul.f32 %v4823, %v4823
  %v4888 = vmul.f32 %v4824, %v4824
  %v4889 = vmul.f32 %v4825, %v4825
  %v4890 = vmul.f32 %v4826, %v4826
  %v4891 = vmul.f32 %v4827, %v4827
  %v4892 = vmul.f32 %v4828, %v4828
  %v4893 = vmul.f32 %v4829, %v4829
  %v4894 = vmul.f32 %v4830, %v4830
  %v4895 = vmul.f32 %v4831, %v4831
  %v4896 = vmul.f32 %v4832, %v4832
  %v4897 = vmul.f32 %v4833, %v4833
  %v4898 = vmul.f32 %v4834, %v4834
  %v4899 = vmul.f32 %v4835, %v4835
  %v4900 = vmul.f32 %v4836, %v4836
  %v4901 = vmul.f32 %v4837, %v4837
  %v4902 = vmul.f32 %v4838, %v4838
  %v4903 = vmul.f32 %v4839, %v4839
  %v4904 = vmul.f32 %v4840, %v4840
  %v4905 = vmul.f32 %v4841, %v4841
  %v4906 = vmul.f32 %v4842, %v4842
  %v4907 = vmul.f32 %v4843, %v4843
  %v4908 = vmul.f32 %v4844, %v4844
  %v4909 = vmul.f32 %v4845, %v4845
  %v4910 = vmul.f32 %v4846, %v4846
  %v4911 = vmul.f32 %v4847, %v4847
  %v4912 = vmul.f32 %v4848, %v4848
  %v4913 = vmul.f32 %v4849, %v4849
  %v4914 = vmul.f32 %v4850, %v4850
  %v4915 = vmul.f32 %v4851, %v4851
  %v4916 = vmul.f32 %v4852, %v4852
  %v4917 = vmul.f32 %v4853, %v4853
  %v4918 = vmul.f32 %v4854, %v4854
  %v4919 = vmul.f32 %v4855, %v4855
  %v4920 = vmul.f32 %v4856, %v4856
  %v4921 = vmul.f32 %v4857, %v4857
  %v4922 = vmul.f32 %v4858, %v4858
  %v4923 = vmul.f32 %v4859, %v4859
  %v4924 = vmul.f32 %v4860, %v4860
  %v4925 = vmul.f32 %v4861, %v4861
  %v4926 = vmul.f32 %v4862, %v4862
  %v4927 = vmul.f32 %v4863, %v4863
  %v4928 = vmul.f32 %v4864, %v4864
  %v4929 = vmul.f32 %v4865, %v4865
  %v4930 = vmul.f32 %v4866, %v4866
  %v4931 = vmul.f32 %v4867, %v4867
  %v4932 = vmul.f32 %v4868, %v4868
  %v4933 = vmul.f32 %v4869, %v4869
  %v4934 = vmul.f32 %v4870, %v4870
  %v4935 = vmul.f32 %v4871, %v4871
  %v4936 = vmul.f32 %v4872, %v4872
  %v4937 = vadd.f32 %v4873, %v4874
  %v4938 = vadd.f32 %v4937, %v4875
  %v4939 = vadd.f32 %v4938, %v4876
  %v4940 = vadd.f32 %v4939, %v4877
  %v4941 = vadd.f32 %v4940, %v4878
  %v4942 = vadd.f32 %v4941, %v4879
  %v4943 = vadd.f32 %v4942, %v4880
  %v4944 = vadd.f32 %v4943, %v4881
  %v4945 = vadd.f32 %v4944, %v4882
  %v4946 = vadd.f32 %v4945, %v4883
  %v4947 = vadd.f32 %v4946, %v4884
  %v4948 = vadd.f32 %v4947, %v4885
  %v4949 = vadd.f32 %v4948, %v4886
  %v4950 = vadd.f32 %v4949, %v4887
  %v4951 = vadd.f32 %v4950, %v4888
  %v4952 = vadd.f32 %v4951, %v4889
  %v4953 = vadd.f32 %v4952, %v4890
  %v4954 = vadd.f32 %v4953, %v4891
  %v4955 = vadd.f32 %v4954, %v4892
  %v4956 = vadd.f32 %v4955, %v4893
  %v4957 = vadd.f32 %v4956, %v4894
  %v4958 = vadd.f32 %v4957, %v4895
  %v4959 = vadd.f32 %v4958, %v4896
  %v4960 = vadd.f32 %v4959, %v4897
  %v4961 = vadd.f32 %v4960, %v4898
  %v4962 = vadd.f32 %v4961, %v4899
  %v4963 = vadd.f32 %v4962, %v4900
  %v4964 = vadd.f32 %v4963, %v4901
  %v4965 = vadd.f32 %v4964, %v4902
  %v4966 = vadd.f32 %v4965, %v4903
  %v4967 = vadd.f32 %v4966, %v4904
  %v4968 = vadd.f32 %v4967, %v4905
  %v4969 = vadd.f32 %v4968, %v4906
  %v4970 = vadd.f32 %v4969, %v4907
  %v4971 = vadd.f32 %v4970, %v4908
  %v4972 = vadd.f32 %v4971, %v4909
  %v4973 = vadd.f32 %v4972, %v4910
  %v4974 = vadd.f32 %v4973, %v4911
  %v4975 = vadd.f32 %v4974, %v4912
  %v4976 = vadd.f32 %v4975, %v4913
  %v4977 = vadd.f32 %v4976, %v4914
  %v4978 = vadd.f32 %v4977, %v4915
  %v4979 = vadd.f32 %v4978, %v4916
  %v4980 = vadd.f32 %v4979, %v4917
  %v4981 = vadd.f32 %v4980, %v4918
  %v4982 = vadd.f32 %v4981, %v4919
  %v4983 = vadd.f32 %v4982, %v4920
  %v4984 = vadd.f32 %v4983, %v4921
  %v4985 = vadd.f32 %v4984, %v4922
  %v4986 = vadd.f32 %v4985, %v4923
  %v4987 = vadd.f32 %v4986, %v4924
  %v4988 = vadd.f32 %v4987, %v4925
  %v4989 = vadd.f32 %v4988, %v4926
  %v4990 = vadd.f32 %v4989, %v4927
  %v4991 = vadd.f32 %v4990, %v4928
  %v4992 = vadd.f32 %v4991, %v4929
  %v4993 = vadd.f32 %v4992, %v4930
  %v4994 = vadd.f32 %v4993, %v4931
  %v4995 = vadd.f32 %v4994, %v4932
  %v4996 = vadd.f32 %v4995, %v4933
  %v4997 = vadd.f32 %v4996, %v4934
  %v4998 = vadd.f32 %v4997, %v4935
  %v4999 = vadd.f32 %v4998, %v4936
  %v5000 = vrot.slane %v4999, 4
  %v5001 = vadd.f32 %v4999, %v5000
  %v5002 = vrot.slane %v5001, 2
  %v5003 = vadd.f32 %v5001, %v5002
  %v5004 = vrot.slane %v5003, 1
  %v5005 = vadd.f32 %v5003, %v5004
  %v5006 = vmul.f32 %v5005, 0.001953125
  %v5007 = vadd.f32 %v5006, 1e-05
  %v5008 = vrsqrt.pop %v5007
  %v5009 = vld [vmem:[%s2] sm:$0x1]
  %v5010 = vmul.f32 %v5008, %v5009
  %v5011 = vlaneseq
  %v5012 = vshrl.u32 %v5011, 7
  %v5013 = vsub.s32 0, %v5012
  %v5014 = vrot.slane %v5010, %v5013
  %v5015 = vmul.f32 %v4809, %v5014
  %v5016 = vmul.f32 %v4810, %v5014
  %v5017 = vmul.f32 %v4811, %v5014
  %v5018 = vmul.f32 %v4812, %v5014
  %v5019 = vmul.f32 %v4813, %v5014
  %v5020 = vmul.f32 %v4814, %v5014
  %v5021 = vmul.f32 %v4815, %v5014
  %v5022 = vmul.f32 %v4816, %v5014
  %v5023 = vmul.f32 %v4817, %v5014
  %v5024 = vmul.f32 %v4818, %v5014
  %v5025 = vmul.f32 %v4819, %v5014
  %v5026 = vmul.f32 %v4820, %v5014
  %v5027 = vmul.f32 %v4821, %v5014
  %v5028 = vmul.f32 %v4822, %v5014
  %v5029 = vmul.f32 %v4823, %v5014
  %v5030 = vmul.f32 %v4824, %v5014
  %v5031 = vmul.f32 %v4825, %v5014
  %v5032 = vmul.f32 %v4826, %v5014
  %v5033 = vmul.f32 %v4827, %v5014
  %v5034 = vmul.f32 %v4828, %v5014
  %v5035 = vmul.f32 %v4829, %v5014
  %v5036 = vmul.f32 %v4830, %v5014
  %v5037 = vmul.f32 %v4831, %v5014
  %v5038 = vmul.f32 %v4832, %v5014
  %v5039 = vmul.f32 %v4833, %v5014
  %v5040 = vmul.f32 %v4834, %v5014
  %v5041 = vmul.f32 %v4835, %v5014
  %v5042 = vmul.f32 %v4836, %v5014
  %v5043 = vmul.f32 %v4837, %v5014
  %v5044 = vmul.f32 %v4838, %v5014
  %v5045 = vmul.f32 %v4839, %v5014
  %v5046 = vmul.f32 %v4840, %v5014
  %v5047 = vmul.f32 %v4841, %v5014
  %v5048 = vmul.f32 %v4842, %v5014
  %v5049 = vmul.f32 %v4843, %v5014
  %v5050 = vmul.f32 %v4844, %v5014
  %v5051 = vmul.f32 %v4845, %v5014
  %v5052 = vmul.f32 %v4846, %v5014
  %v5053 = vmul.f32 %v4847, %v5014
  %v5054 = vmul.f32 %v4848, %v5014
  %v5055 = vmul.f32 %v4849, %v5014
  %v5056 = vmul.f32 %v4850, %v5014
  %v5057 = vmul.f32 %v4851, %v5014
  %v5058 = vmul.f32 %v4852, %v5014
  %v5059 = vmul.f32 %v4853, %v5014
  %v5060 = vmul.f32 %v4854, %v5014
  %v5061 = vmul.f32 %v4855, %v5014
  %v5062 = vmul.f32 %v4856, %v5014
  %v5063 = vmul.f32 %v4857, %v5014
  %v5064 = vmul.f32 %v4858, %v5014
  %v5065 = vmul.f32 %v4859, %v5014
  %v5066 = vmul.f32 %v4860, %v5014
  %v5067 = vmul.f32 %v4861, %v5014
  %v5068 = vmul.f32 %v4862, %v5014
  %v5069 = vmul.f32 %v4863, %v5014
  %v5070 = vmul.f32 %v4864, %v5014
  %v5071 = vmul.f32 %v4865, %v5014
  %v5072 = vmul.f32 %v4866, %v5014
  %v5073 = vmul.f32 %v4867, %v5014
  %v5074 = vmul.f32 %v4868, %v5014
  %v5075 = vmul.f32 %v4869, %v5014
  %v5076 = vmul.f32 %v4870, %v5014
  %v5077 = vmul.f32 %v4871, %v5014
  %v5078 = vmul.f32 %v4872, %v5014
  %v5079 = vld [vmem:[%s3] sm:$0x1]
  %v5081 = vlaneseq
  %v5082 = vshrl.u32 %v5081, 7
  %v5083 = vsub.s32 0, %v5082
  %v5084 = vrot.slane %v5079, %v5083
  %v5086 = vadd.f32 %v5015, %v5084
  %v5087 = vadd.f32 %v5016, %v5084
  %v5088 = vadd.f32 %v5017, %v5084
  %v5089 = vadd.f32 %v5018, %v5084
  %v5090 = vadd.f32 %v5019, %v5084
  %v5091 = vadd.f32 %v5020, %v5084
  %v5092 = vadd.f32 %v5021, %v5084
  %v5093 = vadd.f32 %v5022, %v5084
  %v5094 = vadd.f32 %v5023, %v5084
  %v5095 = vadd.f32 %v5024, %v5084
  %v5096 = vadd.f32 %v5025, %v5084
  %v5097 = vadd.f32 %v5026, %v5084
  %v5098 = vadd.f32 %v5027, %v5084
  %v5099 = vadd.f32 %v5028, %v5084
  %v5100 = vadd.f32 %v5029, %v5084
  %v5101 = vadd.f32 %v5030, %v5084
  %v5102 = vadd.f32 %v5031, %v5084
  %v5103 = vadd.f32 %v5032, %v5084
  %v5104 = vadd.f32 %v5033, %v5084
  %v5105 = vadd.f32 %v5034, %v5084
  %v5106 = vadd.f32 %v5035, %v5084
  %v5107 = vadd.f32 %v5036, %v5084
  %v5108 = vadd.f32 %v5037, %v5084
  %v5109 = vadd.f32 %v5038, %v5084
  %v5110 = vadd.f32 %v5039, %v5084
  %v5111 = vadd.f32 %v5040, %v5084
  %v5112 = vadd.f32 %v5041, %v5084
  %v5113 = vadd.f32 %v5042, %v5084
  %v5114 = vadd.f32 %v5043, %v5084
  %v5115 = vadd.f32 %v5044, %v5084
  %v5116 = vadd.f32 %v5045, %v5084
  %v5117 = vadd.f32 %v5046, %v5084
  %v5118 = vadd.f32 %v5047, %v5084
  %v5119 = vadd.f32 %v5048, %v5084
  %v5120 = vadd.f32 %v5049, %v5084
  %v5121 = vadd.f32 %v5050, %v5084
  %v5122 = vadd.f32 %v5051, %v5084
  %v5123 = vadd.f32 %v5052, %v5084
  %v5124 = vadd.f32 %v5053, %v5084
  %v5125 = vadd.f32 %v5054, %v5084
  %v5126 = vadd.f32 %v5055, %v5084
  %v5127 = vadd.f32 %v5056, %v5084
  %v5128 = vadd.f32 %v5057, %v5084
  %v5129 = vadd.f32 %v5058, %v5084
  %v5130 = vadd.f32 %v5059, %v5084
  %v5131 = vadd.f32 %v5060, %v5084
  %v5132 = vadd.f32 %v5061, %v5084
  %v5133 = vadd.f32 %v5062, %v5084
  %v5134 = vadd.f32 %v5063, %v5084
  %v5135 = vadd.f32 %v5064, %v5084
  %v5136 = vadd.f32 %v5065, %v5084
  %v5137 = vadd.f32 %v5066, %v5084
  %v5138 = vadd.f32 %v5067, %v5084
  %v5139 = vadd.f32 %v5068, %v5084
  %v5140 = vadd.f32 %v5069, %v5084
  %v5141 = vadd.f32 %v5070, %v5084
  %v5142 = vadd.f32 %v5071, %v5084
  %v5143 = vadd.f32 %v5072, %v5084
  %v5144 = vadd.f32 %v5073, %v5084
  %v5145 = vadd.f32 %v5074, %v5084
  %v5146 = vadd.f32 %v5075, %v5084
  %v5147 = vadd.f32 %v5076, %v5084
  %v5148 = vadd.f32 %v5077, %v5084
  %v5149 = vadd.f32 %v5078, %v5084
  %v5150 = vmax.f32 %v5086, 0.0
  %v5151 = vmax.f32 %v5087, 0.0
  %v5152 = vmax.f32 %v5088, 0.0
  %v5153 = vmax.f32 %v5089, 0.0
  %v5154 = vmax.f32 %v5090, 0.0
  %v5155 = vmax.f32 %v5091, 0.0
  %v5156 = vmax.f32 %v5092, 0.0
  %v5157 = vmax.f32 %v5093, 0.0
  %v5158 = vmax.f32 %v5094, 0.0
  %v5159 = vmax.f32 %v5095, 0.0
  %v5160 = vmax.f32 %v5096, 0.0
  %v5161 = vmax.f32 %v5097, 0.0
  %v5162 = vmax.f32 %v5098, 0.0
  %v5163 = vmax.f32 %v5099, 0.0
  %v5164 = vmax.f32 %v5100, 0.0
  %v5165 = vmax.f32 %v5101, 0.0
  %v5166 = vmax.f32 %v5102, 0.0
  %v5167 = vmax.f32 %v5103, 0.0
  %v5168 = vmax.f32 %v5104, 0.0
  %v5169 = vmax.f32 %v5105, 0.0
  %v5170 = vmax.f32 %v5106, 0.0
  %v5171 = vmax.f32 %v5107, 0.0
  %v5172 = vmax.f32 %v5108, 0.0
  %v5173 = vmax.f32 %v5109, 0.0
  %v5174 = vmax.f32 %v5110, 0.0
  %v5175 = vmax.f32 %v5111, 0.0
  %v5176 = vmax.f32 %v5112, 0.0
  %v5177 = vmax.f32 %v5113, 0.0
  %v5178 = vmax.f32 %v5114, 0.0
  %v5179 = vmax.f32 %v5115, 0.0
  %v5180 = vmax.f32 %v5116, 0.0
  %v5181 = vmax.f32 %v5117, 0.0
  %v5182 = vmax.f32 %v5118, 0.0
  %v5183 = vmax.f32 %v5119, 0.0
  %v5184 = vmax.f32 %v5120, 0.0
  %v5185 = vmax.f32 %v5121, 0.0
  %v5186 = vmax.f32 %v5122, 0.0
  %v5187 = vmax.f32 %v5123, 0.0
  %v5188 = vmax.f32 %v5124, 0.0
  %v5189 = vmax.f32 %v5125, 0.0
  %v5190 = vmax.f32 %v5126, 0.0
  %v5191 = vmax.f32 %v5127, 0.0
  %v5192 = vmax.f32 %v5128, 0.0
  %v5193 = vmax.f32 %v5129, 0.0
  %v5194 = vmax.f32 %v5130, 0.0
  %v5195 = vmax.f32 %v5131, 0.0
  %v5196 = vmax.f32 %v5132, 0.0
  %v5197 = vmax.f32 %v5133, 0.0
  %v5198 = vmax.f32 %v5134, 0.0
  %v5199 = vmax.f32 %v5135, 0.0
  %v5200 = vmax.f32 %v5136, 0.0
  %v5201 = vmax.f32 %v5137, 0.0
  %v5202 = vmax.f32 %v5138, 0.0
  %v5203 = vmax.f32 %v5139, 0.0
  %v5204 = vmax.f32 %v5140, 0.0
  %v5205 = vmax.f32 %v5141, 0.0
  %v5206 = vmax.f32 %v5142, 0.0
  %v5207 = vmax.f32 %v5143, 0.0
  %v5208 = vmax.f32 %v5144, 0.0
  %v5209 = vmax.f32 %v5145, 0.0
  %v5210 = vmax.f32 %v5146, 0.0
  %v5211 = vmax.f32 %v5147, 0.0
  %v5212 = vmax.f32 %v5148, 0.0
  %v5213 = vmax.f32 %v5149, 0.0
  %5214 = vst [vmem:[%s176 + $0x1] sm:$0xff] %v5150
  %5215 = vst [vmem:[%s176 + $0x9] sm:$0xff] %v5151
  %5216 = vst [vmem:[%s176 + $0x19] sm:$0xff] %v5152
  %5217 = vst [vmem:[%s176 + $0x21] sm:$0xff] %v5153
  %5218 = vst [vmem:[%s176 + $0x31] sm:$0xff] %v5154
  %5219 = vst [vmem:[%s176 + $0x39] sm:$0xff] %v5155
  %5220 = vst [vmem:[%s176 + $0x49] sm:$0xff] %v5156
  %5221 = vst [vmem:[%s176 + $0x51] sm:$0xff] %v5157
  %5222 = vst [vmem:[%s176 + $0x61] sm:$0xff] %v5158
  %5223 = vst [vmem:[%s176 + $0x69] sm:$0xff] %v5159
  %5224 = vst [vmem:[%s176 + $0x79] sm:$0xff] %v5160
  %5225 = vst [vmem:[%s176 + $0x81] sm:$0xff] %v5161
  %5226 = vst [vmem:[%s176 + $0x91] sm:$0xff] %v5162
  %5227 = vst [vmem:[%s176 + $0x99] sm:$0xff] %v5163
  %5228 = vst [vmem:[%s176 + $0xa9] sm:$0xff] %v5164
  %5229 = vst [vmem:[%s176 + $0xb1] sm:$0xff] %v5165
  %5230 = vst [vmem:[%s176 + $0xc1] sm:$0xff] %v5166
  %5231 = vst [vmem:[%s176 + $0xc9] sm:$0xff] %v5167
  %5232 = vst [vmem:[%s176 + $0xd9] sm:$0xff] %v5168
  %5233 = vst [vmem:[%s176 + $0xe1] sm:$0xff] %v5169
  %5234 = vst [vmem:[%s176 + $0xf1] sm:$0xff] %v5170
  %5235 = vst [vmem:[%s176 + $0xf9] sm:$0xff] %v5171
  %5236 = vst [vmem:[%s176 + $0x109] sm:$0xff] %v5172
  %5237 = vst [vmem:[%s176 + $0x111] sm:$0xff] %v5173
  %5238 = vst [vmem:[%s176 + $0x121] sm:$0xff] %v5174
  %5239 = vst [vmem:[%s176 + $0x129] sm:$0xff] %v5175
  %5240 = vst [vmem:[%s176 + $0x139] sm:$0xff] %v5176
  %5241 = vst [vmem:[%s176 + $0x141] sm:$0xff] %v5177
  %5242 = vst [vmem:[%s176 + $0x151] sm:$0xff] %v5178
  %5243 = vst [vmem:[%s176 + $0x159] sm:$0xff] %v5179
  %5244 = vst [vmem:[%s176 + $0x169] sm:$0xff] %v5180
  %5245 = vst [vmem:[%s176 + $0x171] sm:$0xff] %v5181
  %5246 = vst [vmem:[%s176 + $0x1b1] sm:$0xff] %v5182
  %5247 = vst [vmem:[%s176 + $0x1b9] sm:$0xff] %v5183
  %5248 = vst [vmem:[%s176 + $0x1c9] sm:$0xff] %v5184
  %5249 = vst [vmem:[%s176 + $0x1d1] sm:$0xff] %v5185
  %5250 = vst [vmem:[%s176 + $0x1e1] sm:$0xff] %v5186
  %5251 = vst [vmem:[%s176 + $0x1e9] sm:$0xff] %v5187
  %5252 = vst [vmem:[%s176 + $0x1f9] sm:$0xff] %v5188
  %5253 = vst [vmem:[%s176 + $0x201] sm:$0xff] %v5189
  %5254 = vst [vmem:[%s176 + $0x211] sm:$0xff] %v5190
  %5255 = vst [vmem:[%s176 + $0x219] sm:$0xff] %v5191
  %5256 = vst [vmem:[%s176 + $0x229] sm:$0xff] %v5192
  %5257 = vst [vmem:[%s176 + $0x231] sm:$0xff] %v5193
  %5258 = vst [vmem:[%s176 + $0x241] sm:$0xff] %v5194
  %5259 = vst [vmem:[%s176 + $0x249] sm:$0xff] %v5195
  %5260 = vst [vmem:[%s176 + $0x259] sm:$0xff] %v5196
  %5261 = vst [vmem:[%s176 + $0x261] sm:$0xff] %v5197
  %5262 = vst [vmem:[%s176 + $0x271] sm:$0xff] %v5198
  %5263 = vst [vmem:[%s176 + $0x279] sm:$0xff] %v5199
  %5264 = vst [vmem:[%s176 + $0x289] sm:$0xff] %v5200
  %5265 = vst [vmem:[%s176 + $0x291] sm:$0xff] %v5201
  %5266 = vst [vmem:[%s176 + $0x2a1] sm:$0xff] %v5202
  %5267 = vst [vmem:[%s176 + $0x2a9] sm:$0xff] %v5203
  %5268 = vst [vmem:[%s176 + $0x2b9] sm:$0xff] %v5204
  %5269 = vst [vmem:[%s176 + $0x2c1] sm:$0xff] %v5205
  %5270 = vst [vmem:[%s176 + $0x2d1] sm:$0xff] %v5206
  %5271 = vst [vmem:[%s176 + $0x2d9] sm:$0xff] %v5207
  %5272 = vst [vmem:[%s176 + $0x2e9] sm:$0xff] %v5208
  %5273 = vst [vmem:[%s176 + $0x2f1] sm:$0xff] %v5209
  %5274 = vst [vmem:[%s176 + $0x301] sm:$0xff] %v5210
  %5275 = vst [vmem:[%s176 + $0x309] sm:$0xff] %v5211
  %5276 = vst [vmem:[%s176 + $0x319] sm:$0xff] %v5212
  %5277 = vst [vmem:[%s176 + $0x321] sm:$0xff] %v5213
  %v5278 = vld [vmem:[#allocation2] sm:$0xff]
  %v5279 = vld [vmem:[#allocation2 + $0x8] sm:$0xff]
  %v5280 = vld [vmem:[#allocation2 + $0x18] sm:$0xff]
  %v5281 = vld [vmem:[#allocation2 + $0x20] sm:$0xff]
  %v5282 = vld [vmem:[#allocation2 + $0x30] sm:$0xff]
  %v5283 = vld [vmem:[#allocation2 + $0x38] sm:$0xff]
  %v5284 = vld [vmem:[#allocation2 + $0x48] sm:$0xff]
  %v5285 = vld [vmem:[#allocation2 + $0x50] sm:$0xff]
  %v5286 = vld [vmem:[#allocation2 + $0x60] sm:$0xff]
  %v5287 = vld [vmem:[#allocation2 + $0x68] sm:$0xff]
  %v5288 = vld [vmem:[#allocation2 + $0x78] sm:$0xff]
  %v5289 = vld [vmem:[#allocation2 + $0x80] sm:$0xff]
  %v5290 = vld [vmem:[#allocation2 + $0x90] sm:$0xff]
  %v5291 = vld [vmem:[#allocation2 + $0x98] sm:$0xff]
  %v5292 = vld [vmem:[#allocation2 + $0xa8] sm:$0xff]
  %v5293 = vld [vmem:[#allocation2 + $0xb0] sm:$0xff]
  %v5294 = vld [vmem:[#allocation2 + $0xc0] sm:$0xff]
  %v5295 = vld [vmem:[#allocation2 + $0xc8] sm:$0xff]
  %v5296 = vld [vmem:[#allocation2 + $0xd8] sm:$0xff]
  %v5297 = vld [vmem:[#allocation2 + $0xe0] sm:$0xff]
  %v5298 = vld [vmem:[#allocation2 + $0xf0] sm:$0xff]
  %v5299 = vld [vmem:[#allocation2 + $0xf8] sm:$0xff]
  %v5300 = vld [vmem:[#allocation2 + $0x108] sm:$0xff]
  %v5301 = vld [vmem:[#allocation2 + $0x110] sm:$0xff]
  %v5302 = vld [vmem:[#allocation2 + $0x120] sm:$0xff]
  %v5303 = vld [vmem:[#allocation2 + $0x128] sm:$0xff]
  %v5304 = vld [vmem:[#allocation2 + $0x138] sm:$0xff]
  %v5305 = vld [vmem:[#allocation2 + $0x140] sm:$0xff]
  %v5306 = vld [vmem:[#allocation2 + $0x150] sm:$0xff]
  %v5307 = vld [vmem:[#allocation2 + $0x158] sm:$0xff]
  %v5308 = vld [vmem:[#allocation2 + $0x168] sm:$0xff]
  %v5309 = vld [vmem:[#allocation2 + $0x170] sm:$0xff]
  %v5310 = vld [vmem:[#allocation2 + $0x1b0] sm:$0xff]
  %v5311 = vld [vmem:[#allocation2 + $0x1b8] sm:$0xff]
  %v5312 = vld [vmem:[#allocation2 + $0x1c8] sm:$0xff]
  %v5313 = vld [vmem:[#allocation2 + $0x1d0] sm:$0xff]
  %v5314 = vld [vmem:[#allocation2 + $0x1e0] sm:$0xff]
  %v5315 = vld [vmem:[#allocation2 + $0x1e8] sm:$0xff]
  %v5316 = vld [vmem:[#allocation2 + $0x1f8] sm:$0xff]
  %v5317 = vld [vmem:[#allocation2 + $0x200] sm:$0xff]
  %v5318 = vld [vmem:[#allocation2 + $0x210] sm:$0xff]
  %v5319 = vld [vmem:[#allocation2 + $0x218] sm:$0xff]
  %v5320 = vld [vmem:[#allocation2 + $0x228] sm:$0xff]
  %v5321 = vld [vmem:[#allocation2 + $0x230] sm:$0xff]
  %v5322 = vld [vmem:[#allocation2 + $0x240] sm:$0xff]
  %v5323 = vld [vmem:[#allocation2 + $0x248] sm:$0xff]
  %v5324 = vld [vmem:[#allocation2 + $0x258] sm:$0xff]
  %v5325 = vld [vmem:[#allocation2 + $0x260] sm:$0xff]
  %v5326 = vld [vmem:[#allocation2 + $0x270] sm:$0xff]
  %v5327 = vld [vmem:[#allocation2 + $0x278] sm:$0xff]
  %v5328 = vld [vmem:[#allocation2 + $0x288] sm:$0xff]
  %v5329 = vld [vmem:[#allocation2 + $0x290] sm:$0xff]
  %v5330 = vld [vmem:[#allocation2 + $0x2a0] sm:$0xff]
  %v5331 = vld [vmem:[#allocation2 + $0x2a8] sm:$0xff]
  %v5332 = vld [vmem:[#allocation2 + $0x2b8] sm:$0xff]
  %v5333 = vld [vmem:[#allocation2 + $0x2c0] sm:$0xff]
  %v5334 = vld [vmem:[#allocation2 + $0x2d0] sm:$0xff]
  %v5335 = vld [vmem:[#allocation2 + $0x2d8] sm:$0xff]
  %v5336 = vld [vmem:[#allocation2 + $0x2e8] sm:$0xff]
  %v5337 = vld [vmem:[#allocation2 + $0x2f0] sm:$0xff]
  %v5338 = vld [vmem:[#allocation2 + $0x300] sm:$0xff]
  %v5339 = vld [vmem:[#allocation2 + $0x308] sm:$0xff]
  %v5340 = vld [vmem:[#allocation2 + $0x318] sm:$0xff]
  %v5341 = vld [vmem:[#allocation2 + $0x320] sm:$0xff]
  %v5342 = vpack.c.bf16 %v5279, %v5278
  %v5343 = vpack.c.bf16 %v5281, %v5280
  %v5344 = vpack.c.bf16 %v5283, %v5282
  %v5345 = vpack.c.bf16 %v5285, %v5284
  %v5346 = vpack.c.bf16 %v5287, %v5286
  %v5347 = vpack.c.bf16 %v5289, %v5288
  %v5348 = vpack.c.bf16 %v5291, %v5290
  %v5349 = vpack.c.bf16 %v5293, %v5292
  %v5350 = vpack.c.bf16 %v5295, %v5294
  %v5351 = vpack.c.bf16 %v5297, %v5296
  %v5352 = vpack.c.bf16 %v5299, %v5298
  %v5353 = vpack.c.bf16 %v5301, %v5300
  %v5354 = vpack.c.bf16 %v5303, %v5302
  %v5355 = vpack.c.bf16 %v5305, %v5304
  %v5356 = vpack.c.bf16 %v5307, %v5306
  %v5357 = vpack.c.bf16 %v5309, %v5308
  %v5358 = vpack.c.bf16 %v5311, %v5310
  %v5359 = vpack.c.bf16 %v5313, %v5312
  %v5360 = vpack.c.bf16 %v5315, %v5314
  %v5361 = vpack.c.bf16 %v5317, %v5316
  %v5362 = vpack.c.bf16 %v5319, %v5318
  %v5363 = vpack.c.bf16 %v5321, %v5320
  %v5364 = vpack.c.bf16 %v5323, %v5322
  %v5365 = vpack.c.bf16 %v5325, %v5324
  %v5366 = vpack.c.bf16 %v5327, %v5326
  %v5367 = vpack.c.bf16 %v5329, %v5328
  %v5368 = vpack.c.bf16 %v5331, %v5330
  %v5369 = vpack.c.bf16 %v5333, %v5332
  %v5370 = vpack.c.bf16 %v5335, %v5334
  %v5371 = vpack.c.bf16 %v5337, %v5336
  %v5372 = vpack.c.bf16 %v5339, %v5338
  %v5373 = vpack.c.bf16 %v5341, %v5340
  %v5374 = vld [vmem:[%s4] sm:$0xf]
  %v5375 = vld [vmem:[%s4 + $0x4] sm:$0xf]
  %v5376 = vld [vmem:[%s4 + $0x8] sm:$0xf]
  %v5377 = vld [vmem:[%s4 + $0xc] sm:$0xf]
  %v5378 = vld [vmem:[%s4 + $0x10] sm:$0xf]
  %v5379 = vld [vmem:[%s4 + $0x14] sm:$0xf]
  %v5380 = vld [vmem:[%s4 + $0x18] sm:$0xf]
  %v5381 = vld [vmem:[%s4 + $0x1c] sm:$0xf]
  %v5382 = vld [vmem:[%s4 + $0x20] sm:$0xf]
  %v5383 = vld [vmem:[%s4 + $0x24] sm:$0xf]
  %v5384 = vld [vmem:[%s4 + $0x28] sm:$0xf]
  %v5385 = vld [vmem:[%s4 + $0x2c] sm:$0xf]
  %v5386 = vld [vmem:[%s4 + $0x30] sm:$0xf]
  %v5387 = vld [vmem:[%s4 + $0x34] sm:$0xf]
  %v5388 = vld [vmem:[%s4 + $0x38] sm:$0xf]
  %v5389 = vld [vmem:[%s4 + $0x3c] sm:$0xf]
  %v5390 = vld [vmem:[#allocation2 + $0x1] sm:$0xff]
  %v5391 = vld [vmem:[#allocation2 + $0x9] sm:$0xff]
  %v5392 = vld [vmem:[#allocation2 + $0x19] sm:$0xff]
  %v5393 = vld [vmem:[#allocation2 + $0x21] sm:$0xff]
  %v5394 = vld [vmem:[#allocation2 + $0x31] sm:$0xff]
  %v5395 = vld [vmem:[#allocation2 + $0x39] sm:$0xff]
  %v5396 = vld [vmem:[#allocation2 + $0x49] sm:$0xff]
  %v5397 = vld [vmem:[#allocation2 + $0x51] sm:$0xff]
  %v5398 = vld [vmem:[#allocation2 + $0x61] sm:$0xff]
  %v5399 = vld [vmem:[#allocation2 + $0x69] sm:$0xff]
  %v5400 = vld [vmem:[#allocation2 + $0x79] sm:$0xff]
  %v5401 = vld [vmem:[#allocation2 + $0x81] sm:$0xff]
  %v5402 = vld [vmem:[#allocation2 + $0x91] sm:$0xff]
  %v5403 = vld [vmem:[#allocation2 + $0x99] sm:$0xff]
  %v5404 = vld [vmem:[#allocation2 + $0xa9] sm:$0xff]
  %v5405 = vld [vmem:[#allocation2 + $0xb1] sm:$0xff]
  %v5406 = vld [vmem:[#allocation2 + $0xc1] sm:$0xff]
  %v5407 = vld [vmem:[#allocation2 + $0xc9] sm:$0xff]
  %v5408 = vld [vmem:[#allocation2 + $0xd9] sm:$0xff]
  %v5409 = vld [vmem:[#allocation2 + $0xe1] sm:$0xff]
  %v5410 = vld [vmem:[#allocation2 + $0xf1] sm:$0xff]
  %v5411 = vld [vmem:[#allocation2 + $0xf9] sm:$0xff]
  %v5412 = vld [vmem:[#allocation2 + $0x109] sm:$0xff]
  %v5413 = vld [vmem:[#allocation2 + $0x111] sm:$0xff]
  %v5414 = vld [vmem:[#allocation2 + $0x121] sm:$0xff]
  %v5415 = vld [vmem:[#allocation2 + $0x129] sm:$0xff]
  %v5416 = vld [vmem:[#allocation2 + $0x139] sm:$0xff]
  %v5417 = vld [vmem:[#allocation2 + $0x141] sm:$0xff]
  %v5418 = vld [vmem:[#allocation2 + $0x151] sm:$0xff]
  %v5419 = vld [vmem:[#allocation2 + $0x159] sm:$0xff]
  %v5420 = vld [vmem:[#allocation2 + $0x169] sm:$0xff]
  %v5421 = vld [vmem:[#allocation2 + $0x171] sm:$0xff]
  %v5422 = vld [vmem:[#allocation2 + $0x1b1] sm:$0xff]
  %v5423 = vld [vmem:[#allocation2 + $0x1b9] sm:$0xff]
  %v5424 = vld [vmem:[#allocation2 + $0x1c9] sm:$0xff]
  %v5425 = vld [vmem:[#allocation2 + $0x1d1] sm:$0xff]
  %v5426 = vld [vmem:[#allocation2 + $0x1e1] sm:$0xff]
  %v5427 = vld [vmem:[#allocation2 + $0x1e9] sm:$0xff]
  %v5428 = vld [vmem:[#allocation2 + $0x1f9] sm:$0xff]
  %v5429 = vld [vmem:[#allocation2 + $0x201] sm:$0xff]
  %v5430 = vld [vmem:[#allocation2 + $0x211] sm:$0xff]
  %v5431 = vld [vmem:[#allocation2 + $0x219] sm:$0xff]
  %v5432 = vld [vmem:[#allocation2 + $0x229] sm:$0xff]
  %v5433 = vld [vmem:[#allocation2 + $0x231] sm:$0xff]
  %v5434 = vld [vmem:[#allocation2 + $0x241] sm:$0xff]
  %v5435 = vld [vmem:[#allocation2 + $0x249] sm:$0xff]
  %v5436 = vld [vmem:[#allocation2 + $0x259] sm:$0xff]
  %v5437 = vld [vmem:[#allocation2 + $0x261] sm:$0xff]
  %v5438 = vld [vmem:[#allocation2 + $0x271] sm:$0xff]
  %v5439 = vld [vmem:[#allocation2 + $0x279] sm:$0xff]
  %v5440 = vld [vmem:[#allocation2 + $0x289] sm:$0xff]
  %v5441 = vld [vmem:[#allocation2 + $0x291] sm:$0xff]
  %v5442 = vld [vmem:[#allocation2 + $0x2a1] sm:$0xff]
  %v5443 = vld [vmem:[#allocation2 + $0x2a9] sm:$0xff]
  %v5444 = vld [vmem:[#allocation2 + $0x2b9] sm:$0xff]
  %v5445 = vld [vmem:[#allocation2 + $0x2c1] sm:$0xff]
  %v5446 = vld [vmem:[#allocation2 + $0x2d1] sm:$0xff]
  %v5447 = vld [vmem:[#allocation2 + $0x2d9] sm:$0xff]
  %v5448 = vld [vmem:[#allocation2 + $0x2e9] sm:$0xff]
  %v5449 = vld [vmem:[#allocation2 + $0x2f1] sm:$0xff]
  %v5450 = vld [vmem:[#allocation2 + $0x301] sm:$0xff]
  %v5451 = vld [vmem:[#allocation2 + $0x309] sm:$0xff]
  %v5452 = vld [vmem:[#allocation2 + $0x319] sm:$0xff]
  %v5453 = vld [vmem:[#allocation2 + $0x321] sm:$0xff]
  %v5454 = vpack.c.bf16 %v5391, %v5390
  %v5455 = vpack.c.bf16 %v5393, %v5392
  %v5456 = vpack.c.bf16 %v5395, %v5394
  %v5457 = vpack.c.bf16 %v5397, %v5396
  %v5458 = vpack.c.bf16 %v5399, %v5398
  %v5459 = vpack.c.bf16 %v5401, %v5400
  %v5460 = vpack.c.bf16 %v5403, %v5402
  %v5461 = vpack.c.bf16 %v5405, %v5404
  %v5462 = vpack.c.bf16 %v5407, %v5406
  %v5463 = vpack.c.bf16 %v5409, %v5408
  %v5464 = vpack.c.bf16 %v5411, %v5410
  %v5465 = vpack.c.bf16 %v5413, %v5412
  %v5466 = vpack.c.bf16 %v5415, %v5414
  %v5467 = vpack.c.bf16 %v5417, %v5416
  %v5468 = vpack.c.bf16 %v5419, %v5418
  %v5469 = vpack.c.bf16 %v5421, %v5420
  %v5470 = vpack.c.bf16 %v5423, %v5422
  %v5471 = vpack.c.bf16 %v5425, %v5424
  %v5472 = vpack.c.bf16 %v5427, %v5426
  %v5473 = vpack.c.bf16 %v5429, %v5428
  %v5474 = vpack.c.bf16 %v5431, %v5430
  %v5475 = vpack.c.bf16 %v5433, %v5432
  %v5476 = vpack.c.bf16 %v5435, %v5434
  %v5477 = vpack.c.bf16 %v5437, %v5436
  %v5478 = vpack.c.bf16 %v5439, %v5438
  %v5479 = vpack.c.bf16 %v5441, %v5440
  %v5480 = vpack.c.bf16 %v5443, %v5442
  %v5481 = vpack.c.bf16 %v5445, %v5444
  %v5482 = vpack.c.bf16 %v5447, %v5446
  %v5483 = vpack.c.bf16 %v5449, %v5448
  %v5484 = vpack.c.bf16 %v5451, %v5450
  %v5485 = vpack.c.bf16 %v5453, %v5452
  %s5486 = scalar_lea.vmem %s4, 64
  %v5487 = vld [vmem:[%s5486] sm:$0xf]
  %v5488 = vld [vmem:[%s5486 + $0x4] sm:$0xf]
  %v5489 = vld [vmem:[%s5486 + $0x8] sm:$0xf]
  %v5490 = vld [vmem:[%s5486 + $0xc] sm:$0xf]
  %v5491 = vld [vmem:[%s5486 + $0x10] sm:$0xf]
  %v5492 = vld [vmem:[%s5486 + $0x14] sm:$0xf]
  %v5493 = vld [vmem:[%s5486 + $0x18] sm:$0xf]
  %v5494 = vld [vmem:[%s5486 + $0x1c] sm:$0xf]
  %v5495 = vld [vmem:[%s5486 + $0x20] sm:$0xf]
  %v5496 = vld [vmem:[%s5486 + $0x24] sm:$0xf]
  %v5497 = vld [vmem:[%s5486 + $0x28] sm:$0xf]
  %v5498 = vld [vmem:[%s5486 + $0x2c] sm:$0xf]
  %v5499 = vld [vmem:[%s5486 + $0x30] sm:$0xf]
  %v5500 = vld [vmem:[%s5486 + $0x34] sm:$0xf]
  %v5501 = vld [vmem:[%s5486 + $0x38] sm:$0xf]
  %v5502 = vld [vmem:[%s5486 + $0x3c] sm:$0xf]
  %v5519 = vunpack.c.l.b16 %v5487
  %v5520 = vunpack.c.l.b16 %v5488
  %v5521 = vunpack.c.l.b16 %v5489
  %v5522 = vunpack.c.l.b16 %v5490
  %v5523 = vunpack.c.l.b16 %v5491
  %v5524 = vunpack.c.l.b16 %v5492
  %v5525 = vunpack.c.l.b16 %v5493
  %v5526 = vunpack.c.l.b16 %v5494
  %v5527 = vunpack.c.l.b16 %v5495
  %v5528 = vunpack.c.l.b16 %v5496
  %v5529 = vunpack.c.l.b16 %v5497
  %v5530 = vunpack.c.l.b16 %v5498
  %v5531 = vunpack.c.l.b16 %v5499
  %v5532 = vunpack.c.l.b16 %v5500
  %v5533 = vunpack.c.l.b16 %v5501
  %v5534 = vunpack.c.l.b16 %v5502
  %v5535 = vpack.c.b16 %v5520, %v5519
  %v5536 = vpack.c.b16 %v5522, %v5521
  %v5537 = vpack.c.b16 %v5524, %v5523
  %v5538 = vpack.c.b16 %v5526, %v5525
  %v5539 = vpack.c.b16 %v5528, %v5527
  %v5540 = vpack.c.b16 %v5530, %v5529
  %v5541 = vpack.c.b16 %v5532, %v5531
  %v5542 = vpack.c.b16 %v5534, %v5533
  %5551 = vmatprep.subr.bf16.mxu0 0
  %5552 = vmatpush1.bf16.msra.mxu0 %v5535
  %5553 = vmatprep.subr.bf16.mxu0 0
  %5554 = vmatpush1.bf16.msra.mxu0 %v5536
  %5555 = vmatprep.subr.bf16.mxu0 0
  %5556 = vmatpush1.bf16.msra.mxu0 %v5537
  %5557 = vmatprep.subr.bf16.mxu0 0
  %5558 = vmatpush1.bf16.msra.mxu0 %v5538
  %5559 = vmatprep.subr.bf16.mxu0 0
  %5560 = vmatpush1.bf16.msra.mxu0 %v5539
  %5561 = vmatprep.subr.bf16.mxu0 0
  %5562 = vmatpush1.bf16.msra.mxu0 %v5540
  %5563 = vmatprep.subr.bf16.mxu0 0
  %5564 = vmatpush1.bf16.msra.mxu0 %v5541
  %5565 = vmatprep.subr.bf16.mxu0 0
  %5566 = vmatpush1.bf16.msra.mxu0 %v5542
  %5567 = vmatprep.subr.bf16.mxu0 0
  %5568 = vmatpush1.bf16.msra.mxu0 0
  %5569 = vmatprep.subr.bf16.mxu0 0
  %5570 = vmatpush1.bf16.msra.mxu0 0
  %5571 = vmatprep.subr.bf16.mxu0 0
  %5572 = vmatpush1.bf16.msra.mxu0 0
  %5573 = vmatprep.subr.bf16.mxu0 0
  %5574 = vmatpush1.bf16.msra.mxu0 0
  %5575 = vmatprep.subr.bf16.mxu0 0
  %5576 = vmatpush1.bf16.msra.mxu0 0
  %5577 = vmatprep.subr.bf16.mxu0 0
  %5578 = vmatpush1.bf16.msra.mxu0 0
  %5579 = vmatprep.subr.bf16.mxu0 0
  %5580 = vmatpush1.bf16.msra.mxu0 0
  %5581 = vmatprep.subr.bf16.mxu0 0
  %5582 = vmatpush1.bf16.msra.mxu0 0
  %5583 = vmatprep.mubr.bf16.mxu0 0
  %5584 = vmatmul.mubr.bf16.gmra.mrb[0].mxu0 %v5454
  %v5585 = vpop.f32.mrb[0].mxu0
  %v5586 = vadd.f32 0.0, %v5585
  %v5587 = vpop.f32.mrb[0].mxu0
  %v5588 = vpop.f32.mrb[0].mxu0
  %v5589 = vadd.f32 0.0, %v5588
  %v5590 = vpop.f32.mrb[0].mxu0
  %5591 = vmatprep.mubr.bf16.mxu0 0
  %5592 = vmatmul.mubr.bf16.gmra.mrb[0].mxu0 %v5455
  %v5593 = vpop.f32.mrb[0].mxu0
  %v5594 = vadd.f32 0.0, %v5593
  %v5595 = vpop.f32.mrb[0].mxu0
  %v5596 = vpop.f32.mrb[0].mxu0
  %v5597 = vadd.f32 0.0, %v5596
  %v5598 = vpop.f32.mrb[0].mxu0
  %5599 = vmatprep.mubr.bf16.mxu0 0
  %5600 = vmatmul.mubr.bf16.gmra.mrb[0].mxu0 %v5456
  %v5601 = vpop.f32.mrb[0].mxu0
  %v5602 = vadd.f32 0.0, %v5601
  %v5603 = vpop.f32.mrb[0].mxu0
  %v5604 = vpop.f32.mrb[0].mxu0
  %v5605 = vadd.f32 0.0, %v5604
  %v5606 = vpop.f32.mrb[0].mxu0
  %5607 = vmatprep.mubr.bf16.mxu0 0
  %5608 = vmatmul.mubr.bf16.gmra.mrb[0].mxu0 %v5457
  %v5609 = vpop.f32.mrb[0].mxu0
  %v5610 = vadd.f32 0.0, %v5609
  %v5611 = vpop.f32.mrb[0].mxu0
  %v5612 = vpop.f32.mrb[0].mxu0
  %v5613 = vadd.f32 0.0, %v5612
  %v5614 = vpop.f32.mrb[0].mxu0
  %5615 = vmatprep.mubr.bf16.mxu0 0
  %5616 = vmatmul.mubr.bf16.gmra.mrb[0].mxu0 %v5458
  %v5617 = vpop.f32.mrb[0].mxu0
  %v5618 = vadd.f32 0.0, %v5617
  %v5619 = vpop.f32.mrb[0].mxu0
  %v5620 = vpop.f32.mrb[0].mxu0
  %v5621 = vadd.f32 0.0, %v5620
  %v5622 = vpop.f32.mrb[0].mxu0
  %5623 = vmatprep.mubr.bf16.mxu0 0
  %5624 = vmatmul.mubr.bf16.gmra.mrb[0].mxu0 %v5459
  %v5625 = vpop.f32.mrb[0].mxu0
  %v5626 = vadd.f32 0.0, %v5625
  %v5627 = vpop.f32.mrb[0].mxu0
  %v5628 = vpop.f32.mrb[0].mxu0
  %v5629 = vadd.f32 0.0, %v5628
  %v5630 = vpop.f32.mrb[0].mxu0
  %5631 = vmatprep.mubr.bf16.mxu0 0
  %5632 = vmatmul.mubr.bf16.gmra.mrb[0].mxu0 %v5460
  %v5633 = vpop.f32.mrb[0].mxu0
  %v5634 = vadd.f32 0.0, %v5633
  %v5635 = vpop.f32.mrb[0].mxu0
  %v5636 = vpop.f32.mrb[0].mxu0
  %v5637 = vadd.f32 0.0, %v5636
  %v5638 = vpop.f32.mrb[0].mxu0
  %5639 = vmatprep.mubr.bf16.mxu0 0
  %5640 = vmatmul.mubr.bf16.gmra.mrb[0].mxu0 %v5461
  %v5641 = vpop.f32.mrb[0].mxu0
  %v5642 = vadd.f32 0.0, %v5641
  %v5643 = vpop.f32.mrb[0].mxu0
  %v5644 = vpop.f32.mrb[0].mxu0
  %v5645 = vadd.f32 0.0, %v5644
  %v5646 = vpop.f32.mrb[0].mxu0
  %5647 = vmatprep.mubr.bf16.mxu0 0
  %5648 = vmatmul.mubr.bf16.gmra.mrb[0].mxu0 %v5462
  %v5649 = vpop.f32.mrb[0].mxu0
  %v5650 = vadd.f32 0.0, %v5649
  %v5651 = vpop.f32.mrb[0].mxu0
  %v5652 = vpop.f32.mrb[0].mxu0
  %v5653 = vadd.f32 0.0, %v5652
  %v5654 = vpop.f32.mrb[0].mxu0
  %5655 = vmatprep.mubr.bf16.mxu0 0
  %5656 = vmatmul.mubr.bf16.gmra.mrb[0].mxu0 %v5463
  %v5657 = vpop.f32.mrb[0].mxu0
  %v5658 = vadd.f32 0.0, %v5657
  %v5659 = vpop.f32.mrb[0].mxu0
  %v5660 = vpop.f32.mrb[0].mxu0
  %v5661 = vadd.f32 0.0, %v5660
  %v5662 = vpop.f32.mrb[0].mxu0
  %5663 = vmatprep.mubr.bf16.mxu0 0
  %5664 = vmatmul.mubr.bf16.gmra.mrb[0].mxu0 %v5464
  %v5665 = vpop.f32.mrb[0].mxu0
  %v5666 = vadd.f32 0.0, %v5665
  %v5667 = vpop.f32.mrb[0].mxu0
  %v5668 = vpop.f32.mrb[0].mxu0
  %v5669 = vadd.f32 0.0, %v5668
  %v5670 = vpop.f32.mrb[0].mxu0
  %5671 = vmatprep.mubr.bf16.mxu0 0
  %5672 = vmatmul.mubr.bf16.gmra.mrb[0].mxu0 %v5465
  %v5673 = vpop.f32.mrb[0].mxu0
  %v5674 = vadd.f32 0.0, %v5673
  %v5675 = vpop.f32.mrb[0].mxu0
  %v5676 = vpop.f32.mrb[0].mxu0
  %v5677 = vadd.f32 0.0, %v5676
  %v5678 = vpop.f32.mrb[0].mxu0
  %5679 = vmatprep.mubr.bf16.mxu0 0
  %5680 = vmatmul.mubr.bf16.gmra.mrb[0].mxu0 %v5466
  %v5681 = vpop.f32.mrb[0].mxu0
  %v5682 = vadd.f32 0.0, %v5681
  %v5683 = vpop.f32.mrb[0].mxu0
  %v5684 = vpop.f32.mrb[0].mxu0
  %v5685 = vadd.f32 0.0, %v5684
  %v5686 = vpop.f32.mrb[0].mxu0
  %5687 = vmatprep.mubr.bf16.mxu0 0
  %5688 = vmatmul.mubr.bf16.gmra.mrb[0].mxu0 %v5467
  %v5689 = vpop.f32.mrb[0].mxu0
  %v5690 = vadd.f32 0.0, %v5689
  %v5691 = vpop.f32.mrb[0].mxu0
  %v5692 = vpop.f32.mrb[0].mxu0
  %v5693 = vadd.f32 0.0, %v5692
  %v5694 = vpop.f32.mrb[0].mxu0
  %5695 = vmatprep.mubr.bf16.mxu0 0
  %5696 = vmatmul.mubr.bf16.gmra.mrb[0].mxu0 %v5468
  %v5697 = vpop.f32.mrb[0].mxu0
  %v5698 = vadd.f32 0.0, %v5697
  %v5699 = vpop.f32.mrb[0].mxu0
  %v5700 = vpop.f32.mrb[0].mxu0
  %v5701 = vadd.f32 0.0, %v5700
  %v5702 = vpop.f32.mrb[0].mxu0
  %5703 = vmatprep.mubr.bf16.mxu0 0
  %5704 = vmatmul.mubr.bf16.gmra.mrb[0].mxu0 %v5469
  %v5705 = vpop.f32.mrb[0].mxu0
  %v5706 = vadd.f32 0.0, %v5705
  %v5707 = vpop.f32.mrb[0].mxu0
  %v5708 = vpop.f32.mrb[0].mxu0
  %v5709 = vadd.f32 0.0, %v5708
  %v5710 = vpop.f32.mrb[0].mxu0
  %5711 = vmatprep.mubr.bf16.mxu0 0
  %5712 = vmatmul.mubr.bf16.gmra.mrb[0].mxu0 %v5470
  %v5713 = vpop.f32.mrb[0].mxu0
  %v5714 = vadd.f32 0.0, %v5713
  %v5715 = vpop.f32.mrb[0].mxu0
  %v5716 = vpop.f32.mrb[0].mxu0
  %v5717 = vadd.f32 0.0, %v5716
  %v5718 = vpop.f32.mrb[0].mxu0
  %5719 = vmatprep.mubr.bf16.mxu0 0
  %5720 = vmatmul.mubr.bf16.gmra.mrb[0].mxu0 %v5471
  %v5721 = vpop.f32.mrb[0].mxu0
  %v5722 = vadd.f32 0.0, %v5721
  %v5723 = vpop.f32.mrb[0].mxu0
  %v5724 = vpop.f32.mrb[0].mxu0
  %v5725 = vadd.f32 0.0, %v5724
  %v5726 = vpop.f32.mrb[0].mxu0
  %5727 = vmatprep.mubr.bf16.mxu0 0
  %5728 = vmatmul.mubr.bf16.gmra.mrb[0].mxu0 %v5472
  %v5729 = vpop.f32.mrb[0].mxu0
  %v5730 = vadd.f32 0.0, %v5729
  %v5731 = vpop.f32.mrb[0].mxu0
  %v5732 = vpop.f32.mrb[0].mxu0
  %v5733 = vadd.f32 0.0, %v5732
  %v5734 = vpop.f32.mrb[0].mxu0
  %5735 = vmatprep.mubr.bf16.mxu0 0
  %5736 = vmatmul.mubr.bf16.gmra.mrb[0].mxu0 %v5473
  %v5737 = vpop.f32.mrb[0].mxu0
  %v5738 = vadd.f32 0.0, %v5737
  %v5739 = vpop.f32.mrb[0].mxu0
  %v5740 = vpop.f32.mrb[0].mxu0
  %v5741 = vadd.f32 0.0, %v5740
  %v5742 = vpop.f32.mrb[0].mxu0
  %5743 = vmatprep.mubr.bf16.mxu0 0
  %5744 = vmatmul.mubr.bf16.gmra.mrb[0].mxu0 %v5474
  %v5745 = vpop.f32.mrb[0].mxu0
  %v5746 = vadd.f32 0.0, %v5745
  %v5747 = vpop.f32.mrb[0].mxu0
  %v5748 = vpop.f32.mrb[0].mxu0
  %v5749 = vadd.f32 0.0, %v5748
  %v5750 = vpop.f32.mrb[0].mxu0
  %5751 = vmatprep.mubr.bf16.mxu0 0
  %5752 = vmatmul.mubr.bf16.gmra.mrb[0].mxu0 %v5475
  %v5753 = vpop.f32.mrb[0].mxu0
  %v5754 = vadd.f32 0.0, %v5753
  %v5755 = vpop.f32.mrb[0].mxu0
  %v5756 = vpop.f32.mrb[0].mxu0
  %v5757 = vadd.f32 0.0, %v5756
  %v5758 = vpop.f32.mrb[0].mxu0
  %5759 = vmatprep.mubr.bf16.mxu0 0
  %5760 = vmatmul.mubr.bf16.gmra.mrb[0].mxu0 %v5476
  %v5761 = vpop.f32.mrb[0].mxu0
  %v5762 = vadd.f32 0.0, %v5761
  %v5763 = vpop.f32.mrb[0].mxu0
  %v5764 = vpop.f32.mrb[0].mxu0
  %v5765 = vadd.f32 0.0, %v5764
  %v5766 = vpop.f32.mrb[0].mxu0
  %5767 = vmatprep.mubr.bf16.mxu0 0
  %5768 = vmatmul.mubr.bf16.gmra.mrb[0].mxu0 %v5477
  %v5769 = vpop.f32.mrb[0].mxu0
  %v5770 = vadd.f32 0.0, %v5769
  %v5771 = vpop.f32.mrb[0].mxu0
  %v5772 = vpop.f32.mrb[0].mxu0
  %v5773 = vadd.f32 0.0, %v5772
  %v5774 = vpop.f32.mrb[0].mxu0
  %5775 = vmatprep.mubr.bf16.mxu0 0
  %5776 = vmatmul.mubr.bf16.gmra.mrb[0].mxu0 %v5478
  %v5777 = vpop.f32.mrb[0].mxu0
  %v5778 = vadd.f32 0.0, %v5777
  %v5779 = vpop.f32.mrb[0].mxu0
  %v5780 = vpop.f32.mrb[0].mxu0
  %v5781 = vadd.f32 0.0, %v5780
  %v5782 = vpop.f32.mrb[0].mxu0
  %5783 = vmatprep.mubr.bf16.mxu0 0
  %5784 = vmatmul.mubr.bf16.gmra.mrb[0].mxu0 %v5479
  %v5785 = vpop.f32.mrb[0].mxu0
  %v5786 = vadd.f32 0.0, %v5785
  %v5787 = vpop.f32.mrb[0].mxu0
  %v5788 = vpop.f32.mrb[0].mxu0
  %v5789 = vadd.f32 0.0, %v5788
  %v5790 = vpop.f32.mrb[0].mxu0
  %5791 = vmatprep.mubr.bf16.mxu0 0
  %5792 = vmatmul.mubr.bf16.gmra.mrb[0].mxu0 %v5480
  %v5793 = vpop.f32.mrb[0].mxu0
  %v5794 = vadd.f32 0.0, %v5793
  %v5795 = vpop.f32.mrb[0].mxu0
  %v5796 = vpop.f32.mrb[0].mxu0
  %v5797 = vadd.f32 0.0, %v5796
  %v5798 = vpop.f32.mrb[0].mxu0
  %5799 = vmatprep.mubr.bf16.mxu0 0
  %5800 = vmatmul.mubr.bf16.gmra.mrb[0].mxu0 %v5481
  %v5801 = vpop.f32.mrb[0].mxu0
  %v5802 = vadd.f32 0.0, %v5801
  %v5803 = vpop.f32.mrb[0].mxu0
  %v5804 = vpop.f32.mrb[0].mxu0
  %v5805 = vadd.f32 0.0, %v5804
  %v5806 = vpop.f32.mrb[0].mxu0
  %5807 = vmatprep.mubr.bf16.mxu0 0
  %5808 = vmatmul.mubr.bf16.gmra.mrb[0].mxu0 %v5482
  %v5809 = vpop.f32.mrb[0].mxu0
  %v5810 = vadd.f32 0.0, %v5809
  %v5811 = vpop.f32.mrb[0].mxu0
  %v5812 = vpop.f32.mrb[0].mxu0
  %v5813 = vadd.f32 0.0, %v5812
  %v5814 = vpop.f32.mrb[0].mxu0
  %5815 = vmatprep.mubr.bf16.mxu0 0
  %5816 = vmatmul.mubr.bf16.gmra.mrb[0].mxu0 %v5483
  %v5817 = vpop.f32.mrb[0].mxu0
  %v5818 = vadd.f32 0.0, %v5817
  %v5819 = vpop.f32.mrb[0].mxu0
  %v5820 = vpop.f32.mrb[0].mxu0
  %v5821 = vadd.f32 0.0, %v5820
  %v5822 = vpop.f32.mrb[0].mxu0
  %5823 = vmatprep.mubr.bf16.mxu0 0
  %5824 = vmatmul.mubr.bf16.gmra.mrb[0].mxu0 %v5484
  %v5825 = vpop.f32.mrb[0].mxu0
  %v5826 = vadd.f32 0.0, %v5825
  %v5827 = vpop.f32.mrb[0].mxu0
  %v5828 = vpop.f32.mrb[0].mxu0
  %v5829 = vadd.f32 0.0, %v5828
  %v5830 = vpop.f32.mrb[0].mxu0
  %5831 = vmatprep.mubr.bf16.mxu0 0
  %5832 = vmatmul.mubr.bf16.gmra.mrb[0].mxu0 %v5485
  %v5833 = vpop.f32.mrb[0].mxu0
  %v5834 = vadd.f32 0.0, %v5833
  %v5835 = vpop.f32.mrb[0].mxu0
  %v5836 = vpop.f32.mrb[0].mxu0
  %v5837 = vadd.f32 0.0, %v5836
  %v5838 = vpop.f32.mrb[0].mxu0
  %5839 = vdwg.mxu0
  %v5856 = vunpack.c.l.b16 %v5374
  %v5857 = vunpack.c.l.b16 %v5375
  %v5858 = vunpack.c.l.b16 %v5376
  %v5859 = vunpack.c.l.b16 %v5377
  %v5860 = vunpack.c.l.b16 %v5378
  %v5861 = vunpack.c.l.b16 %v5379
  %v5862 = vunpack.c.l.b16 %v5380
  %v5863 = vunpack.c.l.b16 %v5381
  %v5864 = vunpack.c.l.b16 %v5382
  %v5865 = vunpack.c.l.b16 %v5383
  %v5866 = vunpack.c.l.b16 %v5384
  %v5867 = vunpack.c.l.b16 %v5385
  %v5868 = vunpack.c.l.b16 %v5386
  %v5869 = vunpack.c.l.b16 %v5387
  %v5870 = vunpack.c.l.b16 %v5388
  %v5871 = vunpack.c.l.b16 %v5389
  %v5872 = vpack.c.b16 %v5857, %v5856
  %v5873 = vpack.c.b16 %v5859, %v5858
  %v5874 = vpack.c.b16 %v5861, %v5860
  %v5875 = vpack.c.b16 %v5863, %v5862
  %v5876 = vpack.c.b16 %v5865, %v5864
  %v5877 = vpack.c.b16 %v5867, %v5866
  %v5878 = vpack.c.b16 %v5869, %v5868
  %v5879 = vpack.c.b16 %v5871, %v5870
  %5888 = vmatprep.subr.bf16.mxu0 0
  %5889 = vmatpush1.bf16.msra.mxu0 %v5872
  %5890 = vmatprep.subr.bf16.mxu0 0
  %5891 = vmatpush1.bf16.msra.mxu0 %v5873
  %5892 = vmatprep.subr.bf16.mxu0 0
  %5893 = vmatpush1.bf16.msra.mxu0 %v5874
  %5894 = vmatprep.subr.bf16.mxu0 0
  %5895 = vmatpush1.bf16.msra.mxu0 %v5875
  %5896 = vmatprep.subr.bf16.mxu0 0
  %5897 = vmatpush1.bf16.msra.mxu0 %v5876
  %5898 = vmatprep.subr.bf16.mxu0 0
  %5899 = vmatpush1.bf16.msra.mxu0 %v5877
  %5900 = vmatprep.subr.bf16.mxu0 0
  %5901 = vmatpush1.bf16.msra.mxu0 %v5878
  %5902 = vmatprep.subr.bf16.mxu0 0
  %5903 = vmatpush1.bf16.msra.mxu0 %v5879
  %5904 = vmatprep.subr.bf16.mxu0 0
  %5905 = vmatpush1.bf16.msra.mxu0 0
  %5906 = vmatprep.subr.bf16.mxu0 0
  %5907 = vmatpush1.bf16.msra.mxu0 0
  %5908 = vmatprep.subr.bf16.mxu0 0
  %5909 = vmatpush1.bf16.msra.mxu0 0
  %5910 = vmatprep.subr.bf16.mxu0 0
  %5911 = vmatpush1.bf16.msra.mxu0 0
  %5912 = vmatprep.subr.bf16.mxu0 0
  %5913 = vmatpush1.bf16.msra.mxu0 0
  %5914 = vmatprep.subr.bf16.mxu0 0
  %5915 = vmatpush1.bf16.msra.mxu0 0
  %5916 = vmatprep.subr.bf16.mxu0 0
  %5917 = vmatpush1.bf16.msra.mxu0 0
  %5918 = vmatprep.subr.bf16.mxu0 0
  %5919 = vmatpush1.bf16.msra.mxu0 0
  %5920 = vmatprep.mubr.bf16.mxu0 0
  %5921 = vmatmul.mubr.bf16.gmra.mrb[0].mxu0 %v5342
  %v5922 = vpop.f32.mrb[0].mxu0
  %v5923 = vadd.f32 %v5586, %v5922
  %v5924 = vpop.f32.mrb[0].mxu0
  %v5925 = vpop.f32.mrb[0].mxu0
  %v5926 = vadd.f32 %v5589, %v5925
  %v5927 = vpop.f32.mrb[0].mxu0
  %5928 = vmatprep.mubr.bf16.mxu0 0
  %5929 = vmatmul.mubr.bf16.gmra.mrb[0].mxu0 %v5343
  %v5930 = vpop.f32.mrb[0].mxu0
  %v5931 = vadd.f32 %v5594, %v5930
  %v5932 = vpop.f32.mrb[0].mxu0
  %v5933 = vpop.f32.mrb[0].mxu0
  %v5934 = vadd.f32 %v5597, %v5933
  %v5935 = vpop.f32.mrb[0].mxu0
  %5936 = vmatprep.mubr.bf16.mxu0 0
  %5937 = vmatmul.mubr.bf16.gmra.mrb[0].mxu0 %v5344
  %v5938 = vpop.f32.mrb[0].mxu0
  %v5939 = vadd.f32 %v5602, %v5938
  %v5940 = vpop.f32.mrb[0].mxu0
  %v5941 = vpop.f32.mrb[0].mxu0
  %v5942 = vadd.f32 %v5605, %v5941
  %v5943 = vpop.f32.mrb[0].mxu0
  %5944 = vmatprep.mubr.bf16.mxu0 0
  %5945 = vmatmul.mubr.bf16.gmra.mrb[0].mxu0 %v5345
  %v5946 = vpop.f32.mrb[0].mxu0
  %v5947 = vadd.f32 %v5610, %v5946
  %v5948 = vpop.f32.mrb[0].mxu0
  %v5949 = vpop.f32.mrb[0].mxu0
  %v5950 = vadd.f32 %v5613, %v5949
  %v5951 = vpop.f32.mrb[0].mxu0
  %5952 = vmatprep.mubr.bf16.mxu0 0
  %5953 = vmatmul.mubr.bf16.gmra.mrb[0].mxu0 %v5346
  %v5954 = vpop.f32.mrb[0].mxu0
  %v5955 = vadd.f32 %v5618, %v5954
  %v5956 = vpop.f32.mrb[0].mxu0
  %v5957 = vpop.f32.mrb[0].mxu0
  %v5958 = vadd.f32 %v5621, %v5957
  %v5959 = vpop.f32.mrb[0].mxu0
  %5960 = vmatprep.mubr.bf16.mxu0 0
  %5961 = vmatmul.mubr.bf16.gmra.mrb[0].mxu0 %v5347
  %v5962 = vpop.f32.mrb[0].mxu0
  %v5963 = vadd.f32 %v5626, %v5962
  %v5964 = vpop.f32.mrb[0].mxu0
  %v5965 = vpop.f32.mrb[0].mxu0
  %v5966 = vadd.f32 %v5629, %v5965
  %v5967 = vpop.f32.mrb[0].mxu0
  %5968 = vmatprep.mubr.bf16.mxu0 0
  %5969 = vmatmul.mubr.bf16.gmra.mrb[0].mxu0 %v5348
  %v5970 = vpop.f32.mrb[0].mxu0
  %v5971 = vadd.f32 %v5634, %v5970
  %v5972 = vpop.f32.mrb[0].mxu0
  %v5973 = vpop.f32.mrb[0].mxu0
  %v5974 = vadd.f32 %v5637, %v5973
  %v5975 = vpop.f32.mrb[0].mxu0
  %5976 = vmatprep.mubr.bf16.mxu0 0
  %5977 = vmatmul.mubr.bf16.gmra.mrb[0].mxu0 %v5349
  %v5978 = vpop.f32.mrb[0].mxu0
  %v5979 = vadd.f32 %v5642, %v5978
  %v5980 = vpop.f32.mrb[0].mxu0
  %v5981 = vpop.f32.mrb[0].mxu0
  %v5982 = vadd.f32 %v5645, %v5981
  %v5983 = vpop.f32.mrb[0].mxu0
  %5984 = vmatprep.mubr.bf16.mxu0 0
  %5985 = vmatmul.mubr.bf16.gmra.mrb[0].mxu0 %v5350
  %v5986 = vpop.f32.mrb[0].mxu0
  %v5987 = vadd.f32 %v5650, %v5986
  %v5988 = vpop.f32.mrb[0].mxu0
  %v5989 = vpop.f32.mrb[0].mxu0
  %v5990 = vadd.f32 %v5653, %v5989
  %v5991 = vpop.f32.mrb[0].mxu0
  %5992 = vmatprep.mubr.bf16.mxu0 0
  %5993 = vmatmul.mubr.bf16.gmra.mrb[0].mxu0 %v5351
  %v5994 = vpop.f32.mrb[0].mxu0
  %v5995 = vadd.f32 %v5658, %v5994
  %v5996 = vpop.f32.mrb[0].mxu0
  %v5997 = vpop.f32.mrb[0].mxu0
  %v5998 = vadd.f32 %v5661, %v5997
  %v5999 = vpop.f32.mrb[0].mxu0
  %6000 = vmatprep.mubr.bf16.mxu0 0
  %6001 = vmatmul.mubr.bf16.gmra.mrb[0].mxu0 %v5352
  %v6002 = vpop.f32.mrb[0].mxu0
  %v6003 = vadd.f32 %v5666, %v6002
  %v6004 = vpop.f32.mrb[0].mxu0
  %v6005 = vpop.f32.mrb[0].mxu0
  %v6006 = vadd.f32 %v5669, %v6005
  %v6007 = vpop.f32.mrb[0].mxu0
  %6008 = vmatprep.mubr.bf16.mxu0 0
  %6009 = vmatmul.mubr.bf16.gmra.mrb[0].mxu0 %v5353
  %v6010 = vpop.f32.mrb[0].mxu0
  %v6011 = vadd.f32 %v5674, %v6010
  %v6012 = vpop.f32.mrb[0].mxu0
  %v6013 = vpop.f32.mrb[0].mxu0
  %v6014 = vadd.f32 %v5677, %v6013
  %v6015 = vpop.f32.mrb[0].mxu0
  %6016 = vmatprep.mubr.bf16.mxu0 0
  %6017 = vmatmul.mubr.bf16.gmra.mrb[0].mxu0 %v5354
  %v6018 = vpop.f32.mrb[0].mxu0
  %v6019 = vadd.f32 %v5682, %v6018
  %v6020 = vpop.f32.mrb[0].mxu0
  %v6021 = vpop.f32.mrb[0].mxu0
  %v6022 = vadd.f32 %v5685, %v6021
  %v6023 = vpop.f32.mrb[0].mxu0
  %6024 = vmatprep.mubr.bf16.mxu0 0
  %6025 = vmatmul.mubr.bf16.gmra.mrb[0].mxu0 %v5355
  %v6026 = vpop.f32.mrb[0].mxu0
  %v6027 = vadd.f32 %v5690, %v6026
  %v6028 = vpop.f32.mrb[0].mxu0
  %v6029 = vpop.f32.mrb[0].mxu0
  %v6030 = vadd.f32 %v5693, %v6029
  %v6031 = vpop.f32.mrb[0].mxu0
  %6032 = vmatprep.mubr.bf16.mxu0 0
  %6033 = vmatmul.mubr.bf16.gmra.mrb[0].mxu0 %v5356
  %v6034 = vpop.f32.mrb[0].mxu0
  %v6035 = vadd.f32 %v5698, %v6034
  %v6036 = vpop.f32.mrb[0].mxu0
  %v6037 = vpop.f32.mrb[0].mxu0
  %v6038 = vadd.f32 %v5701, %v6037
  %v6039 = vpop.f32.mrb[0].mxu0
  %6040 = vmatprep.mubr.bf16.mxu0 0
  %6041 = vmatmul.mubr.bf16.gmra.mrb[0].mxu0 %v5357
  %v6042 = vpop.f32.mrb[0].mxu0
  %v6043 = vadd.f32 %v5706, %v6042
  %v6044 = vpop.f32.mrb[0].mxu0
  %v6045 = vpop.f32.mrb[0].mxu0
  %v6046 = vadd.f32 %v5709, %v6045
  %v6047 = vpop.f32.mrb[0].mxu0
  %6048 = vmatprep.mubr.bf16.mxu0 0
  %6049 = vmatmul.mubr.bf16.gmra.mrb[0].mxu0 %v5358
  %v6050 = vpop.f32.mrb[0].mxu0
  %v6051 = vadd.f32 %v5714, %v6050
  %v6052 = vpop.f32.mrb[0].mxu0
  %v6053 = vpop.f32.mrb[0].mxu0
  %v6054 = vadd.f32 %v5717, %v6053
  %v6055 = vpop.f32.mrb[0].mxu0
  %6056 = vmatprep.mubr.bf16.mxu0 0
  %6057 = vmatmul.mubr.bf16.gmra.mrb[0].mxu0 %v5359
  %v6058 = vpop.f32.mrb[0].mxu0
  %v6059 = vadd.f32 %v5722, %v6058
  %v6060 = vpop.f32.mrb[0].mxu0
  %v6061 = vpop.f32.mrb[0].mxu0
  %v6062 = vadd.f32 %v5725, %v6061
  %v6063 = vpop.f32.mrb[0].mxu0
  %6064 = vmatprep.mubr.bf16.mxu0 0
  %6065 = vmatmul.mubr.bf16.gmra.mrb[0].mxu0 %v5360
  %v6066 = vpop.f32.mrb[0].mxu0
  %v6067 = vadd.f32 %v5730, %v6066
  %v6068 = vpop.f32.mrb[0].mxu0
  %v6069 = vpop.f32.mrb[0].mxu0
  %v6070 = vadd.f32 %v5733, %v6069
  %v6071 = vpop.f32.mrb[0].mxu0
  %6072 = vmatprep.mubr.bf16.mxu0 0
  %6073 = vmatmul.mubr.bf16.gmra.mrb[0].mxu0 %v5361
  %v6074 = vpop.f32.mrb[0].mxu0
  %v6075 = vadd.f32 %v5738, %v6074
  %v6076 = vpop.f32.mrb[0].mxu0
  %v6077 = vpop.f32.mrb[0].mxu0
  %v6078 = vadd.f32 %v5741, %v6077
  %v6079 = vpop.f32.mrb[0].mxu0
  %6080 = vmatprep.mubr.bf16.mxu0 0
  %6081 = vmatmul.mubr.bf16.gmra.mrb[0].mxu0 %v5362
  %v6082 = vpop.f32.mrb[0].mxu0
  %v6083 = vadd.f32 %v5746, %v6082
  %v6084 = vpop.f32.mrb[0].mxu0
  %v6085 = vpop.f32.mrb[0].mxu0
  %v6086 = vadd.f32 %v5749, %v6085
  %v6087 = vpop.f32.mrb[0].mxu0
  %6088 = vmatprep.mubr.bf16.mxu0 0
  %6089 = vmatmul.mubr.bf16.gmra.mrb[0].mxu0 %v5363
  %v6090 = vpop.f32.mrb[0].mxu0
  %v6091 = vadd.f32 %v5754, %v6090
  %v6092 = vpop.f32.mrb[0].mxu0
  %v6093 = vpop.f32.mrb[0].mxu0
  %v6094 = vadd.f32 %v5757, %v6093
  %v6095 = vpop.f32.mrb[0].mxu0
  %6096 = vmatprep.mubr.bf16.mxu0 0
  %6097 = vmatmul.mubr.bf16.gmra.mrb[0].mxu0 %v5364
  %v6098 = vpop.f32.mrb[0].mxu0
  %v6099 = vadd.f32 %v5762, %v6098
  %v6100 = vpop.f32.mrb[0].mxu0
  %v6101 = vpop.f32.mrb[0].mxu0
  %v6102 = vadd.f32 %v5765, %v6101
  %v6103 = vpop.f32.mrb[0].mxu0
  %6104 = vmatprep.mubr.bf16.mxu0 0
  %6105 = vmatmul.mubr.bf16.gmra.mrb[0].mxu0 %v5365
  %v6106 = vpop.f32.mrb[0].mxu0
  %v6107 = vadd.f32 %v5770, %v6106
  %v6108 = vpop.f32.mrb[0].mxu0
  %v6109 = vpop.f32.mrb[0].mxu0
  %v6110 = vadd.f32 %v5773, %v6109
  %v6111 = vpop.f32.mrb[0].mxu0
  %6112 = vmatprep.mubr.bf16.mxu0 0
  %6113 = vmatmul.mubr.bf16.gmra.mrb[0].mxu0 %v5366
  %v6114 = vpop.f32.mrb[0].mxu0
  %v6115 = vadd.f32 %v5778, %v6114
  %v6116 = vpop.f32.mrb[0].mxu0
  %v6117 = vpop.f32.mrb[0].mxu0
  %v6118 = vadd.f32 %v5781, %v6117
  %v6119 = vpop.f32.mrb[0].mxu0
  %6120 = vmatprep.mubr.bf16.mxu0 0
  %6121 = vmatmul.mubr.bf16.gmra.mrb[0].mxu0 %v5367
  %v6122 = vpop.f32.mrb[0].mxu0
  %v6123 = vadd.f32 %v5786, %v6122
  %v6124 = vpop.f32.mrb[0].mxu0
  %v6125 = vpop.f32.mrb[0].mxu0
  %v6126 = vadd.f32 %v5789, %v6125
  %v6127 = vpop.f32.mrb[0].mxu0
  %6128 = vmatprep.mubr.bf16.mxu0 0
  %6129 = vmatmul.mubr.bf16.gmra.mrb[0].mxu0 %v5368
  %v6130 = vpop.f32.mrb[0].mxu0
  %v6131 = vadd.f32 %v5794, %v6130
  %v6132 = vpop.f32.mrb[0].mxu0
  %v6133 = vpop.f32.mrb[0].mxu0
  %v6134 = vadd.f32 %v5797, %v6133
  %v6135 = vpop.f32.mrb[0].mxu0
  %6136 = vmatprep.mubr.bf16.mxu0 0
  %6137 = vmatmul.mubr.bf16.gmra.mrb[0].mxu0 %v5369
  %v6138 = vpop.f32.mrb[0].mxu0
  %v6139 = vadd.f32 %v5802, %v6138
  %v6140 = vpop.f32.mrb[0].mxu0
  %v6141 = vpop.f32.mrb[0].mxu0
  %v6142 = vadd.f32 %v5805, %v6141
  %v6143 = vpop.f32.mrb[0].mxu0
  %6144 = vmatprep.mubr.bf16.mxu0 0
  %6145 = vmatmul.mubr.bf16.gmra.mrb[0].mxu0 %v5370
  %v6146 = vpop.f32.mrb[0].mxu0
  %v6147 = vadd.f32 %v5810, %v6146
  %v6148 = vpop.f32.mrb[0].mxu0
  %v6149 = vpop.f32.mrb[0].mxu0
  %v6150 = vadd.f32 %v5813, %v6149
  %v6151 = vpop.f32.mrb[0].mxu0
  %6152 = vmatprep.mubr.bf16.mxu0 0
  %6153 = vmatmul.mubr.bf16.gmra.mrb[0].mxu0 %v5371
  %v6154 = vpop.f32.mrb[0].mxu0
  %v6155 = vadd.f32 %v5818, %v6154
  %v6156 = vpop.f32.mrb[0].mxu0
  %v6157 = vpop.f32.mrb[0].mxu0
  %v6158 = vadd.f32 %v5821, %v6157
  %v6159 = vpop.f32.mrb[0].mxu0
  %6160 = vmatprep.mubr.bf16.mxu0 0
  %6161 = vmatmul.mubr.bf16.gmra.mrb[0].mxu0 %v5372
  %v6162 = vpop.f32.mrb[0].mxu0
  %v6163 = vadd.f32 %v5826, %v6162
  %v6164 = vpop.f32.mrb[0].mxu0
  %v6165 = vpop.f32.mrb[0].mxu0
  %v6166 = vadd.f32 %v5829, %v6165
  %v6167 = vpop.f32.mrb[0].mxu0
  %6168 = vmatprep.mubr.bf16.mxu0 0
  %6169 = vmatmul.mubr.bf16.gmra.mrb[0].mxu0 %v5373
  %v6170 = vpop.f32.mrb[0].mxu0
  %v6171 = vadd.f32 %v5834, %v6170
  %v6172 = vpop.f32.mrb[0].mxu0
  %v6173 = vpop.f32.mrb[0].mxu0
  %v6174 = vadd.f32 %v5837, %v6173
  %v6175 = vpop.f32.mrb[0].mxu0
  %6176 = vdwg.mxu0
  %v6177 = vld [vmem:[#allocation2 + $0x2] sm:$0xff]
  %v6178 = vld [vmem:[#allocation2 + $0xa] sm:$0xff]
  %v6179 = vld [vmem:[#allocation2 + $0x1a] sm:$0xff]
  %v6180 = vld [vmem:[#allocation2 + $0x22] sm:$0xff]
  %v6181 = vld [vmem:[#allocation2 + $0x32] sm:$0xff]
  %v6182 = vld [vmem:[#allocation2 + $0x3a] sm:$0xff]
  %v6183 = vld [vmem:[#allocation2 + $0x4a] sm:$0xff]
  %v6184 = vld [vmem:[#allocation2 + $0x52] sm:$0xff]
  %v6185 = vld [vmem:[#allocation2 + $0x62] sm:$0xff]
  %v6186 = vld [vmem:[#allocation2 + $0x6a] sm:$0xff]
  %v6187 = vld [vmem:[#allocation2 + $0x7a] sm:$0xff]
  %v6188 = vld [vmem:[#allocation2 + $0x82] sm:$0xff]
  %v6189 = vld [vmem:[#allocation2 + $0x92] sm:$0xff]
  %v6190 = vld [vmem:[#allocation2 + $0x9a] sm:$0xff]
  %v6191 = vld [vmem:[#allocation2 + $0xaa] sm:$0xff]
  %v6192 = vld [vmem:[#allocation2 + $0xb2] sm:$0xff]
  %v6193 = vld [vmem:[#allocation2 + $0xc2] sm:$0xff]
  %v6194 = vld [vmem:[#allocation2 + $0xca] sm:$0xff]
  %v6195 = vld [vmem:[#allocation2 + $0xda] sm:$0xff]
  %v6196 = vld [vmem:[#allocation2 + $0xe2] sm:$0xff]
  %v6197 = vld [vmem:[#allocation2 + $0xf2] sm:$0xff]
  %v6198 = vld [vmem:[#allocation2 + $0xfa] sm:$0xff]
  %v6199 = vld [vmem:[#allocation2 + $0x10a] sm:$0xff]
  %v6200 = vld [vmem:[#allocation2 + $0x112] sm:$0xff]
  %v6201 = vld [vmem:[#allocation2 + $0x122] sm:$0xff]
  %v6202 = vld [vmem:[#allocation2 + $0x12a] sm:$0xff]
  %v6203 = vld [vmem:[#allocation2 + $0x13a] sm:$0xff]
  %v6204 = vld [vmem:[#allocation2 + $0x142] sm:$0xff]
  %v6205 = vld [vmem:[#allocation2 + $0x152] sm:$0xff]
  %v6206 = vld [vmem:[#allocation2 + $0x15a] sm:$0xff]
  %v6207 = vld [vmem:[#allocation2 + $0x16a] sm:$0xff]
  %v6208 = vld [vmem:[#allocation2 + $0x172] sm:$0xff]
  %v6209 = vld [vmem:[#allocation2 + $0x1b2] sm:$0xff]
  %v6210 = vld [vmem:[#allocation2 + $0x1ba] sm:$0xff]
  %v6211 = vld [vmem:[#allocation2 + $0x1ca] sm:$0xff]
  %v6212 = vld [vmem:[#allocation2 + $0x1d2] sm:$0xff]
  %v6213 = vld [vmem:[#allocation2 + $0x1e2] sm:$0xff]
  %v6214 = vld [vmem:[#allocation2 + $0x1ea] sm:$0xff]
  %v6215 = vld [vmem:[#allocation2 + $0x1fa] sm:$0xff]
  %v6216 = vld [vmem:[#allocation2 + $0x202] sm:$0xff]
  %v6217 = vld [vmem:[#allocation2 + $0x212] sm:$0xff]
  %v6218 = vld [vmem:[#allocation2 + $0x21a] sm:$0xff]
  %v6219 = vld [vmem:[#allocation2 + $0x22a] sm:$0xff]
  %v6220 = vld [vmem:[#allocation2 + $0x232] sm:$0xff]
  %v6221 = vld [vmem:[#allocation2 + $0x242] sm:$0xff]
  %v6222 = vld [vmem:[#allocation2 + $0x24a] sm:$0xff]
  %v6223 = vld [vmem:[#allocation2 + $0x25a] sm:$0xff]
  %v6224 = vld [vmem:[#allocation2 + $0x262] sm:$0xff]
  %v6225 = vld [vmem:[#allocation2 + $0x272] sm:$0xff]
  %v6226 = vld [vmem:[#allocation2 + $0x27a] sm:$0xff]
  %v6227 = vld [vmem:[#allocation2 + $0x28a] sm:$0xff]
  %v6228 = vld [vmem:[#allocation2 + $0x292] sm:$0xff]
  %v6229 = vld [vmem:[#allocation2 + $0x2a2] sm:$0xff]
  %v6230 = vld [vmem:[#allocation2 + $0x2aa] sm:$0xff]
  %v6231 = vld [vmem:[#allocation2 + $0x2ba] sm:$0xff]
  %v6232 = vld [vmem:[#allocation2 + $0x2c2] sm:$0xff]
  %v6233 = vld [vmem:[#allocation2 + $0x2d2] sm:$0xff]
  %v6234 = vld [vmem:[#allocation2 + $0x2da] sm:$0xff]
  %v6235 = vld [vmem:[#allocation2 + $0x2ea] sm:$0xff]
  %v6236 = vld [vmem:[#allocation2 + $0x2f2] sm:$0xff]
  %v6237 = vld [vmem:[#allocation2 + $0x302] sm:$0xff]
  %v6238 = vld [vmem:[#allocation2 + $0x30a] sm:$0xff]
  %v6239 = vld [vmem:[#allocation2 + $0x31a] sm:$0xff]
  %v6240 = vld [vmem:[#allocation2 + $0x322] sm:$0xff]
  %v6241 = vpack.c.bf16 %v6178, %v6177
  %v6242 = vpack.c.bf16 %v6180, %v6179
  %v6243 = vpack.c.bf16 %v6182, %v6181
  %v6244 = vpack.c.bf16 %v6184, %v6183
  %v6245 = vpack.c.bf16 %v6186, %v6185
  %v6246 = vpack.c.bf16 %v6188, %v6187
  %v6247 = vpack.c.bf16 %v6190, %v6189
  %v6248 = vpack.c.bf16 %v6192, %v6191
  %v6249 = vpack.c.bf16 %v6194, %v6193
  %v6250 = vpack.c.bf16 %v6196, %v6195
  %v6251 = vpack.c.bf16 %v6198, %v6197
  %v6252 = vpack.c.bf16 %v6200, %v6199
  %v6253 = vpack.c.bf16 %v6202, %v6201
  %v6254 = vpack.c.bf16 %v6204, %v6203
  %v6255 = vpack.c.bf16 %v6206, %v6205
  %v6256 = vpack.c.bf16 %v6208, %v6207
  %v6257 = vpack.c.bf16 %v6210, %v6209
  %v6258 = vpack.c.bf16 %v6212, %v6211
  %v6259 = vpack.c.bf16 %v6214, %v6213
  %v6260 = vpack.c.bf16 %v6216, %v6215
  %v6261 = vpack.c.bf16 %v6218, %v6217
  %v6262 = vpack.c.bf16 %v6220, %v6219
  %v6263 = vpack.c.bf16 %v6222, %v6221
  %v6264 = vpack.c.bf16 %v6224, %v6223
  %v6265 = vpack.c.bf16 %v6226, %v6225
  %v6266 = vpack.c.bf16 %v6228, %v6227
  %v6267 = vpack.c.bf16 %v6230, %v6229
  %v6268 = vpack.c.bf16 %v6232, %v6231
  %v6269 = vpack.c.bf16 %v6234, %v6233
  %v6270 = vpack.c.bf16 %v6236, %v6235
  %v6271 = vpack.c.bf16 %v6238, %v6237
  %v6272 = vpack.c.bf16 %v6240, %v6239
  %s6273 = scalar_lea.vmem %s4, 128
  %v6274 = vld [vmem:[%s6273] sm:$0xf]
  %v6275 = vld [vmem:[%s6273 + $0x4] sm:$0xf]
  %v6276 = vld [vmem:[%s6273 + $0x8] sm:$0xf]
  %v6277 = vld [vmem:[%s6273 + $0xc] sm:$0xf]
  %v6278 = vld [vmem:[%s6273 + $0x10] sm:$0xf]
  %v6279 = vld [vmem:[%s6273 + $0x14] sm:$0xf]
  %v6280 = vld [vmem:[%s6273 + $0x18] sm:$0xf]
  %v6281 = vld [vmem:[%s6273 + $0x1c] sm:$0xf]
  %v6282 = vld [vmem:[%s6273 + $0x20] sm:$0xf]
  %v6283 = vld [vmem:[%s6273 + $0x24] sm:$0xf]
  %v6284 = vld [vmem:[%s6273 + $0x28] sm:$0xf]
  %v6285 = vld [vmem:[%s6273 + $0x2c] sm:$0xf]
  %v6286 = vld [vmem:[%s6273 + $0x30] sm:$0xf]
  %v6287 = vld [vmem:[%s6273 + $0x34] sm:$0xf]
  %v6288 = vld [vmem:[%s6273 + $0x38] sm:$0xf]
  %v6289 = vld [vmem:[%s6273 + $0x3c] sm:$0xf]
  %v6306 = vunpack.c.l.b16 %v6274
  %v6307 = vunpack.c.l.b16 %v6275
  %v6308 = vunpack.c.l.b16 %v6276
  %v6309 = vunpack.c.l.b16 %v6277
  %v6310 = vunpack.c.l.b16 %v6278
  %v6311 = vunpack.c.l.b16 %v6279
  %v6312 = vunpack.c.l.b16 %v6280
  %v6313 = vunpack.c.l.b16 %v6281
  %v6314 = vunpack.c.l.b16 %v6282
  %v6315 = vunpack.c.l.b16 %v6283
  %v6316 = vunpack.c.l.b16 %v6284
  %v6317 = vunpack.c.l.b16 %v6285
  %v6318 = vunpack.c.l.b16 %v6286
  %v6319 = vunpack.c.l.b16 %v6287
  %v6320 = vunpack.c.l.b16 %v6288
  %v6321 = vunpack.c.l.b16 %v6289
  %v6322 = vpack.c.b16 %v6307, %v6306
  %v6323 = vpack.c.b16 %v6309, %v6308
  %v6324 = vpack.c.b16 %v6311, %v6310
  %v6325 = vpack.c.b16 %v6313, %v6312
  %v6326 = vpack.c.b16 %v6315, %v6314
  %v6327 = vpack.c.b16 %v6317, %v6316
  %v6328 = vpack.c.b16 %v6319, %v6318
  %v6329 = vpack.c.b16 %v6321, %v6320
  %6338 = vmatprep.subr.bf16.mxu0 0
  %6339 = vmatpush1.bf16.msra.mxu0 %v6322
  %6340 = vmatprep.subr.bf16.mxu0 0
  %6341 = vmatpush1.bf16.msra.mxu0 %v6323
  %6342 = vmatprep.subr.bf16.mxu0 0
  %6343 = vmatpush1.bf16.msra.mxu0 %v6324
  %6344 = vmatprep.subr.bf16.mxu0 0
  %6345 = vmatpush1.bf16.msra.mxu0 %v6325
  %6346 = vmatprep.subr.bf16.mxu0 0
  %6347 = vmatpush1.bf16.msra.mxu0 %v6326
  %6348 = vmatprep.subr.bf16.mxu0 0
  %6349 = vmatpush1.bf16.msra.mxu0 %v6327
  %6350 = vmatprep.subr.bf16.mxu0 0
  %6351 = vmatpush1.bf16.msra.mxu0 %v6328
  %6352 = vmatprep.subr.bf16.mxu0 0
  %6353 = vmatpush1.bf16.msra.mxu0 %v6329
  %6354 = vmatprep.subr.bf16.mxu0 0
  %6355 = vmatpush1.bf16.msra.mxu0 0
  %6356 = vmatprep.subr.bf16.mxu0 0
  %6357 = vmatpush1.bf16.msra.mxu0 0
  %6358 = vmatprep.subr.bf16.mxu0 0
  %6359 = vmatpush1.bf16.msra.mxu0 0
  %6360 = vmatprep.subr.bf16.mxu0 0
  %6361 = vmatpush1.bf16.msra.mxu0 0
  %6362 = vmatprep.subr.bf16.mxu0 0
  %6363 = vmatpush1.bf16.msra.mxu0 0
  %6364 = vmatprep.subr.bf16.mxu0 0
  %6365 = vmatpush1.bf16.msra.mxu0 0
  %6366 = vmatprep.subr.bf16.mxu0 0
  %6367 = vmatpush1.bf16.msra.mxu0 0
  %6368 = vmatprep.subr.bf16.mxu0 0
  %6369 = vmatpush1.bf16.msra.mxu0 0
  %6370 = vmatprep.mubr.bf16.mxu0 0
  %6371 = vmatmul.mubr.bf16.gmra.mrb[0].mxu0 %v6241
  %v6372 = vpop.f32.mrb[0].mxu0
  %v6373 = vadd.f32 0.0, %v6372
  %v6374 = vpop.f32.mrb[0].mxu0
  %v6375 = vpop.f32.mrb[0].mxu0
  %v6376 = vadd.f32 0.0, %v6375
  %v6377 = vpop.f32.mrb[0].mxu0
  %6378 = vmatprep.mubr.bf16.mxu0 0
  %6379 = vmatmul.mubr.bf16.gmra.mrb[0].mxu0 %v6242
  %v6380 = vpop.f32.mrb[0].mxu0
  %v6381 = vadd.f32 0.0, %v6380
  %v6382 = vpop.f32.mrb[0].mxu0
  %v6383 = vpop.f32.mrb[0].mxu0
  %v6384 = vadd.f32 0.0, %v6383
  %v6385 = vpop.f32.mrb[0].mxu0
  %6386 = vmatprep.mubr.bf16.mxu0 0
  %6387 = vmatmul.mubr.bf16.gmra.mrb[0].mxu0 %v6243
  %v6388 = vpop.f32.mrb[0].mxu0
  %v6389 = vadd.f32 0.0, %v6388
  %v6390 = vpop.f32.mrb[0].mxu0
  %v6391 = vpop.f32.mrb[0].mxu0
  %v6392 = vadd.f32 0.0, %v6391
  %v6393 = vpop.f32.mrb[0].mxu0
  %6394 = vmatprep.mubr.bf16.mxu0 0
  %6395 = vmatmul.mubr.bf16.gmra.mrb[0].mxu0 %v6244
  %v6396 = vpop.f32.mrb[0].mxu0
  %v6397 = vadd.f32 0.0, %v6396
  %v6398 = vpop.f32.mrb[0].mxu0
  %v6399 = vpop.f32.mrb[0].mxu0
  %v6400 = vadd.f32 0.0, %v6399
  %v6401 = vpop.f32.mrb[0].mxu0
  %6402 = vmatprep.mubr.bf16.mxu0 0
  %6403 = vmatmul.mubr.bf16.gmra.mrb[0].mxu0 %v6245
  %v6404 = vpop.f32.mrb[0].mxu0
  %v6405 = vadd.f32 0.0, %v6404
  %v6406 = vpop.f32.mrb[0].mxu0
  %v6407 = vpop.f32.mrb[0].mxu0
  %v6408 = vadd.f32 0.0, %v6407
  %v6409 = vpop.f32.mrb[0].mxu0
  %6410 = vmatprep.mubr.bf16.mxu0 0
  %6411 = vmatmul.mubr.bf16.gmra.mrb[0].mxu0 %v6246
  %v6412 = vpop.f32.mrb[0].mxu0
  %v6413 = vadd.f32 0.0, %v6412
  %v6414 = vpop.f32.mrb[0].mxu0
  %v6415 = vpop.f32.mrb[0].mxu0
  %v6416 = vadd.f32 0.0, %v6415
  %v6417 = vpop.f32.mrb[0].mxu0
  %6418 = vmatprep.mubr.bf16.mxu0 0
  %6419 = vmatmul.mubr.bf16.gmra.mrb[0].mxu0 %v6247
  %v6420 = vpop.f32.mrb[0].mxu0
  %v6421 = vadd.f32 0.0, %v6420
  %v6422 = vpop.f32.mrb[0].mxu0
  %v6423 = vpop.f32.mrb[0].mxu0
  %v6424 = vadd.f32 0.0, %v6423
  %v6425 = vpop.f32.mrb[0].mxu0
  %6426 = vmatprep.mubr.bf16.mxu0 0
  %6427 = vmatmul.mubr.bf16.gmra.mrb[0].mxu0 %v6248
  %v6428 = vpop.f32.mrb[0].mxu0
  %v6429 = vadd.f32 0.0, %v6428
  %v6430 = vpop.f32.mrb[0].mxu0
  %v6431 = vpop.f32.mrb[0].mxu0
  %v6432 = vadd.f32 0.0, %v6431
  %v6433 = vpop.f32.mrb[0].mxu0
  %6434 = vmatprep.mubr.bf16.mxu0 0
  %6435 = vmatmul.mubr.bf16.gmra.mrb[0].mxu0 %v6249
  %v6436 = vpop.f32.mrb[0].mxu0
  %v6437 = vadd.f32 0.0, %v6436
  %v6438 = vpop.f32.mrb[0].mxu0
  %v6439 = vpop.f32.mrb[0].mxu0
  %v6440 = vadd.f32 0.0, %v6439
  %v6441 = vpop.f32.mrb[0].mxu0
  %6442 = vmatprep.mubr.bf16.mxu0 0
  %6443 = vmatmul.mubr.bf16.gmra.mrb[0].mxu0 %v6250
  %v6444 = vpop.f32.mrb[0].mxu0
  %v6445 = vadd.f32 0.0, %v6444
  %v6446 = vpop.f32.mrb[0].mxu0
  %v6447 = vpop.f32.mrb[0].mxu0
  %v6448 = vadd.f32 0.0, %v6447
  %v6449 = vpop.f32.mrb[0].mxu0
  %6450 = vmatprep.mubr.bf16.mxu0 0
  %6451 = vmatmul.mubr.bf16.gmra.mrb[0].mxu0 %v6251
  %v6452 = vpop.f32.mrb[0].mxu0
  %v6453 = vadd.f32 0.0, %v6452
  %v6454 = vpop.f32.mrb[0].mxu0
  %v6455 = vpop.f32.mrb[0].mxu0
  %v6456 = vadd.f32 0.0, %v6455
  %v6457 = vpop.f32.mrb[0].mxu0
  %6458 = vmatprep.mubr.bf16.mxu0 0
  %6459 = vmatmul.mubr.bf16.gmra.mrb[0].mxu0 %v6252
  %v6460 = vpop.f32.mrb[0].mxu0
  %v6461 = vadd.f32 0.0, %v6460
  %v6462 = vpop.f32.mrb[0].mxu0
  %v6463 = vpop.f32.mrb[0].mxu0
  %v6464 = vadd.f32 0.0, %v6463
  %v6465 = vpop.f32.mrb[0].mxu0
  %6466 = vmatprep.mubr.bf16.mxu0 0
  %6467 = vmatmul.mubr.bf16.gmra.mrb[0].mxu0 %v6253
  %v6468 = vpop.f32.mrb[0].mxu0
  %v6469 = vadd.f32 0.0, %v6468
  %v6470 = vpop.f32.mrb[0].mxu0
  %v6471 = vpop.f32.mrb[0].mxu0
  %v6472 = vadd.f32 0.0, %v6471
  %v6473 = vpop.f32.mrb[0].mxu0
  %6474 = vmatprep.mubr.bf16.mxu0 0
  %6475 = vmatmul.mubr.bf16.gmra.mrb[0].mxu0 %v6254
  %v6476 = vpop.f32.mrb[0].mxu0
  %v6477 = vadd.f32 0.0, %v6476
  %v6478 = vpop.f32.mrb[0].mxu0
  %v6479 = vpop.f32.mrb[0].mxu0
  %v6480 = vadd.f32 0.0, %v6479
  %v6481 = vpop.f32.mrb[0].mxu0
  %6482 = vmatprep.mubr.bf16.mxu0 0
  %6483 = vmatmul.mubr.bf16.gmra.mrb[0].mxu0 %v6255
  %v6484 = vpop.f32.mrb[0].mxu0
  %v6485 = vadd.f32 0.0, %v6484
  %v6486 = vpop.f32.mrb[0].mxu0
  %v6487 = vpop.f32.mrb[0].mxu0
  %v6488 = vadd.f32 0.0, %v6487
  %v6489 = vpop.f32.mrb[0].mxu0
  %6490 = vmatprep.mubr.bf16.mxu0 0
  %6491 = vmatmul.mubr.bf16.gmra.mrb[0].mxu0 %v6256
  %v6492 = vpop.f32.mrb[0].mxu0
  %v6493 = vadd.f32 0.0, %v6492
  %v6494 = vpop.f32.mrb[0].mxu0
  %v6495 = vpop.f32.mrb[0].mxu0
  %v6496 = vadd.f32 0.0, %v6495
  %v6497 = vpop.f32.mrb[0].mxu0
  %6498 = vmatprep.mubr.bf16.mxu0 0
  %6499 = vmatmul.mubr.bf16.gmra.mrb[0].mxu0 %v6257
  %v6500 = vpop.f32.mrb[0].mxu0
  %v6501 = vadd.f32 0.0, %v6500
  %v6502 = vpop.f32.mrb[0].mxu0
  %v6503 = vpop.f32.mrb[0].mxu0
  %v6504 = vadd.f32 0.0, %v6503
  %v6505 = vpop.f32.mrb[0].mxu0
  %6506 = vmatprep.mubr.bf16.mxu0 0
  %6507 = vmatmul.mubr.bf16.gmra.mrb[0].mxu0 %v6258
  %v6508 = vpop.f32.mrb[0].mxu0
  %v6509 = vadd.f32 0.0, %v6508
  %v6510 = vpop.f32.mrb[0].mxu0
  %v6511 = vpop.f32.mrb[0].mxu0
  %v6512 = vadd.f32 0.0, %v6511
  %v6513 = vpop.f32.mrb[0].mxu0
  %6514 = vmatprep.mubr.bf16.mxu0 0
  %6515 = vmatmul.mubr.bf16.gmra.mrb[0].mxu0 %v6259
  %v6516 = vpop.f32.mrb[0].mxu0
  %v6517 = vadd.f32 0.0, %v6516
  %v6518 = vpop.f32.mrb[0].mxu0
  %v6519 = vpop.f32.mrb[0].mxu0
  %v6520 = vadd.f32 0.0, %v6519
  %v6521 = vpop.f32.mrb[0].mxu0
  %6522 = vmatprep.mubr.bf16.mxu0 0
  %6523 = vmatmul.mubr.bf16.gmra.mrb[0].mxu0 %v6260
  %v6524 = vpop.f32.mrb[0].mxu0
  %v6525 = vadd.f32 0.0, %v6524
  %v6526 = vpop.f32.mrb[0].mxu0
  %v6527 = vpop.f32.mrb[0].mxu0
  %v6528 = vadd.f32 0.0, %v6527
  %v6529 = vpop.f32.mrb[0].mxu0
  %6530 = vmatprep.mubr.bf16.mxu0 0
  %6531 = vmatmul.mubr.bf16.gmra.mrb[0].mxu0 %v6261
  %v6532 = vpop.f32.mrb[0].mxu0
  %v6533 = vadd.f32 0.0, %v6532
  %v6534 = vpop.f32.mrb[0].mxu0
  %v6535 = vpop.f32.mrb[0].mxu0
  %v6536 = vadd.f32 0.0, %v6535
  %v6537 = vpop.f32.mrb[0].mxu0
  %6538 = vmatprep.mubr.bf16.mxu0 0
  %6539 = vmatmul.mubr.bf16.gmra.mrb[0].mxu0 %v6262
  %v6540 = vpop.f32.mrb[0].mxu0
  %v6541 = vadd.f32 0.0, %v6540
  %v6542 = vpop.f32.mrb[0].mxu0
  %v6543 = vpop.f32.mrb[0].mxu0
  %v6544 = vadd.f32 0.0, %v6543
  %v6545 = vpop.f32.mrb[0].mxu0
  %6546 = vmatprep.mubr.bf16.mxu0 0
  %6547 = vmatmul.mubr.bf16.gmra.mrb[0].mxu0 %v6263
  %v6548 = vpop.f32.mrb[0].mxu0
  %v6549 = vadd.f32 0.0, %v6548
  %v6550 = vpop.f32.mrb[0].mxu0
  %v6551 = vpop.f32.mrb[0].mxu0
  %v6552 = vadd.f32 0.0, %v6551
  %v6553 = vpop.f32.mrb[0].mxu0
  %6554 = vmatprep.mubr.bf16.mxu0 0
  %6555 = vmatmul.mubr.bf16.gmra.mrb[0].mxu0 %v6264
  %v6556 = vpop.f32.mrb[0].mxu0
  %v6557 = vadd.f32 0.0, %v6556
  %v6558 = vpop.f32.mrb[0].mxu0
  %v6559 = vpop.f32.mrb[0].mxu0
  %v6560 = vadd.f32 0.0, %v6559
  %v6561 = vpop.f32.mrb[0].mxu0
  %6562 = vmatprep.mubr.bf16.mxu0 0
  %6563 = vmatmul.mubr.bf16.gmra.mrb[0].mxu0 %v6265
  %v6564 = vpop.f32.mrb[0].mxu0
  %v6565 = vadd.f32 0.0, %v6564
  %v6566 = vpop.f32.mrb[0].mxu0
  %v6567 = vpop.f32.mrb[0].mxu0
  %v6568 = vadd.f32 0.0, %v6567
  %v6569 = vpop.f32.mrb[0].mxu0
  %6570 = vmatprep.mubr.bf16.mxu0 0
  %6571 = vmatmul.mubr.bf16.gmra.mrb[0].mxu0 %v6266
  %v6572 = vpop.f32.mrb[0].mxu0
  %v6573 = vadd.f32 0.0, %v6572
  %v6574 = vpop.f32.mrb[0].mxu0
  %v6575 = vpop.f32.mrb[0].mxu0
  %v6576 = vadd.f32 0.0, %v6575
  %v6577 = vpop.f32.mrb[0].mxu0
  %6578 = vmatprep.mubr.bf16.mxu0 0
  %6579 = vmatmul.mubr.bf16.gmra.mrb[0].mxu0 %v6267
  %v6580 = vpop.f32.mrb[0].mxu0
  %v6581 = vadd.f32 0.0, %v6580
  %v6582 = vpop.f32.mrb[0].mxu0
  %v6583 = vpop.f32.mrb[0].mxu0
  %v6584 = vadd.f32 0.0, %v6583
  %v6585 = vpop.f32.mrb[0].mxu0
  %6586 = vmatprep.mubr.bf16.mxu0 0
  %6587 = vmatmul.mubr.bf16.gmra.mrb[0].mxu0 %v6268
  %v6588 = vpop.f32.mrb[0].mxu0
  %v6589 = vadd.f32 0.0, %v6588
  %v6590 = vpop.f32.mrb[0].mxu0
  %v6591 = vpop.f32.mrb[0].mxu0
  %v6592 = vadd.f32 0.0, %v6591
  %v6593 = vpop.f32.mrb[0].mxu0
  %6594 = vmatprep.mubr.bf16.mxu0 0
  %6595 = vmatmul.mubr.bf16.gmra.mrb[0].mxu0 %v6269
  %v6596 = vpop.f32.mrb[0].mxu0
  %v6597 = vadd.f32 0.0, %v6596
  %v6598 = vpop.f32.mrb[0].mxu0
  %v6599 = vpop.f32.mrb[0].mxu0
  %v6600 = vadd.f32 0.0, %v6599
  %v6601 = vpop.f32.mrb[0].mxu0
  %6602 = vmatprep.mubr.bf16.mxu0 0
  %6603 = vmatmul.mubr.bf16.gmra.mrb[0].mxu0 %v6270
  %v6604 = vpop.f32.mrb[0].mxu0
  %v6605 = vadd.f32 0.0, %v6604
  %v6606 = vpop.f32.mrb[0].mxu0
  %v6607 = vpop.f32.mrb[0].mxu0
  %v6608 = vadd.f32 0.0, %v6607
  %v6609 = vpop.f32.mrb[0].mxu0
  %6610 = vmatprep.mubr.bf16.mxu0 0
  %6611 = vmatmul.mubr.bf16.gmra.mrb[0].mxu0 %v6271
  %v6612 = vpop.f32.mrb[0].mxu0
  %v6613 = vadd.f32 0.0, %v6612
  %v6614 = vpop.f32.mrb[0].mxu0
  %v6615 = vpop.f32.mrb[0].mxu0
  %v6616 = vadd.f32 0.0, %v6615
  %v6617 = vpop.f32.mrb[0].mxu0
  %6618 = vmatprep.mubr.bf16.mxu0 0
  %6619 = vmatmul.mubr.bf16.gmra.mrb[0].mxu0 %v6272
  %v6620 = vpop.f32.mrb[0].mxu0
  %v6621 = vadd.f32 0.0, %v6620
  %v6622 = vpop.f32.mrb[0].mxu0
  %v6623 = vpop.f32.mrb[0].mxu0
  %v6624 = vadd.f32 0.0, %v6623
  %v6625 = vpop.f32.mrb[0].mxu0
  %6626 = vdwg.mxu0
  %v6627 = vadd.f32 %v5923, %v6373
  %v6628 = vadd.f32 %v5926, %v6376
  %v6629 = vadd.f32 %v5931, %v6381
  %v6630 = vadd.f32 %v5934, %v6384
  %v6631 = vadd.f32 %v5939, %v6389
  %v6632 = vadd.f32 %v5942, %v6392
  %v6633 = vadd.f32 %v5947, %v6397
  %v6634 = vadd.f32 %v5950, %v6400
  %v6635 = vadd.f32 %v5955, %v6405
  %v6636 = vadd.f32 %v5958, %v6408
  %v6637 = vadd.f32 %v5963, %v6413
  %v6638 = vadd.f32 %v5966, %v6416
  %v6639 = vadd.f32 %v5971, %v6421
  %v6640 = vadd.f32 %v5974, %v6424
  %v6641 = vadd.f32 %v5979, %v6429
  %v6642 = vadd.f32 %v5982, %v6432
  %v6643 = vadd.f32 %v5987, %v6437
  %v6644 = vadd.f32 %v5990, %v6440
  %v6645 = vadd.f32 %v5995, %v6445
  %v6646 = vadd.f32 %v5998, %v6448
  %v6647 = vadd.f32 %v6003, %v6453
  %v6648 = vadd.f32 %v6006, %v6456
  %v6649 = vadd.f32 %v6011, %v6461
  %v6650 = vadd.f32 %v6014, %v6464
  %v6651 = vadd.f32 %v6019, %v6469
  %v6652 = vadd.f32 %v6022, %v6472
  %v6653 = vadd.f32 %v6027, %v6477
  %v6654 = vadd.f32 %v6030, %v6480
  %v6655 = vadd.f32 %v6035, %v6485
  %v6656 = vadd.f32 %v6038, %v6488
  %v6657 = vadd.f32 %v6043, %v6493
  %v6658 = vadd.f32 %v6046, %v6496
  %v6659 = vadd.f32 %v6051, %v6501
  %v6660 = vadd.f32 %v6054, %v6504
  %v6661 = vadd.f32 %v6059, %v6509
  %v6662 = vadd.f32 %v6062, %v6512
  %v6663 = vadd.f32 %v6067, %v6517
  %v6664 = vadd.f32 %v6070, %v6520
  %v6665 = vadd.f32 %v6075, %v6525
  %v6666 = vadd.f32 %v6078, %v6528
  %v6667 = vadd.f32 %v6083, %v6533
  %v6668 = vadd.f32 %v6086, %v6536
  %v6669 = vadd.f32 %v6091, %v6541
  %v6670 = vadd.f32 %v6094, %v6544
  %v6671 = vadd.f32 %v6099, %v6549
  %v6672 = vadd.f32 %v6102, %v6552
  %v6673 = vadd.f32 %v6107, %v6557
  %v6674 = vadd.f32 %v6110, %v6560
  %v6675 = vadd.f32 %v6115, %v6565
  %v6676 = vadd.f32 %v6118, %v6568
  %v6677 = vadd.f32 %v6123, %v6573
  %v6678 = vadd.f32 %v6126, %v6576
  %v6679 = vadd.f32 %v6131, %v6581
  %v6680 = vadd.f32 %v6134, %v6584
  %v6681 = vadd.f32 %v6139, %v6589
  %v6682 = vadd.f32 %v6142, %v6592
  %v6683 = vadd.f32 %v6147, %v6597
  %v6684 = vadd.f32 %v6150, %v6600
  %v6685 = vadd.f32 %v6155, %v6605
  %v6686 = vadd.f32 %v6158, %v6608
  %v6687 = vadd.f32 %v6163, %v6613
  %v6688 = vadd.f32 %v6166, %v6616
  %v6689 = vadd.f32 %v6171, %v6621
  %v6690 = vadd.f32 %v6174, %v6624
  %v6691 = vld [vmem:[%s176] sm:$0xff]
  %v6692 = vld [vmem:[%s176 + $0x8] sm:$0xff]
  %v6693 = vld [vmem:[%s176 + $0x18] sm:$0xff]
  %v6694 = vld [vmem:[%s176 + $0x20] sm:$0xff]
  %v6695 = vld [vmem:[%s176 + $0x30] sm:$0xff]
  %v6696 = vld [vmem:[%s176 + $0x38] sm:$0xff]
  %v6697 = vld [vmem:[%s176 + $0x48] sm:$0xff]
  %v6698 = vld [vmem:[%s176 + $0x50] sm:$0xff]
  %v6699 = vld [vmem:[%s176 + $0x60] sm:$0xff]
  %v6700 = vld [vmem:[%s176 + $0x68] sm:$0xff]
  %v6701 = vld [vmem:[%s176 + $0x78] sm:$0xff]
  %v6702 = vld [vmem:[%s176 + $0x80] sm:$0xff]
  %v6703 = vld [vmem:[%s176 + $0x90] sm:$0xff]
  %v6704 = vld [vmem:[%s176 + $0x98] sm:$0xff]
  %v6705 = vld [vmem:[%s176 + $0xa8] sm:$0xff]
  %v6706 = vld [vmem:[%s176 + $0xb0] sm:$0xff]
  %v6707 = vld [vmem:[%s176 + $0xc0] sm:$0xff]
  %v6708 = vld [vmem:[%s176 + $0xc8] sm:$0xff]
  %v6709 = vld [vmem:[%s176 + $0xd8] sm:$0xff]
  %v6710 = vld [vmem:[%s176 + $0xe0] sm:$0xff]
  %v6711 = vld [vmem:[%s176 + $0xf0] sm:$0xff]
  %v6712 = vld [vmem:[%s176 + $0xf8] sm:$0xff]
  %v6713 = vld [vmem:[%s176 + $0x108] sm:$0xff]
  %v6714 = vld [vmem:[%s176 + $0x110] sm:$0xff]
  %v6715 = vld [vmem:[%s176 + $0x120] sm:$0xff]
  %v6716 = vld [vmem:[%s176 + $0x128] sm:$0xff]
  %v6717 = vld [vmem:[%s176 + $0x138] sm:$0xff]
  %v6718 = vld [vmem:[%s176 + $0x140] sm:$0xff]
  %v6719 = vld [vmem:[%s176 + $0x150] sm:$0xff]
  %v6720 = vld [vmem:[%s176 + $0x158] sm:$0xff]
  %v6721 = vld [vmem:[%s176 + $0x168] sm:$0xff]
  %v6722 = vld [vmem:[%s176 + $0x170] sm:$0xff]
  %v6723 = vld [vmem:[%s176 + $0x1b0] sm:$0xff]
  %v6724 = vld [vmem:[%s176 + $0x1b8] sm:$0xff]
  %v6725 = vld [vmem:[%s176 + $0x1c8] sm:$0xff]
  %v6726 = vld [vmem:[%s176 + $0x1d0] sm:$0xff]
  %v6727 = vld [vmem:[%s176 + $0x1e0] sm:$0xff]
  %v6728 = vld [vmem:[%s176 + $0x1e8] sm:$0xff]
  %v6729 = vld [vmem:[%s176 + $0x1f8] sm:$0xff]
  %v6730 = vld [vmem:[%s176 + $0x200] sm:$0xff]
  %v6731 = vld [vmem:[%s176 + $0x210] sm:$0xff]
  %v6732 = vld [vmem:[%s176 + $0x218] sm:$0xff]
  %v6733 = vld [vmem:[%s176 + $0x228] sm:$0xff]
  %v6734 = vld [vmem:[%s176 + $0x230] sm:$0xff]
  %v6735 = vld [vmem:[%s176 + $0x240] sm:$0xff]
  %v6736 = vld [vmem:[%s176 + $0x248] sm:$0xff]
  %v6737 = vld [vmem:[%s176 + $0x258] sm:$0xff]
  %v6738 = vld [vmem:[%s176 + $0x260] sm:$0xff]
  %v6739 = vld [vmem:[%s176 + $0x270] sm:$0xff]
  %v6740 = vld [vmem:[%s176 + $0x278] sm:$0xff]
  %v6741 = vld [vmem:[%s176 + $0x288] sm:$0xff]
  %v6742 = vld [vmem:[%s176 + $0x290] sm:$0xff]
  %v6743 = vld [vmem:[%s176 + $0x2a0] sm:$0xff]
  %v6744 = vld [vmem:[%s176 + $0x2a8] sm:$0xff]
  %v6745 = vld [vmem:[%s176 + $0x2b8] sm:$0xff]
  %v6746 = vld [vmem:[%s176 + $0x2c0] sm:$0xff]
  %v6747 = vld [vmem:[%s176 + $0x2d0] sm:$0xff]
  %v6748 = vld [vmem:[%s176 + $0x2d8] sm:$0xff]
  %v6749 = vld [vmem:[%s176 + $0x2e8] sm:$0xff]
  %v6750 = vld [vmem:[%s176 + $0x2f0] sm:$0xff]
  %v6751 = vld [vmem:[%s176 + $0x300] sm:$0xff]
  %v6752 = vld [vmem:[%s176 + $0x308] sm:$0xff]
  %v6753 = vld [vmem:[%s176 + $0x318] sm:$0xff]
  %v6754 = vld [vmem:[%s176 + $0x320] sm:$0xff]
  %v6755 = vpack.c.bf16 %v6692, %v6691
  %v6756 = vpack.c.bf16 %v6694, %v6693
  %v6757 = vpack.c.bf16 %v6696, %v6695
  %v6758 = vpack.c.bf16 %v6698, %v6697
  %v6759 = vpack.c.bf16 %v6700, %v6699
  %v6760 = vpack.c.bf16 %v6702, %v6701
  %v6761 = vpack.c.bf16 %v6704, %v6703
  %v6762 = vpack.c.bf16 %v6706, %v6705
  %v6763 = vpack.c.bf16 %v6708, %v6707
  %v6764 = vpack.c.bf16 %v6710, %v6709
  %v6765 = vpack.c.bf16 %v6712, %v6711
  %v6766 = vpack.c.bf16 %v6714, %v6713
  %v6767 = vpack.c.bf16 %v6716, %v6715
  %v6768 = vpack.c.bf16 %v6718, %v6717
  %v6769 = vpack.c.bf16 %v6720, %v6719
  %v6770 = vpack.c.bf16 %v6722, %v6721
  %v6771 = vpack.c.bf16 %v6724, %v6723
  %v6772 = vpack.c.bf16 %v6726, %v6725
  %v6773 = vpack.c.bf16 %v6728, %v6727
  %v6774 = vpack.c.bf16 %v6730, %v6729
  %v6775 = vpack.c.bf16 %v6732, %v6731
  %v6776 = vpack.c.bf16 %v6734, %v6733
  %v6777 = vpack.c.bf16 %v6736, %v6735
  %v6778 = vpack.c.bf16 %v6738, %v6737
  %v6779 = vpack.c.bf16 %v6740, %v6739
  %v6780 = vpack.c.bf16 %v6742, %v6741
  %v6781 = vpack.c.bf16 %v6744, %v6743
  %v6782 = vpack.c.bf16 %v6746, %v6745
  %v6783 = vpack.c.bf16 %v6748, %v6747
  %v6784 = vpack.c.bf16 %v6750, %v6749
  %v6785 = vpack.c.bf16 %v6752, %v6751
  %v6786 = vpack.c.bf16 %v6754, %v6753
  %s6787 = scalar_lea.vmem %s4, 192
  %v6788 = vld [vmem:[%s6787] sm:$0xf]
  %v6789 = vld [vmem:[%s6787 + $0x4] sm:$0xf]
  %v6790 = vld [vmem:[%s6787 + $0x8] sm:$0xf]
  %v6791 = vld [vmem:[%s6787 + $0xc] sm:$0xf]
  %v6792 = vld [vmem:[%s6787 + $0x10] sm:$0xf]
  %v6793 = vld [vmem:[%s6787 + $0x14] sm:$0xf]
  %v6794 = vld [vmem:[%s6787 + $0x18] sm:$0xf]
  %v6795 = vld [vmem:[%s6787 + $0x1c] sm:$0xf]
  %v6796 = vld [vmem:[%s6787 + $0x20] sm:$0xf]
  %v6797 = vld [vmem:[%s6787 + $0x24] sm:$0xf]
  %v6798 = vld [vmem:[%s6787 + $0x28] sm:$0xf]
  %v6799 = vld [vmem:[%s6787 + $0x2c] sm:$0xf]
  %v6800 = vld [vmem:[%s6787 + $0x30] sm:$0xf]
  %v6801 = vld [vmem:[%s6787 + $0x34] sm:$0xf]
  %v6802 = vld [vmem:[%s6787 + $0x38] sm:$0xf]
  %v6803 = vld [vmem:[%s6787 + $0x3c] sm:$0xf]
  %v6820 = vunpack.c.l.b16 %v6788
  %v6821 = vunpack.c.l.b16 %v6789
  %v6822 = vunpack.c.l.b16 %v6790
  %v6823 = vunpack.c.l.b16 %v6791
  %v6824 = vunpack.c.l.b16 %v6792
  %v6825 = vunpack.c.l.b16 %v6793
  %v6826 = vunpack.c.l.b16 %v6794
  %v6827 = vunpack.c.l.b16 %v6795
  %v6828 = vunpack.c.l.b16 %v6796
  %v6829 = vunpack.c.l.b16 %v6797
  %v6830 = vunpack.c.l.b16 %v6798
  %v6831 = vunpack.c.l.b16 %v6799
  %v6832 = vunpack.c.l.b16 %v6800
  %v6833 = vunpack.c.l.b16 %v6801
  %v6834 = vunpack.c.l.b16 %v6802
  %v6835 = vunpack.c.l.b16 %v6803
  %v6836 = vpack.c.b16 %v6821, %v6820
  %v6837 = vpack.c.b16 %v6823, %v6822
  %v6838 = vpack.c.b16 %v6825, %v6824
  %v6839 = vpack.c.b16 %v6827, %v6826
  %v6840 = vpack.c.b16 %v6829, %v6828
  %v6841 = vpack.c.b16 %v6831, %v6830
  %v6842 = vpack.c.b16 %v6833, %v6832
  %v6843 = vpack.c.b16 %v6835, %v6834
  %6852 = vmatprep.subr.bf16.mxu0 0
  %6853 = vmatpush1.bf16.msra.mxu0 %v6836
  %6854 = vmatprep.subr.bf16.mxu0 0
  %6855 = vmatpush1.bf16.msra.mxu0 %v6837
  %6856 = vmatprep.subr.bf16.mxu0 0
  %6857 = vmatpush1.bf16.msra.mxu0 %v6838
  %6858 = vmatprep.subr.bf16.mxu0 0
  %6859 = vmatpush1.bf16.msra.mxu0 %v6839
  %6860 = vmatprep.subr.bf16.mxu0 0
  %6861 = vmatpush1.bf16.msra.mxu0 %v6840
  %6862 = vmatprep.subr.bf16.mxu0 0
  %6863 = vmatpush1.bf16.msra.mxu0 %v6841
  %6864 = vmatprep.subr.bf16.mxu0 0
  %6865 = vmatpush1.bf16.msra.mxu0 %v6842
  %6866 = vmatprep.subr.bf16.mxu0 0
  %6867 = vmatpush1.bf16.msra.mxu0 %v6843
  %6868 = vmatprep.subr.bf16.mxu0 0
  %6869 = vmatpush1.bf16.msra.mxu0 0
  %6870 = vmatprep.subr.bf16.mxu0 0
  %6871 = vmatpush1.bf16.msra.mxu0 0
  %6872 = vmatprep.subr.bf16.mxu0 0
  %6873 = vmatpush1.bf16.msra.mxu0 0
  %6874 = vmatprep.subr.bf16.mxu0 0
  %6875 = vmatpush1.bf16.msra.mxu0 0
  %6876 = vmatprep.subr.bf16.mxu0 0
  %6877 = vmatpush1.bf16.msra.mxu0 0
  %6878 = vmatprep.subr.bf16.mxu0 0
  %6879 = vmatpush1.bf16.msra.mxu0 0
  %6880 = vmatprep.subr.bf16.mxu0 0
  %6881 = vmatpush1.bf16.msra.mxu0 0
  %6882 = vmatprep.subr.bf16.mxu0 0
  %6883 = vmatpush1.bf16.msra.mxu0 0
  %6884 = vmatprep.mubr.bf16.mxu0 0
  %6885 = vmatmul.mubr.bf16.gmra.mrb[0].mxu0 %v6755
  %v6886 = vpop.f32.mrb[0].mxu0
  %v6887 = vadd.f32 0.0, %v6886
  %v6888 = vpop.f32.mrb[0].mxu0
  %v6889 = vpop.f32.mrb[0].mxu0
  %v6890 = vadd.f32 0.0, %v6889
  %v6891 = vpop.f32.mrb[0].mxu0
  %6892 = vmatprep.mubr.bf16.mxu0 0
  %6893 = vmatmul.mubr.bf16.gmra.mrb[0].mxu0 %v6756
  %v6894 = vpop.f32.mrb[0].mxu0
  %v6895 = vadd.f32 0.0, %v6894
  %v6896 = vpop.f32.mrb[0].mxu0
  %v6897 = vpop.f32.mrb[0].mxu0
  %v6898 = vadd.f32 0.0, %v6897
  %v6899 = vpop.f32.mrb[0].mxu0
  %6900 = vmatprep.mubr.bf16.mxu0 0
  %6901 = vmatmul.mubr.bf16.gmra.mrb[0].mxu0 %v6757
  %v6902 = vpop.f32.mrb[0].mxu0
  %v6903 = vadd.f32 0.0, %v6902
  %v6904 = vpop.f32.mrb[0].mxu0
  %v6905 = vpop.f32.mrb[0].mxu0
  %v6906 = vadd.f32 0.0, %v6905
  %v6907 = vpop.f32.mrb[0].mxu0
  %6908 = vmatprep.mubr.bf16.mxu0 0
  %6909 = vmatmul.mubr.bf16.gmra.mrb[0].mxu0 %v6758
  %v6910 = vpop.f32.mrb[0].mxu0
  %v6911 = vadd.f32 0.0, %v6910
  %v6912 = vpop.f32.mrb[0].mxu0
  %v6913 = vpop.f32.mrb[0].mxu0
  %v6914 = vadd.f32 0.0, %v6913
  %v6915 = vpop.f32.mrb[0].mxu0
  %6916 = vmatprep.mubr.bf16.mxu0 0
  %6917 = vmatmul.mubr.bf16.gmra.mrb[0].mxu0 %v6759
  %v6918 = vpop.f32.mrb[0].mxu0
  %v6919 = vadd.f32 0.0, %v6918
  %v6920 = vpop.f32.mrb[0].mxu0
  %v6921 = vpop.f32.mrb[0].mxu0
  %v6922 = vadd.f32 0.0, %v6921
  %v6923 = vpop.f32.mrb[0].mxu0
  %6924 = vmatprep.mubr.bf16.mxu0 0
  %6925 = vmatmul.mubr.bf16.gmra.mrb[0].mxu0 %v6760
  %v6926 = vpop.f32.mrb[0].mxu0
  %v6927 = vadd.f32 0.0, %v6926
  %v6928 = vpop.f32.mrb[0].mxu0
  %v6929 = vpop.f32.mrb[0].mxu0
  %v6930 = vadd.f32 0.0, %v6929
  %v6931 = vpop.f32.mrb[0].mxu0
  %6932 = vmatprep.mubr.bf16.mxu0 0
  %6933 = vmatmul.mubr.bf16.gmra.mrb[0].mxu0 %v6761
  %v6934 = vpop.f32.mrb[0].mxu0
  %v6935 = vadd.f32 0.0, %v6934
  %v6936 = vpop.f32.mrb[0].mxu0
  %v6937 = vpop.f32.mrb[0].mxu0
  %v6938 = vadd.f32 0.0, %v6937
  %v6939 = vpop.f32.mrb[0].mxu0
  %6940 = vmatprep.mubr.bf16.mxu0 0
  %6941 = vmatmul.mubr.bf16.gmra.mrb[0].mxu0 %v6762
  %v6942 = vpop.f32.mrb[0].mxu0
  %v6943 = vadd.f32 0.0, %v6942
  %v6944 = vpop.f32.mrb[0].mxu0
  %v6945 = vpop.f32.mrb[0].mxu0
  %v6946 = vadd.f32 0.0, %v6945
  %v6947 = vpop.f32.mrb[0].mxu0
  %6948 = vmatprep.mubr.bf16.mxu0 0
  %6949 = vmatmul.mubr.bf16.gmra.mrb[0].mxu0 %v6763
  %v6950 = vpop.f32.mrb[0].mxu0
  %v6951 = vadd.f32 0.0, %v6950
  %v6952 = vpop.f32.mrb[0].mxu0
  %v6953 = vpop.f32.mrb[0].mxu0
  %v6954 = vadd.f32 0.0, %v6953
  %v6955 = vpop.f32.mrb[0].mxu0
  %6956 = vmatprep.mubr.bf16.mxu0 0
  %6957 = vmatmul.mubr.bf16.gmra.mrb[0].mxu0 %v6764
  %v6958 = vpop.f32.mrb[0].mxu0
  %v6959 = vadd.f32 0.0, %v6958
  %v6960 = vpop.f32.mrb[0].mxu0
  %v6961 = vpop.f32.mrb[0].mxu0
  %v6962 = vadd.f32 0.0, %v6961
  %v6963 = vpop.f32.mrb[0].mxu0
  %6964 = vmatprep.mubr.bf16.mxu0 0
  %6965 = vmatmul.mubr.bf16.gmra.mrb[0].mxu0 %v6765
  %v6966 = vpop.f32.mrb[0].mxu0
  %v6967 = vadd.f32 0.0, %v6966
  %v6968 = vpop.f32.mrb[0].mxu0
  %v6969 = vpop.f32.mrb[0].mxu0
  %v6970 = vadd.f32 0.0, %v6969
  %v6971 = vpop.f32.mrb[0].mxu0
  %6972 = vmatprep.mubr.bf16.mxu0 0
  %6973 = vmatmul.mubr.bf16.gmra.mrb[0].mxu0 %v6766
  %v6974 = vpop.f32.mrb[0].mxu0
  %v6975 = vadd.f32 0.0, %v6974
  %v6976 = vpop.f32.mrb[0].mxu0
  %v6977 = vpop.f32.mrb[0].mxu0
  %v6978 = vadd.f32 0.0, %v6977
  %v6979 = vpop.f32.mrb[0].mxu0
  %6980 = vmatprep.mubr.bf16.mxu0 0
  %6981 = vmatmul.mubr.bf16.gmra.mrb[0].mxu0 %v6767
  %v6982 = vpop.f32.mrb[0].mxu0
  %v6983 = vadd.f32 0.0, %v6982
  %v6984 = vpop.f32.mrb[0].mxu0
  %v6985 = vpop.f32.mrb[0].mxu0
  %v6986 = vadd.f32 0.0, %v6985
  %v6987 = vpop.f32.mrb[0].mxu0
  %6988 = vmatprep.mubr.bf16.mxu0 0
  %6989 = vmatmul.mubr.bf16.gmra.mrb[0].mxu0 %v6768
  %v6990 = vpop.f32.mrb[0].mxu0
  %v6991 = vadd.f32 0.0, %v6990
  %v6992 = vpop.f32.mrb[0].mxu0
  %v6993 = vpop.f32.mrb[0].mxu0
  %v6994 = vadd.f32 0.0, %v6993
  %v6995 = vpop.f32.mrb[0].mxu0
  %6996 = vmatprep.mubr.bf16.mxu0 0
  %6997 = vmatmul.mubr.bf16.gmra.mrb[0].mxu0 %v6769
  %v6998 = vpop.f32.mrb[0].mxu0
  %v6999 = vadd.f32 0.0, %v6998
  %v7000 = vpop.f32.mrb[0].mxu0
  %v7001 = vpop.f32.mrb[0].mxu0
  %v7002 = vadd.f32 0.0, %v7001
  %v7003 = vpop.f32.mrb[0].mxu0
  %7004 = vmatprep.mubr.bf16.mxu0 0
  %7005 = vmatmul.mubr.bf16.gmra.mrb[0].mxu0 %v6770
  %v7006 = vpop.f32.mrb[0].mxu0
  %v7007 = vadd.f32 0.0, %v7006
  %v7008 = vpop.f32.mrb[0].mxu0
  %v7009 = vpop.f32.mrb[0].mxu0
  %v7010 = vadd.f32 0.0, %v7009
  %v7011 = vpop.f32.mrb[0].mxu0
  %7012 = vmatprep.mubr.bf16.mxu0 0
  %7013 = vmatmul.mubr.bf16.gmra.mrb[0].mxu0 %v6771
  %v7014 = vpop.f32.mrb[0].mxu0
  %v7015 = vadd.f32 0.0, %v7014
  %v7016 = vpop.f32.mrb[0].mxu0
  %v7017 = vpop.f32.mrb[0].mxu0
  %v7018 = vadd.f32 0.0, %v7017
  %v7019 = vpop.f32.mrb[0].mxu0
  %7020 = vmatprep.mubr.bf16.mxu0 0
  %7021 = vmatmul.mubr.bf16.gmra.mrb[0].mxu0 %v6772
  %v7022 = vpop.f32.mrb[0].mxu0
  %v7023 = vadd.f32 0.0, %v7022
  %v7024 = vpop.f32.mrb[0].mxu0
  %v7025 = vpop.f32.mrb[0].mxu0
  %v7026 = vadd.f32 0.0, %v7025
  %v7027 = vpop.f32.mrb[0].mxu0
  %7028 = vmatprep.mubr.bf16.mxu0 0
  %7029 = vmatmul.mubr.bf16.gmra.mrb[0].mxu0 %v6773
  %v7030 = vpop.f32.mrb[0].mxu0
  %v7031 = vadd.f32 0.0, %v7030
  %v7032 = vpop.f32.mrb[0].mxu0
  %v7033 = vpop.f32.mrb[0].mxu0
  %v7034 = vadd.f32 0.0, %v7033
  %v7035 = vpop.f32.mrb[0].mxu0
  %7036 = vmatprep.mubr.bf16.mxu0 0
  %7037 = vmatmul.mubr.bf16.gmra.mrb[0].mxu0 %v6774
  %v7038 = vpop.f32.mrb[0].mxu0
  %v7039 = vadd.f32 0.0, %v7038
  %v7040 = vpop.f32.mrb[0].mxu0
  %v7041 = vpop.f32.mrb[0].mxu0
  %v7042 = vadd.f32 0.0, %v7041
  %v7043 = vpop.f32.mrb[0].mxu0
  %7044 = vmatprep.mubr.bf16.mxu0 0
  %7045 = vmatmul.mubr.bf16.gmra.mrb[0].mxu0 %v6775
  %v7046 = vpop.f32.mrb[0].mxu0
  %v7047 = vadd.f32 0.0, %v7046
  %v7048 = vpop.f32.mrb[0].mxu0
  %v7049 = vpop.f32.mrb[0].mxu0
  %v7050 = vadd.f32 0.0, %v7049
  %v7051 = vpop.f32.mrb[0].mxu0
  %7052 = vmatprep.mubr.bf16.mxu0 0
  %7053 = vmatmul.mubr.bf16.gmra.mrb[0].mxu0 %v6776
  %v7054 = vpop.f32.mrb[0].mxu0
  %v7055 = vadd.f32 0.0, %v7054
  %v7056 = vpop.f32.mrb[0].mxu0
  %v7057 = vpop.f32.mrb[0].mxu0
  %v7058 = vadd.f32 0.0, %v7057
  %v7059 = vpop.f32.mrb[0].mxu0
  %7060 = vmatprep.mubr.bf16.mxu0 0
  %7061 = vmatmul.mubr.bf16.gmra.mrb[0].mxu0 %v6777
  %v7062 = vpop.f32.mrb[0].mxu0
  %v7063 = vadd.f32 0.0, %v7062
  %v7064 = vpop.f32.mrb[0].mxu0
  %v7065 = vpop.f32.mrb[0].mxu0
  %v7066 = vadd.f32 0.0, %v7065
  %v7067 = vpop.f32.mrb[0].mxu0
  %7068 = vmatprep.mubr.bf16.mxu0 0
  %7069 = vmatmul.mubr.bf16.gmra.mrb[0].mxu0 %v6778
  %v7070 = vpop.f32.mrb[0].mxu0
  %v7071 = vadd.f32 0.0, %v7070
  %v7072 = vpop.f32.mrb[0].mxu0
  %v7073 = vpop.f32.mrb[0].mxu0
  %v7074 = vadd.f32 0.0, %v7073
  %v7075 = vpop.f32.mrb[0].mxu0
  %7076 = vmatprep.mubr.bf16.mxu0 0
  %7077 = vmatmul.mubr.bf16.gmra.mrb[0].mxu0 %v6779
  %v7078 = vpop.f32.mrb[0].mxu0
  %v7079 = vadd.f32 0.0, %v7078
  %v7080 = vpop.f32.mrb[0].mxu0
  %v7081 = vpop.f32.mrb[0].mxu0
  %v7082 = vadd.f32 0.0, %v7081
  %v7083 = vpop.f32.mrb[0].mxu0
  %7084 = vmatprep.mubr.bf16.mxu0 0
  %7085 = vmatmul.mubr.bf16.gmra.mrb[0].mxu0 %v6780
  %v7086 = vpop.f32.mrb[0].mxu0
  %v7087 = vadd.f32 0.0, %v7086
  %v7088 = vpop.f32.mrb[0].mxu0
  %v7089 = vpop.f32.mrb[0].mxu0
  %v7090 = vadd.f32 0.0, %v7089
  %v7091 = vpop.f32.mrb[0].mxu0
  %7092 = vmatprep.mubr.bf16.mxu0 0
  %7093 = vmatmul.mubr.bf16.gmra.mrb[0].mxu0 %v6781
  %v7094 = vpop.f32.mrb[0].mxu0
  %v7095 = vadd.f32 0.0, %v7094
  %v7096 = vpop.f32.mrb[0].mxu0
  %v7097 = vpop.f32.mrb[0].mxu0
  %v7098 = vadd.f32 0.0, %v7097
  %v7099 = vpop.f32.mrb[0].mxu0
  %7100 = vmatprep.mubr.bf16.mxu0 0
  %7101 = vmatmul.mubr.bf16.gmra.mrb[0].mxu0 %v6782
  %v7102 = vpop.f32.mrb[0].mxu0
  %v7103 = vadd.f32 0.0, %v7102
  %v7104 = vpop.f32.mrb[0].mxu0
  %v7105 = vpop.f32.mrb[0].mxu0
  %v7106 = vadd.f32 0.0, %v7105
  %v7107 = vpop.f32.mrb[0].mxu0
  %7108 = vmatprep.mubr.bf16.mxu0 0
  %7109 = vmatmul.mubr.bf16.gmra.mrb[0].mxu0 %v6783
  %v7110 = vpop.f32.mrb[0].mxu0
  %v7111 = vadd.f32 0.0, %v7110
  %v7112 = vpop.f32.mrb[0].mxu0
  %v7113 = vpop.f32.mrb[0].mxu0
  %v7114 = vadd.f32 0.0, %v7113
  %v7115 = vpop.f32.mrb[0].mxu0
  %7116 = vmatprep.mubr.bf16.mxu0 0
  %7117 = vmatmul.mubr.bf16.gmra.mrb[0].mxu0 %v6784
  %v7118 = vpop.f32.mrb[0].mxu0
  %v7119 = vadd.f32 0.0, %v7118
  %v7120 = vpop.f32.mrb[0].mxu0
  %v7121 = vpop.f32.mrb[0].mxu0
  %v7122 = vadd.f32 0.0, %v7121
  %v7123 = vpop.f32.mrb[0].mxu0
  %7124 = vmatprep.mubr.bf16.mxu0 0
  %7125 = vmatmul.mubr.bf16.gmra.mrb[0].mxu0 %v6785
  %v7126 = vpop.f32.mrb[0].mxu0
  %v7127 = vadd.f32 0.0, %v7126
  %v7128 = vpop.f32.mrb[0].mxu0
  %v7129 = vpop.f32.mrb[0].mxu0
  %v7130 = vadd.f32 0.0, %v7129
  %v7131 = vpop.f32.mrb[0].mxu0
  %7132 = vmatprep.mubr.bf16.mxu0 0
  %7133 = vmatmul.mubr.bf16.gmra.mrb[0].mxu0 %v6786
  %v7134 = vpop.f32.mrb[0].mxu0
  %v7135 = vadd.f32 0.0, %v7134
  %v7136 = vpop.f32.mrb[0].mxu0
  %v7137 = vpop.f32.mrb[0].mxu0
  %v7138 = vadd.f32 0.0, %v7137
  %v7139 = vpop.f32.mrb[0].mxu0
  %7140 = vdwg.mxu0
  %v7141 = vadd.f32 %v6627, %v6887
  %v7142 = vadd.f32 %v6628, %v6890
  %v7143 = vadd.f32 %v6629, %v6895
  %v7144 = vadd.f32 %v6630, %v6898
  %v7145 = vadd.f32 %v6631, %v6903
  %v7146 = vadd.f32 %v6632, %v6906
  %v7147 = vadd.f32 %v6633, %v6911
  %v7148 = vadd.f32 %v6634, %v6914
  %v7149 = vadd.f32 %v6635, %v6919
  %v7150 = vadd.f32 %v6636, %v6922
  %v7151 = vadd.f32 %v6637, %v6927
  %v7152 = vadd.f32 %v6638, %v6930
  %v7153 = vadd.f32 %v6639, %v6935
  %v7154 = vadd.f32 %v6640, %v6938
  %v7155 = vadd.f32 %v6641, %v6943
  %v7156 = vadd.f32 %v6642, %v6946
  %v7157 = vadd.f32 %v6643, %v6951
  %v7158 = vadd.f32 %v6644, %v6954
  %v7159 = vadd.f32 %v6645, %v6959
  %v7160 = vadd.f32 %v6646, %v6962
  %v7161 = vadd.f32 %v6647, %v6967
  %v7162 = vadd.f32 %v6648, %v6970
  %v7163 = vadd.f32 %v6649, %v6975
  %v7164 = vadd.f32 %v6650, %v6978
  %v7165 = vadd.f32 %v6651, %v6983
  %v7166 = vadd.f32 %v6652, %v6986
  %v7167 = vadd.f32 %v6653, %v6991
  %v7168 = vadd.f32 %v6654, %v6994
  %v7169 = vadd.f32 %v6655, %v6999
  %v7170 = vadd.f32 %v6656, %v7002
  %v7171 = vadd.f32 %v6657, %v7007
  %v7172 = vadd.f32 %v6658, %v7010
  %v7173 = vadd.f32 %v6659, %v7015
  %v7174 = vadd.f32 %v6660, %v7018
  %v7175 = vadd.f32 %v6661, %v7023
  %v7176 = vadd.f32 %v6662, %v7026
  %v7177 = vadd.f32 %v6663, %v7031
  %v7178 = vadd.f32 %v6664, %v7034
  %v7179 = vadd.f32 %v6665, %v7039
  %v7180 = vadd.f32 %v6666, %v7042
  %v7181 = vadd.f32 %v6667, %v7047
  %v7182 = vadd.f32 %v6668, %v7050
  %v7183 = vadd.f32 %v6669, %v7055
  %v7184 = vadd.f32 %v6670, %v7058
  %v7185 = vadd.f32 %v6671, %v7063
  %v7186 = vadd.f32 %v6672, %v7066
  %v7187 = vadd.f32 %v6673, %v7071
  %v7188 = vadd.f32 %v6674, %v7074
  %v7189 = vadd.f32 %v6675, %v7079
  %v7190 = vadd.f32 %v6676, %v7082
  %v7191 = vadd.f32 %v6677, %v7087
  %v7192 = vadd.f32 %v6678, %v7090
  %v7193 = vadd.f32 %v6679, %v7095
  %v7194 = vadd.f32 %v6680, %v7098
  %v7195 = vadd.f32 %v6681, %v7103
  %v7196 = vadd.f32 %v6682, %v7106
  %v7197 = vadd.f32 %v6683, %v7111
  %v7198 = vadd.f32 %v6684, %v7114
  %v7199 = vadd.f32 %v6685, %v7119
  %v7200 = vadd.f32 %v6686, %v7122
  %v7201 = vadd.f32 %v6687, %v7127
  %v7202 = vadd.f32 %v6688, %v7130
  %v7203 = vadd.f32 %v6689, %v7135
  %v7204 = vadd.f32 %v6690, %v7138
  %v7205 = vld [vmem:[%s176 + $0x1] sm:$0xff]
  %v7206 = vld [vmem:[%s176 + $0x9] sm:$0xff]
  %v7207 = vld [vmem:[%s176 + $0x19] sm:$0xff]
  %v7208 = vld [vmem:[%s176 + $0x21] sm:$0xff]
  %v7209 = vld [vmem:[%s176 + $0x31] sm:$0xff]
  %v7210 = vld [vmem:[%s176 + $0x39] sm:$0xff]
  %v7211 = vld [vmem:[%s176 + $0x49] sm:$0xff]
  %v7212 = vld [vmem:[%s176 + $0x51] sm:$0xff]
  %v7213 = vld [vmem:[%s176 + $0x61] sm:$0xff]
  %v7214 = vld [vmem:[%s176 + $0x69] sm:$0xff]
  %v7215 = vld [vmem:[%s176 + $0x79] sm:$0xff]
  %v7216 = vld [vmem:[%s176 + $0x81] sm:$0xff]
  %v7217 = vld [vmem:[%s176 + $0x91] sm:$0xff]
  %v7218 = vld [vmem:[%s176 + $0x99] sm:$0xff]
  %v7219 = vld [vmem:[%s176 + $0xa9] sm:$0xff]
  %v7220 = vld [vmem:[%s176 + $0xb1] sm:$0xff]
  %v7221 = vld [vmem:[%s176 + $0xc1] sm:$0xff]
  %v7222 = vld [vmem:[%s176 + $0xc9] sm:$0xff]
  %v7223 = vld [vmem:[%s176 + $0xd9] sm:$0xff]
  %v7224 = vld [vmem:[%s176 + $0xe1] sm:$0xff]
  %v7225 = vld [vmem:[%s176 + $0xf1] sm:$0xff]
  %v7226 = vld [vmem:[%s176 + $0xf9] sm:$0xff]
  %v7227 = vld [vmem:[%s176 + $0x109] sm:$0xff]
  %v7228 = vld [vmem:[%s176 + $0x111] sm:$0xff]
  %v7229 = vld [vmem:[%s176 + $0x121] sm:$0xff]
  %v7230 = vld [vmem:[%s176 + $0x129] sm:$0xff]
  %v7231 = vld [vmem:[%s176 + $0x139] sm:$0xff]
  %v7232 = vld [vmem:[%s176 + $0x141] sm:$0xff]
  %v7233 = vld [vmem:[%s176 + $0x151] sm:$0xff]
  %v7234 = vld [vmem:[%s176 + $0x159] sm:$0xff]
  %v7235 = vld [vmem:[%s176 + $0x169] sm:$0xff]
  %v7236 = vld [vmem:[%s176 + $0x171] sm:$0xff]
  %v7237 = vld [vmem:[%s176 + $0x1b1] sm:$0xff]
  %v7238 = vld [vmem:[%s176 + $0x1b9] sm:$0xff]
  %v7239 = vld [vmem:[%s176 + $0x1c9] sm:$0xff]
  %v7240 = vld [vmem:[%s176 + $0x1d1] sm:$0xff]
  %v7241 = vld [vmem:[%s176 + $0x1e1] sm:$0xff]
  %v7242 = vld [vmem:[%s176 + $0x1e9] sm:$0xff]
  %v7243 = vld [vmem:[%s176 + $0x1f9] sm:$0xff]
  %v7244 = vld [vmem:[%s176 + $0x201] sm:$0xff]
  %v7245 = vld [vmem:[%s176 + $0x211] sm:$0xff]
  %v7246 = vld [vmem:[%s176 + $0x219] sm:$0xff]
  %v7247 = vld [vmem:[%s176 + $0x229] sm:$0xff]
  %v7248 = vld [vmem:[%s176 + $0x231] sm:$0xff]
  %v7249 = vld [vmem:[%s176 + $0x241] sm:$0xff]
  %v7250 = vld [vmem:[%s176 + $0x249] sm:$0xff]
  %v7251 = vld [vmem:[%s176 + $0x259] sm:$0xff]
  %v7252 = vld [vmem:[%s176 + $0x261] sm:$0xff]
  %v7253 = vld [vmem:[%s176 + $0x271] sm:$0xff]
  %v7254 = vld [vmem:[%s176 + $0x279] sm:$0xff]
  %v7255 = vld [vmem:[%s176 + $0x289] sm:$0xff]
  %v7256 = vld [vmem:[%s176 + $0x291] sm:$0xff]
  %v7257 = vld [vmem:[%s176 + $0x2a1] sm:$0xff]
  %v7258 = vld [vmem:[%s176 + $0x2a9] sm:$0xff]
  %v7259 = vld [vmem:[%s176 + $0x2b9] sm:$0xff]
  %v7260 = vld [vmem:[%s176 + $0x2c1] sm:$0xff]
  %v7261 = vld [vmem:[%s176 + $0x2d1] sm:$0xff]
  %v7262 = vld [vmem:[%s176 + $0x2d9] sm:$0xff]
  %v7263 = vld [vmem:[%s176 + $0x2e9] sm:$0xff]
  %v7264 = vld [vmem:[%s176 + $0x2f1] sm:$0xff]
  %v7265 = vld [vmem:[%s176 + $0x301] sm:$0xff]
  %v7266 = vld [vmem:[%s176 + $0x309] sm:$0xff]
  %v7267 = vld [vmem:[%s176 + $0x319] sm:$0xff]
  %v7268 = vld [vmem:[%s176 + $0x321] sm:$0xff]
  %v7269 = vpack.c.bf16 %v7206, %v7205
  %v7270 = vpack.c.bf16 %v7208, %v7207
  %v7271 = vpack.c.bf16 %v7210, %v7209
  %v7272 = vpack.c.bf16 %v7212, %v7211
  %v7273 = vpack.c.bf16 %v7214, %v7213
  %v7274 = vpack.c.bf16 %v7216, %v7215
  %v7275 = vpack.c.bf16 %v7218, %v7217
  %v7276 = vpack.c.bf16 %v7220, %v7219
  %v7277 = vpack.c.bf16 %v7222, %v7221
  %v7278 = vpack.c.bf16 %v7224, %v7223
  %v7279 = vpack.c.bf16 %v7226, %v7225
  %v7280 = vpack.c.bf16 %v7228, %v7227
  %v7281 = vpack.c.bf16 %v7230, %v7229
  %v7282 = vpack.c.bf16 %v7232, %v7231
  %v7283 = vpack.c.bf16 %v7234, %v7233
  %v7284 = vpack.c.bf16 %v7236, %v7235
  %v7285 = vpack.c.bf16 %v7238, %v7237
  %v7286 = vpack.c.bf16 %v7240, %v7239
  %v7287 = vpack.c.bf16 %v7242, %v7241
  %v7288 = vpack.c.bf16 %v7244, %v7243
  %v7289 = vpack.c.bf16 %v7246, %v7245
  %v7290 = vpack.c.bf16 %v7248, %v7247
  %v7291 = vpack.c.bf16 %v7250, %v7249
  %v7292 = vpack.c.bf16 %v7252, %v7251
  %v7293 = vpack.c.bf16 %v7254, %v7253
  %v7294 = vpack.c.bf16 %v7256, %v7255
  %v7295 = vpack.c.bf16 %v7258, %v7257
  %v7296 = vpack.c.bf16 %v7260, %v7259
  %v7297 = vpack.c.bf16 %v7262, %v7261
  %v7298 = vpack.c.bf16 %v7264, %v7263
  %v7299 = vpack.c.bf16 %v7266, %v7265
  %v7300 = vpack.c.bf16 %v7268, %v7267
  %s7301 = scalar_lea.vmem %s4, 256
  %v7302 = vld [vmem:[%s7301] sm:$0xf]
  %v7303 = vld [vmem:[%s7301 + $0x4] sm:$0xf]
  %v7304 = vld [vmem:[%s7301 + $0x8] sm:$0xf]
  %v7305 = vld [vmem:[%s7301 + $0xc] sm:$0xf]
  %v7306 = vld [vmem:[%s7301 + $0x10] sm:$0xf]
  %v7307 = vld [vmem:[%s7301 + $0x14] sm:$0xf]
  %v7308 = vld [vmem:[%s7301 + $0x18] sm:$0xf]
  %v7309 = vld [vmem:[%s7301 + $0x1c] sm:$0xf]
  %v7310 = vld [vmem:[%s7301 + $0x20] sm:$0xf]
  %v7311 = vld [vmem:[%s7301 + $0x24] sm:$0xf]
  %v7312 = vld [vmem:[%s7301 + $0x28] sm:$0xf]
  %v7313 = vld [vmem:[%s7301 + $0x2c] sm:$0xf]
  %v7314 = vld [vmem:[%s7301 + $0x30] sm:$0xf]
  %v7315 = vld [vmem:[%s7301 + $0x34] sm:$0xf]
  %v7316 = vld [vmem:[%s7301 + $0x38] sm:$0xf]
  %v7317 = vld [vmem:[%s7301 + $0x3c] sm:$0xf]
  %v7334 = vunpack.c.l.b16 %v7302
  %v7335 = vunpack.c.l.b16 %v7303
  %v7336 = vunpack.c.l.b16 %v7304
  %v7337 = vunpack.c.l.b16 %v7305
  %v7338 = vunpack.c.l.b16 %v7306
  %v7339 = vunpack.c.l.b16 %v7307
  %v7340 = vunpack.c.l.b16 %v7308
  %v7341 = vunpack.c.l.b16 %v7309
  %v7342 = vunpack.c.l.b16 %v7310
  %v7343 = vunpack.c.l.b16 %v7311
  %v7344 = vunpack.c.l.b16 %v7312
  %v7345 = vunpack.c.l.b16 %v7313
  %v7346 = vunpack.c.l.b16 %v7314
  %v7347 = vunpack.c.l.b16 %v7315
  %v7348 = vunpack.c.l.b16 %v7316
  %v7349 = vunpack.c.l.b16 %v7317
  %v7350 = vpack.c.b16 %v7335, %v7334
  %v7351 = vpack.c.b16 %v7337, %v7336
  %v7352 = vpack.c.b16 %v7339, %v7338
  %v7353 = vpack.c.b16 %v7341, %v7340
  %v7354 = vpack.c.b16 %v7343, %v7342
  %v7355 = vpack.c.b16 %v7345, %v7344
  %v7356 = vpack.c.b16 %v7347, %v7346
  %v7357 = vpack.c.b16 %v7349, %v7348
  %7366 = vmatprep.subr.bf16.mxu0 0
  %7367 = vmatpush1.bf16.msra.mxu0 %v7350
  %7368 = vmatprep.subr.bf16.mxu0 0
  %7369 = vmatpush1.bf16.msra.mxu0 %v7351
  %7370 = vmatprep.subr.bf16.mxu0 0
  %7371 = vmatpush1.bf16.msra.mxu0 %v7352
  %7372 = vmatprep.subr.bf16.mxu0 0
  %7373 = vmatpush1.bf16.msra.mxu0 %v7353
  %7374 = vmatprep.subr.bf16.mxu0 0
  %7375 = vmatpush1.bf16.msra.mxu0 %v7354
  %7376 = vmatprep.subr.bf16.mxu0 0
  %7377 = vmatpush1.bf16.msra.mxu0 %v7355
  %7378 = vmatprep.subr.bf16.mxu0 0
  %7379 = vmatpush1.bf16.msra.mxu0 %v7356
  %7380 = vmatprep.subr.bf16.mxu0 0
  %7381 = vmatpush1.bf16.msra.mxu0 %v7357
  %7382 = vmatprep.subr.bf16.mxu0 0
  %7383 = vmatpush1.bf16.msra.mxu0 0
  %7384 = vmatprep.subr.bf16.mxu0 0
  %7385 = vmatpush1.bf16.msra.mxu0 0
  %7386 = vmatprep.subr.bf16.mxu0 0
  %7387 = vmatpush1.bf16.msra.mxu0 0
  %7388 = vmatprep.subr.bf16.mxu0 0
  %7389 = vmatpush1.bf16.msra.mxu0 0
  %7390 = vmatprep.subr.bf16.mxu0 0
  %7391 = vmatpush1.bf16.msra.mxu0 0
  %7392 = vmatprep.subr.bf16.mxu0 0
  %7393 = vmatpush1.bf16.msra.mxu0 0
  %7394 = vmatprep.subr.bf16.mxu0 0
  %7395 = vmatpush1.bf16.msra.mxu0 0
  %7396 = vmatprep.subr.bf16.mxu0 0
  %7397 = vmatpush1.bf16.msra.mxu0 0
  %7398 = vmatprep.mubr.bf16.mxu0 0
  %7399 = vmatmul.mubr.bf16.gmra.mrb[0].mxu0 %v7269
  %v7400 = vpop.f32.mrb[0].mxu0
  %v7401 = vadd.f32 0.0, %v7400
  %v7402 = vpop.f32.mrb[0].mxu0
  %v7403 = vpop.f32.mrb[0].mxu0
  %v7404 = vadd.f32 0.0, %v7403
  %v7405 = vpop.f32.mrb[0].mxu0
  %7406 = vmatprep.mubr.bf16.mxu0 0
  %7407 = vmatmul.mubr.bf16.gmra.mrb[0].mxu0 %v7270
  %v7408 = vpop.f32.mrb[0].mxu0
  %v7409 = vadd.f32 0.0, %v7408
  %v7410 = vpop.f32.mrb[0].mxu0
  %v7411 = vpop.f32.mrb[0].mxu0
  %v7412 = vadd.f32 0.0, %v7411
  %v7413 = vpop.f32.mrb[0].mxu0
  %7414 = vmatprep.mubr.bf16.mxu0 0
  %7415 = vmatmul.mubr.bf16.gmra.mrb[0].mxu0 %v7271
  %v7416 = vpop.f32.mrb[0].mxu0
  %v7417 = vadd.f32 0.0, %v7416
  %v7418 = vpop.f32.mrb[0].mxu0
  %v7419 = vpop.f32.mrb[0].mxu0
  %v7420 = vadd.f32 0.0, %v7419
  %v7421 = vpop.f32.mrb[0].mxu0
  %7422 = vmatprep.mubr.bf16.mxu0 0
  %7423 = vmatmul.mubr.bf16.gmra.mrb[0].mxu0 %v7272
  %v7424 = vpop.f32.mrb[0].mxu0
  %v7425 = vadd.f32 0.0, %v7424
  %v7426 = vpop.f32.mrb[0].mxu0
  %v7427 = vpop.f32.mrb[0].mxu0
  %v7428 = vadd.f32 0.0, %v7427
  %v7429 = vpop.f32.mrb[0].mxu0
  %7430 = vmatprep.mubr.bf16.mxu0 0
  %7431 = vmatmul.mubr.bf16.gmra.mrb[0].mxu0 %v7273
  %v7432 = vpop.f32.mrb[0].mxu0
  %v7433 = vadd.f32 0.0, %v7432
  %v7434 = vpop.f32.mrb[0].mxu0
  %v7435 = vpop.f32.mrb[0].mxu0
  %v7436 = vadd.f32 0.0, %v7435
  %v7437 = vpop.f32.mrb[0].mxu0
  %7438 = vmatprep.mubr.bf16.mxu0 0
  %7439 = vmatmul.mubr.bf16.gmra.mrb[0].mxu0 %v7274
  %v7440 = vpop.f32.mrb[0].mxu0
  %v7441 = vadd.f32 0.0, %v7440
  %v7442 = vpop.f32.mrb[0].mxu0
  %v7443 = vpop.f32.mrb[0].mxu0
  %v7444 = vadd.f32 0.0, %v7443
  %v7445 = vpop.f32.mrb[0].mxu0
  %7446 = vmatprep.mubr.bf16.mxu0 0
  %7447 = vmatmul.mubr.bf16.gmra.mrb[0].mxu0 %v7275
  %v7448 = vpop.f32.mrb[0].mxu0
  %v7449 = vadd.f32 0.0, %v7448
  %v7450 = vpop.f32.mrb[0].mxu0
  %v7451 = vpop.f32.mrb[0].mxu0
  %v7452 = vadd.f32 0.0, %v7451
  %v7453 = vpop.f32.mrb[0].mxu0
  %7454 = vmatprep.mubr.bf16.mxu0 0
  %7455 = vmatmul.mubr.bf16.gmra.mrb[0].mxu0 %v7276
  %v7456 = vpop.f32.mrb[0].mxu0
  %v7457 = vadd.f32 0.0, %v7456
  %v7458 = vpop.f32.mrb[0].mxu0
  %v7459 = vpop.f32.mrb[0].mxu0
  %v7460 = vadd.f32 0.0, %v7459
  %v7461 = vpop.f32.mrb[0].mxu0
  %7462 = vmatprep.mubr.bf16.mxu0 0
  %7463 = vmatmul.mubr.bf16.gmra.mrb[0].mxu0 %v7277
  %v7464 = vpop.f32.mrb[0].mxu0
  %v7465 = vadd.f32 0.0, %v7464
  %v7466 = vpop.f32.mrb[0].mxu0
  %v7467 = vpop.f32.mrb[0].mxu0
  %v7468 = vadd.f32 0.0, %v7467
  %v7469 = vpop.f32.mrb[0].mxu0
  %7470 = vmatprep.mubr.bf16.mxu0 0
  %7471 = vmatmul.mubr.bf16.gmra.mrb[0].mxu0 %v7278
  %v7472 = vpop.f32.mrb[0].mxu0
  %v7473 = vadd.f32 0.0, %v7472
  %v7474 = vpop.f32.mrb[0].mxu0
  %v7475 = vpop.f32.mrb[0].mxu0
  %v7476 = vadd.f32 0.0, %v7475
  %v7477 = vpop.f32.mrb[0].mxu0
  %7478 = vmatprep.mubr.bf16.mxu0 0
  %7479 = vmatmul.mubr.bf16.gmra.mrb[0].mxu0 %v7279
  %v7480 = vpop.f32.mrb[0].mxu0
  %v7481 = vadd.f32 0.0, %v7480
  %v7482 = vpop.f32.mrb[0].mxu0
  %v7483 = vpop.f32.mrb[0].mxu0
  %v7484 = vadd.f32 0.0, %v7483
  %v7485 = vpop.f32.mrb[0].mxu0
  %7486 = vmatprep.mubr.bf16.mxu0 0
  %7487 = vmatmul.mubr.bf16.gmra.mrb[0].mxu0 %v7280
  %v7488 = vpop.f32.mrb[0].mxu0
  %v7489 = vadd.f32 0.0, %v7488
  %v7490 = vpop.f32.mrb[0].mxu0
  %v7491 = vpop.f32.mrb[0].mxu0
  %v7492 = vadd.f32 0.0, %v7491
  %v7493 = vpop.f32.mrb[0].mxu0
  %7494 = vmatprep.mubr.bf16.mxu0 0
  %7495 = vmatmul.mubr.bf16.gmra.mrb[0].mxu0 %v7281
  %v7496 = vpop.f32.mrb[0].mxu0
  %v7497 = vadd.f32 0.0, %v7496
  %v7498 = vpop.f32.mrb[0].mxu0
  %v7499 = vpop.f32.mrb[0].mxu0
  %v7500 = vadd.f32 0.0, %v7499
  %v7501 = vpop.f32.mrb[0].mxu0
  %7502 = vmatprep.mubr.bf16.mxu0 0
  %7503 = vmatmul.mubr.bf16.gmra.mrb[0].mxu0 %v7282
  %v7504 = vpop.f32.mrb[0].mxu0
  %v7505 = vadd.f32 0.0, %v7504
  %v7506 = vpop.f32.mrb[0].mxu0
  %v7507 = vpop.f32.mrb[0].mxu0
  %v7508 = vadd.f32 0.0, %v7507
  %v7509 = vpop.f32.mrb[0].mxu0
  %7510 = vmatprep.mubr.bf16.mxu0 0
  %7511 = vmatmul.mubr.bf16.gmra.mrb[0].mxu0 %v7283
  %v7512 = vpop.f32.mrb[0].mxu0
  %v7513 = vadd.f32 0.0, %v7512
  %v7514 = vpop.f32.mrb[0].mxu0
  %v7515 = vpop.f32.mrb[0].mxu0
  %v7516 = vadd.f32 0.0, %v7515
  %v7517 = vpop.f32.mrb[0].mxu0
  %7518 = vmatprep.mubr.bf16.mxu0 0
  %7519 = vmatmul.mubr.bf16.gmra.mrb[0].mxu0 %v7284
  %v7520 = vpop.f32.mrb[0].mxu0
  %v7521 = vadd.f32 0.0, %v7520
  %v7522 = vpop.f32.mrb[0].mxu0
  %v7523 = vpop.f32.mrb[0].mxu0
  %v7524 = vadd.f32 0.0, %v7523
  %v7525 = vpop.f32.mrb[0].mxu0
  %7526 = vmatprep.mubr.bf16.mxu0 0
  %7527 = vmatmul.mubr.bf16.gmra.mrb[0].mxu0 %v7285
  %v7528 = vpop.f32.mrb[0].mxu0
  %v7529 = vadd.f32 0.0, %v7528
  %v7530 = vpop.f32.mrb[0].mxu0
  %v7531 = vpop.f32.mrb[0].mxu0
  %v7532 = vadd.f32 0.0, %v7531
  %v7533 = vpop.f32.mrb[0].mxu0
  %7534 = vmatprep.mubr.bf16.mxu0 0
  %7535 = vmatmul.mubr.bf16.gmra.mrb[0].mxu0 %v7286
  %v7536 = vpop.f32.mrb[0].mxu0
  %v7537 = vadd.f32 0.0, %v7536
  %v7538 = vpop.f32.mrb[0].mxu0
  %v7539 = vpop.f32.mrb[0].mxu0
  %v7540 = vadd.f32 0.0, %v7539
  %v7541 = vpop.f32.mrb[0].mxu0
  %7542 = vmatprep.mubr.bf16.mxu0 0
  %7543 = vmatmul.mubr.bf16.gmra.mrb[0].mxu0 %v7287
  %v7544 = vpop.f32.mrb[0].mxu0
  %v7545 = vadd.f32 0.0, %v7544
  %v7546 = vpop.f32.mrb[0].mxu0
  %v7547 = vpop.f32.mrb[0].mxu0
  %v7548 = vadd.f32 0.0, %v7547
  %v7549 = vpop.f32.mrb[0].mxu0
  %7550 = vmatprep.mubr.bf16.mxu0 0
  %7551 = vmatmul.mubr.bf16.gmra.mrb[0].mxu0 %v7288
  %v7552 = vpop.f32.mrb[0].mxu0
  %v7553 = vadd.f32 0.0, %v7552
  %v7554 = vpop.f32.mrb[0].mxu0
  %v7555 = vpop.f32.mrb[0].mxu0
  %v7556 = vadd.f32 0.0, %v7555
  %v7557 = vpop.f32.mrb[0].mxu0
  %7558 = vmatprep.mubr.bf16.mxu0 0
  %7559 = vmatmul.mubr.bf16.gmra.mrb[0].mxu0 %v7289
  %v7560 = vpop.f32.mrb[0].mxu0
  %v7561 = vadd.f32 0.0, %v7560
  %v7562 = vpop.f32.mrb[0].mxu0
  %v7563 = vpop.f32.mrb[0].mxu0
  %v7564 = vadd.f32 0.0, %v7563
  %v7565 = vpop.f32.mrb[0].mxu0
  %7566 = vmatprep.mubr.bf16.mxu0 0
  %7567 = vmatmul.mubr.bf16.gmra.mrb[0].mxu0 %v7290
  %v7568 = vpop.f32.mrb[0].mxu0
  %v7569 = vadd.f32 0.0, %v7568
  %v7570 = vpop.f32.mrb[0].mxu0
  %v7571 = vpop.f32.mrb[0].mxu0
  %v7572 = vadd.f32 0.0, %v7571
  %v7573 = vpop.f32.mrb[0].mxu0
  %7574 = vmatprep.mubr.bf16.mxu0 0
  %7575 = vmatmul.mubr.bf16.gmra.mrb[0].mxu0 %v7291
  %v7576 = vpop.f32.mrb[0].mxu0
  %v7577 = vadd.f32 0.0, %v7576
  %v7578 = vpop.f32.mrb[0].mxu0
  %v7579 = vpop.f32.mrb[0].mxu0
  %v7580 = vadd.f32 0.0, %v7579
  %v7581 = vpop.f32.mrb[0].mxu0
  %7582 = vmatprep.mubr.bf16.mxu0 0
  %7583 = vmatmul.mubr.bf16.gmra.mrb[0].mxu0 %v7292
  %v7584 = vpop.f32.mrb[0].mxu0
  %v7585 = vadd.f32 0.0, %v7584
  %v7586 = vpop.f32.mrb[0].mxu0
  %v7587 = vpop.f32.mrb[0].mxu0
  %v7588 = vadd.f32 0.0, %v7587
  %v7589 = vpop.f32.mrb[0].mxu0
  %7590 = vmatprep.mubr.bf16.mxu0 0
  %7591 = vmatmul.mubr.bf16.gmra.mrb[0].mxu0 %v7293
  %v7592 = vpop.f32.mrb[0].mxu0
  %v7593 = vadd.f32 0.0, %v7592
  %v7594 = vpop.f32.mrb[0].mxu0
  %v7595 = vpop.f32.mrb[0].mxu0
  %v7596 = vadd.f32 0.0, %v7595
  %v7597 = vpop.f32.mrb[0].mxu0
  %7598 = vmatprep.mubr.bf16.mxu0 0
  %7599 = vmatmul.mubr.bf16.gmra.mrb[0].mxu0 %v7294
  %v7600 = vpop.f32.mrb[0].mxu0
  %v7601 = vadd.f32 0.0, %v7600
  %v7602 = vpop.f32.mrb[0].mxu0
  %v7603 = vpop.f32.mrb[0].mxu0
  %v7604 = vadd.f32 0.0, %v7603
  %v7605 = vpop.f32.mrb[0].mxu0
  %7606 = vmatprep.mubr.bf16.mxu0 0
  %7607 = vmatmul.mubr.bf16.gmra.mrb[0].mxu0 %v7295
  %v7608 = vpop.f32.mrb[0].mxu0
  %v7609 = vadd.f32 0.0, %v7608
  %v7610 = vpop.f32.mrb[0].mxu0
  %v7611 = vpop.f32.mrb[0].mxu0
  %v7612 = vadd.f32 0.0, %v7611
  %v7613 = vpop.f32.mrb[0].mxu0
  %7614 = vmatprep.mubr.bf16.mxu0 0
  %7615 = vmatmul.mubr.bf16.gmra.mrb[0].mxu0 %v7296
  %v7616 = vpop.f32.mrb[0].mxu0
  %v7617 = vadd.f32 0.0, %v7616
  %v7618 = vpop.f32.mrb[0].mxu0
  %v7619 = vpop.f32.mrb[0].mxu0
  %v7620 = vadd.f32 0.0, %v7619
  %v7621 = vpop.f32.mrb[0].mxu0
  %7622 = vmatprep.mubr.bf16.mxu0 0
  %7623 = vmatmul.mubr.bf16.gmra.mrb[0].mxu0 %v7297
  %v7624 = vpop.f32.mrb[0].mxu0
  %v7625 = vadd.f32 0.0, %v7624
  %v7626 = vpop.f32.mrb[0].mxu0
  %v7627 = vpop.f32.mrb[0].mxu0
  %v7628 = vadd.f32 0.0, %v7627
  %v7629 = vpop.f32.mrb[0].mxu0
  %7630 = vmatprep.mubr.bf16.mxu0 0
  %7631 = vmatmul.mubr.bf16.gmra.mrb[0].mxu0 %v7298
  %v7632 = vpop.f32.mrb[0].mxu0
  %v7633 = vadd.f32 0.0, %v7632
  %v7634 = vpop.f32.mrb[0].mxu0
  %v7635 = vpop.f32.mrb[0].mxu0
  %v7636 = vadd.f32 0.0, %v7635
  %v7637 = vpop.f32.mrb[0].mxu0
  %7638 = vmatprep.mubr.bf16.mxu0 0
  %7639 = vmatmul.mubr.bf16.gmra.mrb[0].mxu0 %v7299
  %v7640 = vpop.f32.mrb[0].mxu0
  %v7641 = vadd.f32 0.0, %v7640
  %v7642 = vpop.f32.mrb[0].mxu0
  %v7643 = vpop.f32.mrb[0].mxu0
  %v7644 = vadd.f32 0.0, %v7643
  %v7645 = vpop.f32.mrb[0].mxu0
  %7646 = vmatprep.mubr.bf16.mxu0 0
  %7647 = vmatmul.mubr.bf16.gmra.mrb[0].mxu0 %v7300
  %v7648 = vpop.f32.mrb[0].mxu0
  %v7649 = vadd.f32 0.0, %v7648
  %v7650 = vpop.f32.mrb[0].mxu0
  %v7651 = vpop.f32.mrb[0].mxu0
  %v7652 = vadd.f32 0.0, %v7651
  %v7653 = vpop.f32.mrb[0].mxu0
  %7654 = vdwg.mxu0
  %v7655 = vadd.f32 %v7141, %v7401
  %v7656 = vadd.f32 %v7142, %v7404
  %v7657 = vadd.f32 %v7143, %v7409
  %v7658 = vadd.f32 %v7144, %v7412
  %v7659 = vadd.f32 %v7145, %v7417
  %v7660 = vadd.f32 %v7146, %v7420
  %v7661 = vadd.f32 %v7147, %v7425
  %v7662 = vadd.f32 %v7148, %v7428
  %v7663 = vadd.f32 %v7149, %v7433
  %v7664 = vadd.f32 %v7150, %v7436
  %v7665 = vadd.f32 %v7151, %v7441
  %v7666 = vadd.f32 %v7152, %v7444
  %v7667 = vadd.f32 %v7153, %v7449
  %v7668 = vadd.f32 %v7154, %v7452
  %v7669 = vadd.f32 %v7155, %v7457
  %v7670 = vadd.f32 %v7156, %v7460
  %v7671 = vadd.f32 %v7157, %v7465
  %v7672 = vadd.f32 %v7158, %v7468
  %v7673 = vadd.f32 %v7159, %v7473
  %v7674 = vadd.f32 %v7160, %v7476
  %v7675 = vadd.f32 %v7161, %v7481
  %v7676 = vadd.f32 %v7162, %v7484
  %v7677 = vadd.f32 %v7163, %v7489
  %v7678 = vadd.f32 %v7164, %v7492
  %v7679 = vadd.f32 %v7165, %v7497
  %v7680 = vadd.f32 %v7166, %v7500
  %v7681 = vadd.f32 %v7167, %v7505
  %v7682 = vadd.f32 %v7168, %v7508
  %v7683 = vadd.f32 %v7169, %v7513
  %v7684 = vadd.f32 %v7170, %v7516
  %v7685 = vadd.f32 %v7171, %v7521
  %v7686 = vadd.f32 %v7172, %v7524
  %v7687 = vadd.f32 %v7173, %v7529
  %v7688 = vadd.f32 %v7174, %v7532
  %v7689 = vadd.f32 %v7175, %v7537
  %v7690 = vadd.f32 %v7176, %v7540
  %v7691 = vadd.f32 %v7177, %v7545
  %v7692 = vadd.f32 %v7178, %v7548
  %v7693 = vadd.f32 %v7179, %v7553
  %v7694 = vadd.f32 %v7180, %v7556
  %v7695 = vadd.f32 %v7181, %v7561
  %v7696 = vadd.f32 %v7182, %v7564
  %v7697 = vadd.f32 %v7183, %v7569
  %v7698 = vadd.f32 %v7184, %v7572
  %v7699 = vadd.f32 %v7185, %v7577
  %v7700 = vadd.f32 %v7186, %v7580
  %v7701 = vadd.f32 %v7187, %v7585
  %v7702 = vadd.f32 %v7188, %v7588
  %v7703 = vadd.f32 %v7189, %v7593
  %v7704 = vadd.f32 %v7190, %v7596
  %v7705 = vadd.f32 %v7191, %v7601
  %v7706 = vadd.f32 %v7192, %v7604
  %v7707 = vadd.f32 %v7193, %v7609
  %v7708 = vadd.f32 %v7194, %v7612
  %v7709 = vadd.f32 %v7195, %v7617
  %v7710 = vadd.f32 %v7196, %v7620
  %v7711 = vadd.f32 %v7197, %v7625
  %v7712 = vadd.f32 %v7198, %v7628
  %v7713 = vadd.f32 %v7199, %v7633
  %v7714 = vadd.f32 %v7200, %v7636
  %v7715 = vadd.f32 %v7201, %v7641
  %v7716 = vadd.f32 %v7202, %v7644
  %v7717 = vadd.f32 %v7203, %v7649
  %v7718 = vadd.f32 %v7204, %v7652
  %v7719 = vld [vmem:[%s176 + $0x2] sm:$0xff]
  %v7720 = vld [vmem:[%s176 + $0xa] sm:$0xff]
  %v7721 = vld [vmem:[%s176 + $0x1a] sm:$0xff]
  %v7722 = vld [vmem:[%s176 + $0x22] sm:$0xff]
  %v7723 = vld [vmem:[%s176 + $0x32] sm:$0xff]
  %v7724 = vld [vmem:[%s176 + $0x3a] sm:$0xff]
  %v7725 = vld [vmem:[%s176 + $0x4a] sm:$0xff]
  %v7726 = vld [vmem:[%s176 + $0x52] sm:$0xff]
  %v7727 = vld [vmem:[%s176 + $0x62] sm:$0xff]
  %v7728 = vld [vmem:[%s176 + $0x6a] sm:$0xff]
  %v7729 = vld [vmem:[%s176 + $0x7a] sm:$0xff]
  %v7730 = vld [vmem:[%s176 + $0x82] sm:$0xff]
  %v7731 = vld [vmem:[%s176 + $0x92] sm:$0xff]
  %v7732 = vld [vmem:[%s176 + $0x9a] sm:$0xff]
  %v7733 = vld [vmem:[%s176 + $0xaa] sm:$0xff]
  %v7734 = vld [vmem:[%s176 + $0xb2] sm:$0xff]
  %v7735 = vld [vmem:[%s176 + $0xc2] sm:$0xff]
  %v7736 = vld [vmem:[%s176 + $0xca] sm:$0xff]
  %v7737 = vld [vmem:[%s176 + $0xda] sm:$0xff]
  %v7738 = vld [vmem:[%s176 + $0xe2] sm:$0xff]
  %v7739 = vld [vmem:[%s176 + $0xf2] sm:$0xff]
  %v7740 = vld [vmem:[%s176 + $0xfa] sm:$0xff]
  %v7741 = vld [vmem:[%s176 + $0x10a] sm:$0xff]
  %v7742 = vld [vmem:[%s176 + $0x112] sm:$0xff]
  %v7743 = vld [vmem:[%s176 + $0x122] sm:$0xff]
  %v7744 = vld [vmem:[%s176 + $0x12a] sm:$0xff]
  %v7745 = vld [vmem:[%s176 + $0x13a] sm:$0xff]
  %v7746 = vld [vmem:[%s176 + $0x142] sm:$0xff]
  %v7747 = vld [vmem:[%s176 + $0x152] sm:$0xff]
  %v7748 = vld [vmem:[%s176 + $0x15a] sm:$0xff]
  %v7749 = vld [vmem:[%s176 + $0x16a] sm:$0xff]
  %v7750 = vld [vmem:[%s176 + $0x172] sm:$0xff]
  %v7751 = vld [vmem:[%s176 + $0x1b2] sm:$0xff]
  %v7752 = vld [vmem:[%s176 + $0x1ba] sm:$0xff]
  %v7753 = vld [vmem:[%s176 + $0x1ca] sm:$0xff]
  %v7754 = vld [vmem:[%s176 + $0x1d2] sm:$0xff]
  %v7755 = vld [vmem:[%s176 + $0x1e2] sm:$0xff]
  %v7756 = vld [vmem:[%s176 + $0x1ea] sm:$0xff]
  %v7757 = vld [vmem:[%s176 + $0x1fa] sm:$0xff]
  %v7758 = vld [vmem:[%s176 + $0x202] sm:$0xff]
  %v7759 = vld [vmem:[%s176 + $0x212] sm:$0xff]
  %v7760 = vld [vmem:[%s176 + $0x21a] sm:$0xff]
  %v7761 = vld [vmem:[%s176 + $0x22a] sm:$0xff]
  %v7762 = vld [vmem:[%s176 + $0x232] sm:$0xff]
  %v7763 = vld [vmem:[%s176 + $0x242] sm:$0xff]
  %v7764 = vld [vmem:[%s176 + $0x24a] sm:$0xff]
  %v7765 = vld [vmem:[%s176 + $0x25a] sm:$0xff]
  %v7766 = vld [vmem:[%s176 + $0x262] sm:$0xff]
  %v7767 = vld [vmem:[%s176 + $0x272] sm:$0xff]
  %v7768 = vld [vmem:[%s176 + $0x27a] sm:$0xff]
  %v7769 = vld [vmem:[%s176 + $0x28a] sm:$0xff]
  %v7770 = vld [vmem:[%s176 + $0x292] sm:$0xff]
  %v7771 = vld [vmem:[%s176 + $0x2a2] sm:$0xff]
  %v7772 = vld [vmem:[%s176 + $0x2aa] sm:$0xff]
  %v7773 = vld [vmem:[%s176 + $0x2ba] sm:$0xff]
  %v7774 = vld [vmem:[%s176 + $0x2c2] sm:$0xff]
  %v7775 = vld [vmem:[%s176 + $0x2d2] sm:$0xff]
  %v7776 = vld [vmem:[%s176 + $0x2da] sm:$0xff]
  %v7777 = vld [vmem:[%s176 + $0x2ea] sm:$0xff]
  %v7778 = vld [vmem:[%s176 + $0x2f2] sm:$0xff]
  %v7779 = vld [vmem:[%s176 + $0x302] sm:$0xff]
  %v7780 = vld [vmem:[%s176 + $0x30a] sm:$0xff]
  %v7781 = vld [vmem:[%s176 + $0x31a] sm:$0xff]
  %v7782 = vld [vmem:[%s176 + $0x322] sm:$0xff]
  %v7783 = vpack.c.bf16 %v7720, %v7719
  %v7784 = vpack.c.bf16 %v7722, %v7721
  %v7785 = vpack.c.bf16 %v7724, %v7723
  %v7786 = vpack.c.bf16 %v7726, %v7725
  %v7787 = vpack.c.bf16 %v7728, %v7727
  %v7788 = vpack.c.bf16 %v7730, %v7729
  %v7789 = vpack.c.bf16 %v7732, %v7731
  %v7790 = vpack.c.bf16 %v7734, %v7733
  %v7791 = vpack.c.bf16 %v7736, %v7735
  %v7792 = vpack.c.bf16 %v7738, %v7737
  %v7793 = vpack.c.bf16 %v7740, %v7739
  %v7794 = vpack.c.bf16 %v7742, %v7741
  %v7795 = vpack.c.bf16 %v7744, %v7743
  %v7796 = vpack.c.bf16 %v7746, %v7745
  %v7797 = vpack.c.bf16 %v7748, %v7747
  %v7798 = vpack.c.bf16 %v7750, %v7749
  %v7799 = vpack.c.bf16 %v7752, %v7751
  %v7800 = vpack.c.bf16 %v7754, %v7753
  %v7801 = vpack.c.bf16 %v7756, %v7755
  %v7802 = vpack.c.bf16 %v7758, %v7757
  %v7803 = vpack.c.bf16 %v7760, %v7759
  %v7804 = vpack.c.bf16 %v7762, %v7761
  %v7805 = vpack.c.bf16 %v7764, %v7763
  %v7806 = vpack.c.bf16 %v7766, %v7765
  %v7807 = vpack.c.bf16 %v7768, %v7767
  %v7808 = vpack.c.bf16 %v7770, %v7769
  %v7809 = vpack.c.bf16 %v7772, %v7771
  %v7810 = vpack.c.bf16 %v7774, %v7773
  %v7811 = vpack.c.bf16 %v7776, %v7775
  %v7812 = vpack.c.bf16 %v7778, %v7777
  %v7813 = vpack.c.bf16 %v7780, %v7779
  %v7814 = vpack.c.bf16 %v7782, %v7781
  %s7815 = scalar_lea.vmem %s4, 320
  %v7816 = vld [vmem:[%s7815] sm:$0xf]
  %v7817 = vld [vmem:[%s7815 + $0x4] sm:$0xf]
  %v7818 = vld [vmem:[%s7815 + $0x8] sm:$0xf]
  %v7819 = vld [vmem:[%s7815 + $0xc] sm:$0xf]
  %v7820 = vld [vmem:[%s7815 + $0x10] sm:$0xf]
  %v7821 = vld [vmem:[%s7815 + $0x14] sm:$0xf]
  %v7822 = vld [vmem:[%s7815 + $0x18] sm:$0xf]
  %v7823 = vld [vmem:[%s7815 + $0x1c] sm:$0xf]
  %v7824 = vld [vmem:[%s7815 + $0x20] sm:$0xf]
  %v7825 = vld [vmem:[%s7815 + $0x24] sm:$0xf]
  %v7826 = vld [vmem:[%s7815 + $0x28] sm:$0xf]
  %v7827 = vld [vmem:[%s7815 + $0x2c] sm:$0xf]
  %v7828 = vld [vmem:[%s7815 + $0x30] sm:$0xf]
  %v7829 = vld [vmem:[%s7815 + $0x34] sm:$0xf]
  %v7830 = vld [vmem:[%s7815 + $0x38] sm:$0xf]
  %v7831 = vld [vmem:[%s7815 + $0x3c] sm:$0xf]
  %v7848 = vunpack.c.l.b16 %v7816
  %v7849 = vunpack.c.l.b16 %v7817
  %v7850 = vunpack.c.l.b16 %v7818
  %v7851 = vunpack.c.l.b16 %v7819
  %v7852 = vunpack.c.l.b16 %v7820
  %v7853 = vunpack.c.l.b16 %v7821
  %v7854 = vunpack.c.l.b16 %v7822
  %v7855 = vunpack.c.l.b16 %v7823
  %v7856 = vunpack.c.l.b16 %v7824
  %v7857 = vunpack.c.l.b16 %v7825
  %v7858 = vunpack.c.l.b16 %v7826
  %v7859 = vunpack.c.l.b16 %v7827
  %v7860 = vunpack.c.l.b16 %v7828
  %v7861 = vunpack.c.l.b16 %v7829
  %v7862 = vunpack.c.l.b16 %v7830
  %v7863 = vunpack.c.l.b16 %v7831
  %v7864 = vpack.c.b16 %v7849, %v7848
  %v7865 = vpack.c.b16 %v7851, %v7850
  %v7866 = vpack.c.b16 %v7853, %v7852
  %v7867 = vpack.c.b16 %v7855, %v7854
  %v7868 = vpack.c.b16 %v7857, %v7856
  %v7869 = vpack.c.b16 %v7859, %v7858
  %v7870 = vpack.c.b16 %v7861, %v7860
  %v7871 = vpack.c.b16 %v7863, %v7862
  %7880 = vmatprep.subr.bf16.mxu0 0
  %7881 = vmatpush1.bf16.msra.mxu0 %v7864
  %7882 = vmatprep.subr.bf16.mxu0 0
  %7883 = vmatpush1.bf16.msra.mxu0 %v7865
  %7884 = vmatprep.subr.bf16.mxu0 0
  %7885 = vmatpush1.bf16.msra.mxu0 %v7866
  %7886 = vmatprep.subr.bf16.mxu0 0
  %7887 = vmatpush1.bf16.msra.mxu0 %v7867
  %7888 = vmatprep.subr.bf16.mxu0 0
  %7889 = vmatpush1.bf16.msra.mxu0 %v7868
  %7890 = vmatprep.subr.bf16.mxu0 0
  %7891 = vmatpush1.bf16.msra.mxu0 %v7869
  %7892 = vmatprep.subr.bf16.mxu0 0
  %7893 = vmatpush1.bf16.msra.mxu0 %v7870
  %7894 = vmatprep.subr.bf16.mxu0 0
  %7895 = vmatpush1.bf16.msra.mxu0 %v7871
  %7896 = vmatprep.subr.bf16.mxu0 0
  %7897 = vmatpush1.bf16.msra.mxu0 0
  %7898 = vmatprep.subr.bf16.mxu0 0
  %7899 = vmatpush1.bf16.msra.mxu0 0
  %7900 = vmatprep.subr.bf16.mxu0 0
  %7901 = vmatpush1.bf16.msra.mxu0 0
  %7902 = vmatprep.subr.bf16.mxu0 0
  %7903 = vmatpush1.bf16.msra.mxu0 0
  %7904 = vmatprep.subr.bf16.mxu0 0
  %7905 = vmatpush1.bf16.msra.mxu0 0
  %7906 = vmatprep.subr.bf16.mxu0 0
  %7907 = vmatpush1.bf16.msra.mxu0 0
  %7908 = vmatprep.subr.bf16.mxu0 0
  %7909 = vmatpush1.bf16.msra.mxu0 0
  %7910 = vmatprep.subr.bf16.mxu0 0
  %7911 = vmatpush1.bf16.msra.mxu0 0
  %7912 = vmatprep.mubr.bf16.mxu0 0
  %7913 = vmatmul.mubr.bf16.gmra.mrb[0].mxu0 %v7783
  %v7914 = vpop.f32.mrb[0].mxu0
  %v7915 = vadd.f32 0.0, %v7914
  %v7916 = vpop.f32.mrb[0].mxu0
  %v7917 = vpop.f32.mrb[0].mxu0
  %v7918 = vadd.f32 0.0, %v7917
  %v7919 = vpop.f32.mrb[0].mxu0
  %7920 = vmatprep.mubr.bf16.mxu0 0
  %7921 = vmatmul.mubr.bf16.gmra.mrb[0].mxu0 %v7784
  %v7922 = vpop.f32.mrb[0].mxu0
  %v7923 = vadd.f32 0.0, %v7922
  %v7924 = vpop.f32.mrb[0].mxu0
  %v7925 = vpop.f32.mrb[0].mxu0
  %v7926 = vadd.f32 0.0, %v7925
  %v7927 = vpop.f32.mrb[0].mxu0
  %7928 = vmatprep.mubr.bf16.mxu0 0
  %7929 = vmatmul.mubr.bf16.gmra.mrb[0].mxu0 %v7785
  %v7930 = vpop.f32.mrb[0].mxu0
  %v7931 = vadd.f32 0.0, %v7930
  %v7932 = vpop.f32.mrb[0].mxu0
  %v7933 = vpop.f32.mrb[0].mxu0
  %v7934 = vadd.f32 0.0, %v7933
  %v7935 = vpop.f32.mrb[0].mxu0
  %7936 = vmatprep.mubr.bf16.mxu0 0
  %7937 = vmatmul.mubr.bf16.gmra.mrb[0].mxu0 %v7786
  %v7938 = vpop.f32.mrb[0].mxu0
  %v7939 = vadd.f32 0.0, %v7938
  %v7940 = vpop.f32.mrb[0].mxu0
  %v7941 = vpop.f32.mrb[0].mxu0
  %v7942 = vadd.f32 0.0, %v7941
  %v7943 = vpop.f32.mrb[0].mxu0
  %7944 = vmatprep.mubr.bf16.mxu0 0
  %7945 = vmatmul.mubr.bf16.gmra.mrb[0].mxu0 %v7787
  %v7946 = vpop.f32.mrb[0].mxu0
  %v7947 = vadd.f32 0.0, %v7946
  %v7948 = vpop.f32.mrb[0].mxu0
  %v7949 = vpop.f32.mrb[0].mxu0
  %v7950 = vadd.f32 0.0, %v7949
  %v7951 = vpop.f32.mrb[0].mxu0
  %7952 = vmatprep.mubr.bf16.mxu0 0
  %7953 = vmatmul.mubr.bf16.gmra.mrb[0].mxu0 %v7788
  %v7954 = vpop.f32.mrb[0].mxu0
  %v7955 = vadd.f32 0.0, %v7954
  %v7956 = vpop.f32.mrb[0].mxu0
  %v7957 = vpop.f32.mrb[0].mxu0
  %v7958 = vadd.f32 0.0, %v7957
  %v7959 = vpop.f32.mrb[0].mxu0
  %7960 = vmatprep.mubr.bf16.mxu0 0
  %7961 = vmatmul.mubr.bf16.gmra.mrb[0].mxu0 %v7789
  %v7962 = vpop.f32.mrb[0].mxu0
  %v7963 = vadd.f32 0.0, %v7962
  %v7964 = vpop.f32.mrb[0].mxu0
  %v7965 = vpop.f32.mrb[0].mxu0
  %v7966 = vadd.f32 0.0, %v7965
  %v7967 = vpop.f32.mrb[0].mxu0
  %7968 = vmatprep.mubr.bf16.mxu0 0
  %7969 = vmatmul.mubr.bf16.gmra.mrb[0].mxu0 %v7790
  %v7970 = vpop.f32.mrb[0].mxu0
  %v7971 = vadd.f32 0.0, %v7970
  %v7972 = vpop.f32.mrb[0].mxu0
  %v7973 = vpop.f32.mrb[0].mxu0
  %v7974 = vadd.f32 0.0, %v7973
  %v7975 = vpop.f32.mrb[0].mxu0
  %7976 = vmatprep.mubr.bf16.mxu0 0
  %7977 = vmatmul.mubr.bf16.gmra.mrb[0].mxu0 %v7791
  %v7978 = vpop.f32.mrb[0].mxu0
  %v7979 = vadd.f32 0.0, %v7978
  %v7980 = vpop.f32.mrb[0].mxu0
  %v7981 = vpop.f32.mrb[0].mxu0
  %v7982 = vadd.f32 0.0, %v7981
  %v7983 = vpop.f32.mrb[0].mxu0
  %7984 = vmatprep.mubr.bf16.mxu0 0
  %7985 = vmatmul.mubr.bf16.gmra.mrb[0].mxu0 %v7792
  %v7986 = vpop.f32.mrb[0].mxu0
  %v7987 = vadd.f32 0.0, %v7986
  %v7988 = vpop.f32.mrb[0].mxu0
  %v7989 = vpop.f32.mrb[0].mxu0
  %v7990 = vadd.f32 0.0, %v7989
  %v7991 = vpop.f32.mrb[0].mxu0
  %7992 = vmatprep.mubr.bf16.mxu0 0
  %7993 = vmatmul.mubr.bf16.gmra.mrb[0].mxu0 %v7793
  %v7994 = vpop.f32.mrb[0].mxu0
  %v7995 = vadd.f32 0.0, %v7994
  %v7996 = vpop.f32.mrb[0].mxu0
  %v7997 = vpop.f32.mrb[0].mxu0
  %v7998 = vadd.f32 0.0, %v7997
  %v7999 = vpop.f32.mrb[0].mxu0
  %8000 = vmatprep.mubr.bf16.mxu0 0
  %8001 = vmatmul.mubr.bf16.gmra.mrb[0].mxu0 %v7794
  %v8002 = vpop.f32.mrb[0].mxu0
  %v8003 = vadd.f32 0.0, %v8002
  %v8004 = vpop.f32.mrb[0].mxu0
  %v8005 = vpop.f32.mrb[0].mxu0
  %v8006 = vadd.f32 0.0, %v8005
  %v8007 = vpop.f32.mrb[0].mxu0
  %8008 = vmatprep.mubr.bf16.mxu0 0
  %8009 = vmatmul.mubr.bf16.gmra.mrb[0].mxu0 %v7795
  %v8010 = vpop.f32.mrb[0].mxu0
  %v8011 = vadd.f32 0.0, %v8010
  %v8012 = vpop.f32.mrb[0].mxu0
  %v8013 = vpop.f32.mrb[0].mxu0
  %v8014 = vadd.f32 0.0, %v8013
  %v8015 = vpop.f32.mrb[0].mxu0
  %8016 = vmatprep.mubr.bf16.mxu0 0
  %8017 = vmatmul.mubr.bf16.gmra.mrb[0].mxu0 %v7796
  %v8018 = vpop.f32.mrb[0].mxu0
  %v8019 = vadd.f32 0.0, %v8018
  %v8020 = vpop.f32.mrb[0].mxu0
  %v8021 = vpop.f32.mrb[0].mxu0
  %v8022 = vadd.f32 0.0, %v8021
  %v8023 = vpop.f32.mrb[0].mxu0
  %8024 = vmatprep.mubr.bf16.mxu0 0
  %8025 = vmatmul.mubr.bf16.gmra.mrb[0].mxu0 %v7797
  %v8026 = vpop.f32.mrb[0].mxu0
  %v8027 = vadd.f32 0.0, %v8026
  %v8028 = vpop.f32.mrb[0].mxu0
  %v8029 = vpop.f32.mrb[0].mxu0
  %v8030 = vadd.f32 0.0, %v8029
  %v8031 = vpop.f32.mrb[0].mxu0
  %8032 = vmatprep.mubr.bf16.mxu0 0
  %8033 = vmatmul.mubr.bf16.gmra.mrb[0].mxu0 %v7798
  %v8034 = vpop.f32.mrb[0].mxu0
  %v8035 = vadd.f32 0.0, %v8034
  %v8036 = vpop.f32.mrb[0].mxu0
  %v8037 = vpop.f32.mrb[0].mxu0
  %v8038 = vadd.f32 0.0, %v8037
  %v8039 = vpop.f32.mrb[0].mxu0
  %8040 = vmatprep.mubr.bf16.mxu0 0
  %8041 = vmatmul.mubr.bf16.gmra.mrb[0].mxu0 %v7799
  %v8042 = vpop.f32.mrb[0].mxu0
  %v8043 = vadd.f32 0.0, %v8042
  %v8044 = vpop.f32.mrb[0].mxu0
  %v8045 = vpop.f32.mrb[0].mxu0
  %v8046 = vadd.f32 0.0, %v8045
  %v8047 = vpop.f32.mrb[0].mxu0
  %8048 = vmatprep.mubr.bf16.mxu0 0
  %8049 = vmatmul.mubr.bf16.gmra.mrb[0].mxu0 %v7800
  %v8050 = vpop.f32.mrb[0].mxu0
  %v8051 = vadd.f32 0.0, %v8050
  %v8052 = vpop.f32.mrb[0].mxu0
  %v8053 = vpop.f32.mrb[0].mxu0
  %v8054 = vadd.f32 0.0, %v8053
  %v8055 = vpop.f32.mrb[0].mxu0
  %8056 = vmatprep.mubr.bf16.mxu0 0
  %8057 = vmatmul.mubr.bf16.gmra.mrb[0].mxu0 %v7801
  %v8058 = vpop.f32.mrb[0].mxu0
  %v8059 = vadd.f32 0.0, %v8058
  %v8060 = vpop.f32.mrb[0].mxu0
  %v8061 = vpop.f32.mrb[0].mxu0
  %v8062 = vadd.f32 0.0, %v8061
  %v8063 = vpop.f32.mrb[0].mxu0
  %8064 = vmatprep.mubr.bf16.mxu0 0
  %8065 = vmatmul.mubr.bf16.gmra.mrb[0].mxu0 %v7802
  %v8066 = vpop.f32.mrb[0].mxu0
  %v8067 = vadd.f32 0.0, %v8066
  %v8068 = vpop.f32.mrb[0].mxu0
  %v8069 = vpop.f32.mrb[0].mxu0
  %v8070 = vadd.f32 0.0, %v8069
  %v8071 = vpop.f32.mrb[0].mxu0
  %8072 = vmatprep.mubr.bf16.mxu0 0
  %8073 = vmatmul.mubr.bf16.gmra.mrb[0].mxu0 %v7803
  %v8074 = vpop.f32.mrb[0].mxu0
  %v8075 = vadd.f32 0.0, %v8074
  %v8076 = vpop.f32.mrb[0].mxu0
  %v8077 = vpop.f32.mrb[0].mxu0
  %v8078 = vadd.f32 0.0, %v8077
  %v8079 = vpop.f32.mrb[0].mxu0
  %8080 = vmatprep.mubr.bf16.mxu0 0
  %8081 = vmatmul.mubr.bf16.gmra.mrb[0].mxu0 %v7804
  %v8082 = vpop.f32.mrb[0].mxu0
  %v8083 = vadd.f32 0.0, %v8082
  %v8084 = vpop.f32.mrb[0].mxu0
  %v8085 = vpop.f32.mrb[0].mxu0
  %v8086 = vadd.f32 0.0, %v8085
  %v8087 = vpop.f32.mrb[0].mxu0
  %8088 = vmatprep.mubr.bf16.mxu0 0
  %8089 = vmatmul.mubr.bf16.gmra.mrb[0].mxu0 %v7805
  %v8090 = vpop.f32.mrb[0].mxu0
  %v8091 = vadd.f32 0.0, %v8090
  %v8092 = vpop.f32.mrb[0].mxu0
  %v8093 = vpop.f32.mrb[0].mxu0
  %v8094 = vadd.f32 0.0, %v8093
  %v8095 = vpop.f32.mrb[0].mxu0
  %8096 = vmatprep.mubr.bf16.mxu0 0
  %8097 = vmatmul.mubr.bf16.gmra.mrb[0].mxu0 %v7806
  %v8098 = vpop.f32.mrb[0].mxu0
  %v8099 = vadd.f32 0.0, %v8098
  %v8100 = vpop.f32.mrb[0].mxu0
  %v8101 = vpop.f32.mrb[0].mxu0
  %v8102 = vadd.f32 0.0, %v8101
  %v8103 = vpop.f32.mrb[0].mxu0
  %8104 = vmatprep.mubr.bf16.mxu0 0
  %8105 = vmatmul.mubr.bf16.gmra.mrb[0].mxu0 %v7807
  %v8106 = vpop.f32.mrb[0].mxu0
  %v8107 = vadd.f32 0.0, %v8106
  %v8108 = vpop.f32.mrb[0].mxu0
  %v8109 = vpop.f32.mrb[0].mxu0
  %v8110 = vadd.f32 0.0, %v8109
  %v8111 = vpop.f32.mrb[0].mxu0
  %8112 = vmatprep.mubr.bf16.mxu0 0
  %8113 = vmatmul.mubr.bf16.gmra.mrb[0].mxu0 %v7808
  %v8114 = vpop.f32.mrb[0].mxu0
  %v8115 = vadd.f32 0.0, %v8114
  %v8116 = vpop.f32.mrb[0].mxu0
  %v8117 = vpop.f32.mrb[0].mxu0
  %v8118 = vadd.f32 0.0, %v8117
  %v8119 = vpop.f32.mrb[0].mxu0
  %8120 = vmatprep.mubr.bf16.mxu0 0
  %8121 = vmatmul.mubr.bf16.gmra.mrb[0].mxu0 %v7809
  %v8122 = vpop.f32.mrb[0].mxu0
  %v8123 = vadd.f32 0.0, %v8122
  %v8124 = vpop.f32.mrb[0].mxu0
  %v8125 = vpop.f32.mrb[0].mxu0
  %v8126 = vadd.f32 0.0, %v8125
  %v8127 = vpop.f32.mrb[0].mxu0
  %8128 = vmatprep.mubr.bf16.mxu0 0
  %8129 = vmatmul.mubr.bf16.gmra.mrb[0].mxu0 %v7810
  %v8130 = vpop.f32.mrb[0].mxu0
  %v8131 = vadd.f32 0.0, %v8130
  %v8132 = vpop.f32.mrb[0].mxu0
  %v8133 = vpop.f32.mrb[0].mxu0
  %v8134 = vadd.f32 0.0, %v8133
  %v8135 = vpop.f32.mrb[0].mxu0
  %8136 = vmatprep.mubr.bf16.mxu0 0
  %8137 = vmatmul.mubr.bf16.gmra.mrb[0].mxu0 %v7811
  %v8138 = vpop.f32.mrb[0].mxu0
  %v8139 = vadd.f32 0.0, %v8138
  %v8140 = vpop.f32.mrb[0].mxu0
  %v8141 = vpop.f32.mrb[0].mxu0
  %v8142 = vadd.f32 0.0, %v8141
  %v8143 = vpop.f32.mrb[0].mxu0
  %8144 = vmatprep.mubr.bf16.mxu0 0
  %8145 = vmatmul.mubr.bf16.gmra.mrb[0].mxu0 %v7812
  %v8146 = vpop.f32.mrb[0].mxu0
  %v8147 = vadd.f32 0.0, %v8146
  %v8148 = vpop.f32.mrb[0].mxu0
  %v8149 = vpop.f32.mrb[0].mxu0
  %v8150 = vadd.f32 0.0, %v8149
  %v8151 = vpop.f32.mrb[0].mxu0
  %8152 = vmatprep.mubr.bf16.mxu0 0
  %8153 = vmatmul.mubr.bf16.gmra.mrb[0].mxu0 %v7813
  %v8154 = vpop.f32.mrb[0].mxu0
  %v8155 = vadd.f32 0.0, %v8154
  %v8156 = vpop.f32.mrb[0].mxu0
  %v8157 = vpop.f32.mrb[0].mxu0
  %v8158 = vadd.f32 0.0, %v8157
  %v8159 = vpop.f32.mrb[0].mxu0
  %8160 = vmatprep.mubr.bf16.mxu0 0
  %8161 = vmatmul.mubr.bf16.gmra.mrb[0].mxu0 %v7814
  %v8162 = vpop.f32.mrb[0].mxu0
  %v8163 = vadd.f32 0.0, %v8162
  %v8164 = vpop.f32.mrb[0].mxu0
  %v8165 = vpop.f32.mrb[0].mxu0
  %v8166 = vadd.f32 0.0, %v8165
  %v8167 = vpop.f32.mrb[0].mxu0
  %8168 = vdwg.mxu0
  %v8169 = vadd.f32 %v7655, %v7915
  %v8170 = vadd.f32 %v7656, %v7918
  %v8171 = vadd.f32 %v7657, %v7923
  %v8172 = vadd.f32 %v7658, %v7926
  %v8173 = vadd.f32 %v7659, %v7931
  %v8174 = vadd.f32 %v7660, %v7934
  %v8175 = vadd.f32 %v7661, %v7939
  %v8176 = vadd.f32 %v7662, %v7942
  %v8177 = vadd.f32 %v7663, %v7947
  %v8178 = vadd.f32 %v7664, %v7950
  %v8179 = vadd.f32 %v7665, %v7955
  %v8180 = vadd.f32 %v7666, %v7958
  %v8181 = vadd.f32 %v7667, %v7963
  %v8182 = vadd.f32 %v7668, %v7966
  %v8183 = vadd.f32 %v7669, %v7971
  %v8184 = vadd.f32 %v7670, %v7974
  %v8185 = vadd.f32 %v7671, %v7979
  %v8186 = vadd.f32 %v7672, %v7982
  %v8187 = vadd.f32 %v7673, %v7987
  %v8188 = vadd.f32 %v7674, %v7990
  %v8189 = vadd.f32 %v7675, %v7995
  %v8190 = vadd.f32 %v7676, %v7998
  %v8191 = vadd.f32 %v7677, %v8003
  %v8192 = vadd.f32 %v7678, %v8006
  %v8193 = vadd.f32 %v7679, %v8011
  %v8194 = vadd.f32 %v7680, %v8014
  %v8195 = vadd.f32 %v7681, %v8019
  %v8196 = vadd.f32 %v7682, %v8022
  %v8197 = vadd.f32 %v7683, %v8027
  %v8198 = vadd.f32 %v7684, %v8030
  %v8199 = vadd.f32 %v7685, %v8035
  %v8200 = vadd.f32 %v7686, %v8038
  %v8201 = vadd.f32 %v7687, %v8043
  %v8202 = vadd.f32 %v7688, %v8046
  %v8203 = vadd.f32 %v7689, %v8051
  %v8204 = vadd.f32 %v7690, %v8054
  %v8205 = vadd.f32 %v7691, %v8059
  %v8206 = vadd.f32 %v7692, %v8062
  %v8207 = vadd.f32 %v7693, %v8067
  %v8208 = vadd.f32 %v7694, %v8070
  %v8209 = vadd.f32 %v7695, %v8075
  %v8210 = vadd.f32 %v7696, %v8078
  %v8211 = vadd.f32 %v7697, %v8083
  %v8212 = vadd.f32 %v7698, %v8086
  %v8213 = vadd.f32 %v7699, %v8091
  %v8214 = vadd.f32 %v7700, %v8094
  %v8215 = vadd.f32 %v7701, %v8099
  %v8216 = vadd.f32 %v7702, %v8102
  %v8217 = vadd.f32 %v7703, %v8107
  %v8218 = vadd.f32 %v7704, %v8110
  %v8219 = vadd.f32 %v7705, %v8115
  %v8220 = vadd.f32 %v7706, %v8118
  %v8221 = vadd.f32 %v7707, %v8123
  %v8222 = vadd.f32 %v7708, %v8126
  %v8223 = vadd.f32 %v7709, %v8131
  %v8224 = vadd.f32 %v7710, %v8134
  %v8225 = vadd.f32 %v7711, %v8139
  %v8226 = vadd.f32 %v7712, %v8142
  %v8227 = vadd.f32 %v7713, %v8147
  %v8228 = vadd.f32 %v7714, %v8150
  %v8229 = vadd.f32 %v7715, %v8155
  %v8230 = vadd.f32 %v7716, %v8158
  %v8231 = vadd.f32 %v7717, %v8163
  %v8232 = vadd.f32 %v7718, %v8166
  %v8233 = vld [vmem:[%s3196] sm:$0xff]
  %v8234 = vld [vmem:[%s3196 + $0x8] sm:$0xff]
  %v8235 = vld [vmem:[%s3196 + $0x18] sm:$0xff]
  %v8236 = vld [vmem:[%s3196 + $0x20] sm:$0xff]
  %v8237 = vld [vmem:[%s3196 + $0x30] sm:$0xff]
  %v8238 = vld [vmem:[%s3196 + $0x38] sm:$0xff]
  %v8239 = vld [vmem:[%s3196 + $0x48] sm:$0xff]
  %v8240 = vld [vmem:[%s3196 + $0x50] sm:$0xff]
  %v8241 = vld [vmem:[%s3196 + $0x60] sm:$0xff]
  %v8242 = vld [vmem:[%s3196 + $0x68] sm:$0xff]
  %v8243 = vld [vmem:[%s3196 + $0x78] sm:$0xff]
  %v8244 = vld [vmem:[%s3196 + $0x80] sm:$0xff]
  %v8245 = vld [vmem:[%s3196 + $0x90] sm:$0xff]
  %v8246 = vld [vmem:[%s3196 + $0x98] sm:$0xff]
  %v8247 = vld [vmem:[%s3196 + $0xa8] sm:$0xff]
  %v8248 = vld [vmem:[%s3196 + $0xb0] sm:$0xff]
  %v8249 = vld [vmem:[%s3196 + $0xc0] sm:$0xff]
  %v8250 = vld [vmem:[%s3196 + $0xc8] sm:$0xff]
  %v8251 = vld [vmem:[%s3196 + $0xd8] sm:$0xff]
  %v8252 = vld [vmem:[%s3196 + $0xe0] sm:$0xff]
  %v8253 = vld [vmem:[%s3196 + $0xf0] sm:$0xff]
  %v8254 = vld [vmem:[%s3196 + $0xf8] sm:$0xff]
  %v8255 = vld [vmem:[%s3196 + $0x108] sm:$0xff]
  %v8256 = vld [vmem:[%s3196 + $0x110] sm:$0xff]
  %v8257 = vld [vmem:[%s3196 + $0x120] sm:$0xff]
  %v8258 = vld [vmem:[%s3196 + $0x128] sm:$0xff]
  %v8259 = vld [vmem:[%s3196 + $0x138] sm:$0xff]
  %v8260 = vld [vmem:[%s3196 + $0x140] sm:$0xff]
  %v8261 = vld [vmem:[%s3196 + $0x150] sm:$0xff]
  %v8262 = vld [vmem:[%s3196 + $0x158] sm:$0xff]
  %v8263 = vld [vmem:[%s3196 + $0x168] sm:$0xff]
  %v8264 = vld [vmem:[%s3196 + $0x170] sm:$0xff]
  %v8265 = vld [vmem:[%s3196 + $0x1b0] sm:$0xff]
  %v8266 = vld [vmem:[%s3196 + $0x1b8] sm:$0xff]
  %v8267 = vld [vmem:[%s3196 + $0x1c8] sm:$0xff]
  %v8268 = vld [vmem:[%s3196 + $0x1d0] sm:$0xff]
  %v8269 = vld [vmem:[%s3196 + $0x1e0] sm:$0xff]
  %v8270 = vld [vmem:[%s3196 + $0x1e8] sm:$0xff]
  %v8271 = vld [vmem:[%s3196 + $0x1f8] sm:$0xff]
  %v8272 = vld [vmem:[%s3196 + $0x200] sm:$0xff]
  %v8273 = vld [vmem:[%s3196 + $0x210] sm:$0xff]
  %v8274 = vld [vmem:[%s3196 + $0x218] sm:$0xff]
  %v8275 = vld [vmem:[%s3196 + $0x228] sm:$0xff]
  %v8276 = vld [vmem:[%s3196 + $0x230] sm:$0xff]
  %v8277 = vld [vmem:[%s3196 + $0x240] sm:$0xff]
  %v8278 = vld [vmem:[%s3196 + $0x248] sm:$0xff]
  %v8279 = vld [vmem:[%s3196 + $0x258] sm:$0xff]
  %v8280 = vld [vmem:[%s3196 + $0x260] sm:$0xff]
  %v8281 = vld [vmem:[%s3196 + $0x270] sm:$0xff]
  %v8282 = vld [vmem:[%s3196 + $0x278] sm:$0xff]
  %v8283 = vld [vmem:[%s3196 + $0x288] sm:$0xff]
  %v8284 = vld [vmem:[%s3196 + $0x290] sm:$0xff]
  %v8285 = vld [vmem:[%s3196 + $0x2a0] sm:$0xff]
  %v8286 = vld [vmem:[%s3196 + $0x2a8] sm:$0xff]
  %v8287 = vld [vmem:[%s3196 + $0x2b8] sm:$0xff]
  %v8288 = vld [vmem:[%s3196 + $0x2c0] sm:$0xff]
  %v8289 = vld [vmem:[%s3196 + $0x2d0] sm:$0xff]
  %v8290 = vld [vmem:[%s3196 + $0x2d8] sm:$0xff]
  %v8291 = vld [vmem:[%s3196 + $0x2e8] sm:$0xff]
  %v8292 = vld [vmem:[%s3196 + $0x2f0] sm:$0xff]
  %v8293 = vld [vmem:[%s3196 + $0x300] sm:$0xff]
  %v8294 = vld [vmem:[%s3196 + $0x308] sm:$0xff]
  %v8295 = vld [vmem:[%s3196 + $0x318] sm:$0xff]
  %v8296 = vld [vmem:[%s3196 + $0x320] sm:$0xff]
  %v8297 = vpack.c.bf16 %v8234, %v8233
  %v8298 = vpack.c.bf16 %v8236, %v8235
  %v8299 = vpack.c.bf16 %v8238, %v8237
  %v8300 = vpack.c.bf16 %v8240, %v8239
  %v8301 = vpack.c.bf16 %v8242, %v8241
  %v8302 = vpack.c.bf16 %v8244, %v8243
  %v8303 = vpack.c.bf16 %v8246, %v8245
  %v8304 = vpack.c.bf16 %v8248, %v8247
  %v8305 = vpack.c.bf16 %v8250, %v8249
  %v8306 = vpack.c.bf16 %v8252, %v8251
  %v8307 = vpack.c.bf16 %v8254, %v8253
  %v8308 = vpack.c.bf16 %v8256, %v8255
  %v8309 = vpack.c.bf16 %v8258, %v8257
  %v8310 = vpack.c.bf16 %v8260, %v8259
  %v8311 = vpack.c.bf16 %v8262, %v8261
  %v8312 = vpack.c.bf16 %v8264, %v8263
  %v8313 = vpack.c.bf16 %v8266, %v8265
  %v8314 = vpack.c.bf16 %v8268, %v8267
  %v8315 = vpack.c.bf16 %v8270, %v8269
  %v8316 = vpack.c.bf16 %v8272, %v8271
  %v8317 = vpack.c.bf16 %v8274, %v8273
  %v8318 = vpack.c.bf16 %v8276, %v8275
  %v8319 = vpack.c.bf16 %v8278, %v8277
  %v8320 = vpack.c.bf16 %v8280, %v8279
  %v8321 = vpack.c.bf16 %v8282, %v8281
  %v8322 = vpack.c.bf16 %v8284, %v8283
  %v8323 = vpack.c.bf16 %v8286, %v8285
  %v8324 = vpack.c.bf16 %v8288, %v8287
  %v8325 = vpack.c.bf16 %v8290, %v8289
  %v8326 = vpack.c.bf16 %v8292, %v8291
  %v8327 = vpack.c.bf16 %v8294, %v8293
  %v8328 = vpack.c.bf16 %v8296, %v8295
  %s8329 = scalar_lea.vmem %s4, 384
  %v8330 = vld [vmem:[%s8329] sm:$0xf]
  %v8331 = vld [vmem:[%s8329 + $0x4] sm:$0xf]
  %v8332 = vld [vmem:[%s8329 + $0x8] sm:$0xf]
  %v8333 = vld [vmem:[%s8329 + $0xc] sm:$0xf]
  %v8334 = vld [vmem:[%s8329 + $0x10] sm:$0xf]
  %v8335 = vld [vmem:[%s8329 + $0x14] sm:$0xf]
  %v8336 = vld [vmem:[%s8329 + $0x18] sm:$0xf]
  %v8337 = vld [vmem:[%s8329 + $0x1c] sm:$0xf]
  %v8338 = vld [vmem:[%s8329 + $0x20] sm:$0xf]
  %v8339 = vld [vmem:[%s8329 + $0x24] sm:$0xf]
  %v8340 = vld [vmem:[%s8329 + $0x28] sm:$0xf]
  %v8341 = vld [vmem:[%s8329 + $0x2c] sm:$0xf]
  %v8342 = vld [vmem:[%s8329 + $0x30] sm:$0xf]
  %v8343 = vld [vmem:[%s8329 + $0x34] sm:$0xf]
  %v8344 = vld [vmem:[%s8329 + $0x38] sm:$0xf]
  %v8345 = vld [vmem:[%s8329 + $0x3c] sm:$0xf]
  %v8362 = vunpack.c.l.b16 %v8330
  %v8363 = vunpack.c.l.b16 %v8331
  %v8364 = vunpack.c.l.b16 %v8332
  %v8365 = vunpack.c.l.b16 %v8333
  %v8366 = vunpack.c.l.b16 %v8334
  %v8367 = vunpack.c.l.b16 %v8335
  %v8368 = vunpack.c.l.b16 %v8336
  %v8369 = vunpack.c.l.b16 %v8337
  %v8370 = vunpack.c.l.b16 %v8338
  %v8371 = vunpack.c.l.b16 %v8339
  %v8372 = vunpack.c.l.b16 %v8340
  %v8373 = vunpack.c.l.b16 %v8341
  %v8374 = vunpack.c.l.b16 %v8342
  %v8375 = vunpack.c.l.b16 %v8343
  %v8376 = vunpack.c.l.b16 %v8344
  %v8377 = vunpack.c.l.b16 %v8345
  %v8378 = vpack.c.b16 %v8363, %v8362
  %v8379 = vpack.c.b16 %v8365, %v8364
  %v8380 = vpack.c.b16 %v8367, %v8366
  %v8381 = vpack.c.b16 %v8369, %v8368
  %v8382 = vpack.c.b16 %v8371, %v8370
  %v8383 = vpack.c.b16 %v8373, %v8372
  %v8384 = vpack.c.b16 %v8375, %v8374
  %v8385 = vpack.c.b16 %v8377, %v8376
  %8394 = vmatprep.subr.bf16.mxu0 0
  %8395 = vmatpush1.bf16.msra.mxu0 %v8378
  %8396 = vmatprep.subr.bf16.mxu0 0
  %8397 = vmatpush1.bf16.msra.mxu0 %v8379
  %8398 = vmatprep.subr.bf16.mxu0 0
  %8399 = vmatpush1.bf16.msra.mxu0 %v8380
  %8400 = vmatprep.subr.bf16.mxu0 0
  %8401 = vmatpush1.bf16.msra.mxu0 %v8381
  %8402 = vmatprep.subr.bf16.mxu0 0
  %8403 = vmatpush1.bf16.msra.mxu0 %v8382
  %8404 = vmatprep.subr.bf16.mxu0 0
  %8405 = vmatpush1.bf16.msra.mxu0 %v8383
  %8406 = vmatprep.subr.bf16.mxu0 0
  %8407 = vmatpush1.bf16.msra.mxu0 %v8384
  %8408 = vmatprep.subr.bf16.mxu0 0
  %8409 = vmatpush1.bf16.msra.mxu0 %v8385
  %8410 = vmatprep.subr.bf16.mxu0 0
  %8411 = vmatpush1.bf16.msra.mxu0 0
  %8412 = vmatprep.subr.bf16.mxu0 0
  %8413 = vmatpush1.bf16.msra.mxu0 0
  %8414 = vmatprep.subr.bf16.mxu0 0
  %8415 = vmatpush1.bf16.msra.mxu0 0
  %8416 = vmatprep.subr.bf16.mxu0 0
  %8417 = vmatpush1.bf16.msra.mxu0 0
  %8418 = vmatprep.subr.bf16.mxu0 0
  %8419 = vmatpush1.bf16.msra.mxu0 0
  %8420 = vmatprep.subr.bf16.mxu0 0
  %8421 = vmatpush1.bf16.msra.mxu0 0
  %8422 = vmatprep.subr.bf16.mxu0 0
  %8423 = vmatpush1.bf16.msra.mxu0 0
  %8424 = vmatprep.subr.bf16.mxu0 0
  %8425 = vmatpush1.bf16.msra.mxu0 0
  %8426 = vmatprep.mubr.bf16.mxu0 0
  %8427 = vmatmul.mubr.bf16.gmra.mrb[0].mxu0 %v8297
  %v8428 = vpop.f32.mrb[0].mxu0
  %v8429 = vadd.f32 0.0, %v8428
  %v8430 = vpop.f32.mrb[0].mxu0
  %v8431 = vpop.f32.mrb[0].mxu0
  %v8432 = vadd.f32 0.0, %v8431
  %v8433 = vpop.f32.mrb[0].mxu0
  %8434 = vmatprep.mubr.bf16.mxu0 0
  %8435 = vmatmul.mubr.bf16.gmra.mrb[0].mxu0 %v8298
  %v8436 = vpop.f32.mrb[0].mxu0
  %v8437 = vadd.f32 0.0, %v8436
  %v8438 = vpop.f32.mrb[0].mxu0
  %v8439 = vpop.f32.mrb[0].mxu0
  %v8440 = vadd.f32 0.0, %v8439
  %v8441 = vpop.f32.mrb[0].mxu0
  %8442 = vmatprep.mubr.bf16.mxu0 0
  %8443 = vmatmul.mubr.bf16.gmra.mrb[0].mxu0 %v8299
  %v8444 = vpop.f32.mrb[0].mxu0
  %v8445 = vadd.f32 0.0, %v8444
  %v8446 = vpop.f32.mrb[0].mxu0
  %v8447 = vpop.f32.mrb[0].mxu0
  %v8448 = vadd.f32 0.0, %v8447
  %v8449 = vpop.f32.mrb[0].mxu0
  %8450 = vmatprep.mubr.bf16.mxu0 0
  %8451 = vmatmul.mubr.bf16.gmra.mrb[0].mxu0 %v8300
  %v8452 = vpop.f32.mrb[0].mxu0
  %v8453 = vadd.f32 0.0, %v8452
  %v8454 = vpop.f32.mrb[0].mxu0
  %v8455 = vpop.f32.mrb[0].mxu0
  %v8456 = vadd.f32 0.0, %v8455
  %v8457 = vpop.f32.mrb[0].mxu0
  %8458 = vmatprep.mubr.bf16.mxu0 0
  %8459 = vmatmul.mubr.bf16.gmra.mrb[0].mxu0 %v8301
  %v8460 = vpop.f32.mrb[0].mxu0
  %v8461 = vadd.f32 0.0, %v8460
  %v8462 = vpop.f32.mrb[0].mxu0
  %v8463 = vpop.f32.mrb[0].mxu0
  %v8464 = vadd.f32 0.0, %v8463
  %v8465 = vpop.f32.mrb[0].mxu0
  %8466 = vmatprep.mubr.bf16.mxu0 0
  %8467 = vmatmul.mubr.bf16.gmra.mrb[0].mxu0 %v8302
  %v8468 = vpop.f32.mrb[0].mxu0
  %v8469 = vadd.f32 0.0, %v8468
  %v8470 = vpop.f32.mrb[0].mxu0
  %v8471 = vpop.f32.mrb[0].mxu0
  %v8472 = vadd.f32 0.0, %v8471
  %v8473 = vpop.f32.mrb[0].mxu0
  %8474 = vmatprep.mubr.bf16.mxu0 0
  %8475 = vmatmul.mubr.bf16.gmra.mrb[0].mxu0 %v8303
  %v8476 = vpop.f32.mrb[0].mxu0
  %v8477 = vadd.f32 0.0, %v8476
  %v8478 = vpop.f32.mrb[0].mxu0
  %v8479 = vpop.f32.mrb[0].mxu0
  %v8480 = vadd.f32 0.0, %v8479
  %v8481 = vpop.f32.mrb[0].mxu0
  %8482 = vmatprep.mubr.bf16.mxu0 0
  %8483 = vmatmul.mubr.bf16.gmra.mrb[0].mxu0 %v8304
  %v8484 = vpop.f32.mrb[0].mxu0
  %v8485 = vadd.f32 0.0, %v8484
  %v8486 = vpop.f32.mrb[0].mxu0
  %v8487 = vpop.f32.mrb[0].mxu0
  %v8488 = vadd.f32 0.0, %v8487
  %v8489 = vpop.f32.mrb[0].mxu0
  %8490 = vmatprep.mubr.bf16.mxu0 0
  %8491 = vmatmul.mubr.bf16.gmra.mrb[0].mxu0 %v8305
  %v8492 = vpop.f32.mrb[0].mxu0
  %v8493 = vadd.f32 0.0, %v8492
  %v8494 = vpop.f32.mrb[0].mxu0
  %v8495 = vpop.f32.mrb[0].mxu0
  %v8496 = vadd.f32 0.0, %v8495
  %v8497 = vpop.f32.mrb[0].mxu0
  %8498 = vmatprep.mubr.bf16.mxu0 0
  %8499 = vmatmul.mubr.bf16.gmra.mrb[0].mxu0 %v8306
  %v8500 = vpop.f32.mrb[0].mxu0
  %v8501 = vadd.f32 0.0, %v8500
  %v8502 = vpop.f32.mrb[0].mxu0
  %v8503 = vpop.f32.mrb[0].mxu0
  %v8504 = vadd.f32 0.0, %v8503
  %v8505 = vpop.f32.mrb[0].mxu0
  %8506 = vmatprep.mubr.bf16.mxu0 0
  %8507 = vmatmul.mubr.bf16.gmra.mrb[0].mxu0 %v8307
  %v8508 = vpop.f32.mrb[0].mxu0
  %v8509 = vadd.f32 0.0, %v8508
  %v8510 = vpop.f32.mrb[0].mxu0
  %v8511 = vpop.f32.mrb[0].mxu0
  %v8512 = vadd.f32 0.0, %v8511
  %v8513 = vpop.f32.mrb[0].mxu0
  %8514 = vmatprep.mubr.bf16.mxu0 0
  %8515 = vmatmul.mubr.bf16.gmra.mrb[0].mxu0 %v8308
  %v8516 = vpop.f32.mrb[0].mxu0
  %v8517 = vadd.f32 0.0, %v8516
  %v8518 = vpop.f32.mrb[0].mxu0
  %v8519 = vpop.f32.mrb[0].mxu0
  %v8520 = vadd.f32 0.0, %v8519
  %v8521 = vpop.f32.mrb[0].mxu0
  %8522 = vmatprep.mubr.bf16.mxu0 0
  %8523 = vmatmul.mubr.bf16.gmra.mrb[0].mxu0 %v8309
  %v8524 = vpop.f32.mrb[0].mxu0
  %v8525 = vadd.f32 0.0, %v8524
  %v8526 = vpop.f32.mrb[0].mxu0
  %v8527 = vpop.f32.mrb[0].mxu0
  %v8528 = vadd.f32 0.0, %v8527
  %v8529 = vpop.f32.mrb[0].mxu0
  %8530 = vmatprep.mubr.bf16.mxu0 0
  %8531 = vmatmul.mubr.bf16.gmra.mrb[0].mxu0 %v8310
  %v8532 = vpop.f32.mrb[0].mxu0
  %v8533 = vadd.f32 0.0, %v8532
  %v8534 = vpop.f32.mrb[0].mxu0
  %v8535 = vpop.f32.mrb[0].mxu0
  %v8536 = vadd.f32 0.0, %v8535
  %v8537 = vpop.f32.mrb[0].mxu0
  %8538 = vmatprep.mubr.bf16.mxu0 0
  %8539 = vmatmul.mubr.bf16.gmra.mrb[0].mxu0 %v8311
  %v8540 = vpop.f32.mrb[0].mxu0
  %v8541 = vadd.f32 0.0, %v8540
  %v8542 = vpop.f32.mrb[0].mxu0
  %v8543 = vpop.f32.mrb[0].mxu0
  %v8544 = vadd.f32 0.0, %v8543
  %v8545 = vpop.f32.mrb[0].mxu0
  %8546 = vmatprep.mubr.bf16.mxu0 0
  %8547 = vmatmul.mubr.bf16.gmra.mrb[0].mxu0 %v8312
  %v8548 = vpop.f32.mrb[0].mxu0
  %v8549 = vadd.f32 0.0, %v8548
  %v8550 = vpop.f32.mrb[0].mxu0
  %v8551 = vpop.f32.mrb[0].mxu0
  %v8552 = vadd.f32 0.0, %v8551
  %v8553 = vpop.f32.mrb[0].mxu0
  %8554 = vmatprep.mubr.bf16.mxu0 0
  %8555 = vmatmul.mubr.bf16.gmra.mrb[0].mxu0 %v8313
  %v8556 = vpop.f32.mrb[0].mxu0
  %v8557 = vadd.f32 0.0, %v8556
  %v8558 = vpop.f32.mrb[0].mxu0
  %v8559 = vpop.f32.mrb[0].mxu0
  %v8560 = vadd.f32 0.0, %v8559
  %v8561 = vpop.f32.mrb[0].mxu0
  %8562 = vmatprep.mubr.bf16.mxu0 0
  %8563 = vmatmul.mubr.bf16.gmra.mrb[0].mxu0 %v8314
  %v8564 = vpop.f32.mrb[0].mxu0
  %v8565 = vadd.f32 0.0, %v8564
  %v8566 = vpop.f32.mrb[0].mxu0
  %v8567 = vpop.f32.mrb[0].mxu0
  %v8568 = vadd.f32 0.0, %v8567
  %v8569 = vpop.f32.mrb[0].mxu0
  %8570 = vmatprep.mubr.bf16.mxu0 0
  %8571 = vmatmul.mubr.bf16.gmra.mrb[0].mxu0 %v8315
  %v8572 = vpop.f32.mrb[0].mxu0
  %v8573 = vadd.f32 0.0, %v8572
  %v8574 = vpop.f32.mrb[0].mxu0
  %v8575 = vpop.f32.mrb[0].mxu0
  %v8576 = vadd.f32 0.0, %v8575
  %v8577 = vpop.f32.mrb[0].mxu0
  %8578 = vmatprep.mubr.bf16.mxu0 0
  %8579 = vmatmul.mubr.bf16.gmra.mrb[0].mxu0 %v8316
  %v8580 = vpop.f32.mrb[0].mxu0
  %v8581 = vadd.f32 0.0, %v8580
  %v8582 = vpop.f32.mrb[0].mxu0
  %v8583 = vpop.f32.mrb[0].mxu0
  %v8584 = vadd.f32 0.0, %v8583
  %v8585 = vpop.f32.mrb[0].mxu0
  %8586 = vmatprep.mubr.bf16.mxu0 0
  %8587 = vmatmul.mubr.bf16.gmra.mrb[0].mxu0 %v8317
  %v8588 = vpop.f32.mrb[0].mxu0
  %v8589 = vadd.f32 0.0, %v8588
  %v8590 = vpop.f32.mrb[0].mxu0
  %v8591 = vpop.f32.mrb[0].mxu0
  %v8592 = vadd.f32 0.0, %v8591
  %v8593 = vpop.f32.mrb[0].mxu0
  %8594 = vmatprep.mubr.bf16.mxu0 0
  %8595 = vmatmul.mubr.bf16.gmra.mrb[0].mxu0 %v8318
  %v8596 = vpop.f32.mrb[0].mxu0
  %v8597 = vadd.f32 0.0, %v8596
  %v8598 = vpop.f32.mrb[0].mxu0
  %v8599 = vpop.f32.mrb[0].mxu0
  %v8600 = vadd.f32 0.0, %v8599
  %v8601 = vpop.f32.mrb[0].mxu0
  %8602 = vmatprep.mubr.bf16.mxu0 0
  %8603 = vmatmul.mubr.bf16.gmra.mrb[0].mxu0 %v8319
  %v8604 = vpop.f32.mrb[0].mxu0
  %v8605 = vadd.f32 0.0, %v8604
  %v8606 = vpop.f32.mrb[0].mxu0
  %v8607 = vpop.f32.mrb[0].mxu0
  %v8608 = vadd.f32 0.0, %v8607
  %v8609 = vpop.f32.mrb[0].mxu0
  %8610 = vmatprep.mubr.bf16.mxu0 0
  %8611 = vmatmul.mubr.bf16.gmra.mrb[0].mxu0 %v8320
  %v8612 = vpop.f32.mrb[0].mxu0
  %v8613 = vadd.f32 0.0, %v8612
  %v8614 = vpop.f32.mrb[0].mxu0
  %v8615 = vpop.f32.mrb[0].mxu0
  %v8616 = vadd.f32 0.0, %v8615
  %v8617 = vpop.f32.mrb[0].mxu0
  %8618 = vmatprep.mubr.bf16.mxu0 0
  %8619 = vmatmul.mubr.bf16.gmra.mrb[0].mxu0 %v8321
  %v8620 = vpop.f32.mrb[0].mxu0
  %v8621 = vadd.f32 0.0, %v8620
  %v8622 = vpop.f32.mrb[0].mxu0
  %v8623 = vpop.f32.mrb[0].mxu0
  %v8624 = vadd.f32 0.0, %v8623
  %v8625 = vpop.f32.mrb[0].mxu0
  %8626 = vmatprep.mubr.bf16.mxu0 0
  %8627 = vmatmul.mubr.bf16.gmra.mrb[0].mxu0 %v8322
  %v8628 = vpop.f32.mrb[0].mxu0
  %v8629 = vadd.f32 0.0, %v8628
  %v8630 = vpop.f32.mrb[0].mxu0
  %v8631 = vpop.f32.mrb[0].mxu0
  %v8632 = vadd.f32 0.0, %v8631
  %v8633 = vpop.f32.mrb[0].mxu0
  %8634 = vmatprep.mubr.bf16.mxu0 0
  %8635 = vmatmul.mubr.bf16.gmra.mrb[0].mxu0 %v8323
  %v8636 = vpop.f32.mrb[0].mxu0
  %v8637 = vadd.f32 0.0, %v8636
  %v8638 = vpop.f32.mrb[0].mxu0
  %v8639 = vpop.f32.mrb[0].mxu0
  %v8640 = vadd.f32 0.0, %v8639
  %v8641 = vpop.f32.mrb[0].mxu0
  %8642 = vmatprep.mubr.bf16.mxu0 0
  %8643 = vmatmul.mubr.bf16.gmra.mrb[0].mxu0 %v8324
  %v8644 = vpop.f32.mrb[0].mxu0
  %v8645 = vadd.f32 0.0, %v8644
  %v8646 = vpop.f32.mrb[0].mxu0
  %v8647 = vpop.f32.mrb[0].mxu0
  %v8648 = vadd.f32 0.0, %v8647
  %v8649 = vpop.f32.mrb[0].mxu0
  %8650 = vmatprep.mubr.bf16.mxu0 0
  %8651 = vmatmul.mubr.bf16.gmra.mrb[0].mxu0 %v8325
  %v8652 = vpop.f32.mrb[0].mxu0
  %v8653 = vadd.f32 0.0, %v8652
  %v8654 = vpop.f32.mrb[0].mxu0
  %v8655 = vpop.f32.mrb[0].mxu0
  %v8656 = vadd.f32 0.0, %v8655
  %v8657 = vpop.f32.mrb[0].mxu0
  %8658 = vmatprep.mubr.bf16.mxu0 0
  %8659 = vmatmul.mubr.bf16.gmra.mrb[0].mxu0 %v8326
  %v8660 = vpop.f32.mrb[0].mxu0
  %v8661 = vadd.f32 0.0, %v8660
  %v8662 = vpop.f32.mrb[0].mxu0
  %v8663 = vpop.f32.mrb[0].mxu0
  %v8664 = vadd.f32 0.0, %v8663
  %v8665 = vpop.f32.mrb[0].mxu0
  %8666 = vmatprep.mubr.bf16.mxu0 0
  %8667 = vmatmul.mubr.bf16.gmra.mrb[0].mxu0 %v8327
  %v8668 = vpop.f32.mrb[0].mxu0
  %v8669 = vadd.f32 0.0, %v8668
  %v8670 = vpop.f32.mrb[0].mxu0
  %v8671 = vpop.f32.mrb[0].mxu0
  %v8672 = vadd.f32 0.0, %v8671
  %v8673 = vpop.f32.mrb[0].mxu0
  %8674 = vmatprep.mubr.bf16.mxu0 0
  %8675 = vmatmul.mubr.bf16.gmra.mrb[0].mxu0 %v8328
  %v8676 = vpop.f32.mrb[0].mxu0
  %v8677 = vadd.f32 0.0, %v8676
  %v8678 = vpop.f32.mrb[0].mxu0
  %v8679 = vpop.f32.mrb[0].mxu0
  %v8680 = vadd.f32 0.0, %v8679
  %v8681 = vpop.f32.mrb[0].mxu0
  %8682 = vdwg.mxu0
  %v8683 = vadd.f32 %v8169, %v8429
  %v8684 = vadd.f32 %v8170, %v8432
  %v8685 = vadd.f32 %v8171, %v8437
  %v8686 = vadd.f32 %v8172, %v8440
  %v8687 = vadd.f32 %v8173, %v8445
  %v8688 = vadd.f32 %v8174, %v8448
  %v8689 = vadd.f32 %v8175, %v8453
  %v8690 = vadd.f32 %v8176, %v8456
  %v8691 = vadd.f32 %v8177, %v8461
  %v8692 = vadd.f32 %v8178, %v8464
  %v8693 = vadd.f32 %v8179, %v8469
  %v8694 = vadd.f32 %v8180, %v8472
  %v8695 = vadd.f32 %v8181, %v8477
  %v8696 = vadd.f32 %v8182, %v8480
  %v8697 = vadd.f32 %v8183, %v8485
  %v8698 = vadd.f32 %v8184, %v8488
  %v8699 = vadd.f32 %v8185, %v8493
  %v8700 = vadd.f32 %v8186, %v8496
  %v8701 = vadd.f32 %v8187, %v8501
  %v8702 = vadd.f32 %v8188, %v8504
  %v8703 = vadd.f32 %v8189, %v8509
  %v8704 = vadd.f32 %v8190, %v8512
  %v8705 = vadd.f32 %v8191, %v8517
  %v8706 = vadd.f32 %v8192, %v8520
  %v8707 = vadd.f32 %v8193, %v8525
  %v8708 = vadd.f32 %v8194, %v8528
  %v8709 = vadd.f32 %v8195, %v8533
  %v8710 = vadd.f32 %v8196, %v8536
  %v8711 = vadd.f32 %v8197, %v8541
  %v8712 = vadd.f32 %v8198, %v8544
  %v8713 = vadd.f32 %v8199, %v8549
  %v8714 = vadd.f32 %v8200, %v8552
  %v8715 = vadd.f32 %v8201, %v8557
  %v8716 = vadd.f32 %v8202, %v8560
  %v8717 = vadd.f32 %v8203, %v8565
  %v8718 = vadd.f32 %v8204, %v8568
  %v8719 = vadd.f32 %v8205, %v8573
  %v8720 = vadd.f32 %v8206, %v8576
  %v8721 = vadd.f32 %v8207, %v8581
  %v8722 = vadd.f32 %v8208, %v8584
  %v8723 = vadd.f32 %v8209, %v8589
  %v8724 = vadd.f32 %v8210, %v8592
  %v8725 = vadd.f32 %v8211, %v8597
  %v8726 = vadd.f32 %v8212, %v8600
  %v8727 = vadd.f32 %v8213, %v8605
  %v8728 = vadd.f32 %v8214, %v8608
  %v8729 = vadd.f32 %v8215, %v8613
  %v8730 = vadd.f32 %v8216, %v8616
  %v8731 = vadd.f32 %v8217, %v8621
  %v8732 = vadd.f32 %v8218, %v8624
  %v8733 = vadd.f32 %v8219, %v8629
  %v8734 = vadd.f32 %v8220, %v8632
  %v8735 = vadd.f32 %v8221, %v8637
  %v8736 = vadd.f32 %v8222, %v8640
  %v8737 = vadd.f32 %v8223, %v8645
  %v8738 = vadd.f32 %v8224, %v8648
  %v8739 = vadd.f32 %v8225, %v8653
  %v8740 = vadd.f32 %v8226, %v8656
  %v8741 = vadd.f32 %v8227, %v8661
  %v8742 = vadd.f32 %v8228, %v8664
  %v8743 = vadd.f32 %v8229, %v8669
  %v8744 = vadd.f32 %v8230, %v8672
  %v8745 = vadd.f32 %v8231, %v8677
  %v8746 = vadd.f32 %v8232, %v8680
  %v8747 = vld [vmem:[%s3196 + $0x1] sm:$0xff]
  %v8748 = vld [vmem:[%s3196 + $0x9] sm:$0xff]
  %v8749 = vld [vmem:[%s3196 + $0x19] sm:$0xff]
  %v8750 = vld [vmem:[%s3196 + $0x21] sm:$0xff]
  %v8751 = vld [vmem:[%s3196 + $0x31] sm:$0xff]
  %v8752 = vld [vmem:[%s3196 + $0x39] sm:$0xff]
  %v8753 = vld [vmem:[%s3196 + $0x49] sm:$0xff]
  %v8754 = vld [vmem:[%s3196 + $0x51] sm:$0xff]
  %v8755 = vld [vmem:[%s3196 + $0x61] sm:$0xff]
  %v8756 = vld [vmem:[%s3196 + $0x69] sm:$0xff]
  %v8757 = vld [vmem:[%s3196 + $0x79] sm:$0xff]
  %v8758 = vld [vmem:[%s3196 + $0x81] sm:$0xff]
  %v8759 = vld [vmem:[%s3196 + $0x91] sm:$0xff]
  %v8760 = vld [vmem:[%s3196 + $0x99] sm:$0xff]
  %v8761 = vld [vmem:[%s3196 + $0xa9] sm:$0xff]
  %v8762 = vld [vmem:[%s3196 + $0xb1] sm:$0xff]
  %v8763 = vld [vmem:[%s3196 + $0xc1] sm:$0xff]
  %v8764 = vld [vmem:[%s3196 + $0xc9] sm:$0xff]
  %v8765 = vld [vmem:[%s3196 + $0xd9] sm:$0xff]
  %v8766 = vld [vmem:[%s3196 + $0xe1] sm:$0xff]
  %v8767 = vld [vmem:[%s3196 + $0xf1] sm:$0xff]
  %v8768 = vld [vmem:[%s3196 + $0xf9] sm:$0xff]
  %v8769 = vld [vmem:[%s3196 + $0x109] sm:$0xff]
  %v8770 = vld [vmem:[%s3196 + $0x111] sm:$0xff]
  %v8771 = vld [vmem:[%s3196 + $0x121] sm:$0xff]
  %v8772 = vld [vmem:[%s3196 + $0x129] sm:$0xff]
  %v8773 = vld [vmem:[%s3196 + $0x139] sm:$0xff]
  %v8774 = vld [vmem:[%s3196 + $0x141] sm:$0xff]
  %v8775 = vld [vmem:[%s3196 + $0x151] sm:$0xff]
  %v8776 = vld [vmem:[%s3196 + $0x159] sm:$0xff]
  %v8777 = vld [vmem:[%s3196 + $0x169] sm:$0xff]
  %v8778 = vld [vmem:[%s3196 + $0x171] sm:$0xff]
  %v8779 = vld [vmem:[%s3196 + $0x1b1] sm:$0xff]
  %v8780 = vld [vmem:[%s3196 + $0x1b9] sm:$0xff]
  %v8781 = vld [vmem:[%s3196 + $0x1c9] sm:$0xff]
  %v8782 = vld [vmem:[%s3196 + $0x1d1] sm:$0xff]
  %v8783 = vld [vmem:[%s3196 + $0x1e1] sm:$0xff]
  %v8784 = vld [vmem:[%s3196 + $0x1e9] sm:$0xff]
  %v8785 = vld [vmem:[%s3196 + $0x1f9] sm:$0xff]
  %v8786 = vld [vmem:[%s3196 + $0x201] sm:$0xff]
  %v8787 = vld [vmem:[%s3196 + $0x211] sm:$0xff]
  %v8788 = vld [vmem:[%s3196 + $0x219] sm:$0xff]
  %v8789 = vld [vmem:[%s3196 + $0x229] sm:$0xff]
  %v8790 = vld [vmem:[%s3196 + $0x231] sm:$0xff]
  %v8791 = vld [vmem:[%s3196 + $0x241] sm:$0xff]
  %v8792 = vld [vmem:[%s3196 + $0x249] sm:$0xff]
  %v8793 = vld [vmem:[%s3196 + $0x259] sm:$0xff]
  %v8794 = vld [vmem:[%s3196 + $0x261] sm:$0xff]
  %v8795 = vld [vmem:[%s3196 + $0x271] sm:$0xff]
  %v8796 = vld [vmem:[%s3196 + $0x279] sm:$0xff]
  %v8797 = vld [vmem:[%s3196 + $0x289] sm:$0xff]
  %v8798 = vld [vmem:[%s3196 + $0x291] sm:$0xff]
  %v8799 = vld [vmem:[%s3196 + $0x2a1] sm:$0xff]
  %v8800 = vld [vmem:[%s3196 + $0x2a9] sm:$0xff]
  %v8801 = vld [vmem:[%s3196 + $0x2b9] sm:$0xff]
  %v8802 = vld [vmem:[%s3196 + $0x2c1] sm:$0xff]
  %v8803 = vld [vmem:[%s3196 + $0x2d1] sm:$0xff]
  %v8804 = vld [vmem:[%s3196 + $0x2d9] sm:$0xff]
  %v8805 = vld [vmem:[%s3196 + $0x2e9] sm:$0xff]
  %v8806 = vld [vmem:[%s3196 + $0x2f1] sm:$0xff]
  %v8807 = vld [vmem:[%s3196 + $0x301] sm:$0xff]
  %v8808 = vld [vmem:[%s3196 + $0x309] sm:$0xff]
  %v8809 = vld [vmem:[%s3196 + $0x319] sm:$0xff]
  %v8810 = vld [vmem:[%s3196 + $0x321] sm:$0xff]
  %v8811 = vpack.c.bf16 %v8748, %v8747
  %v8812 = vpack.c.bf16 %v8750, %v8749
  %v8813 = vpack.c.bf16 %v8752, %v8751
  %v8814 = vpack.c.bf16 %v8754, %v8753
  %v8815 = vpack.c.bf16 %v8756, %v8755
  %v8816 = vpack.c.bf16 %v8758, %v8757
  %v8817 = vpack.c.bf16 %v8760, %v8759
  %v8818 = vpack.c.bf16 %v8762, %v8761
  %v8819 = vpack.c.bf16 %v8764, %v8763
  %v8820 = vpack.c.bf16 %v8766, %v8765
  %v8821 = vpack.c.bf16 %v8768, %v8767
  %v8822 = vpack.c.bf16 %v8770, %v8769
  %v8823 = vpack.c.bf16 %v8772, %v8771
  %v8824 = vpack.c.bf16 %v8774, %v8773
  %v8825 = vpack.c.bf16 %v8776, %v8775
  %v8826 = vpack.c.bf16 %v8778, %v8777
  %v8827 = vpack.c.bf16 %v8780, %v8779
  %v8828 = vpack.c.bf16 %v8782, %v8781
  %v8829 = vpack.c.bf16 %v8784, %v8783
  %v8830 = vpack.c.bf16 %v8786, %v8785
  %v8831 = vpack.c.bf16 %v8788, %v8787
  %v8832 = vpack.c.bf16 %v8790, %v8789
  %v8833 = vpack.c.bf16 %v8792, %v8791
  %v8834 = vpack.c.bf16 %v8794, %v8793
  %v8835 = vpack.c.bf16 %v8796, %v8795
  %v8836 = vpack.c.bf16 %v8798, %v8797
  %v8837 = vpack.c.bf16 %v8800, %v8799
  %v8838 = vpack.c.bf16 %v8802, %v8801
  %v8839 = vpack.c.bf16 %v8804, %v8803
  %v8840 = vpack.c.bf16 %v8806, %v8805
  %v8841 = vpack.c.bf16 %v8808, %v8807
  %v8842 = vpack.c.bf16 %v8810, %v8809
  %s8843 = scalar_lea.vmem %s4, 448
  %v8844 = vld [vmem:[%s8843] sm:$0xf]
  %v8845 = vld [vmem:[%s8843 + $0x4] sm:$0xf]
  %v8846 = vld [vmem:[%s8843 + $0x8] sm:$0xf]
  %v8847 = vld [vmem:[%s8843 + $0xc] sm:$0xf]
  %v8848 = vld [vmem:[%s8843 + $0x10] sm:$0xf]
  %v8849 = vld [vmem:[%s8843 + $0x14] sm:$0xf]
  %v8850 = vld [vmem:[%s8843 + $0x18] sm:$0xf]
  %v8851 = vld [vmem:[%s8843 + $0x1c] sm:$0xf]
  %v8852 = vld [vmem:[%s8843 + $0x20] sm:$0xf]
  %v8853 = vld [vmem:[%s8843 + $0x24] sm:$0xf]
  %v8854 = vld [vmem:[%s8843 + $0x28] sm:$0xf]
  %v8855 = vld [vmem:[%s8843 + $0x2c] sm:$0xf]
  %v8856 = vld [vmem:[%s8843 + $0x30] sm:$0xf]
  %v8857 = vld [vmem:[%s8843 + $0x34] sm:$0xf]
  %v8858 = vld [vmem:[%s8843 + $0x38] sm:$0xf]
  %v8859 = vld [vmem:[%s8843 + $0x3c] sm:$0xf]
  %v8876 = vunpack.c.l.b16 %v8844
  %v8877 = vunpack.c.l.b16 %v8845
  %v8878 = vunpack.c.l.b16 %v8846
  %v8879 = vunpack.c.l.b16 %v8847
  %v8880 = vunpack.c.l.b16 %v8848
  %v8881 = vunpack.c.l.b16 %v8849
  %v8882 = vunpack.c.l.b16 %v8850
  %v8883 = vunpack.c.l.b16 %v8851
  %v8884 = vunpack.c.l.b16 %v8852
  %v8885 = vunpack.c.l.b16 %v8853
  %v8886 = vunpack.c.l.b16 %v8854
  %v8887 = vunpack.c.l.b16 %v8855
  %v8888 = vunpack.c.l.b16 %v8856
  %v8889 = vunpack.c.l.b16 %v8857
  %v8890 = vunpack.c.l.b16 %v8858
  %v8891 = vunpack.c.l.b16 %v8859
  %v8892 = vpack.c.b16 %v8877, %v8876
  %v8893 = vpack.c.b16 %v8879, %v8878
  %v8894 = vpack.c.b16 %v8881, %v8880
  %v8895 = vpack.c.b16 %v8883, %v8882
  %v8896 = vpack.c.b16 %v8885, %v8884
  %v8897 = vpack.c.b16 %v8887, %v8886
  %v8898 = vpack.c.b16 %v8889, %v8888
  %v8899 = vpack.c.b16 %v8891, %v8890
  %8908 = vmatprep.subr.bf16.mxu0 0
  %8909 = vmatpush1.bf16.msra.mxu0 %v8892
  %8910 = vmatprep.subr.bf16.mxu0 0
  %8911 = vmatpush1.bf16.msra.mxu0 %v8893
  %8912 = vmatprep.subr.bf16.mxu0 0
  %8913 = vmatpush1.bf16.msra.mxu0 %v8894
  %8914 = vmatprep.subr.bf16.mxu0 0
  %8915 = vmatpush1.bf16.msra.mxu0 %v8895
  %8916 = vmatprep.subr.bf16.mxu0 0
  %8917 = vmatpush1.bf16.msra.mxu0 %v8896
  %8918 = vmatprep.subr.bf16.mxu0 0
  %8919 = vmatpush1.bf16.msra.mxu0 %v8897
  %8920 = vmatprep.subr.bf16.mxu0 0
  %8921 = vmatpush1.bf16.msra.mxu0 %v8898
  %8922 = vmatprep.subr.bf16.mxu0 0
  %8923 = vmatpush1.bf16.msra.mxu0 %v8899
  %8924 = vmatprep.subr.bf16.mxu0 0
  %8925 = vmatpush1.bf16.msra.mxu0 0
  %8926 = vmatprep.subr.bf16.mxu0 0
  %8927 = vmatpush1.bf16.msra.mxu0 0
  %8928 = vmatprep.subr.bf16.mxu0 0
  %8929 = vmatpush1.bf16.msra.mxu0 0
  %8930 = vmatprep.subr.bf16.mxu0 0
  %8931 = vmatpush1.bf16.msra.mxu0 0
  %8932 = vmatprep.subr.bf16.mxu0 0
  %8933 = vmatpush1.bf16.msra.mxu0 0
  %8934 = vmatprep.subr.bf16.mxu0 0
  %8935 = vmatpush1.bf16.msra.mxu0 0
  %8936 = vmatprep.subr.bf16.mxu0 0
  %8937 = vmatpush1.bf16.msra.mxu0 0
  %8938 = vmatprep.subr.bf16.mxu0 0
  %8939 = vmatpush1.bf16.msra.mxu0 0
  %8940 = vmatprep.mubr.bf16.mxu0 0
  %8941 = vmatmul.mubr.bf16.gmra.mrb[0].mxu0 %v8811
  %v8942 = vpop.f32.mrb[0].mxu0
  %v8943 = vadd.f32 0.0, %v8942
  %v8944 = vpop.f32.mrb[0].mxu0
  %v8945 = vpop.f32.mrb[0].mxu0
  %v8946 = vadd.f32 0.0, %v8945
  %v8947 = vpop.f32.mrb[0].mxu0
  %8948 = vmatprep.mubr.bf16.mxu0 0
  %8949 = vmatmul.mubr.bf16.gmra.mrb[0].mxu0 %v8812
  %v8950 = vpop.f32.mrb[0].mxu0
  %v8951 = vadd.f32 0.0, %v8950
  %v8952 = vpop.f32.mrb[0].mxu0
  %v8953 = vpop.f32.mrb[0].mxu0
  %v8954 = vadd.f32 0.0, %v8953
  %v8955 = vpop.f32.mrb[0].mxu0
  %8956 = vmatprep.mubr.bf16.mxu0 0
  %8957 = vmatmul.mubr.bf16.gmra.mrb[0].mxu0 %v8813
  %v8958 = vpop.f32.mrb[0].mxu0
  %v8959 = vadd.f32 0.0, %v8958
  %v8960 = vpop.f32.mrb[0].mxu0
  %v8961 = vpop.f32.mrb[0].mxu0
  %v8962 = vadd.f32 0.0, %v8961
  %v8963 = vpop.f32.mrb[0].mxu0
  %8964 = vmatprep.mubr.bf16.mxu0 0
  %8965 = vmatmul.mubr.bf16.gmra.mrb[0].mxu0 %v8814
  %v8966 = vpop.f32.mrb[0].mxu0
  %v8967 = vadd.f32 0.0, %v8966
  %v8968 = vpop.f32.mrb[0].mxu0
  %v8969 = vpop.f32.mrb[0].mxu0
  %v8970 = vadd.f32 0.0, %v8969
  %v8971 = vpop.f32.mrb[0].mxu0
  %8972 = vmatprep.mubr.bf16.mxu0 0
  %8973 = vmatmul.mubr.bf16.gmra.mrb[0].mxu0 %v8815
  %v8974 = vpop.f32.mrb[0].mxu0
  %v8975 = vadd.f32 0.0, %v8974
  %v8976 = vpop.f32.mrb[0].mxu0
  %v8977 = vpop.f32.mrb[0].mxu0
  %v8978 = vadd.f32 0.0, %v8977
  %v8979 = vpop.f32.mrb[0].mxu0
  %8980 = vmatprep.mubr.bf16.mxu0 0
  %8981 = vmatmul.mubr.bf16.gmra.mrb[0].mxu0 %v8816
  %v8982 = vpop.f32.mrb[0].mxu0
  %v8983 = vadd.f32 0.0, %v8982
  %v8984 = vpop.f32.mrb[0].mxu0
  %v8985 = vpop.f32.mrb[0].mxu0
  %v8986 = vadd.f32 0.0, %v8985
  %v8987 = vpop.f32.mrb[0].mxu0
  %8988 = vmatprep.mubr.bf16.mxu0 0
  %8989 = vmatmul.mubr.bf16.gmra.mrb[0].mxu0 %v8817
  %v8990 = vpop.f32.mrb[0].mxu0
  %v8991 = vadd.f32 0.0, %v8990
  %v8992 = vpop.f32.mrb[0].mxu0
  %v8993 = vpop.f32.mrb[0].mxu0
  %v8994 = vadd.f32 0.0, %v8993
  %v8995 = vpop.f32.mrb[0].mxu0
  %8996 = vmatprep.mubr.bf16.mxu0 0
  %8997 = vmatmul.mubr.bf16.gmra.mrb[0].mxu0 %v8818
  %v8998 = vpop.f32.mrb[0].mxu0
  %v8999 = vadd.f32 0.0, %v8998
  %v9000 = vpop.f32.mrb[0].mxu0
  %v9001 = vpop.f32.mrb[0].mxu0
  %v9002 = vadd.f32 0.0, %v9001
  %v9003 = vpop.f32.mrb[0].mxu0
  %9004 = vmatprep.mubr.bf16.mxu0 0
  %9005 = vmatmul.mubr.bf16.gmra.mrb[0].mxu0 %v8819
  %v9006 = vpop.f32.mrb[0].mxu0
  %v9007 = vadd.f32 0.0, %v9006
  %v9008 = vpop.f32.mrb[0].mxu0
  %v9009 = vpop.f32.mrb[0].mxu0
  %v9010 = vadd.f32 0.0, %v9009
  %v9011 = vpop.f32.mrb[0].mxu0
  %9012 = vmatprep.mubr.bf16.mxu0 0
  %9013 = vmatmul.mubr.bf16.gmra.mrb[0].mxu0 %v8820
  %v9014 = vpop.f32.mrb[0].mxu0
  %v9015 = vadd.f32 0.0, %v9014
  %v9016 = vpop.f32.mrb[0].mxu0
  %v9017 = vpop.f32.mrb[0].mxu0
  %v9018 = vadd.f32 0.0, %v9017
  %v9019 = vpop.f32.mrb[0].mxu0
  %9020 = vmatprep.mubr.bf16.mxu0 0
  %9021 = vmatmul.mubr.bf16.gmra.mrb[0].mxu0 %v8821
  %v9022 = vpop.f32.mrb[0].mxu0
  %v9023 = vadd.f32 0.0, %v9022
  %v9024 = vpop.f32.mrb[0].mxu0
  %v9025 = vpop.f32.mrb[0].mxu0
  %v9026 = vadd.f32 0.0, %v9025
  %v9027 = vpop.f32.mrb[0].mxu0
  %9028 = vmatprep.mubr.bf16.mxu0 0
  %9029 = vmatmul.mubr.bf16.gmra.mrb[0].mxu0 %v8822
  %v9030 = vpop.f32.mrb[0].mxu0
  %v9031 = vadd.f32 0.0, %v9030
  %v9032 = vpop.f32.mrb[0].mxu0
  %v9033 = vpop.f32.mrb[0].mxu0
  %v9034 = vadd.f32 0.0, %v9033
  %v9035 = vpop.f32.mrb[0].mxu0
  %9036 = vmatprep.mubr.bf16.mxu0 0
  %9037 = vmatmul.mubr.bf16.gmra.mrb[0].mxu0 %v8823
  %v9038 = vpop.f32.mrb[0].mxu0
  %v9039 = vadd.f32 0.0, %v9038
  %v9040 = vpop.f32.mrb[0].mxu0
  %v9041 = vpop.f32.mrb[0].mxu0
  %v9042 = vadd.f32 0.0, %v9041
  %v9043 = vpop.f32.mrb[0].mxu0
  %9044 = vmatprep.mubr.bf16.mxu0 0
  %9045 = vmatmul.mubr.bf16.gmra.mrb[0].mxu0 %v8824
  %v9046 = vpop.f32.mrb[0].mxu0
  %v9047 = vadd.f32 0.0, %v9046
  %v9048 = vpop.f32.mrb[0].mxu0
  %v9049 = vpop.f32.mrb[0].mxu0
  %v9050 = vadd.f32 0.0, %v9049
  %v9051 = vpop.f32.mrb[0].mxu0
  %9052 = vmatprep.mubr.bf16.mxu0 0
  %9053 = vmatmul.mubr.bf16.gmra.mrb[0].mxu0 %v8825
  %v9054 = vpop.f32.mrb[0].mxu0
  %v9055 = vadd.f32 0.0, %v9054
  %v9056 = vpop.f32.mrb[0].mxu0
  %v9057 = vpop.f32.mrb[0].mxu0
  %v9058 = vadd.f32 0.0, %v9057
  %v9059 = vpop.f32.mrb[0].mxu0
  %9060 = vmatprep.mubr.bf16.mxu0 0
  %9061 = vmatmul.mubr.bf16.gmra.mrb[0].mxu0 %v8826
  %v9062 = vpop.f32.mrb[0].mxu0
  %v9063 = vadd.f32 0.0, %v9062
  %v9064 = vpop.f32.mrb[0].mxu0
  %v9065 = vpop.f32.mrb[0].mxu0
  %v9066 = vadd.f32 0.0, %v9065
  %v9067 = vpop.f32.mrb[0].mxu0
  %9068 = vmatprep.mubr.bf16.mxu0 0
  %9069 = vmatmul.mubr.bf16.gmra.mrb[0].mxu0 %v8827
  %v9070 = vpop.f32.mrb[0].mxu0
  %v9071 = vadd.f32 0.0, %v9070
  %v9072 = vpop.f32.mrb[0].mxu0
  %v9073 = vpop.f32.mrb[0].mxu0
  %v9074 = vadd.f32 0.0, %v9073
  %v9075 = vpop.f32.mrb[0].mxu0
  %9076 = vmatprep.mubr.bf16.mxu0 0
  %9077 = vmatmul.mubr.bf16.gmra.mrb[0].mxu0 %v8828
  %v9078 = vpop.f32.mrb[0].mxu0
  %v9079 = vadd.f32 0.0, %v9078
  %v9080 = vpop.f32.mrb[0].mxu0
  %v9081 = vpop.f32.mrb[0].mxu0
  %v9082 = vadd.f32 0.0, %v9081
  %v9083 = vpop.f32.mrb[0].mxu0
  %9084 = vmatprep.mubr.bf16.mxu0 0
  %9085 = vmatmul.mubr.bf16.gmra.mrb[0].mxu0 %v8829
  %v9086 = vpop.f32.mrb[0].mxu0
  %v9087 = vadd.f32 0.0, %v9086
  %v9088 = vpop.f32.mrb[0].mxu0
  %v9089 = vpop.f32.mrb[0].mxu0
  %v9090 = vadd.f32 0.0, %v9089
  %v9091 = vpop.f32.mrb[0].mxu0
  %9092 = vmatprep.mubr.bf16.mxu0 0
  %9093 = vmatmul.mubr.bf16.gmra.mrb[0].mxu0 %v8830
  %v9094 = vpop.f32.mrb[0].mxu0
  %v9095 = vadd.f32 0.0, %v9094
  %v9096 = vpop.f32.mrb[0].mxu0
  %v9097 = vpop.f32.mrb[0].mxu0
  %v9098 = vadd.f32 0.0, %v9097
  %v9099 = vpop.f32.mrb[0].mxu0
  %9100 = vmatprep.mubr.bf16.mxu0 0
  %9101 = vmatmul.mubr.bf16.gmra.mrb[0].mxu0 %v8831
  %v9102 = vpop.f32.mrb[0].mxu0
  %v9103 = vadd.f32 0.0, %v9102
  %v9104 = vpop.f32.mrb[0].mxu0
  %v9105 = vpop.f32.mrb[0].mxu0
  %v9106 = vadd.f32 0.0, %v9105
  %v9107 = vpop.f32.mrb[0].mxu0
  %9108 = vmatprep.mubr.bf16.mxu0 0
  %9109 = vmatmul.mubr.bf16.gmra.mrb[0].mxu0 %v8832
  %v9110 = vpop.f32.mrb[0].mxu0
  %v9111 = vadd.f32 0.0, %v9110
  %v9112 = vpop.f32.mrb[0].mxu0
  %v9113 = vpop.f32.mrb[0].mxu0
  %v9114 = vadd.f32 0.0, %v9113
  %v9115 = vpop.f32.mrb[0].mxu0
  %9116 = vmatprep.mubr.bf16.mxu0 0
  %9117 = vmatmul.mubr.bf16.gmra.mrb[0].mxu0 %v8833
  %v9118 = vpop.f32.mrb[0].mxu0
  %v9119 = vadd.f32 0.0, %v9118
  %v9120 = vpop.f32.mrb[0].mxu0
  %v9121 = vpop.f32.mrb[0].mxu0
  %v9122 = vadd.f32 0.0, %v9121
  %v9123 = vpop.f32.mrb[0].mxu0
  %9124 = vmatprep.mubr.bf16.mxu0 0
  %9125 = vmatmul.mubr.bf16.gmra.mrb[0].mxu0 %v8834
  %v9126 = vpop.f32.mrb[0].mxu0
  %v9127 = vadd.f32 0.0, %v9126
  %v9128 = vpop.f32.mrb[0].mxu0
  %v9129 = vpop.f32.mrb[0].mxu0
  %v9130 = vadd.f32 0.0, %v9129
  %v9131 = vpop.f32.mrb[0].mxu0
  %9132 = vmatprep.mubr.bf16.mxu0 0
  %9133 = vmatmul.mubr.bf16.gmra.mrb[0].mxu0 %v8835
  %v9134 = vpop.f32.mrb[0].mxu0
  %v9135 = vadd.f32 0.0, %v9134
  %v9136 = vpop.f32.mrb[0].mxu0
  %v9137 = vpop.f32.mrb[0].mxu0
  %v9138 = vadd.f32 0.0, %v9137
  %v9139 = vpop.f32.mrb[0].mxu0
  %9140 = vmatprep.mubr.bf16.mxu0 0
  %9141 = vmatmul.mubr.bf16.gmra.mrb[0].mxu0 %v8836
  %v9142 = vpop.f32.mrb[0].mxu0
  %v9143 = vadd.f32 0.0, %v9142
  %v9144 = vpop.f32.mrb[0].mxu0
  %v9145 = vpop.f32.mrb[0].mxu0
  %v9146 = vadd.f32 0.0, %v9145
  %v9147 = vpop.f32.mrb[0].mxu0
  %9148 = vmatprep.mubr.bf16.mxu0 0
  %9149 = vmatmul.mubr.bf16.gmra.mrb[0].mxu0 %v8837
  %v9150 = vpop.f32.mrb[0].mxu0
  %v9151 = vadd.f32 0.0, %v9150
  %v9152 = vpop.f32.mrb[0].mxu0
  %v9153 = vpop.f32.mrb[0].mxu0
  %v9154 = vadd.f32 0.0, %v9153
  %v9155 = vpop.f32.mrb[0].mxu0
  %9156 = vmatprep.mubr.bf16.mxu0 0
  %9157 = vmatmul.mubr.bf16.gmra.mrb[0].mxu0 %v8838
  %v9158 = vpop.f32.mrb[0].mxu0
  %v9159 = vadd.f32 0.0, %v9158
  %v9160 = vpop.f32.mrb[0].mxu0
  %v9161 = vpop.f32.mrb[0].mxu0
  %v9162 = vadd.f32 0.0, %v9161
  %v9163 = vpop.f32.mrb[0].mxu0
  %9164 = vmatprep.mubr.bf16.mxu0 0
  %9165 = vmatmul.mubr.bf16.gmra.mrb[0].mxu0 %v8839
  %v9166 = vpop.f32.mrb[0].mxu0
  %v9167 = vadd.f32 0.0, %v9166
  %v9168 = vpop.f32.mrb[0].mxu0
  %v9169 = vpop.f32.mrb[0].mxu0
  %v9170 = vadd.f32 0.0, %v9169
  %v9171 = vpop.f32.mrb[0].mxu0
  %9172 = vmatprep.mubr.bf16.mxu0 0
  %9173 = vmatmul.mubr.bf16.gmra.mrb[0].mxu0 %v8840
  %v9174 = vpop.f32.mrb[0].mxu0
  %v9175 = vadd.f32 0.0, %v9174
  %v9176 = vpop.f32.mrb[0].mxu0
  %v9177 = vpop.f32.mrb[0].mxu0
  %v9178 = vadd.f32 0.0, %v9177
  %v9179 = vpop.f32.mrb[0].mxu0
  %9180 = vmatprep.mubr.bf16.mxu0 0
  %9181 = vmatmul.mubr.bf16.gmra.mrb[0].mxu0 %v8841
  %v9182 = vpop.f32.mrb[0].mxu0
  %v9183 = vadd.f32 0.0, %v9182
  %v9184 = vpop.f32.mrb[0].mxu0
  %v9185 = vpop.f32.mrb[0].mxu0
  %v9186 = vadd.f32 0.0, %v9185
  %v9187 = vpop.f32.mrb[0].mxu0
  %9188 = vmatprep.mubr.bf16.mxu0 0
  %9189 = vmatmul.mubr.bf16.gmra.mrb[0].mxu0 %v8842
  %v9190 = vpop.f32.mrb[0].mxu0
  %v9191 = vadd.f32 0.0, %v9190
  %v9192 = vpop.f32.mrb[0].mxu0
  %v9193 = vpop.f32.mrb[0].mxu0
  %v9194 = vadd.f32 0.0, %v9193
  %v9195 = vpop.f32.mrb[0].mxu0
  %9196 = vdwg.mxu0
  %v9197 = vadd.f32 %v8683, %v8943
  %v9198 = vadd.f32 %v8684, %v8946
  %v9199 = vadd.f32 %v8685, %v8951
  %v9200 = vadd.f32 %v8686, %v8954
  %v9201 = vadd.f32 %v8687, %v8959
  %v9202 = vadd.f32 %v8688, %v8962
  %v9203 = vadd.f32 %v8689, %v8967
  %v9204 = vadd.f32 %v8690, %v8970
  %v9205 = vadd.f32 %v8691, %v8975
  %v9206 = vadd.f32 %v8692, %v8978
  %v9207 = vadd.f32 %v8693, %v8983
  %v9208 = vadd.f32 %v8694, %v8986
  %v9209 = vadd.f32 %v8695, %v8991
  %v9210 = vadd.f32 %v8696, %v8994
  %v9211 = vadd.f32 %v8697, %v8999
  %v9212 = vadd.f32 %v8698, %v9002
  %v9213 = vadd.f32 %v8699, %v9007
  %v9214 = vadd.f32 %v8700, %v9010
  %v9215 = vadd.f32 %v8701, %v9015
  %v9216 = vadd.f32 %v8702, %v9018
  %v9217 = vadd.f32 %v8703, %v9023
  %v9218 = vadd.f32 %v8704, %v9026
  %v9219 = vadd.f32 %v8705, %v9031
  %v9220 = vadd.f32 %v8706, %v9034
  %v9221 = vadd.f32 %v8707, %v9039
  %v9222 = vadd.f32 %v8708, %v9042
  %v9223 = vadd.f32 %v8709, %v9047
  %v9224 = vadd.f32 %v8710, %v9050
  %v9225 = vadd.f32 %v8711, %v9055
  %v9226 = vadd.f32 %v8712, %v9058
  %v9227 = vadd.f32 %v8713, %v9063
  %v9228 = vadd.f32 %v8714, %v9066
  %v9229 = vadd.f32 %v8715, %v9071
  %v9230 = vadd.f32 %v8716, %v9074
  %v9231 = vadd.f32 %v8717, %v9079
  %v9232 = vadd.f32 %v8718, %v9082
  %v9233 = vadd.f32 %v8719, %v9087
  %v9234 = vadd.f32 %v8720, %v9090
  %v9235 = vadd.f32 %v8721, %v9095
  %v9236 = vadd.f32 %v8722, %v9098
  %v9237 = vadd.f32 %v8723, %v9103
  %v9238 = vadd.f32 %v8724, %v9106
  %v9239 = vadd.f32 %v8725, %v9111
  %v9240 = vadd.f32 %v8726, %v9114
  %v9241 = vadd.f32 %v8727, %v9119
  %v9242 = vadd.f32 %v8728, %v9122
  %v9243 = vadd.f32 %v8729, %v9127
  %v9244 = vadd.f32 %v8730, %v9130
  %v9245 = vadd.f32 %v8731, %v9135
  %v9246 = vadd.f32 %v8732, %v9138
  %v9247 = vadd.f32 %v8733, %v9143
  %v9248 = vadd.f32 %v8734, %v9146
  %v9249 = vadd.f32 %v8735, %v9151
  %v9250 = vadd.f32 %v8736, %v9154
  %v9251 = vadd.f32 %v8737, %v9159
  %v9252 = vadd.f32 %v8738, %v9162
  %v9253 = vadd.f32 %v8739, %v9167
  %v9254 = vadd.f32 %v8740, %v9170
  %v9255 = vadd.f32 %v8741, %v9175
  %v9256 = vadd.f32 %v8742, %v9178
  %v9257 = vadd.f32 %v8743, %v9183
  %v9258 = vadd.f32 %v8744, %v9186
  %v9259 = vadd.f32 %v8745, %v9191
  %v9260 = vadd.f32 %v8746, %v9194
  %v9261 = vld [vmem:[%s3196 + $0x2] sm:$0xff]
  %v9262 = vld [vmem:[%s3196 + $0xa] sm:$0xff]
  %v9263 = vld [vmem:[%s3196 + $0x1a] sm:$0xff]
  %v9264 = vld [vmem:[%s3196 + $0x22] sm:$0xff]
  %v9265 = vld [vmem:[%s3196 + $0x32] sm:$0xff]
  %v9266 = vld [vmem:[%s3196 + $0x3a] sm:$0xff]
  %v9267 = vld [vmem:[%s3196 + $0x4a] sm:$0xff]
  %v9268 = vld [vmem:[%s3196 + $0x52] sm:$0xff]
  %v9269 = vld [vmem:[%s3196 + $0x62] sm:$0xff]
  %v9270 = vld [vmem:[%s3196 + $0x6a] sm:$0xff]
  %v9271 = vld [vmem:[%s3196 + $0x7a] sm:$0xff]
  %v9272 = vld [vmem:[%s3196 + $0x82] sm:$0xff]
  %v9273 = vld [vmem:[%s3196 + $0x92] sm:$0xff]
  %v9274 = vld [vmem:[%s3196 + $0x9a] sm:$0xff]
  %v9275 = vld [vmem:[%s3196 + $0xaa] sm:$0xff]
  %v9276 = vld [vmem:[%s3196 + $0xb2] sm:$0xff]
  %v9277 = vld [vmem:[%s3196 + $0xc2] sm:$0xff]
  %v9278 = vld [vmem:[%s3196 + $0xca] sm:$0xff]
  %v9279 = vld [vmem:[%s3196 + $0xda] sm:$0xff]
  %v9280 = vld [vmem:[%s3196 + $0xe2] sm:$0xff]
  %v9281 = vld [vmem:[%s3196 + $0xf2] sm:$0xff]
  %v9282 = vld [vmem:[%s3196 + $0xfa] sm:$0xff]
  %v9283 = vld [vmem:[%s3196 + $0x10a] sm:$0xff]
  %v9284 = vld [vmem:[%s3196 + $0x112] sm:$0xff]
  %v9285 = vld [vmem:[%s3196 + $0x122] sm:$0xff]
  %v9286 = vld [vmem:[%s3196 + $0x12a] sm:$0xff]
  %v9287 = vld [vmem:[%s3196 + $0x13a] sm:$0xff]
  %v9288 = vld [vmem:[%s3196 + $0x142] sm:$0xff]
  %v9289 = vld [vmem:[%s3196 + $0x152] sm:$0xff]
  %v9290 = vld [vmem:[%s3196 + $0x15a] sm:$0xff]
  %v9291 = vld [vmem:[%s3196 + $0x16a] sm:$0xff]
  %v9292 = vld [vmem:[%s3196 + $0x172] sm:$0xff]
  %v9293 = vld [vmem:[%s3196 + $0x1b2] sm:$0xff]
  %v9294 = vld [vmem:[%s3196 + $0x1ba] sm:$0xff]
  %v9295 = vld [vmem:[%s3196 + $0x1ca] sm:$0xff]
  %v9296 = vld [vmem:[%s3196 + $0x1d2] sm:$0xff]
  %v9297 = vld [vmem:[%s3196 + $0x1e2] sm:$0xff]
  %v9298 = vld [vmem:[%s3196 + $0x1ea] sm:$0xff]
  %v9299 = vld [vmem:[%s3196 + $0x1fa] sm:$0xff]
  %v9300 = vld [vmem:[%s3196 + $0x202] sm:$0xff]
  %v9301 = vld [vmem:[%s3196 + $0x212] sm:$0xff]
  %v9302 = vld [vmem:[%s3196 + $0x21a] sm:$0xff]
  %v9303 = vld [vmem:[%s3196 + $0x22a] sm:$0xff]
  %v9304 = vld [vmem:[%s3196 + $0x232] sm:$0xff]
  %v9305 = vld [vmem:[%s3196 + $0x242] sm:$0xff]
  %v9306 = vld [vmem:[%s3196 + $0x24a] sm:$0xff]
  %v9307 = vld [vmem:[%s3196 + $0x25a] sm:$0xff]
  %v9308 = vld [vmem:[%s3196 + $0x262] sm:$0xff]
  %v9309 = vld [vmem:[%s3196 + $0x272] sm:$0xff]
  %v9310 = vld [vmem:[%s3196 + $0x27a] sm:$0xff]
  %v9311 = vld [vmem:[%s3196 + $0x28a] sm:$0xff]
  %v9312 = vld [vmem:[%s3196 + $0x292] sm:$0xff]
  %v9313 = vld [vmem:[%s3196 + $0x2a2] sm:$0xff]
  %v9314 = vld [vmem:[%s3196 + $0x2aa] sm:$0xff]
  %v9315 = vld [vmem:[%s3196 + $0x2ba] sm:$0xff]
  %v9316 = vld [vmem:[%s3196 + $0x2c2] sm:$0xff]
  %v9317 = vld [vmem:[%s3196 + $0x2d2] sm:$0xff]
  %v9318 = vld [vmem:[%s3196 + $0x2da] sm:$0xff]
  %v9319 = vld [vmem:[%s3196 + $0x2ea] sm:$0xff]
  %v9320 = vld [vmem:[%s3196 + $0x2f2] sm:$0xff]
  %v9321 = vld [vmem:[%s3196 + $0x302] sm:$0xff]
  %v9322 = vld [vmem:[%s3196 + $0x30a] sm:$0xff]
  %v9323 = vld [vmem:[%s3196 + $0x31a] sm:$0xff]
  %v9324 = vld [vmem:[%s3196 + $0x322] sm:$0xff]
  %v9325 = vpack.c.bf16 %v9262, %v9261
  %v9326 = vpack.c.bf16 %v9264, %v9263
  %v9327 = vpack.c.bf16 %v9266, %v9265
  %v9328 = vpack.c.bf16 %v9268, %v9267
  %v9329 = vpack.c.bf16 %v9270, %v9269
  %v9330 = vpack.c.bf16 %v9272, %v9271
  %v9331 = vpack.c.bf16 %v9274, %v9273
  %v9332 = vpack.c.bf16 %v9276, %v9275
  %v9333 = vpack.c.bf16 %v9278, %v9277
  %v9334 = vpack.c.bf16 %v9280, %v9279
  %v9335 = vpack.c.bf16 %v9282, %v9281
  %v9336 = vpack.c.bf16 %v9284, %v9283
  %v9337 = vpack.c.bf16 %v9286, %v9285
  %v9338 = vpack.c.bf16 %v9288, %v9287
  %v9339 = vpack.c.bf16 %v9290, %v9289
  %v9340 = vpack.c.bf16 %v9292, %v9291
  %v9341 = vpack.c.bf16 %v9294, %v9293
  %v9342 = vpack.c.bf16 %v9296, %v9295
  %v9343 = vpack.c.bf16 %v9298, %v9297
  %v9344 = vpack.c.bf16 %v9300, %v9299
  %v9345 = vpack.c.bf16 %v9302, %v9301
  %v9346 = vpack.c.bf16 %v9304, %v9303
  %v9347 = vpack.c.bf16 %v9306, %v9305
  %v9348 = vpack.c.bf16 %v9308, %v9307
  %v9349 = vpack.c.bf16 %v9310, %v9309
  %v9350 = vpack.c.bf16 %v9312, %v9311
  %v9351 = vpack.c.bf16 %v9314, %v9313
  %v9352 = vpack.c.bf16 %v9316, %v9315
  %v9353 = vpack.c.bf16 %v9318, %v9317
  %v9354 = vpack.c.bf16 %v9320, %v9319
  %v9355 = vpack.c.bf16 %v9322, %v9321
  %v9356 = vpack.c.bf16 %v9324, %v9323
  %s9357 = scalar_lea.vmem %s4, 512
  %v9358 = vld [vmem:[%s9357] sm:$0xf]
  %v9359 = vld [vmem:[%s9357 + $0x4] sm:$0xf]
  %v9360 = vld [vmem:[%s9357 + $0x8] sm:$0xf]
  %v9361 = vld [vmem:[%s9357 + $0xc] sm:$0xf]
  %v9362 = vld [vmem:[%s9357 + $0x10] sm:$0xf]
  %v9363 = vld [vmem:[%s9357 + $0x14] sm:$0xf]
  %v9364 = vld [vmem:[%s9357 + $0x18] sm:$0xf]
  %v9365 = vld [vmem:[%s9357 + $0x1c] sm:$0xf]
  %v9366 = vld [vmem:[%s9357 + $0x20] sm:$0xf]
  %v9367 = vld [vmem:[%s9357 + $0x24] sm:$0xf]
  %v9368 = vld [vmem:[%s9357 + $0x28] sm:$0xf]
  %v9369 = vld [vmem:[%s9357 + $0x2c] sm:$0xf]
  %v9370 = vld [vmem:[%s9357 + $0x30] sm:$0xf]
  %v9371 = vld [vmem:[%s9357 + $0x34] sm:$0xf]
  %v9372 = vld [vmem:[%s9357 + $0x38] sm:$0xf]
  %v9373 = vld [vmem:[%s9357 + $0x3c] sm:$0xf]
  %v9390 = vunpack.c.l.b16 %v9358
  %v9391 = vunpack.c.l.b16 %v9359
  %v9392 = vunpack.c.l.b16 %v9360
  %v9393 = vunpack.c.l.b16 %v9361
  %v9394 = vunpack.c.l.b16 %v9362
  %v9395 = vunpack.c.l.b16 %v9363
  %v9396 = vunpack.c.l.b16 %v9364
  %v9397 = vunpack.c.l.b16 %v9365
  %v9398 = vunpack.c.l.b16 %v9366
  %v9399 = vunpack.c.l.b16 %v9367
  %v9400 = vunpack.c.l.b16 %v9368
  %v9401 = vunpack.c.l.b16 %v9369
  %v9402 = vunpack.c.l.b16 %v9370
  %v9403 = vunpack.c.l.b16 %v9371
  %v9404 = vunpack.c.l.b16 %v9372
  %v9405 = vunpack.c.l.b16 %v9373
  %v9406 = vpack.c.b16 %v9391, %v9390
  %v9407 = vpack.c.b16 %v9393, %v9392
  %v9408 = vpack.c.b16 %v9395, %v9394
  %v9409 = vpack.c.b16 %v9397, %v9396
  %v9410 = vpack.c.b16 %v9399, %v9398
  %v9411 = vpack.c.b16 %v9401, %v9400
  %v9412 = vpack.c.b16 %v9403, %v9402
  %v9413 = vpack.c.b16 %v9405, %v9404
  %9422 = vmatprep.subr.bf16.mxu0 0
  %9423 = vmatpush1.bf16.msra.mxu0 %v9406
  %9424 = vmatprep.subr.bf16.mxu0 0
  %9425 = vmatpush1.bf16.msra.mxu0 %v9407
  %9426 = vmatprep.subr.bf16.mxu0 0
  %9427 = vmatpush1.bf16.msra.mxu0 %v9408
  %9428 = vmatprep.subr.bf16.mxu0 0
  %9429 = vmatpush1.bf16.msra.mxu0 %v9409
  %9430 = vmatprep.subr.bf16.mxu0 0
  %9431 = vmatpush1.bf16.msra.mxu0 %v9410
  %9432 = vmatprep.subr.bf16.mxu0 0
  %9433 = vmatpush1.bf16.msra.mxu0 %v9411
  %9434 = vmatprep.subr.bf16.mxu0 0
  %9435 = vmatpush1.bf16.msra.mxu0 %v9412
  %9436 = vmatprep.subr.bf16.mxu0 0
  %9437 = vmatpush1.bf16.msra.mxu0 %v9413
  %9438 = vmatprep.subr.bf16.mxu0 0
  %9439 = vmatpush1.bf16.msra.mxu0 0
  %9440 = vmatprep.subr.bf16.mxu0 0
  %9441 = vmatpush1.bf16.msra.mxu0 0
  %9442 = vmatprep.subr.bf16.mxu0 0
  %9443 = vmatpush1.bf16.msra.mxu0 0
  %9444 = vmatprep.subr.bf16.mxu0 0
  %9445 = vmatpush1.bf16.msra.mxu0 0
  %9446 = vmatprep.subr.bf16.mxu0 0
  %9447 = vmatpush1.bf16.msra.mxu0 0
  %9448 = vmatprep.subr.bf16.mxu0 0
  %9449 = vmatpush1.bf16.msra.mxu0 0
  %9450 = vmatprep.subr.bf16.mxu0 0
  %9451 = vmatpush1.bf16.msra.mxu0 0
  %9452 = vmatprep.subr.bf16.mxu0 0
  %9453 = vmatpush1.bf16.msra.mxu0 0
  %9454 = vmatprep.mubr.bf16.mxu0 0
  %9455 = vmatmul.mubr.bf16.gmra.mrb[0].mxu0 %v9325
  %v9456 = vpop.f32.mrb[0].mxu0
  %v9457 = vadd.f32 0.0, %v9456
  %v9458 = vpop.f32.mrb[0].mxu0
  %v9459 = vpop.f32.mrb[0].mxu0
  %v9460 = vadd.f32 0.0, %v9459
  %v9461 = vpop.f32.mrb[0].mxu0
  %9462 = vmatprep.mubr.bf16.mxu0 0
  %9463 = vmatmul.mubr.bf16.gmra.mrb[0].mxu0 %v9326
  %v9464 = vpop.f32.mrb[0].mxu0
  %v9465 = vadd.f32 0.0, %v9464
  %v9466 = vpop.f32.mrb[0].mxu0
  %v9467 = vpop.f32.mrb[0].mxu0
  %v9468 = vadd.f32 0.0, %v9467
  %v9469 = vpop.f32.mrb[0].mxu0
  %9470 = vmatprep.mubr.bf16.mxu0 0
  %9471 = vmatmul.mubr.bf16.gmra.mrb[0].mxu0 %v9327
  %v9472 = vpop.f32.mrb[0].mxu0
  %v9473 = vadd.f32 0.0, %v9472
  %v9474 = vpop.f32.mrb[0].mxu0
  %v9475 = vpop.f32.mrb[0].mxu0
  %v9476 = vadd.f32 0.0, %v9475
  %v9477 = vpop.f32.mrb[0].mxu0
  %9478 = vmatprep.mubr.bf16.mxu0 0
  %9479 = vmatmul.mubr.bf16.gmra.mrb[0].mxu0 %v9328
  %v9480 = vpop.f32.mrb[0].mxu0
  %v9481 = vadd.f32 0.0, %v9480
  %v9482 = vpop.f32.mrb[0].mxu0
  %v9483 = vpop.f32.mrb[0].mxu0
  %v9484 = vadd.f32 0.0, %v9483
  %v9485 = vpop.f32.mrb[0].mxu0
  %9486 = vmatprep.mubr.bf16.mxu0 0
  %9487 = vmatmul.mubr.bf16.gmra.mrb[0].mxu0 %v9329
  %v9488 = vpop.f32.mrb[0].mxu0
  %v9489 = vadd.f32 0.0, %v9488
  %v9490 = vpop.f32.mrb[0].mxu0
  %v9491 = vpop.f32.mrb[0].mxu0
  %v9492 = vadd.f32 0.0, %v9491
  %v9493 = vpop.f32.mrb[0].mxu0
  %9494 = vmatprep.mubr.bf16.mxu0 0
  %9495 = vmatmul.mubr.bf16.gmra.mrb[0].mxu0 %v9330
  %v9496 = vpop.f32.mrb[0].mxu0
  %v9497 = vadd.f32 0.0, %v9496
  %v9498 = vpop.f32.mrb[0].mxu0
  %v9499 = vpop.f32.mrb[0].mxu0
  %v9500 = vadd.f32 0.0, %v9499
  %v9501 = vpop.f32.mrb[0].mxu0
  %9502 = vmatprep.mubr.bf16.mxu0 0
  %9503 = vmatmul.mubr.bf16.gmra.mrb[0].mxu0 %v9331
  %v9504 = vpop.f32.mrb[0].mxu0
  %v9505 = vadd.f32 0.0, %v9504
  %v9506 = vpop.f32.mrb[0].mxu0
  %v9507 = vpop.f32.mrb[0].mxu0
  %v9508 = vadd.f32 0.0, %v9507
  %v9509 = vpop.f32.mrb[0].mxu0
  %9510 = vmatprep.mubr.bf16.mxu0 0
  %9511 = vmatmul.mubr.bf16.gmra.mrb[0].mxu0 %v9332
  %v9512 = vpop.f32.mrb[0].mxu0
  %v9513 = vadd.f32 0.0, %v9512
  %v9514 = vpop.f32.mrb[0].mxu0
  %v9515 = vpop.f32.mrb[0].mxu0
  %v9516 = vadd.f32 0.0, %v9515
  %v9517 = vpop.f32.mrb[0].mxu0
  %9518 = vmatprep.mubr.bf16.mxu0 0
  %9519 = vmatmul.mubr.bf16.gmra.mrb[0].mxu0 %v9333
  %v9520 = vpop.f32.mrb[0].mxu0
  %v9521 = vadd.f32 0.0, %v9520
  %v9522 = vpop.f32.mrb[0].mxu0
  %v9523 = vpop.f32.mrb[0].mxu0
  %v9524 = vadd.f32 0.0, %v9523
  %v9525 = vpop.f32.mrb[0].mxu0
  %9526 = vmatprep.mubr.bf16.mxu0 0
  %9527 = vmatmul.mubr.bf16.gmra.mrb[0].mxu0 %v9334
  %v9528 = vpop.f32.mrb[0].mxu0
  %v9529 = vadd.f32 0.0, %v9528
  %v9530 = vpop.f32.mrb[0].mxu0
  %v9531 = vpop.f32.mrb[0].mxu0
  %v9532 = vadd.f32 0.0, %v9531
  %v9533 = vpop.f32.mrb[0].mxu0
  %9534 = vmatprep.mubr.bf16.mxu0 0
  %9535 = vmatmul.mubr.bf16.gmra.mrb[0].mxu0 %v9335
  %v9536 = vpop.f32.mrb[0].mxu0
  %v9537 = vadd.f32 0.0, %v9536
  %v9538 = vpop.f32.mrb[0].mxu0
  %v9539 = vpop.f32.mrb[0].mxu0
  %v9540 = vadd.f32 0.0, %v9539
  %v9541 = vpop.f32.mrb[0].mxu0
  %9542 = vmatprep.mubr.bf16.mxu0 0
  %9543 = vmatmul.mubr.bf16.gmra.mrb[0].mxu0 %v9336
  %v9544 = vpop.f32.mrb[0].mxu0
  %v9545 = vadd.f32 0.0, %v9544
  %v9546 = vpop.f32.mrb[0].mxu0
  %v9547 = vpop.f32.mrb[0].mxu0
  %v9548 = vadd.f32 0.0, %v9547
  %v9549 = vpop.f32.mrb[0].mxu0
  %9550 = vmatprep.mubr.bf16.mxu0 0
  %9551 = vmatmul.mubr.bf16.gmra.mrb[0].mxu0 %v9337
  %v9552 = vpop.f32.mrb[0].mxu0
  %v9553 = vadd.f32 0.0, %v9552
  %v9554 = vpop.f32.mrb[0].mxu0
  %v9555 = vpop.f32.mrb[0].mxu0
  %v9556 = vadd.f32 0.0, %v9555
  %v9557 = vpop.f32.mrb[0].mxu0
  %9558 = vmatprep.mubr.bf16.mxu0 0
  %9559 = vmatmul.mubr.bf16.gmra.mrb[0].mxu0 %v9338
  %v9560 = vpop.f32.mrb[0].mxu0
  %v9561 = vadd.f32 0.0, %v9560
  %v9562 = vpop.f32.mrb[0].mxu0
  %v9563 = vpop.f32.mrb[0].mxu0
  %v9564 = vadd.f32 0.0, %v9563
  %v9565 = vpop.f32.mrb[0].mxu0
  %9566 = vmatprep.mubr.bf16.mxu0 0
  %9567 = vmatmul.mubr.bf16.gmra.mrb[0].mxu0 %v9339
  %v9568 = vpop.f32.mrb[0].mxu0
  %v9569 = vadd.f32 0.0, %v9568
  %v9570 = vpop.f32.mrb[0].mxu0
  %v9571 = vpop.f32.mrb[0].mxu0
  %v9572 = vadd.f32 0.0, %v9571
  %v9573 = vpop.f32.mrb[0].mxu0
  %9574 = vmatprep.mubr.bf16.mxu0 0
  %9575 = vmatmul.mubr.bf16.gmra.mrb[0].mxu0 %v9340
  %v9576 = vpop.f32.mrb[0].mxu0
  %v9577 = vadd.f32 0.0, %v9576
  %v9578 = vpop.f32.mrb[0].mxu0
  %v9579 = vpop.f32.mrb[0].mxu0
  %v9580 = vadd.f32 0.0, %v9579
  %v9581 = vpop.f32.mrb[0].mxu0
  %9582 = vmatprep.mubr.bf16.mxu0 0
  %9583 = vmatmul.mubr.bf16.gmra.mrb[0].mxu0 %v9341
  %v9584 = vpop.f32.mrb[0].mxu0
  %v9585 = vadd.f32 0.0, %v9584
  %v9586 = vpop.f32.mrb[0].mxu0
  %v9587 = vpop.f32.mrb[0].mxu0
  %v9588 = vadd.f32 0.0, %v9587
  %v9589 = vpop.f32.mrb[0].mxu0
  %9590 = vmatprep.mubr.bf16.mxu0 0
  %9591 = vmatmul.mubr.bf16.gmra.mrb[0].mxu0 %v9342
  %v9592 = vpop.f32.mrb[0].mxu0
  %v9593 = vadd.f32 0.0, %v9592
  %v9594 = vpop.f32.mrb[0].mxu0
  %v9595 = vpop.f32.mrb[0].mxu0
  %v9596 = vadd.f32 0.0, %v9595
  %v9597 = vpop.f32.mrb[0].mxu0
  %9598 = vmatprep.mubr.bf16.mxu0 0
  %9599 = vmatmul.mubr.bf16.gmra.mrb[0].mxu0 %v9343
  %v9600 = vpop.f32.mrb[0].mxu0
  %v9601 = vadd.f32 0.0, %v9600
  %v9602 = vpop.f32.mrb[0].mxu0
  %v9603 = vpop.f32.mrb[0].mxu0
  %v9604 = vadd.f32 0.0, %v9603
  %v9605 = vpop.f32.mrb[0].mxu0
  %9606 = vmatprep.mubr.bf16.mxu0 0
  %9607 = vmatmul.mubr.bf16.gmra.mrb[0].mxu0 %v9344
  %v9608 = vpop.f32.mrb[0].mxu0
  %v9609 = vadd.f32 0.0, %v9608
  %v9610 = vpop.f32.mrb[0].mxu0
  %v9611 = vpop.f32.mrb[0].mxu0
  %v9612 = vadd.f32 0.0, %v9611
  %v9613 = vpop.f32.mrb[0].mxu0
  %9614 = vmatprep.mubr.bf16.mxu0 0
  %9615 = vmatmul.mubr.bf16.gmra.mrb[0].mxu0 %v9345
  %v9616 = vpop.f32.mrb[0].mxu0
  %v9617 = vadd.f32 0.0, %v9616
  %v9618 = vpop.f32.mrb[0].mxu0
  %v9619 = vpop.f32.mrb[0].mxu0
  %v9620 = vadd.f32 0.0, %v9619
  %v9621 = vpop.f32.mrb[0].mxu0
  %9622 = vmatprep.mubr.bf16.mxu0 0
  %9623 = vmatmul.mubr.bf16.gmra.mrb[0].mxu0 %v9346
  %v9624 = vpop.f32.mrb[0].mxu0
  %v9625 = vadd.f32 0.0, %v9624
  %v9626 = vpop.f32.mrb[0].mxu0
  %v9627 = vpop.f32.mrb[0].mxu0
  %v9628 = vadd.f32 0.0, %v9627
  %v9629 = vpop.f32.mrb[0].mxu0
  %9630 = vmatprep.mubr.bf16.mxu0 0
  %9631 = vmatmul.mubr.bf16.gmra.mrb[0].mxu0 %v9347
  %v9632 = vpop.f32.mrb[0].mxu0
  %v9633 = vadd.f32 0.0, %v9632
  %v9634 = vpop.f32.mrb[0].mxu0
  %v9635 = vpop.f32.mrb[0].mxu0
  %v9636 = vadd.f32 0.0, %v9635
  %v9637 = vpop.f32.mrb[0].mxu0
  %9638 = vmatprep.mubr.bf16.mxu0 0
  %9639 = vmatmul.mubr.bf16.gmra.mrb[0].mxu0 %v9348
  %v9640 = vpop.f32.mrb[0].mxu0
  %v9641 = vadd.f32 0.0, %v9640
  %v9642 = vpop.f32.mrb[0].mxu0
  %v9643 = vpop.f32.mrb[0].mxu0
  %v9644 = vadd.f32 0.0, %v9643
  %v9645 = vpop.f32.mrb[0].mxu0
  %9646 = vmatprep.mubr.bf16.mxu0 0
  %9647 = vmatmul.mubr.bf16.gmra.mrb[0].mxu0 %v9349
  %v9648 = vpop.f32.mrb[0].mxu0
  %v9649 = vadd.f32 0.0, %v9648
  %v9650 = vpop.f32.mrb[0].mxu0
  %v9651 = vpop.f32.mrb[0].mxu0
  %v9652 = vadd.f32 0.0, %v9651
  %v9653 = vpop.f32.mrb[0].mxu0
  %9654 = vmatprep.mubr.bf16.mxu0 0
  %9655 = vmatmul.mubr.bf16.gmra.mrb[0].mxu0 %v9350
  %v9656 = vpop.f32.mrb[0].mxu0
  %v9657 = vadd.f32 0.0, %v9656
  %v9658 = vpop.f32.mrb[0].mxu0
  %v9659 = vpop.f32.mrb[0].mxu0
  %v9660 = vadd.f32 0.0, %v9659
  %v9661 = vpop.f32.mrb[0].mxu0
  %9662 = vmatprep.mubr.bf16.mxu0 0
  %9663 = vmatmul.mubr.bf16.gmra.mrb[0].mxu0 %v9351
  %v9664 = vpop.f32.mrb[0].mxu0
  %v9665 = vadd.f32 0.0, %v9664
  %v9666 = vpop.f32.mrb[0].mxu0
  %v9667 = vpop.f32.mrb[0].mxu0
  %v9668 = vadd.f32 0.0, %v9667
  %v9669 = vpop.f32.mrb[0].mxu0
  %9670 = vmatprep.mubr.bf16.mxu0 0
  %9671 = vmatmul.mubr.bf16.gmra.mrb[0].mxu0 %v9352
  %v9672 = vpop.f32.mrb[0].mxu0
  %v9673 = vadd.f32 0.0, %v9672
  %v9674 = vpop.f32.mrb[0].mxu0
  %v9675 = vpop.f32.mrb[0].mxu0
  %v9676 = vadd.f32 0.0, %v9675
  %v9677 = vpop.f32.mrb[0].mxu0
  %9678 = vmatprep.mubr.bf16.mxu0 0
  %9679 = vmatmul.mubr.bf16.gmra.mrb[0].mxu0 %v9353
  %v9680 = vpop.f32.mrb[0].mxu0
  %v9681 = vadd.f32 0.0, %v9680
  %v9682 = vpop.f32.mrb[0].mxu0
  %v9683 = vpop.f32.mrb[0].mxu0
  %v9684 = vadd.f32 0.0, %v9683
  %v9685 = vpop.f32.mrb[0].mxu0
  %9686 = vmatprep.mubr.bf16.mxu0 0
  %9687 = vmatmul.mubr.bf16.gmra.mrb[0].mxu0 %v9354
  %v9688 = vpop.f32.mrb[0].mxu0
  %v9689 = vadd.f32 0.0, %v9688
  %v9690 = vpop.f32.mrb[0].mxu0
  %v9691 = vpop.f32.mrb[0].mxu0
  %v9692 = vadd.f32 0.0, %v9691
  %v9693 = vpop.f32.mrb[0].mxu0
  %9694 = vmatprep.mubr.bf16.mxu0 0
  %9695 = vmatmul.mubr.bf16.gmra.mrb[0].mxu0 %v9355
  %v9696 = vpop.f32.mrb[0].mxu0
  %v9697 = vadd.f32 0.0, %v9696
  %v9698 = vpop.f32.mrb[0].mxu0
  %v9699 = vpop.f32.mrb[0].mxu0
  %v9700 = vadd.f32 0.0, %v9699
  %v9701 = vpop.f32.mrb[0].mxu0
  %9702 = vmatprep.mubr.bf16.mxu0 0
  %9703 = vmatmul.mubr.bf16.gmra.mrb[0].mxu0 %v9356
  %v9704 = vpop.f32.mrb[0].mxu0
  %v9705 = vadd.f32 0.0, %v9704
  %v9706 = vpop.f32.mrb[0].mxu0
  %v9707 = vpop.f32.mrb[0].mxu0
  %v9708 = vadd.f32 0.0, %v9707
  %v9709 = vpop.f32.mrb[0].mxu0
  %9710 = vdwg.mxu0
  %v9711 = vadd.f32 %v9197, %v9457
  %v9712 = vadd.f32 %v9198, %v9460
  %v9713 = vadd.f32 %v9199, %v9465
  %v9714 = vadd.f32 %v9200, %v9468
  %v9715 = vadd.f32 %v9201, %v9473
  %v9716 = vadd.f32 %v9202, %v9476
  %v9717 = vadd.f32 %v9203, %v9481
  %v9718 = vadd.f32 %v9204, %v9484
  %v9719 = vadd.f32 %v9205, %v9489
  %v9720 = vadd.f32 %v9206, %v9492
  %v9721 = vadd.f32 %v9207, %v9497
  %v9722 = vadd.f32 %v9208, %v9500
  %v9723 = vadd.f32 %v9209, %v9505
  %v9724 = vadd.f32 %v9210, %v9508
  %v9725 = vadd.f32 %v9211, %v9513
  %v9726 = vadd.f32 %v9212, %v9516
  %v9727 = vadd.f32 %v9213, %v9521
  %v9728 = vadd.f32 %v9214, %v9524
  %v9729 = vadd.f32 %v9215, %v9529
  %v9730 = vadd.f32 %v9216, %v9532
  %v9731 = vadd.f32 %v9217, %v9537
  %v9732 = vadd.f32 %v9218, %v9540
  %v9733 = vadd.f32 %v9219, %v9545
  %v9734 = vadd.f32 %v9220, %v9548
  %v9735 = vadd.f32 %v9221, %v9553
  %v9736 = vadd.f32 %v9222, %v9556
  %v9737 = vadd.f32 %v9223, %v9561
  %v9738 = vadd.f32 %v9224, %v9564
  %v9739 = vadd.f32 %v9225, %v9569
  %v9740 = vadd.f32 %v9226, %v9572
  %v9741 = vadd.f32 %v9227, %v9577
  %v9742 = vadd.f32 %v9228, %v9580
  %v9743 = vadd.f32 %v9229, %v9585
  %v9744 = vadd.f32 %v9230, %v9588
  %v9745 = vadd.f32 %v9231, %v9593
  %v9746 = vadd.f32 %v9232, %v9596
  %v9747 = vadd.f32 %v9233, %v9601
  %v9748 = vadd.f32 %v9234, %v9604
  %v9749 = vadd.f32 %v9235, %v9609
  %v9750 = vadd.f32 %v9236, %v9612
  %v9751 = vadd.f32 %v9237, %v9617
  %v9752 = vadd.f32 %v9238, %v9620
  %v9753 = vadd.f32 %v9239, %v9625
  %v9754 = vadd.f32 %v9240, %v9628
  %v9755 = vadd.f32 %v9241, %v9633
  %v9756 = vadd.f32 %v9242, %v9636
  %v9757 = vadd.f32 %v9243, %v9641
  %v9758 = vadd.f32 %v9244, %v9644
  %v9759 = vadd.f32 %v9245, %v9649
  %v9760 = vadd.f32 %v9246, %v9652
  %v9761 = vadd.f32 %v9247, %v9657
  %v9762 = vadd.f32 %v9248, %v9660
  %v9763 = vadd.f32 %v9249, %v9665
  %v9764 = vadd.f32 %v9250, %v9668
  %v9765 = vadd.f32 %v9251, %v9673
  %v9766 = vadd.f32 %v9252, %v9676
  %v9767 = vadd.f32 %v9253, %v9681
  %v9768 = vadd.f32 %v9254, %v9684
  %v9769 = vadd.f32 %v9255, %v9689
  %v9770 = vadd.f32 %v9256, %v9692
  %v9771 = vadd.f32 %v9257, %v9697
  %v9772 = vadd.f32 %v9258, %v9700
  %v9773 = vadd.f32 %v9259, %v9705
  %v9774 = vadd.f32 %v9260, %v9708
  %v9775 = vadd.f32 %v9711, %v9712
  %v9776 = vadd.f32 %v9775, %v9713
  %v9777 = vadd.f32 %v9776, %v9714
  %v9778 = vadd.f32 %v9777, %v9715
  %v9779 = vadd.f32 %v9778, %v9716
  %v9780 = vadd.f32 %v9779, %v9717
  %v9781 = vadd.f32 %v9780, %v9718
  %v9782 = vadd.f32 %v9781, %v9719
  %v9783 = vadd.f32 %v9782, %v9720
  %v9784 = vadd.f32 %v9783, %v9721
  %v9785 = vadd.f32 %v9784, %v9722
  %v9786 = vadd.f32 %v9785, %v9723
  %v9787 = vadd.f32 %v9786, %v9724
  %v9788 = vadd.f32 %v9787, %v9725
  %v9789 = vadd.f32 %v9788, %v9726
  %v9790 = vadd.f32 %v9789, %v9727
  %v9791 = vadd.f32 %v9790, %v9728
  %v9792 = vadd.f32 %v9791, %v9729
  %v9793 = vadd.f32 %v9792, %v9730
  %v9794 = vadd.f32 %v9793, %v9731
  %v9795 = vadd.f32 %v9794, %v9732
  %v9796 = vadd.f32 %v9795, %v9733
  %v9797 = vadd.f32 %v9796, %v9734
  %v9798 = vadd.f32 %v9797, %v9735
  %v9799 = vadd.f32 %v9798, %v9736
  %v9800 = vadd.f32 %v9799, %v9737
  %v9801 = vadd.f32 %v9800, %v9738
  %v9802 = vadd.f32 %v9801, %v9739
  %v9803 = vadd.f32 %v9802, %v9740
  %v9804 = vadd.f32 %v9803, %v9741
  %v9805 = vadd.f32 %v9804, %v9742
  %v9806 = vadd.f32 %v9805, %v9743
  %v9807 = vadd.f32 %v9806, %v9744
  %v9808 = vadd.f32 %v9807, %v9745
  %v9809 = vadd.f32 %v9808, %v9746
  %v9810 = vadd.f32 %v9809, %v9747
  %v9811 = vadd.f32 %v9810, %v9748
  %v9812 = vadd.f32 %v9811, %v9749
  %v9813 = vadd.f32 %v9812, %v9750
  %v9814 = vadd.f32 %v9813, %v9751
  %v9815 = vadd.f32 %v9814, %v9752
  %v9816 = vadd.f32 %v9815, %v9753
  %v9817 = vadd.f32 %v9816, %v9754
  %v9818 = vadd.f32 %v9817, %v9755
  %v9819 = vadd.f32 %v9818, %v9756
  %v9820 = vadd.f32 %v9819, %v9757
  %v9821 = vadd.f32 %v9820, %v9758
  %v9822 = vadd.f32 %v9821, %v9759
  %v9823 = vadd.f32 %v9822, %v9760
  %v9824 = vadd.f32 %v9823, %v9761
  %v9825 = vadd.f32 %v9824, %v9762
  %v9826 = vadd.f32 %v9825, %v9763
  %v9827 = vadd.f32 %v9826, %v9764
  %v9828 = vadd.f32 %v9827, %v9765
  %v9829 = vadd.f32 %v9828, %v9766
  %v9830 = vadd.f32 %v9829, %v9767
  %v9831 = vadd.f32 %v9830, %v9768
  %v9832 = vadd.f32 %v9831, %v9769
  %v9833 = vadd.f32 %v9832, %v9770
  %v9834 = vadd.f32 %v9833, %v9771
  %v9835 = vadd.f32 %v9834, %v9772
  %v9836 = vadd.f32 %v9835, %v9773
  %v9837 = vadd.f32 %v9836, %v9774
  %v9838 = vrot.slane %v9837, 4
  %v9839 = vadd.f32 %v9837, %v9838
  %v9840 = vrot.slane %v9839, 2
  %v9841 = vadd.f32 %v9839, %v9840
  %v9842 = vrot.slane %v9841, 1
  %v9843 = vadd.f32 %v9841, %v9842
  %v9844 = vmul.f32 %v9843, 0.001953125
  %v9845 = vsub.f32 %v9711, %v9844
  %v9846 = vsub.f32 %v9712, %v9844
  %v9847 = vsub.f32 %v9713, %v9844
  %v9848 = vsub.f32 %v9714, %v9844
  %v9849 = vsub.f32 %v9715, %v9844
  %v9850 = vsub.f32 %v9716, %v9844
  %v9851 = vsub.f32 %v9717, %v9844
  %v9852 = vsub.f32 %v9718, %v9844
  %v9853 = vsub.f32 %v9719, %v9844
  %v9854 = vsub.f32 %v9720, %v9844
  %v9855 = vsub.f32 %v9721, %v9844
  %v9856 = vsub.f32 %v9722, %v9844
  %v9857 = vsub.f32 %v9723, %v9844
  %v9858 = vsub.f32 %v9724, %v9844
  %v9859 = vsub.f32 %v9725, %v9844
  %v9860 = vsub.f32 %v9726, %v9844
  %v9861 = vsub.f32 %v9727, %v9844
  %v9862 = vsub.f32 %v9728, %v9844
  %v9863 = vsub.f32 %v9729, %v9844
  %v9864 = vsub.f32 %v9730, %v9844
  %v9865 = vsub.f32 %v9731, %v9844
  %v9866 = vsub.f32 %v9732, %v9844
  %v9867 = vsub.f32 %v9733, %v9844
  %v9868 = vsub.f32 %v9734, %v9844
  %v9869 = vsub.f32 %v9735, %v9844
  %v9870 = vsub.f32 %v9736, %v9844
  %v9871 = vsub.f32 %v9737, %v9844
  %v9872 = vsub.f32 %v9738, %v9844
  %v9873 = vsub.f32 %v9739, %v9844
  %v9874 = vsub.f32 %v9740, %v9844
  %v9875 = vsub.f32 %v9741, %v9844
  %v9876 = vsub.f32 %v9742, %v9844
  %v9877 = vsub.f32 %v9743, %v9844
  %v9878 = vsub.f32 %v9744, %v9844
  %v9879 = vsub.f32 %v9745, %v9844
  %v9880 = vsub.f32 %v9746, %v9844
  %v9881 = vsub.f32 %v9747, %v9844
  %v9882 = vsub.f32 %v9748, %v9844
  %v9883 = vsub.f32 %v9749, %v9844
  %v9884 = vsub.f32 %v9750, %v9844
  %v9885 = vsub.f32 %v9751, %v9844
  %v9886 = vsub.f32 %v9752, %v9844
  %v9887 = vsub.f32 %v9753, %v9844
  %v9888 = vsub.f32 %v9754, %v9844
  %v9889 = vsub.f32 %v9755, %v9844
  %v9890 = vsub.f32 %v9756, %v9844
  %v9891 = vsub.f32 %v9757, %v9844
  %v9892 = vsub.f32 %v9758, %v9844
  %v9893 = vsub.f32 %v9759, %v9844
  %v9894 = vsub.f32 %v9760, %v9844
  %v9895 = vsub.f32 %v9761, %v9844
  %v9896 = vsub.f32 %v9762, %v9844
  %v9897 = vsub.f32 %v9763, %v9844
  %v9898 = vsub.f32 %v9764, %v9844
  %v9899 = vsub.f32 %v9765, %v9844
  %v9900 = vsub.f32 %v9766, %v9844
  %v9901 = vsub.f32 %v9767, %v9844
  %v9902 = vsub.f32 %v9768, %v9844
  %v9903 = vsub.f32 %v9769, %v9844
  %v9904 = vsub.f32 %v9770, %v9844
  %v9905 = vsub.f32 %v9771, %v9844
  %v9906 = vsub.f32 %v9772, %v9844
  %v9907 = vsub.f32 %v9773, %v9844
  %v9908 = vsub.f32 %v9774, %v9844
  %v9909 = vmul.f32 %v9845, %v9845
  %v9910 = vmul.f32 %v9846, %v9846
  %v9911 = vmul.f32 %v9847, %v9847
  %v9912 = vmul.f32 %v9848, %v9848
  %v9913 = vmul.f32 %v9849, %v9849
  %v9914 = vmul.f32 %v9850, %v9850
  %v9915 = vmul.f32 %v9851, %v9851
  %v9916 = vmul.f32 %v9852, %v9852
  %v9917 = vmul.f32 %v9853, %v9853
  %v9918 = vmul.f32 %v9854, %v9854
  %v9919 = vmul.f32 %v9855, %v9855
  %v9920 = vmul.f32 %v9856, %v9856
  %v9921 = vmul.f32 %v9857, %v9857
  %v9922 = vmul.f32 %v9858, %v9858
  %v9923 = vmul.f32 %v9859, %v9859
  %v9924 = vmul.f32 %v9860, %v9860
  %v9925 = vmul.f32 %v9861, %v9861
  %v9926 = vmul.f32 %v9862, %v9862
  %v9927 = vmul.f32 %v9863, %v9863
  %v9928 = vmul.f32 %v9864, %v9864
  %v9929 = vmul.f32 %v9865, %v9865
  %v9930 = vmul.f32 %v9866, %v9866
  %v9931 = vmul.f32 %v9867, %v9867
  %v9932 = vmul.f32 %v9868, %v9868
  %v9933 = vmul.f32 %v9869, %v9869
  %v9934 = vmul.f32 %v9870, %v9870
  %v9935 = vmul.f32 %v9871, %v9871
  %v9936 = vmul.f32 %v9872, %v9872
  %v9937 = vmul.f32 %v9873, %v9873
  %v9938 = vmul.f32 %v9874, %v9874
  %v9939 = vmul.f32 %v9875, %v9875
  %v9940 = vmul.f32 %v9876, %v9876
  %v9941 = vmul.f32 %v9877, %v9877
  %v9942 = vmul.f32 %v9878, %v9878
  %v9943 = vmul.f32 %v9879, %v9879
  %v9944 = vmul.f32 %v9880, %v9880
  %v9945 = vmul.f32 %v9881, %v9881
  %v9946 = vmul.f32 %v9882, %v9882
  %v9947 = vmul.f32 %v9883, %v9883
  %v9948 = vmul.f32 %v9884, %v9884
  %v9949 = vmul.f32 %v9885, %v9885
  %v9950 = vmul.f32 %v9886, %v9886
  %v9951 = vmul.f32 %v9887, %v9887
  %v9952 = vmul.f32 %v9888, %v9888
  %v9953 = vmul.f32 %v9889, %v9889
  %v9954 = vmul.f32 %v9890, %v9890
  %v9955 = vmul.f32 %v9891, %v9891
  %v9956 = vmul.f32 %v9892, %v9892
  %v9957 = vmul.f32 %v9893, %v9893
  %v9958 = vmul.f32 %v9894, %v9894
  %v9959 = vmul.f32 %v9895, %v9895
  %v9960 = vmul.f32 %v9896, %v9896
  %v9961 = vmul.f32 %v9897, %v9897
  %v9962 = vmul.f32 %v9898, %v9898
  %v9963 = vmul.f32 %v9899, %v9899
  %v9964 = vmul.f32 %v9900, %v9900
  %v9965 = vmul.f32 %v9901, %v9901
  %v9966 = vmul.f32 %v9902, %v9902
  %v9967 = vmul.f32 %v9903, %v9903
  %v9968 = vmul.f32 %v9904, %v9904
  %v9969 = vmul.f32 %v9905, %v9905
  %v9970 = vmul.f32 %v9906, %v9906
  %v9971 = vmul.f32 %v9907, %v9907
  %v9972 = vmul.f32 %v9908, %v9908
  %v9973 = vadd.f32 %v9909, %v9910
  %v9974 = vadd.f32 %v9973, %v9911
  %v9975 = vadd.f32 %v9974, %v9912
  %v9976 = vadd.f32 %v9975, %v9913
  %v9977 = vadd.f32 %v9976, %v9914
  %v9978 = vadd.f32 %v9977, %v9915
  %v9979 = vadd.f32 %v9978, %v9916
  %v9980 = vadd.f32 %v9979, %v9917
  %v9981 = vadd.f32 %v9980, %v9918
  %v9982 = vadd.f32 %v9981, %v9919
  %v9983 = vadd.f32 %v9982, %v9920
  %v9984 = vadd.f32 %v9983, %v9921
  %v9985 = vadd.f32 %v9984, %v9922
  %v9986 = vadd.f32 %v9985, %v9923
  %v9987 = vadd.f32 %v9986, %v9924
  %v9988 = vadd.f32 %v9987, %v9925
  %v9989 = vadd.f32 %v9988, %v9926
  %v9990 = vadd.f32 %v9989, %v9927
  %v9991 = vadd.f32 %v9990, %v9928
  %v9992 = vadd.f32 %v9991, %v9929
  %v9993 = vadd.f32 %v9992, %v9930
  %v9994 = vadd.f32 %v9993, %v9931
  %v9995 = vadd.f32 %v9994, %v9932
  %v9996 = vadd.f32 %v9995, %v9933
  %v9997 = vadd.f32 %v9996, %v9934
  %v9998 = vadd.f32 %v9997, %v9935
  %v9999 = vadd.f32 %v9998, %v9936
  %v10000 = vadd.f32 %v9999, %v9937
  %v10001 = vadd.f32 %v10000, %v9938
  %v10002 = vadd.f32 %v10001, %v9939
  %v10003 = vadd.f32 %v10002, %v9940
  %v10004 = vadd.f32 %v10003, %v9941
  %v10005 = vadd.f32 %v10004, %v9942
  %v10006 = vadd.f32 %v10005, %v9943
  %v10007 = vadd.f32 %v10006, %v9944
  %v10008 = vadd.f32 %v10007, %v9945
  %v10009 = vadd.f32 %v10008, %v9946
  %v10010 = vadd.f32 %v10009, %v9947
  %v10011 = vadd.f32 %v10010, %v9948
  %v10012 = vadd.f32 %v10011, %v9949
  %v10013 = vadd.f32 %v10012, %v9950
  %v10014 = vadd.f32 %v10013, %v9951
  %v10015 = vadd.f32 %v10014, %v9952
  %v10016 = vadd.f32 %v10015, %v9953
  %v10017 = vadd.f32 %v10016, %v9954
  %v10018 = vadd.f32 %v10017, %v9955
  %v10019 = vadd.f32 %v10018, %v9956
  %v10020 = vadd.f32 %v10019, %v9957
  %v10021 = vadd.f32 %v10020, %v9958
  %v10022 = vadd.f32 %v10021, %v9959
  %v10023 = vadd.f32 %v10022, %v9960
  %v10024 = vadd.f32 %v10023, %v9961
  %v10025 = vadd.f32 %v10024, %v9962
  %v10026 = vadd.f32 %v10025, %v9963
  %v10027 = vadd.f32 %v10026, %v9964
  %v10028 = vadd.f32 %v10027, %v9965
  %v10029 = vadd.f32 %v10028, %v9966
  %v10030 = vadd.f32 %v10029, %v9967
  %v10031 = vadd.f32 %v10030, %v9968
  %v10032 = vadd.f32 %v10031, %v9969
  %v10033 = vadd.f32 %v10032, %v9970
  %v10034 = vadd.f32 %v10033, %v9971
  %v10035 = vadd.f32 %v10034, %v9972
  %v10036 = vrot.slane %v10035, 4
  %v10037 = vadd.f32 %v10035, %v10036
  %v10038 = vrot.slane %v10037, 2
  %v10039 = vadd.f32 %v10037, %v10038
  %v10040 = vrot.slane %v10039, 1
  %v10041 = vadd.f32 %v10039, %v10040
  %v10042 = vmul.f32 %v10041, 0.001953125
  %v10043 = vadd.f32 %v10042, 1e-05
  %v10044 = vrsqrt.pop %v10043
  %v10045 = vld [vmem:[%s5] sm:$0x1]
  %v10046 = vmul.f32 %v10044, %v10045
  %v10047 = vlaneseq
  %v10048 = vshrl.u32 %v10047, 7
  %v10049 = vsub.s32 0, %v10048
  %v10050 = vrot.slane %v10046, %v10049
  %v10051 = vmul.f32 %v9845, %v10050
  %v10052 = vmul.f32 %v9846, %v10050
  %v10053 = vmul.f32 %v9847, %v10050
  %v10054 = vmul.f32 %v9848, %v10050
  %v10055 = vmul.f32 %v9849, %v10050
  %v10056 = vmul.f32 %v9850, %v10050
  %v10057 = vmul.f32 %v9851, %v10050
  %v10058 = vmul.f32 %v9852, %v10050
  %v10059 = vmul.f32 %v9853, %v10050
  %v10060 = vmul.f32 %v9854, %v10050
  %v10061 = vmul.f32 %v9855, %v10050
  %v10062 = vmul.f32 %v9856, %v10050
  %v10063 = vmul.f32 %v9857, %v10050
  %v10064 = vmul.f32 %v9858, %v10050
  %v10065 = vmul.f32 %v9859, %v10050
  %v10066 = vmul.f32 %v9860, %v10050
  %v10067 = vmul.f32 %v9861, %v10050
  %v10068 = vmul.f32 %v9862, %v10050
  %v10069 = vmul.f32 %v9863, %v10050
  %v10070 = vmul.f32 %v9864, %v10050
  %v10071 = vmul.f32 %v9865, %v10050
  %v10072 = vmul.f32 %v9866, %v10050
  %v10073 = vmul.f32 %v9867, %v10050
  %v10074 = vmul.f32 %v9868, %v10050
  %v10075 = vmul.f32 %v9869, %v10050
  %v10076 = vmul.f32 %v9870, %v10050
  %v10077 = vmul.f32 %v9871, %v10050
  %v10078 = vmul.f32 %v9872, %v10050
  %v10079 = vmul.f32 %v9873, %v10050
  %v10080 = vmul.f32 %v9874, %v10050
  %v10081 = vmul.f32 %v9875, %v10050
  %v10082 = vmul.f32 %v9876, %v10050
  %v10083 = vmul.f32 %v9877, %v10050
  %v10084 = vmul.f32 %v9878, %v10050
  %v10085 = vmul.f32 %v9879, %v10050
  %v10086 = vmul.f32 %v9880, %v10050
  %v10087 = vmul.f32 %v9881, %v10050
  %v10088 = vmul.f32 %v9882, %v10050
  %v10089 = vmul.f32 %v9883, %v10050
  %v10090 = vmul.f32 %v9884, %v10050
  %v10091 = vmul.f32 %v9885, %v10050
  %v10092 = vmul.f32 %v9886, %v10050
  %v10093 = vmul.f32 %v9887, %v10050
  %v10094 = vmul.f32 %v9888, %v10050
  %v10095 = vmul.f32 %v9889, %v10050
  %v10096 = vmul.f32 %v9890, %v10050
  %v10097 = vmul.f32 %v9891, %v10050
  %v10098 = vmul.f32 %v9892, %v10050
  %v10099 = vmul.f32 %v9893, %v10050
  %v10100 = vmul.f32 %v9894, %v10050
  %v10101 = vmul.f32 %v9895, %v10050
  %v10102 = vmul.f32 %v9896, %v10050
  %v10103 = vmul.f32 %v9897, %v10050
  %v10104 = vmul.f32 %v9898, %v10050
  %v10105 = vmul.f32 %v9899, %v10050
  %v10106 = vmul.f32 %v9900, %v10050
  %v10107 = vmul.f32 %v9901, %v10050
  %v10108 = vmul.f32 %v9902, %v10050
  %v10109 = vmul.f32 %v9903, %v10050
  %v10110 = vmul.f32 %v9904, %v10050
  %v10111 = vmul.f32 %v9905, %v10050
  %v10112 = vmul.f32 %v9906, %v10050
  %v10113 = vmul.f32 %v9907, %v10050
  %v10114 = vmul.f32 %v9908, %v10050
  %v10115 = vld [vmem:[%s6] sm:$0x1]
  %v10117 = vlaneseq
  %v10118 = vshrl.u32 %v10117, 7
  %v10119 = vsub.s32 0, %v10118
  %v10120 = vrot.slane %v10115, %v10119
  %v10122 = vadd.f32 %v10051, %v10120
  %v10123 = vadd.f32 %v10052, %v10120
  %v10124 = vadd.f32 %v10053, %v10120
  %v10125 = vadd.f32 %v10054, %v10120
  %v10126 = vadd.f32 %v10055, %v10120
  %v10127 = vadd.f32 %v10056, %v10120
  %v10128 = vadd.f32 %v10057, %v10120
  %v10129 = vadd.f32 %v10058, %v10120
  %v10130 = vadd.f32 %v10059, %v10120
  %v10131 = vadd.f32 %v10060, %v10120
  %v10132 = vadd.f32 %v10061, %v10120
  %v10133 = vadd.f32 %v10062, %v10120
  %v10134 = vadd.f32 %v10063, %v10120
  %v10135 = vadd.f32 %v10064, %v10120
  %v10136 = vadd.f32 %v10065, %v10120
  %v10137 = vadd.f32 %v10066, %v10120
  %v10138 = vadd.f32 %v10067, %v10120
  %v10139 = vadd.f32 %v10068, %v10120
  %v10140 = vadd.f32 %v10069, %v10120
  %v10141 = vadd.f32 %v10070, %v10120
  %v10142 = vadd.f32 %v10071, %v10120
  %v10143 = vadd.f32 %v10072, %v10120
  %v10144 = vadd.f32 %v10073, %v10120
  %v10145 = vadd.f32 %v10074, %v10120
  %v10146 = vadd.f32 %v10075, %v10120
  %v10147 = vadd.f32 %v10076, %v10120
  %v10148 = vadd.f32 %v10077, %v10120
  %v10149 = vadd.f32 %v10078, %v10120
  %v10150 = vadd.f32 %v10079, %v10120
  %v10151 = vadd.f32 %v10080, %v10120
  %v10152 = vadd.f32 %v10081, %v10120
  %v10153 = vadd.f32 %v10082, %v10120
  %v10154 = vadd.f32 %v10083, %v10120
  %v10155 = vadd.f32 %v10084, %v10120
  %v10156 = vadd.f32 %v10085, %v10120
  %v10157 = vadd.f32 %v10086, %v10120
  %v10158 = vadd.f32 %v10087, %v10120
  %v10159 = vadd.f32 %v10088, %v10120
  %v10160 = vadd.f32 %v10089, %v10120
  %v10161 = vadd.f32 %v10090, %v10120
  %v10162 = vadd.f32 %v10091, %v10120
  %v10163 = vadd.f32 %v10092, %v10120
  %v10164 = vadd.f32 %v10093, %v10120
  %v10165 = vadd.f32 %v10094, %v10120
  %v10166 = vadd.f32 %v10095, %v10120
  %v10167 = vadd.f32 %v10096, %v10120
  %v10168 = vadd.f32 %v10097, %v10120
  %v10169 = vadd.f32 %v10098, %v10120
  %v10170 = vadd.f32 %v10099, %v10120
  %v10171 = vadd.f32 %v10100, %v10120
  %v10172 = vadd.f32 %v10101, %v10120
  %v10173 = vadd.f32 %v10102, %v10120
  %v10174 = vadd.f32 %v10103, %v10120
  %v10175 = vadd.f32 %v10104, %v10120
  %v10176 = vadd.f32 %v10105, %v10120
  %v10177 = vadd.f32 %v10106, %v10120
  %v10178 = vadd.f32 %v10107, %v10120
  %v10179 = vadd.f32 %v10108, %v10120
  %v10180 = vadd.f32 %v10109, %v10120
  %v10181 = vadd.f32 %v10110, %v10120
  %v10182 = vadd.f32 %v10111, %v10120
  %v10183 = vadd.f32 %v10112, %v10120
  %v10184 = vadd.f32 %v10113, %v10120
  %v10185 = vadd.f32 %v10114, %v10120
  %v10186 = vadd.f32 %v10122, %v112
  %v10187 = vadd.f32 %v10123, %v113
  %v10188 = vadd.f32 %v10124, %v114
  %v10189 = vadd.f32 %v10125, %v115
  %v10190 = vadd.f32 %v10126, %v116
  %v10191 = vadd.f32 %v10127, %v117
  %v10192 = vadd.f32 %v10128, %v118
  %v10193 = vadd.f32 %v10129, %v119
  %v10194 = vadd.f32 %v10130, %v120
  %v10195 = vadd.f32 %v10131, %v121
  %v10196 = vadd.f32 %v10132, %v122
  %v10197 = vadd.f32 %v10133, %v123
  %v10198 = vadd.f32 %v10134, %v124
  %v10199 = vadd.f32 %v10135, %v125
  %v10200 = vadd.f32 %v10136, %v126
  %v10201 = vadd.f32 %v10137, %v127
  %v10202 = vadd.f32 %v10138, %v128
  %v10203 = vadd.f32 %v10139, %v129
  %v10204 = vadd.f32 %v10140, %v130
  %v10205 = vadd.f32 %v10141, %v131
  %v10206 = vadd.f32 %v10142, %v132
  %v10207 = vadd.f32 %v10143, %v133
  %v10208 = vadd.f32 %v10144, %v134
  %v10209 = vadd.f32 %v10145, %v135
  %v10210 = vadd.f32 %v10146, %v136
  %v10211 = vadd.f32 %v10147, %v137
  %v10212 = vadd.f32 %v10148, %v138
  %v10213 = vadd.f32 %v10149, %v139
  %v10214 = vadd.f32 %v10150, %v140
  %v10215 = vadd.f32 %v10151, %v141
  %v10216 = vadd.f32 %v10152, %v142
  %v10217 = vadd.f32 %v10153, %v143
  %v10218 = vadd.f32 %v10154, %v144
  %v10219 = vadd.f32 %v10155, %v145
  %v10220 = vadd.f32 %v10156, %v146
  %v10221 = vadd.f32 %v10157, %v147
  %v10222 = vadd.f32 %v10158, %v148
  %v10223 = vadd.f32 %v10159, %v149
  %v10224 = vadd.f32 %v10160, %v150
  %v10225 = vadd.f32 %v10161, %v151
  %v10226 = vadd.f32 %v10162, %v152
  %v10227 = vadd.f32 %v10163, %v153
  %v10228 = vadd.f32 %v10164, %v154
  %v10229 = vadd.f32 %v10165, %v155
  %v10230 = vadd.f32 %v10166, %v156
  %v10231 = vadd.f32 %v10167, %v157
  %v10232 = vadd.f32 %v10168, %v158
  %v10233 = vadd.f32 %v10169, %v159
  %v10234 = vadd.f32 %v10170, %v160
  %v10235 = vadd.f32 %v10171, %v161
  %v10236 = vadd.f32 %v10172, %v162
  %v10237 = vadd.f32 %v10173, %v163
  %v10238 = vadd.f32 %v10174, %v164
  %v10239 = vadd.f32 %v10175, %v165
  %v10240 = vadd.f32 %v10176, %v166
  %v10241 = vadd.f32 %v10177, %v167
  %v10242 = vadd.f32 %v10178, %v168
  %v10243 = vadd.f32 %v10179, %v169
  %v10244 = vadd.f32 %v10180, %v170
  %v10245 = vadd.f32 %v10181, %v171
  %v10246 = vadd.f32 %v10182, %v172
  %v10247 = vadd.f32 %v10183, %v173
  %v10248 = vadd.f32 %v10184, %v174
  %v10249 = vadd.f32 %v10185, %v175
  %v10250 = vmax.f32 %v10186, 0.0
  %v10251 = vmax.f32 %v10187, 0.0
  %v10252 = vmax.f32 %v10188, 0.0
  %v10253 = vmax.f32 %v10189, 0.0
  %v10254 = vmax.f32 %v10190, 0.0
  %v10255 = vmax.f32 %v10191, 0.0
  %v10256 = vmax.f32 %v10192, 0.0
  %v10257 = vmax.f32 %v10193, 0.0
  %v10258 = vmax.f32 %v10194, 0.0
  %v10259 = vmax.f32 %v10195, 0.0
  %v10260 = vmax.f32 %v10196, 0.0
  %v10261 = vmax.f32 %v10197, 0.0
  %v10262 = vmax.f32 %v10198, 0.0
  %v10263 = vmax.f32 %v10199, 0.0
  %v10264 = vmax.f32 %v10200, 0.0
  %v10265 = vmax.f32 %v10201, 0.0
  %v10266 = vmax.f32 %v10202, 0.0
  %v10267 = vmax.f32 %v10203, 0.0
  %v10268 = vmax.f32 %v10204, 0.0
  %v10269 = vmax.f32 %v10205, 0.0
  %v10270 = vmax.f32 %v10206, 0.0
  %v10271 = vmax.f32 %v10207, 0.0
  %v10272 = vmax.f32 %v10208, 0.0
  %v10273 = vmax.f32 %v10209, 0.0
  %v10274 = vmax.f32 %v10210, 0.0
  %v10275 = vmax.f32 %v10211, 0.0
  %v10276 = vmax.f32 %v10212, 0.0
  %v10277 = vmax.f32 %v10213, 0.0
  %v10278 = vmax.f32 %v10214, 0.0
  %v10279 = vmax.f32 %v10215, 0.0
  %v10280 = vmax.f32 %v10216, 0.0
  %v10281 = vmax.f32 %v10217, 0.0
  %v10282 = vmax.f32 %v10218, 0.0
  %v10283 = vmax.f32 %v10219, 0.0
  %v10284 = vmax.f32 %v10220, 0.0
  %v10285 = vmax.f32 %v10221, 0.0
  %v10286 = vmax.f32 %v10222, 0.0
  %v10287 = vmax.f32 %v10223, 0.0
  %v10288 = vmax.f32 %v10224, 0.0
  %v10289 = vmax.f32 %v10225, 0.0
  %v10290 = vmax.f32 %v10226, 0.0
  %v10291 = vmax.f32 %v10227, 0.0
  %v10292 = vmax.f32 %v10228, 0.0
  %v10293 = vmax.f32 %v10229, 0.0
  %v10294 = vmax.f32 %v10230, 0.0
  %v10295 = vmax.f32 %v10231, 0.0
  %v10296 = vmax.f32 %v10232, 0.0
  %v10297 = vmax.f32 %v10233, 0.0
  %v10298 = vmax.f32 %v10234, 0.0
  %v10299 = vmax.f32 %v10235, 0.0
  %v10300 = vmax.f32 %v10236, 0.0
  %v10301 = vmax.f32 %v10237, 0.0
  %v10302 = vmax.f32 %v10238, 0.0
  %v10303 = vmax.f32 %v10239, 0.0
  %v10304 = vmax.f32 %v10240, 0.0
  %v10305 = vmax.f32 %v10241, 0.0
  %v10306 = vmax.f32 %v10242, 0.0
  %v10307 = vmax.f32 %v10243, 0.0
  %v10308 = vmax.f32 %v10244, 0.0
  %v10309 = vmax.f32 %v10245, 0.0
  %v10310 = vmax.f32 %v10246, 0.0
  %v10311 = vmax.f32 %v10247, 0.0
  %v10312 = vmax.f32 %v10248, 0.0
  %v10313 = vmax.f32 %v10249, 0.0
  %10314 = vst [vmem:[%s7] sm:$0xff] %v10250
  %10315 = vst [vmem:[%s7 + $0x8] sm:$0xff] %v10251
  %10316 = vst [vmem:[%s7 + $0x10] sm:$0xff] %v10252
  %10317 = vst [vmem:[%s7 + $0x18] sm:$0xff] %v10253
  %10318 = vst [vmem:[%s7 + $0x20] sm:$0xff] %v10254
  %10319 = vst [vmem:[%s7 + $0x28] sm:$0xff] %v10255
  %10320 = vst [vmem:[%s7 + $0x30] sm:$0xff] %v10256
  %10321 = vst [vmem:[%s7 + $0x38] sm:$0xff] %v10257
  %10322 = vst [vmem:[%s7 + $0x40] sm:$0xff] %v10258
  %10323 = vst [vmem:[%s7 + $0x48] sm:$0xff] %v10259
  %10324 = vst [vmem:[%s7 + $0x50] sm:$0xff] %v10260
  %10325 = vst [vmem:[%s7 + $0x58] sm:$0xff] %v10261
  %10326 = vst [vmem:[%s7 + $0x60] sm:$0xff] %v10262
  %10327 = vst [vmem:[%s7 + $0x68] sm:$0xff] %v10263
  %10328 = vst [vmem:[%s7 + $0x70] sm:$0xff] %v10264
  %10329 = vst [vmem:[%s7 + $0x78] sm:$0xff] %v10265
  %10330 = vst [vmem:[%s7 + $0x80] sm:$0xff] %v10266
  %10331 = vst [vmem:[%s7 + $0x88] sm:$0xff] %v10267
  %10332 = vst [vmem:[%s7 + $0x90] sm:$0xff] %v10268
  %10333 = vst [vmem:[%s7 + $0x98] sm:$0xff] %v10269
  %10334 = vst [vmem:[%s7 + $0xa0] sm:$0xff] %v10270
  %10335 = vst [vmem:[%s7 + $0xa8] sm:$0xff] %v10271
  %10336 = vst [vmem:[%s7 + $0xb0] sm:$0xff] %v10272
  %10337 = vst [vmem:[%s7 + $0xb8] sm:$0xff] %v10273
  %10338 = vst [vmem:[%s7 + $0xc0] sm:$0xff] %v10274
  %10339 = vst [vmem:[%s7 + $0xc8] sm:$0xff] %v10275
  %10340 = vst [vmem:[%s7 + $0xd0] sm:$0xff] %v10276
  %10341 = vst [vmem:[%s7 + $0xd8] sm:$0xff] %v10277
  %10342 = vst [vmem:[%s7 + $0xe0] sm:$0xff] %v10278
  %10343 = vst [vmem:[%s7 + $0xe8] sm:$0xff] %v10279
  %10344 = vst [vmem:[%s7 + $0xf0] sm:$0xff] %v10280
  %10345 = vst [vmem:[%s7 + $0xf8] sm:$0xff] %v10281
  %10346 = vst [vmem:[%s7 + $0x100] sm:$0xff] %v10282
  %10347 = vst [vmem:[%s7 + $0x108] sm:$0xff] %v10283
  %10348 = vst [vmem:[%s7 + $0x110] sm:$0xff] %v10284
  %10349 = vst [vmem:[%s7 + $0x118] sm:$0xff] %v10285
  %10350 = vst [vmem:[%s7 + $0x120] sm:$0xff] %v10286
  %10351 = vst [vmem:[%s7 + $0x128] sm:$0xff] %v10287
  %10352 = vst [vmem:[%s7 + $0x130] sm:$0xff] %v10288
  %10353 = vst [vmem:[%s7 + $0x138] sm:$0xff] %v10289
  %10354 = vst [vmem:[%s7 + $0x140] sm:$0xff] %v10290
  %10355 = vst [vmem:[%s7 + $0x148] sm:$0xff] %v10291
  %10356 = vst [vmem:[%s7 + $0x150] sm:$0xff] %v10292
  %10357 = vst [vmem:[%s7 + $0x158] sm:$0xff] %v10293
  %10358 = vst [vmem:[%s7 + $0x160] sm:$0xff] %v10294
  %10359 = vst [vmem:[%s7 + $0x168] sm:$0xff] %v10295
  %10360 = vst [vmem:[%s7 + $0x170] sm:$0xff] %v10296
  %10361 = vst [vmem:[%s7 + $0x178] sm:$0xff] %v10297
  %10362 = vst [vmem:[%s7 + $0x180] sm:$0xff] %v10298
  %10363 = vst [vmem:[%s7 + $0x188] sm:$0xff] %v10299
  %10364 = vst [vmem:[%s7 + $0x190] sm:$0xff] %v10300
  %10365 = vst [vmem:[%s7 + $0x198] sm:$0xff] %v10301
  %10366 = vst [vmem:[%s7 + $0x1a0] sm:$0xff] %v10302
  %10367 = vst [vmem:[%s7 + $0x1a8] sm:$0xff] %v10303
  %10368 = vst [vmem:[%s7 + $0x1b0] sm:$0xff] %v10304
  %10369 = vst [vmem:[%s7 + $0x1b8] sm:$0xff] %v10305
  %10370 = vst [vmem:[%s7 + $0x1c0] sm:$0xff] %v10306
  %10371 = vst [vmem:[%s7 + $0x1c8] sm:$0xff] %v10307
  %10372 = vst [vmem:[%s7 + $0x1d0] sm:$0xff] %v10308
  %10373 = vst [vmem:[%s7 + $0x1d8] sm:$0xff] %v10309
  %10374 = vst [vmem:[%s7 + $0x1e0] sm:$0xff] %v10310
  %10375 = vst [vmem:[%s7 + $0x1e8] sm:$0xff] %v10311
  %10376 = vst [vmem:[%s7 + $0x1f0] sm:$0xff] %v10312
  %10377 = vst [vmem:[%s7 + $0x1f8] sm:$0xff] %v10313
  // Predicated region
  $region30: #{basic_block_forward.1} parent=0 // pred_check
    _
  $region31: #{basic_block_forward.1} parent=0 // pred_check_branch
    %10379 = sbr.rel (0) target = $region33
  $region32: #{basic_block_forward.1} parent=0 // pred_region
    _
  $region33: #{basic_block_forward.1} parent=0 // pred_fallthru
    _
  // Predicated region
  $region34: #{basic_block_forward.1} parent=0 // pred_check
    _
  $region35: #{basic_block_forward.1} parent=0 // pred_check_branch
    %10381 = sbr.rel (0) target = $region37
  $region36: #{basic_block_forward.1} parent=0 // pred_region
    _
  $region37: #{basic_block_forward.1} parent=0 // pred_fallthru
    _

</llo_original>
